<compile_context>
chip_gen: v5e
topology: v5e:2x2
jax: 0.10.0
libtpu: 0.0.40
codegen_flags: <defaults>
</compile_context>

<pallas_src>
import functools
import math

import jax
import jax.numpy as jnp
import numpy as np
from jax.experimental import pallas as pl
from jax.experimental.pallas import tpu as pltpu

# ---------------- small deterministic config (scaled-down ViT) ----------------
IMG = 16            # image H = W
PATCH = 8
CHANNELS = 3
HIDDEN = 32
HEADS = 4
HEAD_DIM = HIDDEN // HEADS
LAYERS = 2
MLP = 64
N_PATCH = (IMG // PATCH) ** 2           # 4 patches
SEQ = N_PATCH + 1                       # 5 tokens (CLS + patches)
CPP = CHANNELS * PATCH * PATCH          # flattened patch size (192)
LN_EPS = 1e-12                          # HF ViT layer_norm_eps
OUT_LANES = 128                         # lane-dense output padding

_CPARAMS = pltpu.CompilerParams(dimension_semantics=("arbitrary",))


def _full_spec(shape):
    # whole-array block (legal: block_shape equals full array dims), 1-point grid
    return pl.BlockSpec(shape, lambda i: (0,) * len(shape))


# ---------------- the fused kernel ----------------
def _progress_vit_kernel(
    x_ref,        # (R, CPP+1)  patches (+ CLS indicator column/rows), R = 2B*SEQ
    wext_ref,     # (CPP+1, H)  [patch_w ; cls - patch_b]
    embb_ref,     # (R, H)      tiled positional embedding + patch bias
    mask_ref,     # (R, R)      additive block-diagonal attention mask (0 / -1e9)
    ln1_g_ref, ln1_b_ref,       # (L, 1, H)
    qkv_w_ref, qkv_b_ref,       # (L, H, 3H), (L, 1, 3H)
    o_w_ref, o_b_ref,           # (L, H, H), (L, 1, H)
    ln2_g_ref, ln2_b_ref,       # (L, 1, H)
    fc1_w_ref, fc1_b_ref,       # (L, H, MLP), (L, 1, MLP)
    fc2_w_ref, fc2_b_ref,       # (L, MLP, H), (L, 1, H)
    clssel_ref,                 # (2B, R)     CLS-row selector (one-hot rows)
    lnf_g_ref, lnf_b_ref,       # (1, H)
    pool_w_ref, pool_b_ref,     # (H, H), (1, H)
    fc_w_ref,                   # (2, H)      row0 -> pooled(image1), row1 -> pooled(image2)
    fc_b_ref,                   # (1, 1)
    out_ref,                    # (B, OUT_LANES)  lane-dense sigmoid output
    *, batch):
    f32 = jnp.float32
    scale = 1.0 / math.sqrt(HEAD_DIM)

    def layernorm(x, g, b):
        mu = jnp.mean(x, axis=-1, keepdims=True)
        xc = x - mu
        var = jnp.mean(xc * xc, axis=-1, keepdims=True)
        return xc * jax.lax.rsqrt(var + LN_EPS) * g + b

    def gelu(x):
        # TODO(synk): HF ViT uses erf-GELU; tanh approximation used for guaranteed Mosaic lowering.
        c = math.sqrt(2.0 / math.pi)
        return 0.5 * x * (1.0 + jnp.tanh(c * (x + 0.044715 * x * x * x)))

    mask = mask_ref[...]

    # ---- patch embedding + CLS token + positional embedding (one matmul) ----
    h = jnp.dot(x_ref[...], wext_ref[...], preferred_element_type=f32) + embb_ref[...]

    # ---- transformer encoder (statically unrolled: LAYERS and HEADS are tiny) ----
    for l in range(LAYERS):
        # pre-LN multi-head self-attention
        hn = layernorm(h, ln1_g_ref[l], ln1_b_ref[l])
        qkv = jnp.dot(hn, qkv_w_ref[l], preferred_element_type=f32) + qkv_b_ref[l]
        ow = o_w_ref[l]
        attn = None
        for hh in range(HEADS):
            lo = hh * HEAD_DIM
            q = qkv[:, lo:lo + HEAD_DIM]
            k = qkv[:, HIDDEN + lo:HIDDEN + lo + HEAD_DIM]
            v = qkv[:, 2 * HIDDEN + lo:2 * HIDDEN + lo + HEAD_DIM]
            # scores over the whole (2B*SEQ) row-batch; the additive block-diagonal
            # mask keeps attention strictly within each image's own tokens.
            s = jax.lax.dot_general(q, k, (((1,), (1,)), ((), ())),
                                    preferred_element_type=f32) * scale + mask
            m = jnp.max(s, axis=-1, keepdims=True)
            p = jnp.exp(s - m)
            p = p * pl.reciprocal(jnp.sum(p, axis=-1, keepdims=True), approx=True)
            ctx = jnp.dot(p, v, preferred_element_type=f32)                      # (R, Dh)
            # head-concat + output projection folded into per-head accumulation
            part = jnp.dot(ctx, ow[lo:lo + HEAD_DIM, :], preferred_element_type=f32)
            attn = part if attn is None else attn + part
        h = h + attn + o_b_ref[l]

        # pre-LN MLP (GELU)
        hn = layernorm(h, ln2_g_ref[l], ln2_b_ref[l])
        ff = gelu(jnp.dot(hn, fc1_w_ref[l], preferred_element_type=f32) + fc1_b_ref[l])
        h = h + jnp.dot(ff, fc2_w_ref[l], preferred_element_type=f32) + fc2_b_ref[l]

    # ---- final LN (on CLS rows; LN is row-wise so this equals LN-all-then-select),
    #      pooler (Linear + tanh), progress head (concat -> fc -> sigmoid) ----
    cls_tok = jnp.dot(clssel_ref[...], h, preferred_element_type=f32)            # (2B, H)
    cls_tok = layernorm(cls_tok, lnf_g_ref[...], lnf_b_ref[...])
    pooled = jnp.tanh(jnp.dot(cls_tok, pool_w_ref[...], preferred_element_type=f32)
                      + pool_b_ref[...])                                          # (2B, H)

    fcw = fc_w_ref[...]
    p1 = pooled[:batch, :]                  # pooler_output(image1)
    p2 = pooled[batch:, :]                  # pooler_output(image2)
    logit = (jnp.sum(p1 * fcw[0:1, :], axis=-1, keepdims=True)
             + jnp.sum(p2 * fcw[1:2, :], axis=-1, keepdims=True)
             + fc_b_ref[...])                                                    # (B, 1)
    prob = 1.0 / (1.0 + jnp.exp(-logit))
    out_ref[...] = jnp.broadcast_to(prob, out_ref.shape)                         # lane-dense store


# ---------------- parameters (deterministic, synthetic) ----------------
def init_params(key):
    keys = iter(jax.random.split(key, 32))

    def nrm(shape, scale=0.02):
        return scale * jax.random.normal(next(keys), shape, dtype=jnp.float32)

    return {
        # conv patch-embed weight pre-flattened as (C*p*p, H), column order (c, ph, pw)
        "patch_w": nrm((CPP, HIDDEN)),
        "patch_b": jnp.zeros((1, HIDDEN), jnp.float32),
        "cls": nrm((1, HIDDEN)),
        "pos": nrm((SEQ, HIDDEN)),
        "ln1_g": jnp.ones((LAYERS, 1, HIDDEN), jnp.float32),
        "ln1_b": jnp.zeros((LAYERS, 1, HIDDEN), jnp.float32),
        "qkv_w": nrm((LAYERS, HIDDEN, 3 * HIDDEN)),     # [Wq | Wk | Wv]
        "qkv_b": jnp.zeros((LAYERS, 1, 3 * HIDDEN), jnp.float32),
        "o_w": nrm((LAYERS, HIDDEN, HIDDEN)),
        "o_b": jnp.zeros((LAYERS, 1, HIDDEN), jnp.float32),
        "ln2_g": jnp.ones((LAYERS, 1, HIDDEN), jnp.float32),
        "ln2_b": jnp.zeros((LAYERS, 1, HIDDEN), jnp.float32),
        "fc1_w": nrm((LAYERS, HIDDEN, MLP)),
        "fc1_b": jnp.zeros((LAYERS, 1, MLP), jnp.float32),
        "fc2_w": nrm((LAYERS, MLP, HIDDEN)),
        "fc2_b": jnp.zeros((LAYERS, 1, HIDDEN), jnp.float32),
        "lnf_g": jnp.ones((1, HIDDEN), jnp.float32),
        "lnf_b": jnp.zeros((1, HIDDEN), jnp.float32),
        "pool_w": nrm((HIDDEN, HIDDEN)),
        "pool_b": jnp.zeros((1, HIDDEN), jnp.float32),
        # fc: Linear(2H -> 1); row0 multiplies pooled(image1), row1 pooled(image2)
        "fc_w": nrm((2, HIDDEN)),
        "fc_b": jnp.zeros((1, 1), jnp.float32),
    }


# ---------------- JAX glue (layout plumbing) + single pallas_call ----------------
def _unfold_patches(imgs):
    """NCHW (N, C, IMG, IMG) -> (N, N_PATCH, C*P*P), feature order (c, ph, pw)."""
    n = imgs.shape[0]
    hp = IMG // PATCH
    x = imgs.reshape(n, CHANNELS, hp, PATCH, hp, PATCH)
    return x.transpose(0, 2, 4, 1, 3, 5).reshape(n, N_PATCH, CPP)


def progress_vit_forward(params, image1, image2):
    B = image1.shape[0]
    B2 = 2 * B
    R = B2 * SEQ

    imgs = jnp.concatenate([image1, image2], axis=0).astype(jnp.float32)   # (2B, C, IMG, IMG)
    x = _unfold_patches(imgs)                                              # (2B, NP, CPP)

    # Extended patch matrix: extra column is a CLS indicator; extra first row per
    # image is the CLS one-hot.  With w_ext = [patch_w ; cls - patch_b], the single
    # matmul + emb_bias reproduces [CLS ; patch_embed] + pos exactly.
    x = jnp.concatenate([x, jnp.zeros((B2, N_PATCH, 1), jnp.float32)], axis=-1)
    cls_row = jnp.zeros((1, 1, CPP + 1), jnp.float32).at[0, 0, CPP].set(1.0)
    cls_rows = jnp.broadcast_to(cls_row, (B2, 1, CPP + 1))
    x_ext = jnp.concatenate([cls_rows, x], axis=1).reshape(R, CPP + 1)

    w_ext = jnp.concatenate([params["patch_w"], params["cls"] - params["patch_b"]], axis=0)
    emb_bias = jnp.tile(params["pos"] + params["patch_b"], (B2, 1))        # (R, H)

    # block-diagonal additive attention mask: tokens only attend within their image
    img_id = jnp.repeat(jnp.arange(B2), SEQ)
    attn_mask = jnp.where(img_id[:, None] == img_id[None, :], 0.0, -1e9).astype(jnp.float32)

    # selector picking each image's CLS row (row b*SEQ) out of the token matrix
    cls_sel = jnp.zeros((B2, R), jnp.float32).at[jnp.arange(B2), jnp.arange(B2) * SEQ].set(1.0)

    ins = [
        x_ext, w_ext, emb_bias, attn_mask,
        params["ln1_g"], params["ln1_b"], params["qkv_w"], params["qkv_b"],
        params["o_w"], params["o_b"], params["ln2_g"], params["ln2_b"],
        params["fc1_w"], params["fc1_b"], params["fc2_w"], params["fc2_b"],
        cls_sel, params["lnf_g"], params["lnf_b"],
        params["pool_w"], params["pool_b"], params["fc_w"], params["fc_b"],
    ]

    out = pl.pallas_call(
        functools.partial(_progress_vit_kernel, batch=B),
        grid=(1,),
        in_specs=[_full_spec(a.shape) for a in ins],
        out_specs=_full_spec((B, OUT_LANES)),
        out_shape=jax.ShapeDtypeStruct((B, OUT_LANES), jnp.float32),
        compiler_params=_CPARAMS,
    )(*ins)
    return out[:, :1]                                                      # (B, 1)


# ---------------- pure-JAX reference (for correctness check) ----------------
def _reference_forward(params, image1, image2):
    def ln(x, g, b):
        mu = jnp.mean(x, axis=-1, keepdims=True)
        xc = x - mu
        var = jnp.mean(xc * xc, axis=-1, keepdims=True)
        return xc * jax.lax.rsqrt(var + LN_EPS) * g + b

    def gelu(x):
        c = math.sqrt(2.0 / math.pi)
        return 0.5 * x * (1.0 + jnp.tanh(c * (x + 0.044715 * x * x * x)))

    def encode(img):
        b = img.shape[0]
        tok = _unfold_patches(img.astype(jnp.float32)) @ params["patch_w"] + params["patch_b"]
        cls = jnp.broadcast_to(params["cls"][None], (b, 1, HIDDEN))
        h = jnp.concatenate([cls, tok], axis=1) + params["pos"][None]
        scale = 1.0 / math.sqrt(HEAD_DIM)
        for l in range(LAYERS):
            hn = ln(h, params["ln1_g"][l, 0], params["ln1_b"][l, 0])
            qkv = hn @ params["qkv_w"][l] + params["qkv_b"][l]
            q, k, v = jnp.split(qkv, 3, axis=-1)
            sh = lambda t: t.reshape(b, SEQ, HEADS, HEAD_DIM).transpose(0, 2, 1, 3)
            s = jnp.einsum("bhqd,bhkd->bhqk", sh(q), sh(k)) * scale
            p = jax.nn.softmax(s, axis=-1)
            ctx = jnp.einsum("bhqk,bhkd->bhqd", p, sh(v))
            ctx = ctx.transpose(0, 2, 1, 3).reshape(b, SEQ, HIDDEN)
            h = h + ctx @ params["o_w"][l] + params["o_b"][l]
            hn = ln(h, params["ln2_g"][l, 0], params["ln2_b"][l, 0])
            ff = gelu(hn @ params["fc1_w"][l] + params["fc1_b"][l])
            h = h + ff @ params["fc2_w"][l] + params["fc2_b"][l]
        h = ln(h, params["lnf_g"][0], params["lnf_b"][0])
        return jnp.tanh(h[:, 0, :] @ params["pool_w"] + params["pool_b"])

    cat = jnp.concatenate([encode(image1), encode(image2)], axis=-1)
    w = jnp.concatenate([params["fc_w"][0], params["fc_w"][1]], axis=0)[:, None]
    return jax.nn.sigmoid(cat @ w + params["fc_b"])


# ---------------- main ----------------
if __name__ == "__main__":
    jax.config.update("jax_default_matmul_precision", "highest")

    key = jax.random.PRNGKey(0)
    kp, k1, k2 = jax.random.split(key, 3)
    params = init_params(kp)

    image1 = jax.random.normal(k1, (2, CHANNELS, IMG, IMG), dtype=jnp.float32)
    image2 = jax.random.normal(k2, (2, CHANNELS, IMG, IMG), dtype=jnp.float32)

    fwd = jax.jit(functools.partial(progress_vit_forward, params))
    out = jax.block_until_ready(fwd(image1, image2))

    assert out.shape == (2, 1)
    assert bool(jnp.all(jnp.isfinite(out)))
    assert bool(jnp.all((out > 0.0) & (out < 1.0)))        # sigmoid range

    ref = _reference_forward(params, image1, image2)
    max_err = float(jnp.max(jnp.abs(out - ref)))
    assert max_err < 2e-3, f"mismatch vs JAX reference: {max_err}"
    assert np.allclose(np.asarray(out), np.asarray(ref), atol=2e-3)

    print("KERNEL_OK")
</pallas_src>

<mosaic_0001>
module attributes {stable_mosaic.version = 11 : i64} {
  func.func @_progress_vit_kernel(%arg0: i32, %arg1: memref<20x193xf32, #tpu.memory_space<vmem>>, %arg2: memref<193x32xf32, #tpu.memory_space<vmem>>, %arg3: memref<20x32xf32, #tpu.memory_space<vmem>>, %arg4: memref<20x20xf32, #tpu.memory_space<vmem>>, %arg5: memref<2x1x32xf32, #tpu.memory_space<vmem>>, %arg6: memref<2x1x32xf32, #tpu.memory_space<vmem>>, %arg7: memref<2x32x96xf32, #tpu.memory_space<vmem>>, %arg8: memref<2x1x96xf32, #tpu.memory_space<vmem>>, %arg9: memref<2x32x32xf32, #tpu.memory_space<vmem>>, %arg10: memref<2x1x32xf32, #tpu.memory_space<vmem>>, %arg11: memref<2x1x32xf32, #tpu.memory_space<vmem>>, %arg12: memref<2x1x32xf32, #tpu.memory_space<vmem>>, %arg13: memref<2x32x64xf32, #tpu.memory_space<vmem>>, %arg14: memref<2x1x64xf32, #tpu.memory_space<vmem>>, %arg15: memref<2x64x32xf32, #tpu.memory_space<vmem>>, %arg16: memref<2x1x32xf32, #tpu.memory_space<vmem>>, %arg17: memref<4x20xf32, #tpu.memory_space<vmem>>, %arg18: memref<1x32xf32, #tpu.memory_space<vmem>>, %arg19: memref<1x32xf32, #tpu.memory_space<vmem>>, %arg20: memref<32x32xf32, #tpu.memory_space<vmem>>, %arg21: memref<1x32xf32, #tpu.memory_space<vmem>>, %arg22: memref<2x32xf32, #tpu.memory_space<vmem>>, %arg23: memref<1x1xf32, #tpu.memory_space<vmem>>, %arg24: memref<2x128xf32, #tpu.memory_space<vmem>>) attributes {dimension_semantics = [#tpu.dimension_semantics<arbitrary>], iteration_bounds = array<i64: 1>, scalar_prefetch = 0 : i64, scratch_operands = 0 : i64, tpu.core_type = #tpu.core_type<tc>, window_params = [{pipeline_mode = #tpu.pipeline_mode<synchronous>, transform_indices = @transform_0, window_bounds = array<i64: 20, 193>}, {pipeline_mode = #tpu.pipeline_mode<synchronous>, transform_indices = @transform_1, window_bounds = array<i64: 193, 32>}, {pipeline_mode = #tpu.pipeline_mode<synchronous>, transform_indices = @transform_2, window_bounds = array<i64: 20, 32>}, {pipeline_mode = #tpu.pipeline_mode<synchronous>, transform_indices = @transform_3, window_bounds = array<i64: 20, 20>}, {pipeline_mode = #tpu.pipeline_mode<synchronous>, transform_indices = @transform_4, window_bounds = array<i64: 2, 1, 32>}, {pipeline_mode = #tpu.pipeline_mode<synchronous>, transform_indices = @transform_5, window_bounds = array<i64: 2, 1, 32>}, {pipeline_mode = #tpu.pipeline_mode<synchronous>, transform_indices = @transform_6, window_bounds = array<i64: 2, 32, 96>}, {pipeline_mode = #tpu.pipeline_mode<synchronous>, transform_indices = @transform_7, window_bounds = array<i64: 2, 1, 96>}, {pipeline_mode = #tpu.pipeline_mode<synchronous>, transform_indices = @transform_8, window_bounds = array<i64: 2, 32, 32>}, {pipeline_mode = #tpu.pipeline_mode<synchronous>, transform_indices = @transform_9, window_bounds = array<i64: 2, 1, 32>}, {pipeline_mode = #tpu.pipeline_mode<synchronous>, transform_indices = @transform_10, window_bounds = array<i64: 2, 1, 32>}, {pipeline_mode = #tpu.pipeline_mode<synchronous>, transform_indices = @transform_11, window_bounds = array<i64: 2, 1, 32>}, {pipeline_mode = #tpu.pipeline_mode<synchronous>, transform_indices = @transform_12, window_bounds = array<i64: 2, 32, 64>}, {pipeline_mode = #tpu.pipeline_mode<synchronous>, transform_indices = @transform_13, window_bounds = array<i64: 2, 1, 64>}, {pipeline_mode = #tpu.pipeline_mode<synchronous>, transform_indices = @transform_14, window_bounds = array<i64: 2, 64, 32>}, {pipeline_mode = #tpu.pipeline_mode<synchronous>, transform_indices = @transform_15, window_bounds = array<i64: 2, 1, 32>}, {pipeline_mode = #tpu.pipeline_mode<synchronous>, transform_indices = @transform_16, window_bounds = array<i64: 4, 20>}, {pipeline_mode = #tpu.pipeline_mode<synchronous>, transform_indices = @transform_17, window_bounds = array<i64: 1, 32>}, {pipeline_mode = #tpu.pipeline_mode<synchronous>, transform_indices = @transform_18, window_bounds = array<i64: 1, 32>}, {pipeline_mode = #tpu.pipeline_mode<synchronous>, transform_indices = @transform_19, window_bounds = array<i64: 32, 32>}, {pipeline_mode = #tpu.pipeline_mode<synchronous>, transform_indices = @transform_20, window_bounds = array<i64: 1, 32>}, {pipeline_mode = #tpu.pipeline_mode<synchronous>, transform_indices = @transform_21, window_bounds = array<i64: 2, 32>}, {pipeline_mode = #tpu.pipeline_mode<synchronous>, transform_indices = @transform_22, window_bounds = array<i64: 1, 1>}, {pipeline_mode = #tpu.pipeline_mode<synchronous>, transform_indices = @transform_23, window_bounds = array<i64: 2, 128>}]} {
    %c0 = arith.constant 0 : index
    %c0_0 = arith.constant 0 : index
    %0 = vector.load %arg4[%c0, %c0_0] : memref<20x20xf32, #tpu.memory_space<vmem>>, vector<20x20xf32>
    %c0_1 = arith.constant 0 : index
    %c0_2 = arith.constant 0 : index
    %1 = vector.load %arg1[%c0_1, %c0_2] : memref<20x193xf32, #tpu.memory_space<vmem>>, vector<20x193xf32>
    %c0_3 = arith.constant 0 : index
    %c0_4 = arith.constant 0 : index
    %2 = vector.load %arg2[%c0_3, %c0_4] : memref<193x32xf32, #tpu.memory_space<vmem>>, vector<193x32xf32>
    %cst = arith.constant dense<0.000000e+00> : vector<20x32xf32>
    %3 = tpu.matmul %1, %2, %cst {dimension_numbers = #tpu.dot_dimension_numbers<[1], [0], [0], [1], [0, 0, 1, 1], [], []>, precision = #tpu.contract_precision<fp32>} : vector<20x193xf32>, vector<193x32xf32>, vector<20x32xf32> -> vector<20x32xf32>
    %c0_5 = arith.constant 0 : index
    %c0_6 = arith.constant 0 : index
    %4 = vector.load %arg3[%c0_5, %c0_6] : memref<20x32xf32, #tpu.memory_space<vmem>>, vector<20x32xf32>
    %5 = arith.addf %3, %4 : vector<20x32xf32>
    %c0_7 = arith.constant 0 : index
    %c0_8 = arith.constant 0 : index
    %c0_9 = arith.constant 0 : index
    %6 = vector.load %arg5[%c0_7, %c0_8, %c0_9] : memref<2x1x32xf32, #tpu.memory_space<vmem>>, vector<1x1x32xf32>
    %7 = vector.shape_cast %6 : vector<1x1x32xf32> to vector<1x32xf32>
    %c0_10 = arith.constant 0 : index
    %c0_11 = arith.constant 0 : index
    %c0_12 = arith.constant 0 : index
    %8 = vector.load %arg6[%c0_10, %c0_11, %c0_12] : memref<2x1x32xf32, #tpu.memory_space<vmem>>, vector<1x1x32xf32>
    %9 = vector.shape_cast %8 : vector<1x1x32xf32> to vector<1x32xf32>
    %cst_13 = arith.constant dense<0.000000e+00> : vector<20xf32>
    %10 = vector.multi_reduction <add>, %5, %cst_13 [1] : vector<20x32xf32> to vector<20xf32>
    %11 = vector.shape_cast %10 : vector<20xf32> to vector<20x1xf32>
    %cst_14 = arith.constant 3.200000e+01 : f32
    %12 = vector.broadcast %cst_14 : f32 to vector<20x1xf32>
    %13 = arith.divf %11, %12 : vector<20x1xf32>
    %14 = vector.broadcast %13 : vector<20x1xf32> to vector<20x32xf32>
    %15 = arith.subf %5, %14 : vector<20x32xf32>
    %16 = arith.mulf %15, %15 : vector<20x32xf32>
    %cst_15 = arith.constant dense<0.000000e+00> : vector<20xf32>
    %17 = vector.multi_reduction <add>, %16, %cst_15 [1] : vector<20x32xf32> to vector<20xf32>
    %18 = vector.shape_cast %17 : vector<20xf32> to vector<20x1xf32>
    %cst_16 = arith.constant 3.200000e+01 : f32
    %19 = vector.broadcast %cst_16 : f32 to vector<20x1xf32>
    %20 = arith.divf %18, %19 : vector<20x1xf32>
    %cst_17 = arith.constant 9.99999996E-13 : f32
    %21 = vector.broadcast %cst_17 : f32 to vector<20x1xf32>
    %22 = arith.addf %20, %21 : vector<20x1xf32>
    %23 = math.rsqrt %22 : vector<20x1xf32>
    %24 = vector.broadcast %23 : vector<20x1xf32> to vector<20x32xf32>
    %25 = arith.mulf %15, %24 : vector<20x32xf32>
    %26 = vector.broadcast %7 : vector<1x32xf32> to vector<20x32xf32>
    %27 = arith.mulf %25, %26 : vector<20x32xf32>
    %28 = vector.broadcast %9 : vector<1x32xf32> to vector<20x32xf32>
    %29 = arith.addf %27, %28 : vector<20x32xf32>
    %c0_18 = arith.constant 0 : index
    %c0_19 = arith.constant 0 : index
    %c0_20 = arith.constant 0 : index
    %30 = vector.load %arg7[%c0_18, %c0_19, %c0_20] : memref<2x32x96xf32, #tpu.memory_space<vmem>>, vector<1x32x96xf32>
    %31 = vector.shape_cast %30 : vector<1x32x96xf32> to vector<32x96xf32>
    %cst_21 = arith.constant dense<0.000000e+00> : vector<20x96xf32>
    %32 = tpu.matmul %29, %31, %cst_21 {dimension_numbers = #tpu.dot_dimension_numbers<[1], [0], [0], [1], [0, 0, 1, 1], [], []>, precision = #tpu.contract_precision<fp32>} : vector<20x32xf32>, vector<32x96xf32>, vector<20x96xf32> -> vector<20x96xf32>
    %c0_22 = arith.constant 0 : index
    %c0_23 = arith.constant 0 : index
    %c0_24 = arith.constant 0 : index
    %33 = vector.load %arg8[%c0_22, %c0_23, %c0_24] : memref<2x1x96xf32, #tpu.memory_space<vmem>>, vector<1x1x96xf32>
    %34 = vector.shape_cast %33 : vector<1x1x96xf32> to vector<1x96xf32>
    %35 = vector.broadcast %34 : vector<1x96xf32> to vector<20x96xf32>
    %36 = arith.addf %32, %35 : vector<20x96xf32>
    %c0_25 = arith.constant 0 : index
    %c0_26 = arith.constant 0 : index
    %c0_27 = arith.constant 0 : index
    %37 = vector.load %arg9[%c0_25, %c0_26, %c0_27] : memref<2x32x32xf32, #tpu.memory_space<vmem>>, vector<1x32x32xf32>
    %38 = vector.shape_cast %37 : vector<1x32x32xf32> to vector<32x32xf32>
    %39 = vector.extract_strided_slice %36 {offsets = [0, 0], sizes = [20, 8], strides = [1, 1]} : vector<20x96xf32> to vector<20x8xf32>
    %40 = vector.extract_strided_slice %36 {offsets = [0, 32], sizes = [20, 8], strides = [1, 1]} : vector<20x96xf32> to vector<20x8xf32>
    %41 = vector.extract_strided_slice %36 {offsets = [0, 64], sizes = [20, 8], strides = [1, 1]} : vector<20x96xf32> to vector<20x8xf32>
    %cst_28 = arith.constant dense<0.000000e+00> : vector<20x20xf32>
    %42 = tpu.matmul %39, %40, %cst_28 {dimension_numbers = #tpu.dot_dimension_numbers<[1], [1], [0], [0], [0, 0, 1, 0], [], []>, precision = #tpu.contract_precision<fp32>} : vector<20x8xf32>, vector<20x8xf32>, vector<20x20xf32> -> vector<20x20xf32>
    %cst_29 = arith.constant 0.353553385 : f32
    %43 = vector.broadcast %cst_29 : f32 to vector<20x20xf32>
    %44 = arith.mulf %42, %43 : vector<20x20xf32>
    %45 = arith.addf %44, %0 : vector<20x20xf32>
    %cst_30 = arith.constant dense<0xFF800000> : vector<20xf32>
    %46 = vector.multi_reduction <maximumf>, %45, %cst_30 [1] : vector<20x20xf32> to vector<20xf32>
    %47 = vector.shape_cast %46 : vector<20xf32> to vector<20x1xf32>
    %48 = vector.broadcast %47 : vector<20x1xf32> to vector<20x20xf32>
    %49 = arith.subf %45, %48 : vector<20x20xf32>
    %50 = math.exp %49 : vector<20x20xf32>
    %cst_31 = arith.constant dense<0.000000e+00> : vector<20xf32>
    %51 = vector.multi_reduction <add>, %50, %cst_31 [1] : vector<20x20xf32> to vector<20xf32>
    %52 = vector.shape_cast %51 : vector<20xf32> to vector<20x1xf32>
    %53 = tpu.reciprocal %52 {approx = true} : vector<20x1xf32> -> vector<20x1xf32>
    %54 = vector.broadcast %53 : vector<20x1xf32> to vector<20x20xf32>
    %55 = arith.mulf %50, %54 : vector<20x20xf32>
    %cst_32 = arith.constant dense<0.000000e+00> : vector<20x8xf32>
    %56 = tpu.matmul %55, %41, %cst_32 {dimension_numbers = #tpu.dot_dimension_numbers<[1], [0], [0], [1], [0, 0, 1, 1], [], []>, precision = #tpu.contract_precision<fp32>} : vector<20x20xf32>, vector<20x8xf32>, vector<20x8xf32> -> vector<20x8xf32>
    %57 = vector.extract_strided_slice %38 {offsets = [0, 0], sizes = [8, 32], strides = [1, 1]} : vector<32x32xf32> to vector<8x32xf32>
    %cst_33 = arith.constant dense<0.000000e+00> : vector<20x32xf32>
    %58 = tpu.matmul %56, %57, %cst_33 {dimension_numbers = #tpu.dot_dimension_numbers<[1], [0], [0], [1], [0, 0, 1, 1], [], []>, precision = #tpu.contract_precision<fp32>} : vector<20x8xf32>, vector<8x32xf32>, vector<20x32xf32> -> vector<20x32xf32>
    %59 = vector.extract_strided_slice %36 {offsets = [0, 8], sizes = [20, 8], strides = [1, 1]} : vector<20x96xf32> to vector<20x8xf32>
    %60 = vector.extract_strided_slice %36 {offsets = [0, 40], sizes = [20, 8], strides = [1, 1]} : vector<20x96xf32> to vector<20x8xf32>
    %61 = vector.extract_strided_slice %36 {offsets = [0, 72], sizes = [20, 8], strides = [1, 1]} : vector<20x96xf32> to vector<20x8xf32>
    %cst_34 = arith.constant dense<0.000000e+00> : vector<20x20xf32>
    %62 = tpu.matmul %59, %60, %cst_34 {dimension_numbers = #tpu.dot_dimension_numbers<[1], [1], [0], [0], [0, 0, 1, 0], [], []>, precision = #tpu.contract_precision<fp32>} : vector<20x8xf32>, vector<20x8xf32>, vector<20x20xf32> -> vector<20x20xf32>
    %cst_35 = arith.constant 0.353553385 : f32
    %63 = vector.broadcast %cst_35 : f32 to vector<20x20xf32>
    %64 = arith.mulf %62, %63 : vector<20x20xf32>
    %65 = arith.addf %64, %0 : vector<20x20xf32>
    %cst_36 = arith.constant dense<0xFF800000> : vector<20xf32>
    %66 = vector.multi_reduction <maximumf>, %65, %cst_36 [1] : vector<20x20xf32> to vector<20xf32>
    %67 = vector.shape_cast %66 : vector<20xf32> to vector<20x1xf32>
    %68 = vector.broadcast %67 : vector<20x1xf32> to vector<20x20xf32>
    %69 = arith.subf %65, %68 : vector<20x20xf32>
    %70 = math.exp %69 : vector<20x20xf32>
    %cst_37 = arith.constant dense<0.000000e+00> : vector<20xf32>
    %71 = vector.multi_reduction <add>, %70, %cst_37 [1] : vector<20x20xf32> to vector<20xf32>
    %72 = vector.shape_cast %71 : vector<20xf32> to vector<20x1xf32>
    %73 = tpu.reciprocal %72 {approx = true} : vector<20x1xf32> -> vector<20x1xf32>
    %74 = vector.broadcast %73 : vector<20x1xf32> to vector<20x20xf32>
    %75 = arith.mulf %70, %74 : vector<20x20xf32>
    %cst_38 = arith.constant dense<0.000000e+00> : vector<20x8xf32>
    %76 = tpu.matmul %75, %61, %cst_38 {dimension_numbers = #tpu.dot_dimension_numbers<[1], [0], [0], [1], [0, 0, 1, 1], [], []>, precision = #tpu.contract_precision<fp32>} : vector<20x20xf32>, vector<20x8xf32>, vector<20x8xf32> -> vector<20x8xf32>
    %77 = vector.extract_strided_slice %38 {offsets = [8, 0], sizes = [8, 32], strides = [1, 1]} : vector<32x32xf32> to vector<8x32xf32>
    %cst_39 = arith.constant dense<0.000000e+00> : vector<20x32xf32>
    %78 = tpu.matmul %76, %77, %cst_39 {dimension_numbers = #tpu.dot_dimension_numbers<[1], [0], [0], [1], [0, 0, 1, 1], [], []>, precision = #tpu.contract_precision<fp32>} : vector<20x8xf32>, vector<8x32xf32>, vector<20x32xf32> -> vector<20x32xf32>
    %79 = arith.addf %58, %78 : vector<20x32xf32>
    %80 = vector.extract_strided_slice %36 {offsets = [0, 16], sizes = [20, 8], strides = [1, 1]} : vector<20x96xf32> to vector<20x8xf32>
    %81 = vector.extract_strided_slice %36 {offsets = [0, 48], sizes = [20, 8], strides = [1, 1]} : vector<20x96xf32> to vector<20x8xf32>
    %82 = vector.extract_strided_slice %36 {offsets = [0, 80], sizes = [20, 8], strides = [1, 1]} : vector<20x96xf32> to vector<20x8xf32>
    %cst_40 = arith.constant dense<0.000000e+00> : vector<20x20xf32>
    %83 = tpu.matmul %80, %81, %cst_40 {dimension_numbers = #tpu.dot_dimension_numbers<[1], [1], [0], [0], [0, 0, 1, 0], [], []>, precision = #tpu.contract_precision<fp32>} : vector<20x8xf32>, vector<20x8xf32>, vector<20x20xf32> -> vector<20x20xf32>
    %cst_41 = arith.constant 0.353553385 : f32
    %84 = vector.broadcast %cst_41 : f32 to vector<20x20xf32>
    %85 = arith.mulf %83, %84 : vector<20x20xf32>
    %86 = arith.addf %85, %0 : vector<20x20xf32>
    %cst_42 = arith.constant dense<0xFF800000> : vector<20xf32>
    %87 = vector.multi_reduction <maximumf>, %86, %cst_42 [1] : vector<20x20xf32> to vector<20xf32>
    %88 = vector.shape_cast %87 : vector<20xf32> to vector<20x1xf32>
    %89 = vector.broadcast %88 : vector<20x1xf32> to vector<20x20xf32>
    %90 = arith.subf %86, %89 : vector<20x20xf32>
    %91 = math.exp %90 : vector<20x20xf32>
    %cst_43 = arith.constant dense<0.000000e+00> : vector<20xf32>
    %92 = vector.multi_reduction <add>, %91, %cst_43 [1] : vector<20x20xf32> to vector<20xf32>
    %93 = vector.shape_cast %92 : vector<20xf32> to vector<20x1xf32>
    %94 = tpu.reciprocal %93 {approx = true} : vector<20x1xf32> -> vector<20x1xf32>
    %95 = vector.broadcast %94 : vector<20x1xf32> to vector<20x20xf32>
    %96 = arith.mulf %91, %95 : vector<20x20xf32>
    %cst_44 = arith.constant dense<0.000000e+00> : vector<20x8xf32>
    %97 = tpu.matmul %96, %82, %cst_44 {dimension_numbers = #tpu.dot_dimension_numbers<[1], [0], [0], [1], [0, 0, 1, 1], [], []>, precision = #tpu.contract_precision<fp32>} : vector<20x20xf32>, vector<20x8xf32>, vector<20x8xf32> -> vector<20x8xf32>
    %98 = vector.extract_strided_slice %38 {offsets = [16, 0], sizes = [8, 32], strides = [1, 1]} : vector<32x32xf32> to vector<8x32xf32>
    %cst_45 = arith.constant dense<0.000000e+00> : vector<20x32xf32>
    %99 = tpu.matmul %97, %98, %cst_45 {dimension_numbers = #tpu.dot_dimension_numbers<[1], [0], [0], [1], [0, 0, 1, 1], [], []>, precision = #tpu.contract_precision<fp32>} : vector<20x8xf32>, vector<8x32xf32>, vector<20x32xf32> -> vector<20x32xf32>
    %100 = arith.addf %79, %99 : vector<20x32xf32>
    %101 = vector.extract_strided_slice %36 {offsets = [0, 24], sizes = [20, 8], strides = [1, 1]} : vector<20x96xf32> to vector<20x8xf32>
    %102 = vector.extract_strided_slice %36 {offsets = [0, 56], sizes = [20, 8], strides = [1, 1]} : vector<20x96xf32> to vector<20x8xf32>
    %103 = vector.extract_strided_slice %36 {offsets = [0, 88], sizes = [20, 8], strides = [1, 1]} : vector<20x96xf32> to vector<20x8xf32>
    %cst_46 = arith.constant dense<0.000000e+00> : vector<20x20xf32>
    %104 = tpu.matmul %101, %102, %cst_46 {dimension_numbers = #tpu.dot_dimension_numbers<[1], [1], [0], [0], [0, 0, 1, 0], [], []>, precision = #tpu.contract_precision<fp32>} : vector<20x8xf32>, vector<20x8xf32>, vector<20x20xf32> -> vector<20x20xf32>
    %cst_47 = arith.constant 0.353553385 : f32
    %105 = vector.broadcast %cst_47 : f32 to vector<20x20xf32>
    %106 = arith.mulf %104, %105 : vector<20x20xf32>
    %107 = arith.addf %106, %0 : vector<20x20xf32>
    %cst_48 = arith.constant dense<0xFF800000> : vector<20xf32>
    %108 = vector.multi_reduction <maximumf>, %107, %cst_48 [1] : vector<20x20xf32> to vector<20xf32>
    %109 = vector.shape_cast %108 : vector<20xf32> to vector<20x1xf32>
    %110 = vector.broadcast %109 : vector<20x1xf32> to vector<20x20xf32>
    %111 = arith.subf %107, %110 : vector<20x20xf32>
    %112 = math.exp %111 : vector<20x20xf32>
    %cst_49 = arith.constant dense<0.000000e+00> : vector<20xf32>
    %113 = vector.multi_reduction <add>, %112, %cst_49 [1] : vector<20x20xf32> to vector<20xf32>
    %114 = vector.shape_cast %113 : vector<20xf32> to vector<20x1xf32>
    %115 = tpu.reciprocal %114 {approx = true} : vector<20x1xf32> -> vector<20x1xf32>
    %116 = vector.broadcast %115 : vector<20x1xf32> to vector<20x20xf32>
    %117 = arith.mulf %112, %116 : vector<20x20xf32>
    %cst_50 = arith.constant dense<0.000000e+00> : vector<20x8xf32>
    %118 = tpu.matmul %117, %103, %cst_50 {dimension_numbers = #tpu.dot_dimension_numbers<[1], [0], [0], [1], [0, 0, 1, 1], [], []>, precision = #tpu.contract_precision<fp32>} : vector<20x20xf32>, vector<20x8xf32>, vector<20x8xf32> -> vector<20x8xf32>
    %119 = vector.extract_strided_slice %38 {offsets = [24, 0], sizes = [8, 32], strides = [1, 1]} : vector<32x32xf32> to vector<8x32xf32>
    %cst_51 = arith.constant dense<0.000000e+00> : vector<20x32xf32>
    %120 = tpu.matmul %118, %119, %cst_51 {dimension_numbers = #tpu.dot_dimension_numbers<[1], [0], [0], [1], [0, 0, 1, 1], [], []>, precision = #tpu.contract_precision<fp32>} : vector<20x8xf32>, vector<8x32xf32>, vector<20x32xf32> -> vector<20x32xf32>
    %121 = arith.addf %100, %120 : vector<20x32xf32>
    %122 = arith.addf %5, %121 : vector<20x32xf32>
    %c0_52 = arith.constant 0 : index
    %c0_53 = arith.constant 0 : index
    %c0_54 = arith.constant 0 : index
    %123 = vector.load %arg10[%c0_52, %c0_53, %c0_54] : memref<2x1x32xf32, #tpu.memory_space<vmem>>, vector<1x1x32xf32>
    %124 = vector.shape_cast %123 : vector<1x1x32xf32> to vector<1x32xf32>
    %125 = vector.broadcast %124 : vector<1x32xf32> to vector<20x32xf32>
    %126 = arith.addf %122, %125 : vector<20x32xf32>
    %c0_55 = arith.constant 0 : index
    %c0_56 = arith.constant 0 : index
    %c0_57 = arith.constant 0 : index
    %127 = vector.load %arg11[%c0_55, %c0_56, %c0_57] : memref<2x1x32xf32, #tpu.memory_space<vmem>>, vector<1x1x32xf32>
    %128 = vector.shape_cast %127 : vector<1x1x32xf32> to vector<1x32xf32>
    %c0_58 = arith.constant 0 : index
    %c0_59 = arith.constant 0 : index
    %c0_60 = arith.constant 0 : index
    %129 = vector.load %arg12[%c0_58, %c0_59, %c0_60] : memref<2x1x32xf32, #tpu.memory_space<vmem>>, vector<1x1x32xf32>
    %130 = vector.shape_cast %129 : vector<1x1x32xf32> to vector<1x32xf32>
    %cst_61 = arith.constant dense<0.000000e+00> : vector<20xf32>
    %131 = vector.multi_reduction <add>, %126, %cst_61 [1] : vector<20x32xf32> to vector<20xf32>
    %132 = vector.shape_cast %131 : vector<20xf32> to vector<20x1xf32>
    %cst_62 = arith.constant 3.200000e+01 : f32
    %133 = vector.broadcast %cst_62 : f32 to vector<20x1xf32>
    %134 = arith.divf %132, %133 : vector<20x1xf32>
    %135 = vector.broadcast %134 : vector<20x1xf32> to vector<20x32xf32>
    %136 = arith.subf %126, %135 : vector<20x32xf32>
    %137 = arith.mulf %136, %136 : vector<20x32xf32>
    %cst_63 = arith.constant dense<0.000000e+00> : vector<20xf32>
    %138 = vector.multi_reduction <add>, %137, %cst_63 [1] : vector<20x32xf32> to vector<20xf32>
    %139 = vector.shape_cast %138 : vector<20xf32> to vector<20x1xf32>
    %cst_64 = arith.constant 3.200000e+01 : f32
    %140 = vector.broadcast %cst_64 : f32 to vector<20x1xf32>
    %141 = arith.divf %139, %140 : vector<20x1xf32>
    %cst_65 = arith.constant 9.99999996E-13 : f32
    %142 = vector.broadcast %cst_65 : f32 to vector<20x1xf32>
    %143 = arith.addf %141, %142 : vector<20x1xf32>
    %144 = math.rsqrt %143 : vector<20x1xf32>
    %145 = vector.broadcast %144 : vector<20x1xf32> to vector<20x32xf32>
    %146 = arith.mulf %136, %145 : vector<20x32xf32>
    %147 = vector.broadcast %128 : vector<1x32xf32> to vector<20x32xf32>
    %148 = arith.mulf %146, %147 : vector<20x32xf32>
    %149 = vector.broadcast %130 : vector<1x32xf32> to vector<20x32xf32>
    %150 = arith.addf %148, %149 : vector<20x32xf32>
    %c0_66 = arith.constant 0 : index
    %c0_67 = arith.constant 0 : index
    %c0_68 = arith.constant 0 : index
    %151 = vector.load %arg13[%c0_66, %c0_67, %c0_68] : memref<2x32x64xf32, #tpu.memory_space<vmem>>, vector<1x32x64xf32>
    %152 = vector.shape_cast %151 : vector<1x32x64xf32> to vector<32x64xf32>
    %cst_69 = arith.constant dense<0.000000e+00> : vector<20x64xf32>
    %153 = tpu.matmul %150, %152, %cst_69 {dimension_numbers = #tpu.dot_dimension_numbers<[1], [0], [0], [1], [0, 0, 1, 1], [], []>, precision = #tpu.contract_precision<fp32>} : vector<20x32xf32>, vector<32x64xf32>, vector<20x64xf32> -> vector<20x64xf32>
    %c0_70 = arith.constant 0 : index
    %c0_71 = arith.constant 0 : index
    %c0_72 = arith.constant 0 : index
    %154 = vector.load %arg14[%c0_70, %c0_71, %c0_72] : memref<2x1x64xf32, #tpu.memory_space<vmem>>, vector<1x1x64xf32>
    %155 = vector.shape_cast %154 : vector<1x1x64xf32> to vector<1x64xf32>
    %156 = vector.broadcast %155 : vector<1x64xf32> to vector<20x64xf32>
    %157 = arith.addf %153, %156 : vector<20x64xf32>
    %cst_73 = arith.constant 5.000000e-01 : f32
    %158 = vector.broadcast %cst_73 : f32 to vector<20x64xf32>
    %159 = arith.mulf %158, %157 : vector<20x64xf32>
    %cst_74 = arith.constant 4.471500e-02 : f32
    %160 = vector.broadcast %cst_74 : f32 to vector<20x64xf32>
    %161 = arith.mulf %160, %157 : vector<20x64xf32>
    %162 = arith.mulf %161, %157 : vector<20x64xf32>
    %163 = arith.mulf %162, %157 : vector<20x64xf32>
    %164 = arith.addf %157, %163 : vector<20x64xf32>
    %cst_75 = arith.constant 0.797884583 : f32
    %165 = vector.broadcast %cst_75 : f32 to vector<20x64xf32>
    %166 = arith.mulf %165, %164 : vector<20x64xf32>
    %167 = math.tanh %166 : vector<20x64xf32>
    %cst_76 = arith.constant 1.000000e+00 : f32
    %168 = vector.broadcast %cst_76 : f32 to vector<20x64xf32>
    %169 = arith.addf %168, %167 : vector<20x64xf32>
    %170 = arith.mulf %159, %169 : vector<20x64xf32>
    %c0_77 = arith.constant 0 : index
    %c0_78 = arith.constant 0 : index
    %c0_79 = arith.constant 0 : index
    %171 = vector.load %arg15[%c0_77, %c0_78, %c0_79] : memref<2x64x32xf32, #tpu.memory_space<vmem>>, vector<1x64x32xf32>
    %172 = vector.shape_cast %171 : vector<1x64x32xf32> to vector<64x32xf32>
    %cst_80 = arith.constant dense<0.000000e+00> : vector<20x32xf32>
    %173 = tpu.matmul %170, %172, %cst_80 {dimension_numbers = #tpu.dot_dimension_numbers<[1], [0], [0], [1], [0, 0, 1, 1], [], []>, precision = #tpu.contract_precision<fp32>} : vector<20x64xf32>, vector<64x32xf32>, vector<20x32xf32> -> vector<20x32xf32>
    %174 = arith.addf %126, %173 : vector<20x32xf32>
    %c0_81 = arith.constant 0 : index
    %c0_82 = arith.constant 0 : index
    %c0_83 = arith.constant 0 : index
    %175 = vector.load %arg16[%c0_81, %c0_82, %c0_83] : memref<2x1x32xf32, #tpu.memory_space<vmem>>, vector<1x1x32xf32>
    %176 = vector.shape_cast %175 : vector<1x1x32xf32> to vector<1x32xf32>
    %177 = vector.broadcast %176 : vector<1x32xf32> to vector<20x32xf32>
    %178 = arith.addf %174, %177 : vector<20x32xf32>
    %c1 = arith.constant 1 : index
    %c0_84 = arith.constant 0 : index
    %c0_85 = arith.constant 0 : index
    %179 = vector.load %arg5[%c1, %c0_84, %c0_85] : memref<2x1x32xf32, #tpu.memory_space<vmem>>, vector<1x1x32xf32>
    %180 = vector.shape_cast %179 : vector<1x1x32xf32> to vector<1x32xf32>
    %c1_86 = arith.constant 1 : index
    %c0_87 = arith.constant 0 : index
    %c0_88 = arith.constant 0 : index
    %181 = vector.load %arg6[%c1_86, %c0_87, %c0_88] : memref<2x1x32xf32, #tpu.memory_space<vmem>>, vector<1x1x32xf32>
    %182 = vector.shape_cast %181 : vector<1x1x32xf32> to vector<1x32xf32>
    %cst_89 = arith.constant dense<0.000000e+00> : vector<20xf32>
    %183 = vector.multi_reduction <add>, %178, %cst_89 [1] : vector<20x32xf32> to vector<20xf32>
    %184 = vector.shape_cast %183 : vector<20xf32> to vector<20x1xf32>
    %cst_90 = arith.constant 3.200000e+01 : f32
    %185 = vector.broadcast %cst_90 : f32 to vector<20x1xf32>
    %186 = arith.divf %184, %185 : vector<20x1xf32>
    %187 = vector.broadcast %186 : vector<20x1xf32> to vector<20x32xf32>
    %188 = arith.subf %178, %187 : vector<20x32xf32>
    %189 = arith.mulf %188, %188 : vector<20x32xf32>
    %cst_91 = arith.constant dense<0.000000e+00> : vector<20xf32>
    %190 = vector.multi_reduction <add>, %189, %cst_91 [1] : vector<20x32xf32> to vector<20xf32>
    %191 = vector.shape_cast %190 : vector<20xf32> to vector<20x1xf32>
    %cst_92 = arith.constant 3.200000e+01 : f32
    %192 = vector.broadcast %cst_92 : f32 to vector<20x1xf32>
    %193 = arith.divf %191, %192 : vector<20x1xf32>
    %cst_93 = arith.constant 9.99999996E-13 : f32
    %194 = vector.broadcast %cst_93 : f32 to vector<20x1xf32>
    %195 = arith.addf %193, %194 : vector<20x1xf32>
    %196 = math.rsqrt %195 : vector<20x1xf32>
    %197 = vector.broadcast %196 : vector<20x1xf32> to vector<20x32xf32>
    %198 = arith.mulf %188, %197 : vector<20x32xf32>
    %199 = vector.broadcast %180 : vector<1x32xf32> to vector<20x32xf32>
    %200 = arith.mulf %198, %199 : vector<20x32xf32>
    %201 = vector.broadcast %182 : vector<1x32xf32> to vector<20x32xf32>
    %202 = arith.addf %200, %201 : vector<20x32xf32>
    %c1_94 = arith.constant 1 : index
    %c0_95 = arith.constant 0 : index
    %c0_96 = arith.constant 0 : index
    %203 = vector.load %arg7[%c1_94, %c0_95, %c0_96] : memref<2x32x96xf32, #tpu.memory_space<vmem>>, vector<1x32x96xf32>
    %204 = vector.shape_cast %203 : vector<1x32x96xf32> to vector<32x96xf32>
    %cst_97 = arith.constant dense<0.000000e+00> : vector<20x96xf32>
    %205 = tpu.matmul %202, %204, %cst_97 {dimension_numbers = #tpu.dot_dimension_numbers<[1], [0], [0], [1], [0, 0, 1, 1], [], []>, precision = #tpu.contract_precision<fp32>} : vector<20x32xf32>, vector<32x96xf32>, vector<20x96xf32> -> vector<20x96xf32>
    %c1_98 = arith.constant 1 : index
    %c0_99 = arith.constant 0 : index
    %c0_100 = arith.constant 0 : index
    %206 = vector.load %arg8[%c1_98, %c0_99, %c0_100] : memref<2x1x96xf32, #tpu.memory_space<vmem>>, vector<1x1x96xf32>
    %207 = vector.shape_cast %206 : vector<1x1x96xf32> to vector<1x96xf32>
    %208 = vector.broadcast %207 : vector<1x96xf32> to vector<20x96xf32>
    %209 = arith.addf %205, %208 : vector<20x96xf32>
    %c1_101 = arith.constant 1 : index
    %c0_102 = arith.constant 0 : index
    %c0_103 = arith.constant 0 : index
    %210 = vector.load %arg9[%c1_101, %c0_102, %c0_103] : memref<2x32x32xf32, #tpu.memory_space<vmem>>, vector<1x32x32xf32>
    %211 = vector.shape_cast %210 : vector<1x32x32xf32> to vector<32x32xf32>
    %212 = vector.extract_strided_slice %209 {offsets = [0, 0], sizes = [20, 8], strides = [1, 1]} : vector<20x96xf32> to vector<20x8xf32>
    %213 = vector.extract_strided_slice %209 {offsets = [0, 32], sizes = [20, 8], strides = [1, 1]} : vector<20x96xf32> to vector<20x8xf32>
    %214 = vector.extract_strided_slice %209 {offsets = [0, 64], sizes = [20, 8], strides = [1, 1]} : vector<20x96xf32> to vector<20x8xf32>
    %cst_104 = arith.constant dense<0.000000e+00> : vector<20x20xf32>
    %215 = tpu.matmul %212, %213, %cst_104 {dimension_numbers = #tpu.dot_dimension_numbers<[1], [1], [0], [0], [0, 0, 1, 0], [], []>, precision = #tpu.contract_precision<fp32>} : vector<20x8xf32>, vector<20x8xf32>, vector<20x20xf32> -> vector<20x20xf32>
    %cst_105 = arith.constant 0.353553385 : f32
    %216 = vector.broadcast %cst_105 : f32 to vector<20x20xf32>
    %217 = arith.mulf %215, %216 : vector<20x20xf32>
    %218 = arith.addf %217, %0 : vector<20x20xf32>
    %cst_106 = arith.constant dense<0xFF800000> : vector<20xf32>
    %219 = vector.multi_reduction <maximumf>, %218, %cst_106 [1] : vector<20x20xf32> to vector<20xf32>
    %220 = vector.shape_cast %219 : vector<20xf32> to vector<20x1xf32>
    %221 = vector.broadcast %220 : vector<20x1xf32> to vector<20x20xf32>
    %222 = arith.subf %218, %221 : vector<20x20xf32>
    %223 = math.exp %222 : vector<20x20xf32>
    %cst_107 = arith.constant dense<0.000000e+00> : vector<20xf32>
    %224 = vector.multi_reduction <add>, %223, %cst_107 [1] : vector<20x20xf32> to vector<20xf32>
    %225 = vector.shape_cast %224 : vector<20xf32> to vector<20x1xf32>
    %226 = tpu.reciprocal %225 {approx = true} : vector<20x1xf32> -> vector<20x1xf32>
    %227 = vector.broadcast %226 : vector<20x1xf32> to vector<20x20xf32>
    %228 = arith.mulf %223, %227 : vector<20x20xf32>
    %cst_108 = arith.constant dense<0.000000e+00> : vector<20x8xf32>
    %229 = tpu.matmul %228, %214, %cst_108 {dimension_numbers = #tpu.dot_dimension_numbers<[1], [0], [0], [1], [0, 0, 1, 1], [], []>, precision = #tpu.contract_precision<fp32>} : vector<20x20xf32>, vector<20x8xf32>, vector<20x8xf32> -> vector<20x8xf32>
    %230 = vector.extract_strided_slice %211 {offsets = [0, 0], sizes = [8, 32], strides = [1, 1]} : vector<32x32xf32> to vector<8x32xf32>
    %cst_109 = arith.constant dense<0.000000e+00> : vector<20x32xf32>
    %231 = tpu.matmul %229, %230, %cst_109 {dimension_numbers = #tpu.dot_dimension_numbers<[1], [0], [0], [1], [0, 0, 1, 1], [], []>, precision = #tpu.contract_precision<fp32>} : vector<20x8xf32>, vector<8x32xf32>, vector<20x32xf32> -> vector<20x32xf32>
    %232 = vector.extract_strided_slice %209 {offsets = [0, 8], sizes = [20, 8], strides = [1, 1]} : vector<20x96xf32> to vector<20x8xf32>
    %233 = vector.extract_strided_slice %209 {offsets = [0, 40], sizes = [20, 8], strides = [1, 1]} : vector<20x96xf32> to vector<20x8xf32>
    %234 = vector.extract_strided_slice %209 {offsets = [0, 72], sizes = [20, 8], strides = [1, 1]} : vector<20x96xf32> to vector<20x8xf32>
    %cst_110 = arith.constant dense<0.000000e+00> : vector<20x20xf32>
    %235 = tpu.matmul %232, %233, %cst_110 {dimension_numbers = #tpu.dot_dimension_numbers<[1], [1], [0], [0], [0, 0, 1, 0], [], []>, precision = #tpu.contract_precision<fp32>} : vector<20x8xf32>, vector<20x8xf32>, vector<20x20xf32> -> vector<20x20xf32>
    %cst_111 = arith.constant 0.353553385 : f32
    %236 = vector.broadcast %cst_111 : f32 to vector<20x20xf32>
    %237 = arith.mulf %235, %236 : vector<20x20xf32>
    %238 = arith.addf %237, %0 : vector<20x20xf32>
    %cst_112 = arith.constant dense<0xFF800000> : vector<20xf32>
    %239 = vector.multi_reduction <maximumf>, %238, %cst_112 [1] : vector<20x20xf32> to vector<20xf32>
    %240 = vector.shape_cast %239 : vector<20xf32> to vector<20x1xf32>
    %241 = vector.broadcast %240 : vector<20x1xf32> to vector<20x20xf32>
    %242 = arith.subf %238, %241 : vector<20x20xf32>
    %243 = math.exp %242 : vector<20x20xf32>
    %cst_113 = arith.constant dense<0.000000e+00> : vector<20xf32>
    %244 = vector.multi_reduction <add>, %243, %cst_113 [1] : vector<20x20xf32> to vector<20xf32>
    %245 = vector.shape_cast %244 : vector<20xf32> to vector<20x1xf32>
    %246 = tpu.reciprocal %245 {approx = true} : vector<20x1xf32> -> vector<20x1xf32>
    %247 = vector.broadcast %246 : vector<20x1xf32> to vector<20x20xf32>
    %248 = arith.mulf %243, %247 : vector<20x20xf32>
    %cst_114 = arith.constant dense<0.000000e+00> : vector<20x8xf32>
    %249 = tpu.matmul %248, %234, %cst_114 {dimension_numbers = #tpu.dot_dimension_numbers<[1], [0], [0], [1], [0, 0, 1, 1], [], []>, precision = #tpu.contract_precision<fp32>} : vector<20x20xf32>, vector<20x8xf32>, vector<20x8xf32> -> vector<20x8xf32>
    %250 = vector.extract_strided_slice %211 {offsets = [8, 0], sizes = [8, 32], strides = [1, 1]} : vector<32x32xf32> to vector<8x32xf32>
    %cst_115 = arith.constant dense<0.000000e+00> : vector<20x32xf32>
    %251 = tpu.matmul %249, %250, %cst_115 {dimension_numbers = #tpu.dot_dimension_numbers<[1], [0], [0], [1], [0, 0, 1, 1], [], []>, precision = #tpu.contract_precision<fp32>} : vector<20x8xf32>, vector<8x32xf32>, vector<20x32xf32> -> vector<20x32xf32>
    %252 = arith.addf %231, %251 : vector<20x32xf32>
    %253 = vector.extract_strided_slice %209 {offsets = [0, 16], sizes = [20, 8], strides = [1, 1]} : vector<20x96xf32> to vector<20x8xf32>
    %254 = vector.extract_strided_slice %209 {offsets = [0, 48], sizes = [20, 8], strides = [1, 1]} : vector<20x96xf32> to vector<20x8xf32>
    %255 = vector.extract_strided_slice %209 {offsets = [0, 80], sizes = [20, 8], strides = [1, 1]} : vector<20x96xf32> to vector<20x8xf32>
    %cst_116 = arith.constant dense<0.000000e+00> : vector<20x20xf32>
    %256 = tpu.matmul %253, %254, %cst_116 {dimension_numbers = #tpu.dot_dimension_numbers<[1], [1], [0], [0], [0, 0, 1, 0], [], []>, precision = #tpu.contract_precision<fp32>} : vector<20x8xf32>, vector<20x8xf32>, vector<20x20xf32> -> vector<20x20xf32>
    %cst_117 = arith.constant 0.353553385 : f32
    %257 = vector.broadcast %cst_117 : f32 to vector<20x20xf32>
    %258 = arith.mulf %256, %257 : vector<20x20xf32>
    %259 = arith.addf %258, %0 : vector<20x20xf32>
    %cst_118 = arith.constant dense<0xFF800000> : vector<20xf32>
    %260 = vector.multi_reduction <maximumf>, %259, %cst_118 [1] : vector<20x20xf32> to vector<20xf32>
    %261 = vector.shape_cast %260 : vector<20xf32> to vector<20x1xf32>
    %262 = vector.broadcast %261 : vector<20x1xf32> to vector<20x20xf32>
    %263 = arith.subf %259, %262 : vector<20x20xf32>
    %264 = math.exp %263 : vector<20x20xf32>
    %cst_119 = arith.constant dense<0.000000e+00> : vector<20xf32>
    %265 = vector.multi_reduction <add>, %264, %cst_119 [1] : vector<20x20xf32> to vector<20xf32>
    %266 = vector.shape_cast %265 : vector<20xf32> to vector<20x1xf32>
    %267 = tpu.reciprocal %266 {approx = true} : vector<20x1xf32> -> vector<20x1xf32>
    %268 = vector.broadcast %267 : vector<20x1xf32> to vector<20x20xf32>
    %269 = arith.mulf %264, %268 : vector<20x20xf32>
    %cst_120 = arith.constant dense<0.000000e+00> : vector<20x8xf32>
    %270 = tpu.matmul %269, %255, %cst_120 {dimension_numbers = #tpu.dot_dimension_numbers<[1], [0], [0], [1], [0, 0, 1, 1], [], []>, precision = #tpu.contract_precision<fp32>} : vector<20x20xf32>, vector<20x8xf32>, vector<20x8xf32> -> vector<20x8xf32>
    %271 = vector.extract_strided_slice %211 {offsets = [16, 0], sizes = [8, 32], strides = [1, 1]} : vector<32x32xf32> to vector<8x32xf32>
    %cst_121 = arith.constant dense<0.000000e+00> : vector<20x32xf32>
    %272 = tpu.matmul %270, %271, %cst_121 {dimension_numbers = #tpu.dot_dimension_numbers<[1], [0], [0], [1], [0, 0, 1, 1], [], []>, precision = #tpu.contract_precision<fp32>} : vector<20x8xf32>, vector<8x32xf32>, vector<20x32xf32> -> vector<20x32xf32>
    %273 = arith.addf %252, %272 : vector<20x32xf32>
    %274 = vector.extract_strided_slice %209 {offsets = [0, 24], sizes = [20, 8], strides = [1, 1]} : vector<20x96xf32> to vector<20x8xf32>
    %275 = vector.extract_strided_slice %209 {offsets = [0, 56], sizes = [20, 8], strides = [1, 1]} : vector<20x96xf32> to vector<20x8xf32>
    %276 = vector.extract_strided_slice %209 {offsets = [0, 88], sizes = [20, 8], strides = [1, 1]} : vector<20x96xf32> to vector<20x8xf32>
    %cst_122 = arith.constant dense<0.000000e+00> : vector<20x20xf32>
    %277 = tpu.matmul %274, %275, %cst_122 {dimension_numbers = #tpu.dot_dimension_numbers<[1], [1], [0], [0], [0, 0, 1, 0], [], []>, precision = #tpu.contract_precision<fp32>} : vector<20x8xf32>, vector<20x8xf32>, vector<20x20xf32> -> vector<20x20xf32>
    %cst_123 = arith.constant 0.353553385 : f32
    %278 = vector.broadcast %cst_123 : f32 to vector<20x20xf32>
    %279 = arith.mulf %277, %278 : vector<20x20xf32>
    %280 = arith.addf %279, %0 : vector<20x20xf32>
    %cst_124 = arith.constant dense<0xFF800000> : vector<20xf32>
    %281 = vector.multi_reduction <maximumf>, %280, %cst_124 [1] : vector<20x20xf32> to vector<20xf32>
    %282 = vector.shape_cast %281 : vector<20xf32> to vector<20x1xf32>
    %283 = vector.broadcast %282 : vector<20x1xf32> to vector<20x20xf32>
    %284 = arith.subf %280, %283 : vector<20x20xf32>
    %285 = math.exp %284 : vector<20x20xf32>
    %cst_125 = arith.constant dense<0.000000e+00> : vector<20xf32>
    %286 = vector.multi_reduction <add>, %285, %cst_125 [1] : vector<20x20xf32> to vector<20xf32>
    %287 = vector.shape_cast %286 : vector<20xf32> to vector<20x1xf32>
    %288 = tpu.reciprocal %287 {approx = true} : vector<20x1xf32> -> vector<20x1xf32>
    %289 = vector.broadcast %288 : vector<20x1xf32> to vector<20x20xf32>
    %290 = arith.mulf %285, %289 : vector<20x20xf32>
    %cst_126 = arith.constant dense<0.000000e+00> : vector<20x8xf32>
    %291 = tpu.matmul %290, %276, %cst_126 {dimension_numbers = #tpu.dot_dimension_numbers<[1], [0], [0], [1], [0, 0, 1, 1], [], []>, precision = #tpu.contract_precision<fp32>} : vector<20x20xf32>, vector<20x8xf32>, vector<20x8xf32> -> vector<20x8xf32>
    %292 = vector.extract_strided_slice %211 {offsets = [24, 0], sizes = [8, 32], strides = [1, 1]} : vector<32x32xf32> to vector<8x32xf32>
    %cst_127 = arith.constant dense<0.000000e+00> : vector<20x32xf32>
    %293 = tpu.matmul %291, %292, %cst_127 {dimension_numbers = #tpu.dot_dimension_numbers<[1], [0], [0], [1], [0, 0, 1, 1], [], []>, precision = #tpu.contract_precision<fp32>} : vector<20x8xf32>, vector<8x32xf32>, vector<20x32xf32> -> vector<20x32xf32>
    %294 = arith.addf %273, %293 : vector<20x32xf32>
    %295 = arith.addf %178, %294 : vector<20x32xf32>
    %c1_128 = arith.constant 1 : index
    %c0_129 = arith.constant 0 : index
    %c0_130 = arith.constant 0 : index
    %296 = vector.load %arg10[%c1_128, %c0_129, %c0_130] : memref<2x1x32xf32, #tpu.memory_space<vmem>>, vector<1x1x32xf32>
    %297 = vector.shape_cast %296 : vector<1x1x32xf32> to vector<1x32xf32>
    %298 = vector.broadcast %297 : vector<1x32xf32> to vector<20x32xf32>
    %299 = arith.addf %295, %298 : vector<20x32xf32>
    %c1_131 = arith.constant 1 : index
    %c0_132 = arith.constant 0 : index
    %c0_133 = arith.constant 0 : index
    %300 = vector.load %arg11[%c1_131, %c0_132, %c0_133] : memref<2x1x32xf32, #tpu.memory_space<vmem>>, vector<1x1x32xf32>
    %301 = vector.shape_cast %300 : vector<1x1x32xf32> to vector<1x32xf32>
    %c1_134 = arith.constant 1 : index
    %c0_135 = arith.constant 0 : index
    %c0_136 = arith.constant 0 : index
    %302 = vector.load %arg12[%c1_134, %c0_135, %c0_136] : memref<2x1x32xf32, #tpu.memory_space<vmem>>, vector<1x1x32xf32>
    %303 = vector.shape_cast %302 : vector<1x1x32xf32> to vector<1x32xf32>
    %cst_137 = arith.constant dense<0.000000e+00> : vector<20xf32>
    %304 = vector.multi_reduction <add>, %299, %cst_137 [1] : vector<20x32xf32> to vector<20xf32>
    %305 = vector.shape_cast %304 : vector<20xf32> to vector<20x1xf32>
    %cst_138 = arith.constant 3.200000e+01 : f32
    %306 = vector.broadcast %cst_138 : f32 to vector<20x1xf32>
    %307 = arith.divf %305, %306 : vector<20x1xf32>
    %308 = vector.broadcast %307 : vector<20x1xf32> to vector<20x32xf32>
    %309 = arith.subf %299, %308 : vector<20x32xf32>
    %310 = arith.mulf %309, %309 : vector<20x32xf32>
    %cst_139 = arith.constant dense<0.000000e+00> : vector<20xf32>
    %311 = vector.multi_reduction <add>, %310, %cst_139 [1] : vector<20x32xf32> to vector<20xf32>
    %312 = vector.shape_cast %311 : vector<20xf32> to vector<20x1xf32>
    %cst_140 = arith.constant 3.200000e+01 : f32
    %313 = vector.broadcast %cst_140 : f32 to vector<20x1xf32>
    %314 = arith.divf %312, %313 : vector<20x1xf32>
    %cst_141 = arith.constant 9.99999996E-13 : f32
    %315 = vector.broadcast %cst_141 : f32 to vector<20x1xf32>
    %316 = arith.addf %314, %315 : vector<20x1xf32>
    %317 = math.rsqrt %316 : vector<20x1xf32>
    %318 = vector.broadcast %317 : vector<20x1xf32> to vector<20x32xf32>
    %319 = arith.mulf %309, %318 : vector<20x32xf32>
    %320 = vector.broadcast %301 : vector<1x32xf32> to vector<20x32xf32>
    %321 = arith.mulf %319, %320 : vector<20x32xf32>
    %322 = vector.broadcast %303 : vector<1x32xf32> to vector<20x32xf32>
    %323 = arith.addf %321, %322 : vector<20x32xf32>
    %c1_142 = arith.constant 1 : index
    %c0_143 = arith.constant 0 : index
    %c0_144 = arith.constant 0 : index
    %324 = vector.load %arg13[%c1_142, %c0_143, %c0_144] : memref<2x32x64xf32, #tpu.memory_space<vmem>>, vector<1x32x64xf32>
    %325 = vector.shape_cast %324 : vector<1x32x64xf32> to vector<32x64xf32>
    %cst_145 = arith.constant dense<0.000000e+00> : vector<20x64xf32>
    %326 = tpu.matmul %323, %325, %cst_145 {dimension_numbers = #tpu.dot_dimension_numbers<[1], [0], [0], [1], [0, 0, 1, 1], [], []>, precision = #tpu.contract_precision<fp32>} : vector<20x32xf32>, vector<32x64xf32>, vector<20x64xf32> -> vector<20x64xf32>
    %c1_146 = arith.constant 1 : index
    %c0_147 = arith.constant 0 : index
    %c0_148 = arith.constant 0 : index
    %327 = vector.load %arg14[%c1_146, %c0_147, %c0_148] : memref<2x1x64xf32, #tpu.memory_space<vmem>>, vector<1x1x64xf32>
    %328 = vector.shape_cast %327 : vector<1x1x64xf32> to vector<1x64xf32>
    %329 = vector.broadcast %328 : vector<1x64xf32> to vector<20x64xf32>
    %330 = arith.addf %326, %329 : vector<20x64xf32>
    %cst_149 = arith.constant 5.000000e-01 : f32
    %331 = vector.broadcast %cst_149 : f32 to vector<20x64xf32>
    %332 = arith.mulf %331, %330 : vector<20x64xf32>
    %cst_150 = arith.constant 4.471500e-02 : f32
    %333 = vector.broadcast %cst_150 : f32 to vector<20x64xf32>
    %334 = arith.mulf %333, %330 : vector<20x64xf32>
    %335 = arith.mulf %334, %330 : vector<20x64xf32>
    %336 = arith.mulf %335, %330 : vector<20x64xf32>
    %337 = arith.addf %330, %336 : vector<20x64xf32>
    %cst_151 = arith.constant 0.797884583 : f32
    %338 = vector.broadcast %cst_151 : f32 to vector<20x64xf32>
    %339 = arith.mulf %338, %337 : vector<20x64xf32>
    %340 = math.tanh %339 : vector<20x64xf32>
    %cst_152 = arith.constant 1.000000e+00 : f32
    %341 = vector.broadcast %cst_152 : f32 to vector<20x64xf32>
    %342 = arith.addf %341, %340 : vector<20x64xf32>
    %343 = arith.mulf %332, %342 : vector<20x64xf32>
    %c1_153 = arith.constant 1 : index
    %c0_154 = arith.constant 0 : index
    %c0_155 = arith.constant 0 : index
    %344 = vector.load %arg15[%c1_153, %c0_154, %c0_155] : memref<2x64x32xf32, #tpu.memory_space<vmem>>, vector<1x64x32xf32>
    %345 = vector.shape_cast %344 : vector<1x64x32xf32> to vector<64x32xf32>
    %cst_156 = arith.constant dense<0.000000e+00> : vector<20x32xf32>
    %346 = tpu.matmul %343, %345, %cst_156 {dimension_numbers = #tpu.dot_dimension_numbers<[1], [0], [0], [1], [0, 0, 1, 1], [], []>, precision = #tpu.contract_precision<fp32>} : vector<20x64xf32>, vector<64x32xf32>, vector<20x32xf32> -> vector<20x32xf32>
    %347 = arith.addf %299, %346 : vector<20x32xf32>
    %c1_157 = arith.constant 1 : index
    %c0_158 = arith.constant 0 : index
    %c0_159 = arith.constant 0 : index
    %348 = vector.load %arg16[%c1_157, %c0_158, %c0_159] : memref<2x1x32xf32, #tpu.memory_space<vmem>>, vector<1x1x32xf32>
    %349 = vector.shape_cast %348 : vector<1x1x32xf32> to vector<1x32xf32>
    %350 = vector.broadcast %349 : vector<1x32xf32> to vector<20x32xf32>
    %351 = arith.addf %347, %350 : vector<20x32xf32>
    %c0_160 = arith.constant 0 : index
    %c0_161 = arith.constant 0 : index
    %352 = vector.load %arg17[%c0_160, %c0_161] : memref<4x20xf32, #tpu.memory_space<vmem>>, vector<4x20xf32>
    %cst_162 = arith.constant dense<0.000000e+00> : vector<4x32xf32>
    %353 = tpu.matmul %352, %351, %cst_162 {dimension_numbers = #tpu.dot_dimension_numbers<[1], [0], [0], [1], [0, 0, 1, 1], [], []>, precision = #tpu.contract_precision<fp32>} : vector<4x20xf32>, vector<20x32xf32>, vector<4x32xf32> -> vector<4x32xf32>
    %c0_163 = arith.constant 0 : index
    %c0_164 = arith.constant 0 : index
    %354 = vector.load %arg18[%c0_163, %c0_164] : memref<1x32xf32, #tpu.memory_space<vmem>>, vector<1x32xf32>
    %c0_165 = arith.constant 0 : index
    %c0_166 = arith.constant 0 : index
    %355 = vector.load %arg19[%c0_165, %c0_166] : memref<1x32xf32, #tpu.memory_space<vmem>>, vector<1x32xf32>
    %cst_167 = arith.constant dense<0.000000e+00> : vector<4xf32>
    %356 = vector.multi_reduction <add>, %353, %cst_167 [1] : vector<4x32xf32> to vector<4xf32>
    %357 = vector.shape_cast %356 : vector<4xf32> to vector<4x1xf32>
    %cst_168 = arith.constant 3.200000e+01 : f32
    %358 = vector.broadcast %cst_168 : f32 to vector<4x1xf32>
    %359 = arith.divf %357, %358 : vector<4x1xf32>
    %360 = vector.broadcast %359 : vector<4x1xf32> to vector<4x32xf32>
    %361 = arith.subf %353, %360 : vector<4x32xf32>
    %362 = arith.mulf %361, %361 : vector<4x32xf32>
    %cst_169 = arith.constant dense<0.000000e+00> : vector<4xf32>
    %363 = vector.multi_reduction <add>, %362, %cst_169 [1] : vector<4x32xf32> to vector<4xf32>
    %364 = vector.shape_cast %363 : vector<4xf32> to vector<4x1xf32>
    %cst_170 = arith.constant 3.200000e+01 : f32
    %365 = vector.broadcast %cst_170 : f32 to vector<4x1xf32>
    %366 = arith.divf %364, %365 : vector<4x1xf32>
    %cst_171 = arith.constant 9.99999996E-13 : f32
    %367 = vector.broadcast %cst_171 : f32 to vector<4x1xf32>
    %368 = arith.addf %366, %367 : vector<4x1xf32>
    %369 = math.rsqrt %368 : vector<4x1xf32>
    %370 = vector.broadcast %369 : vector<4x1xf32> to vector<4x32xf32>
    %371 = arith.mulf %361, %370 : vector<4x32xf32>
    %372 = vector.broadcast %354 : vector<1x32xf32> to vector<4x32xf32>
    %373 = arith.mulf %371, %372 : vector<4x32xf32>
    %374 = vector.broadcast %355 : vector<1x32xf32> to vector<4x32xf32>
    %375 = arith.addf %373, %374 : vector<4x32xf32>
    %c0_172 = arith.constant 0 : index
    %c0_173 = arith.constant 0 : index
    %376 = vector.load %arg20[%c0_172, %c0_173] : memref<32x32xf32, #tpu.memory_space<vmem>>, vector<32x32xf32>
    %cst_174 = arith.constant dense<0.000000e+00> : vector<4x32xf32>
    %377 = tpu.matmul %375, %376, %cst_174 {dimension_numbers = #tpu.dot_dimension_numbers<[1], [0], [0], [1], [0, 0, 1, 1], [], []>, precision = #tpu.contract_precision<fp32>} : vector<4x32xf32>, vector<32x32xf32>, vector<4x32xf32> -> vector<4x32xf32>
    %c0_175 = arith.constant 0 : index
    %c0_176 = arith.constant 0 : index
    %378 = vector.load %arg21[%c0_175, %c0_176] : memref<1x32xf32, #tpu.memory_space<vmem>>, vector<1x32xf32>
    %379 = vector.broadcast %378 : vector<1x32xf32> to vector<4x32xf32>
    %380 = arith.addf %377, %379 : vector<4x32xf32>
    %381 = math.tanh %380 : vector<4x32xf32>
    %c0_177 = arith.constant 0 : index
    %c0_178 = arith.constant 0 : index
    %382 = vector.load %arg22[%c0_177, %c0_178] : memref<2x32xf32, #tpu.memory_space<vmem>>, vector<2x32xf32>
    %383 = vector.extract_strided_slice %381 {offsets = [0, 0], sizes = [2, 32], strides = [1, 1]} : vector<4x32xf32> to vector<2x32xf32>
    %384 = vector.extract_strided_slice %381 {offsets = [2, 0], sizes = [2, 32], strides = [1, 1]} : vector<4x32xf32> to vector<2x32xf32>
    %385 = vector.extract_strided_slice %382 {offsets = [0, 0], sizes = [1, 32], strides = [1, 1]} : vector<2x32xf32> to vector<1x32xf32>
    %386 = vector.broadcast %385 : vector<1x32xf32> to vector<2x32xf32>
    %387 = arith.mulf %383, %386 : vector<2x32xf32>
    %cst_179 = arith.constant dense<0.000000e+00> : vector<2xf32>
    %388 = vector.multi_reduction <add>, %387, %cst_179 [1] : vector<2x32xf32> to vector<2xf32>
    %389 = vector.shape_cast %388 : vector<2xf32> to vector<2x1xf32>
    %390 = vector.extract_strided_slice %382 {offsets = [1, 0], sizes = [1, 32], strides = [1, 1]} : vector<2x32xf32> to vector<1x32xf32>
    %391 = vector.broadcast %390 : vector<1x32xf32> to vector<2x32xf32>
    %392 = arith.mulf %384, %391 : vector<2x32xf32>
    %cst_180 = arith.constant dense<0.000000e+00> : vector<2xf32>
    %393 = vector.multi_reduction <add>, %392, %cst_180 [1] : vector<2x32xf32> to vector<2xf32>
    %394 = vector.shape_cast %393 : vector<2xf32> to vector<2x1xf32>
    %395 = arith.addf %389, %394 : vector<2x1xf32>
    %c0_181 = arith.constant 0 : index
    %c0_182 = arith.constant 0 : index
    %396 = vector.load %arg23[%c0_181, %c0_182] : memref<1x1xf32, #tpu.memory_space<vmem>>, vector<1x1xf32>
    %397 = vector.broadcast %396 : vector<1x1xf32> to vector<2x1xf32>
    %398 = arith.addf %395, %397 : vector<2x1xf32>
    %cst_183 = arith.constant 0.000000e+00 : f32
    %399 = vector.broadcast %cst_183 : f32 to vector<2x1xf32>
    %400 = arith.subf %399, %398 : vector<2x1xf32>
    %401 = math.exp %400 : vector<2x1xf32>
    %cst_184 = arith.constant 1.000000e+00 : f32
    %402 = vector.broadcast %cst_184 : f32 to vector<2x1xf32>
    %403 = arith.addf %402, %401 : vector<2x1xf32>
    %cst_185 = arith.constant 1.000000e+00 : f32
    %404 = vector.broadcast %cst_185 : f32 to vector<2x1xf32>
    %405 = arith.divf %404, %403 : vector<2x1xf32>
    %406 = vector.shape_cast %405 : vector<2x1xf32> to vector<2x1xf32>
    %407 = vector.broadcast %406 : vector<2x1xf32> to vector<2x128xf32>
    %c0_186 = arith.constant 0 : index
    %c0_187 = arith.constant 0 : index
    %408 = vector.load %arg24[%c0_186, %c0_187] : memref<2x128xf32, #tpu.memory_space<vmem>>, vector<2x128xf32>
    tpu.vector_store %arg24[%c0_186, %c0_187], %407 {strides = array<i32>} : memref<2x128xf32, #tpu.memory_space<vmem>>, vector<2x128xf32>,
    return
  }
  func.func @transform_0(%arg0: i32) -> (i32, i32) {
    %c0_i32 = arith.constant 0 : i32
    %c0_i32_0 = arith.constant 0 : i32
    %c0_i32_1 = arith.constant 0 : i32
    return %c0_i32, %c0_i32_0 : i32, i32
  }
  func.func @transform_1(%arg0: i32) -> (i32, i32) {
    %c0_i32 = arith.constant 0 : i32
    %c0_i32_0 = arith.constant 0 : i32
    %c0_i32_1 = arith.constant 0 : i32
    return %c0_i32, %c0_i32_0 : i32, i32
  }
  func.func @transform_2(%arg0: i32) -> (i32, i32) {
    %c0_i32 = arith.constant 0 : i32
    %c0_i32_0 = arith.constant 0 : i32
    %c0_i32_1 = arith.constant 0 : i32
    return %c0_i32, %c0_i32_0 : i32, i32
  }
  func.func @transform_3(%arg0: i32) -> (i32, i32) {
    %c0_i32 = arith.constant 0 : i32
    %c0_i32_0 = arith.constant 0 : i32
    %c0_i32_1 = arith.constant 0 : i32
    return %c0_i32, %c0_i32_0 : i32, i32
  }
  func.func @transform_4(%arg0: i32) -> (i32, i32, i32) {
    %c0_i32 = arith.constant 0 : i32
    %c0_i32_0 = arith.constant 0 : i32
    %c0_i32_1 = arith.constant 0 : i32
    %c0_i32_2 = arith.constant 0 : i32
    return %c0_i32, %c0_i32_0, %c0_i32_1 : i32, i32, i32
  }
  func.func @transform_5(%arg0: i32) -> (i32, i32, i32) {
    %c0_i32 = arith.constant 0 : i32
    %c0_i32_0 = arith.constant 0 : i32
    %c0_i32_1 = arith.constant 0 : i32
    %c0_i32_2 = arith.constant 0 : i32
    return %c0_i32, %c0_i32_0, %c0_i32_1 : i32, i32, i32
  }
  func.func @transform_6(%arg0: i32) -> (i32, i32, i32) {
    %c0_i32 = arith.constant 0 : i32
    %c0_i32_0 = arith.constant 0 : i32
    %c0_i32_1 = arith.constant 0 : i32
    %c0_i32_2 = arith.constant 0 : i32
    return %c0_i32, %c0_i32_0, %c0_i32_1 : i32, i32, i32
  }
  func.func @transform_7(%arg0: i32) -> (i32, i32, i32) {
    %c0_i32 = arith.constant 0 : i32
    %c0_i32_0 = arith.constant 0 : i32
    %c0_i32_1 = arith.constant 0 : i32
    %c0_i32_2 = arith.constant 0 : i32
    return %c0_i32, %c0_i32_0, %c0_i32_1 : i32, i32, i32
  }
  func.func @transform_8(%arg0: i32) -> (i32, i32, i32) {
    %c0_i32 = arith.constant 0 : i32
    %c0_i32_0 = arith.constant 0 : i32
    %c0_i32_1 = arith.constant 0 : i32
    %c0_i32_2 = arith.constant 0 : i32
    return %c0_i32, %c0_i32_0, %c0_i32_1 : i32, i32, i32
  }
  func.func @transform_9(%arg0: i32) -> (i32, i32, i32) {
    %c0_i32 = arith.constant 0 : i32
    %c0_i32_0 = arith.constant 0 : i32
    %c0_i32_1 = arith.constant 0 : i32
    %c0_i32_2 = arith.constant 0 : i32
    return %c0_i32, %c0_i32_0, %c0_i32_1 : i32, i32, i32
  }
  func.func @transform_10(%arg0: i32) -> (i32, i32, i32) {
    %c0_i32 = arith.constant 0 : i32
    %c0_i32_0 = arith.constant 0 : i32
    %c0_i32_1 = arith.constant 0 : i32
    %c0_i32_2 = arith.constant 0 : i32
    return %c0_i32, %c0_i32_0, %c0_i32_1 : i32, i32, i32
  }
  func.func @transform_11(%arg0: i32) -> (i32, i32, i32) {
    %c0_i32 = arith.constant 0 : i32
    %c0_i32_0 = arith.constant 0 : i32
    %c0_i32_1 = arith.constant 0 : i32
    %c0_i32_2 = arith.constant 0 : i32
    return %c0_i32, %c0_i32_0, %c0_i32_1 : i32, i32, i32
  }
  func.func @transform_12(%arg0: i32) -> (i32, i32, i32) {
    %c0_i32 = arith.constant 0 : i32
    %c0_i32_0 = arith.constant 0 : i32
    %c0_i32_1 = arith.constant 0 : i32
    %c0_i32_2 = arith.constant 0 : i32
    return %c0_i32, %c0_i32_0, %c0_i32_1 : i32, i32, i32
  }
  func.func @transform_13(%arg0: i32) -> (i32, i32, i32) {
    %c0_i32 = arith.constant 0 : i32
    %c0_i32_0 = arith.constant 0 : i32
    %c0_i32_1 = arith.constant 0 : i32
    %c0_i32_2 = arith.constant 0 : i32
    return %c0_i32, %c0_i32_0, %c0_i32_1 : i32, i32, i32
  }
  func.func @transform_14(%arg0: i32) -> (i32, i32, i32) {
    %c0_i32 = arith.constant 0 : i32
    %c0_i32_0 = arith.constant 0 : i32
    %c0_i32_1 = arith.constant 0 : i32
    %c0_i32_2 = arith.constant 0 : i32
    return %c0_i32, %c0_i32_0, %c0_i32_1 : i32, i32, i32
  }
  func.func @transform_15(%arg0: i32) -> (i32, i32, i32) {
    %c0_i32 = arith.constant 0 : i32
    %c0_i32_0 = arith.constant 0 : i32
    %c0_i32_1 = arith.constant 0 : i32
    %c0_i32_2 = arith.constant 0 : i32
    return %c0_i32, %c0_i32_0, %c0_i32_1 : i32, i32, i32
  }
  func.func @transform_16(%arg0: i32) -> (i32, i32) {
    %c0_i32 = arith.constant 0 : i32
    %c0_i32_0 = arith.constant 0 : i32
    %c0_i32_1 = arith.constant 0 : i32
    return %c0_i32, %c0_i32_0 : i32, i32
  }
  func.func @transform_17(%arg0: i32) -> (i32, i32) {
    %c0_i32 = arith.constant 0 : i32
    %c0_i32_0 = arith.constant 0 : i32
    %c0_i32_1 = arith.constant 0 : i32
    return %c0_i32, %c0_i32_0 : i32, i32
  }
  func.func @transform_18(%arg0: i32) -> (i32, i32) {
    %c0_i32 = arith.constant 0 : i32
    %c0_i32_0 = arith.constant 0 : i32
    %c0_i32_1 = arith.constant 0 : i32
    return %c0_i32, %c0_i32_0 : i32, i32
  }
  func.func @transform_19(%arg0: i32) -> (i32, i32) {
    %c0_i32 = arith.constant 0 : i32
    %c0_i32_0 = arith.constant 0 : i32
    %c0_i32_1 = arith.constant 0 : i32
    return %c0_i32, %c0_i32_0 : i32, i32
  }
  func.func @transform_20(%arg0: i32) -> (i32, i32) {
    %c0_i32 = arith.constant 0 : i32
    %c0_i32_0 = arith.constant 0 : i32
    %c0_i32_1 = arith.constant 0 : i32
    return %c0_i32, %c0_i32_0 : i32, i32
  }
  func.func @transform_21(%arg0: i32) -> (i32, i32) {
    %c0_i32 = arith.constant 0 : i32
    %c0_i32_0 = arith.constant 0 : i32
    %c0_i32_1 = arith.constant 0 : i32
    return %c0_i32, %c0_i32_0 : i32, i32
  }
  func.func @transform_22(%arg0: i32) -> (i32, i32) {
    %c0_i32 = arith.constant 0 : i32
    %c0_i32_0 = arith.constant 0 : i32
    %c0_i32_1 = arith.constant 0 : i32
    return %c0_i32, %c0_i32_0 : i32, i32
  }
  func.func @transform_23(%arg0: i32) -> (i32, i32) {
    %c0_i32 = arith.constant 0 : i32
    %c0_i32_0 = arith.constant 0 : i32
    %c0_i32_1 = arith.constant 0 : i32
    return %c0_i32, %c0_i32_0 : i32, i32
  }
}

</mosaic_0001>

<llo_original>
// kernel: tile.7
$region0: #{tile.7}
  %s0 = inlined_call_operand.vmem [shape: f32[4,5,32], index: 0, kind: input, shape index: {}]
  %s1 = inlined_call_operand.vmem [shape: f32[20,32], index: 1, kind: output, shape index: {}]
  %v2 = vld [vmem:[%s0] sm:$0x1f]
  %vm3 = vcmask 261120
  %4 = vst.msk [vmem:[%s1] sm:$0x1f] %vm3, %v2
  %s5 = scalar_lea.vmem %s0, 8
  %v6 = vld [vmem:[%s5] sm:$0x1f]
  %vm7 = vcmask 261120
  %s8 = scalar_lea.vmem %s1, 5
  %9 = vst.msk [vmem:[%s8] sm:$0x1f] %vm7, %v6
  %s10 = scalar_lea.vmem %s0, 16
  %v11 = vld [vmem:[%s10] sm:$0x1f]
  %vm12 = vcmask 261120
  %s13 = scalar_lea.vmem %s1, 10
  %14 = vst.msk [vmem:[%s13] sm:$0x1f] %vm12, %v11
  %s15 = scalar_lea.vmem %s0, 24
  %v16 = vld [vmem:[%s15] sm:$0x1f]
  %vm17 = vcmask 261120
  %s18 = scalar_lea.vmem %s1, 15
  %19 = vst.msk [vmem:[%s18] sm:$0x1f] %vm17, %v16

// kernel: eq.8
$region0: #{eq.8}
  %s0 = inlined_call_operand.vmem [shape: s32[4,5], index: 0, kind: input, shape index: {}]
  %s1 = inlined_call_operand.vmem [shape: s32[20], index: 1, kind: output, shape index: {}]
  $region1: #{eq.8} parent=0
    #allocation0 [shape = 'u8[4096]{0}', space=vmem, size = 0x1000, scoped, tag = 'scoped mem for output reshape']
    #allocation1 [shape = 'u8[4096]{0}', space=vmem, size = 0x1000, scoped, tag = 'scoped mem for input reshape']
    %s3 = ssub.s32 16, 1
    %v4 = vld [vmem:[%s0] sm:%s3]
    %5 = vst [vmem:[#allocation1] sm:%s3] %v4
    %v6 = vld [vmem:[#allocation1] sm:$0x1]
    %vm7 = vcmask 39936
    %8 = vst.msk [vmem:[#allocation0] sm:$0x1] %vm7, %v6
    %s9 = scalar_lea.vmem [#allocation1], 3
    %v10 = vld [vmem:[%s9] sm:$0x1]
    %11 = vrot.lane.b32.xlu0 %v10, 15
    %v12 = vpop.permute.xlu0 %11
    %vm13 = vcmask 162936
    %14 = vst.msk [vmem:[#allocation0] sm:$0x1] %vm13, %v12
    %s15 = scalar_lea.vmem [#allocation1], 2
    %v16 = vld [vmem:[%s15] sm:$0x1]
    %17 = vrot.lane.b32.xlu0 %v16, 10
    %v18 = vpop.permute.xlu0 %17
    %vm19 = vcmask 121936
    %20 = vst.msk [vmem:[#allocation0] sm:$0x1] %vm19, %v18
    %s21 = scalar_lea.vmem [#allocation1], 1
    %v22 = vld [vmem:[%s21] sm:$0x1]
    %23 = vrot.lane.b32.xlu0 %v22, 5
    %v24 = vpop.permute.xlu0 %23
    %vm25 = vcmask 80936
    %26 = vst.msk [vmem:[#allocation0] sm:$0x1] %vm25, %v24
    %s28 = ssub.s32 2, 1
    %v29 = vld [vmem:[#allocation0] sm:%s28]
    %s31 = ssub.s32 2, 1
    %32 = vst [vmem:[%s1] sm:%s31] %v29

// kernel: progress_vit_forward.1
$region0: #{progress_vit_forward.1}
  #allocation0 [shape = 'u32[]', space=smem, size = 0x4, offset = 0x4, fixed_abs, tag = 'smem constant byte address 0x4 - core index']
  #allocation1 [shape = 'u32[72,128]{1,0:T(1,128)}', space=vmem, size = 0x9000, scoped, tag = 'internal scratch']
  #allocation2 [shape = 'f32[1,1]{1,0:T(1,128)S(1)}', space=vmem, size = 0x200, scoped, tag = 'scoped memory for progress_vit_forward.1']
  %s0 = inlined_call_operand.vmem [shape: f32[20,193], index: 0, kind: input, shape index: {}]
  %s1 = inlined_call_operand.vmem [shape: f32[193,32], index: 1, kind: input, shape index: {}]
  %s2 = inlined_call_operand.vmem [shape: f32[20,32], index: 2, kind: input, shape index: {}]
  %s3 = inlined_call_operand.vmem [shape: f32[20,20], index: 3, kind: input, shape index: {}]
  %s4 = inlined_call_operand.vmem [shape: f32[2,1,32], index: 4, kind: input, shape index: {}, may-alias: {4,10}]
  %s5 = inlined_call_operand.vmem [shape: f32[2,1,32], index: 5, kind: input, shape index: {}, may-alias: {5,9,11,15}]
  %s6 = inlined_call_operand.vmem [shape: f32[2,32,96], index: 6, kind: input, shape index: {}]
  %s7 = inlined_call_operand.vmem [shape: f32[2,1,96], index: 7, kind: input, shape index: {}]
  %s8 = inlined_call_operand.vmem [shape: f32[2,32,32], index: 8, kind: input, shape index: {}]
  %s9 = inlined_call_operand.vmem [shape: f32[2,1,32], index: 9, kind: input, shape index: {}, may-alias: {5,9,11,15}]
  %s10 = inlined_call_operand.vmem [shape: f32[2,1,32], index: 10, kind: input, shape index: {}, may-alias: {4,10}]
  %s11 = inlined_call_operand.vmem [shape: f32[2,1,32], index: 11, kind: input, shape index: {}, may-alias: {5,9,11,15}]
  %s12 = inlined_call_operand.vmem [shape: f32[2,32,64], index: 12, kind: input, shape index: {}]
  %s13 = inlined_call_operand.vmem [shape: f32[2,1,64], index: 13, kind: input, shape index: {}]
  %s14 = inlined_call_operand.vmem [shape: f32[2,64,32], index: 14, kind: input, shape index: {}]
  %s15 = inlined_call_operand.vmem [shape: f32[2,1,32], index: 15, kind: input, shape index: {}, may-alias: {5,9,11,15}]
  %s16 = inlined_call_operand.vmem [shape: f32[4,20], index: 16, kind: input, shape index: {}]
  %s17 = inlined_call_operand.vmem [shape: f32[1,32], index: 17, kind: input, shape index: {}]
  %s18 = inlined_call_operand.vmem [shape: f32[1,32], index: 18, kind: input, shape index: {}, may-alias: {18,20}]
  %s19 = inlined_call_operand.vmem [shape: f32[32,32], index: 19, kind: input, shape index: {}]
  %s20 = inlined_call_operand.vmem [shape: f32[1,32], index: 20, kind: input, shape index: {}, may-alias: {18,20}]
  %s21 = inlined_call_operand.vmem [shape: f32[2,32], index: 21, kind: input, shape index: {}]
  %s22 = inlined_call_operand.<no memory space> [shape: f32[1,1], index: 22, kind: input, shape index: {}]
  %s23 = inlined_call_operand.vmem [shape: f32[2,128], index: 23, kind: output, shape index: {}]
  %s24 = sld [smem:[#allocation0]]
  $region102: #{progress_vit_forward.1} parent=0
    _
  %s26 = ssub.s32 1, %s24
  %s27 = scalar_select 0, %s26, %s24
  %v28 = vstv %s22
  %29 = vst [vmem:[#allocation2] sm:$0x1] %v28
  // Predicated region
  $region2: #{progress_vit_forward.1} parent=0 // pred_check
    _
  $region3: #{progress_vit_forward.1} parent=0 // pred_check_branch
    %31 = sbr.rel (0) target = $region5
  $region4: #{progress_vit_forward.1} parent=0 // pred_region
    _
  $region5: #{progress_vit_forward.1} parent=0 // pred_fallthru
    _
  // Predicated region
  $region6: #{progress_vit_forward.1} parent=0 // pred_check
    _
  $region7: #{progress_vit_forward.1} parent=0 // pred_check_branch
    %33 = sbr.rel (0) target = $region9
  $region8: #{progress_vit_forward.1} parent=0 // pred_region
    _
  $region9: #{progress_vit_forward.1} parent=0 // pred_fallthru
    _
  // Predicated region
  $region10: #{progress_vit_forward.1} parent=0 // pred_check
    _
  $region11: #{progress_vit_forward.1} parent=0 // pred_check_branch
    %35 = sbr.rel (0) target = $region13
  $region12: #{progress_vit_forward.1} parent=0 // pred_region
    _
  $region13: #{progress_vit_forward.1} parent=0 // pred_fallthru
    _
  // Predicated region
  $region14: #{progress_vit_forward.1} parent=0 // pred_check
    _
  $region15: #{progress_vit_forward.1} parent=0 // pred_check_branch
    %37 = sbr.rel (0) target = $region17
  $region16: #{progress_vit_forward.1} parent=0 // pred_region
    _
  $region17: #{progress_vit_forward.1} parent=0 // pred_fallthru
    _
  // Predicated region
  $region18: #{progress_vit_forward.1} parent=0 // pred_check
    _
  $region19: #{progress_vit_forward.1} parent=0 // pred_check_branch
    %39 = sbr.rel (0) target = $region21
  $region20: #{progress_vit_forward.1} parent=0 // pred_region
    _
  $region21: #{progress_vit_forward.1} parent=0 // pred_fallthru
    _
  // Predicated region
  $region22: #{progress_vit_forward.1} parent=0 // pred_check
    _
  $region23: #{progress_vit_forward.1} parent=0 // pred_check_branch
    %41 = sbr.rel (0) target = $region25
  $region24: #{progress_vit_forward.1} parent=0 // pred_region
    _
  $region25: #{progress_vit_forward.1} parent=0 // pred_fallthru
    _
  // Predicated region
  $region26: #{progress_vit_forward.1} parent=0 // pred_check
    _
  $region27: #{progress_vit_forward.1} parent=0 // pred_check_branch
    %43 = sbr.rel (0) target = $region29
  $region28: #{progress_vit_forward.1} parent=0 // pred_region
    _
  $region29: #{progress_vit_forward.1} parent=0 // pred_fallthru
    _
  // Predicated region
  $region30: #{progress_vit_forward.1} parent=0 // pred_check
    _
  $region31: #{progress_vit_forward.1} parent=0 // pred_check_branch
    %45 = sbr.rel (0) target = $region33
  $region32: #{progress_vit_forward.1} parent=0 // pred_region
    _
  $region33: #{progress_vit_forward.1} parent=0 // pred_fallthru
    _
  // Predicated region
  $region34: #{progress_vit_forward.1} parent=0 // pred_check
    _
  $region35: #{progress_vit_forward.1} parent=0 // pred_check_branch
    %47 = sbr.rel (0) target = $region37
  $region36: #{progress_vit_forward.1} parent=0 // pred_region
    _
  $region37: #{progress_vit_forward.1} parent=0 // pred_fallthru
    _
  // Predicated region
  $region38: #{progress_vit_forward.1} parent=0 // pred_check
    _
  $region39: #{progress_vit_forward.1} parent=0 // pred_check_branch
    %49 = sbr.rel (0) target = $region41
  $region40: #{progress_vit_forward.1} parent=0 // pred_region
    _
  $region41: #{progress_vit_forward.1} parent=0 // pred_fallthru
    _
  // Predicated region
  $region42: #{progress_vit_forward.1} parent=0 // pred_check
    _
  $region43: #{progress_vit_forward.1} parent=0 // pred_check_branch
    %51 = sbr.rel (0) target = $region45
  $region44: #{progress_vit_forward.1} parent=0 // pred_region
    _
  $region45: #{progress_vit_forward.1} parent=0 // pred_fallthru
    _
  // Predicated region
  $region46: #{progress_vit_forward.1} parent=0 // pred_check
    _
  $region47: #{progress_vit_forward.1} parent=0 // pred_check_branch
    %53 = sbr.rel (0) target = $region49
  $region48: #{progress_vit_forward.1} parent=0 // pred_region
    _
  $region49: #{progress_vit_forward.1} parent=0 // pred_fallthru
    _
  // Predicated region
  $region50: #{progress_vit_forward.1} parent=0 // pred_check
    _
  $region51: #{progress_vit_forward.1} parent=0 // pred_check_branch
    %55 = sbr.rel (0) target = $region53
  $region52: #{progress_vit_forward.1} parent=0 // pred_region
    _
  $region53: #{progress_vit_forward.1} parent=0 // pred_fallthru
    _
  // Predicated region
  $region54: #{progress_vit_forward.1} parent=0 // pred_check
    _
  $region55: #{progress_vit_forward.1} parent=0 // pred_check_branch
    %57 = sbr.rel (0) target = $region57
  $region56: #{progress_vit_forward.1} parent=0 // pred_region
    _
  $region57: #{progress_vit_forward.1} parent=0 // pred_fallthru
    _
  // Predicated region
  $region58: #{progress_vit_forward.1} parent=0 // pred_check
    _
  $region59: #{progress_vit_forward.1} parent=0 // pred_check_branch
    %59 = sbr.rel (0) target = $region61
  $region60: #{progress_vit_forward.1} parent=0 // pred_region
    _
  $region61: #{progress_vit_forward.1} parent=0 // pred_fallthru
    _
  // Predicated region
  $region62: #{progress_vit_forward.1} parent=0 // pred_check
    _
  $region63: #{progress_vit_forward.1} parent=0 // pred_check_branch
    %61 = sbr.rel (0) target = $region65
  $region64: #{progress_vit_forward.1} parent=0 // pred_region
    _
  $region65: #{progress_vit_forward.1} parent=0 // pred_fallthru
    _
  // Predicated region
  $region66: #{progress_vit_forward.1} parent=0 // pred_check
    _
  $region67: #{progress_vit_forward.1} parent=0 // pred_check_branch
    %63 = sbr.rel (0) target = $region69
  $region68: #{progress_vit_forward.1} parent=0 // pred_region
    _
  $region69: #{progress_vit_forward.1} parent=0 // pred_fallthru
    _
  // Predicated region
  $region70: #{progress_vit_forward.1} parent=0 // pred_check
    _
  $region71: #{progress_vit_forward.1} parent=0 // pred_check_branch
    %65 = sbr.rel (0) target = $region73
  $region72: #{progress_vit_forward.1} parent=0 // pred_region
    _
  $region73: #{progress_vit_forward.1} parent=0 // pred_fallthru
    _
  // Predicated region
  $region74: #{progress_vit_forward.1} parent=0 // pred_check
    _
  $region75: #{progress_vit_forward.1} parent=0 // pred_check_branch
    %67 = sbr.rel (0) target = $region77
  $region76: #{progress_vit_forward.1} parent=0 // pred_region
    _
  $region77: #{progress_vit_forward.1} parent=0 // pred_fallthru
    _
  // Predicated region
  $region78: #{progress_vit_forward.1} parent=0 // pred_check
    _
  $region79: #{progress_vit_forward.1} parent=0 // pred_check_branch
    %69 = sbr.rel (0) target = $region81
  $region80: #{progress_vit_forward.1} parent=0 // pred_region
    _
  $region81: #{progress_vit_forward.1} parent=0 // pred_fallthru
    _
  // Predicated region
  $region82: #{progress_vit_forward.1} parent=0 // pred_check
    _
  $region83: #{progress_vit_forward.1} parent=0 // pred_check_branch
    %71 = sbr.rel (0) target = $region85
  $region84: #{progress_vit_forward.1} parent=0 // pred_region
    _
  $region85: #{progress_vit_forward.1} parent=0 // pred_fallthru
    _
  // Predicated region
  $region86: #{progress_vit_forward.1} parent=0 // pred_check
    _
  $region87: #{progress_vit_forward.1} parent=0 // pred_check_branch
    %73 = sbr.rel (0) target = $region89
  $region88: #{progress_vit_forward.1} parent=0 // pred_region
    _
  $region89: #{progress_vit_forward.1} parent=0 // pred_fallthru
    _
  // Predicated region
  $region90: #{progress_vit_forward.1} parent=0 // pred_check
    _
  $region91: #{progress_vit_forward.1} parent=0 // pred_check_branch
    %75 = sbr.rel (0) target = $region93
  $region92: #{progress_vit_forward.1} parent=0 // pred_region
    _
  $region93: #{progress_vit_forward.1} parent=0 // pred_fallthru
    _
  %v76 = vld [vmem:[%s3] sm:$0xff]
  %v77 = vld [vmem:[%s3 + $0x8] sm:$0xff]
  %v78 = vld [vmem:[%s3 + $0x10] sm:$0xf]
  %v79 = vld [vmem:[%s0] sm:$0xff]
  %v80 = vld [vmem:[%s0 + $0x8] sm:$0xff]
  %v81 = vld [vmem:[%s0 + $0x10] sm:$0xff]
  %v82 = vld [vmem:[%s0 + $0x18] sm:$0xff]
  %v83 = vld [vmem:[%s0 + $0x20] sm:$0xf]
  %v84 = vld [vmem:[%s0 + $0x28] sm:$0xf]
  %v85 = vld [vmem:[%s1] sm:$0xff]
  %v86 = vld [vmem:[%s1 + $0x8] sm:$0xff]
  %v87 = vld [vmem:[%s1 + $0x10] sm:$0xff]
  %v88 = vld [vmem:[%s1 + $0x18] sm:$0xff]
  %v89 = vld [vmem:[%s1 + $0x20] sm:$0xff]
  %v90 = vld [vmem:[%s1 + $0x28] sm:$0xff]
  %v91 = vld [vmem:[%s1 + $0x30] sm:$0xff]
  %v92 = vld [vmem:[%s1 + $0x38] sm:$0xff]
  %v93 = vld [vmem:[%s1 + $0x40] sm:$0xff]
  %v94 = vld [vmem:[%s1 + $0x48] sm:$0xff]
  %v95 = vld [vmem:[%s1 + $0x50] sm:$0xff]
  %v96 = vld [vmem:[%s1 + $0x58] sm:$0xff]
  %v97 = vld [vmem:[%s1 + $0x60] sm:$0xff]
  %v98 = vld [vmem:[%s1 + $0x68] sm:$0xff]
  %v99 = vld [vmem:[%s1 + $0x70] sm:$0xff]
  %v100 = vld [vmem:[%s1 + $0x78] sm:$0xff]
  %v101 = vld [vmem:[%s1 + $0x80] sm:$0xff]
  %v102 = vld [vmem:[%s1 + $0x88] sm:$0xff]
  %v103 = vld [vmem:[%s1 + $0x90] sm:$0xff]
  %v104 = vld [vmem:[%s1 + $0x98] sm:$0xff]
  %v105 = vld [vmem:[%s1 + $0xa0] sm:$0xff]
  %v106 = vld [vmem:[%s1 + $0xa8] sm:$0xff]
  %v107 = vld [vmem:[%s1 + $0xb0] sm:$0xff]
  %v108 = vld [vmem:[%s1 + $0xb8] sm:$0xff]
  %v109 = vld [vmem:[%s1 + $0xc0] sm:$0x1]
  %v110 = vld [vmem:[%s2] sm:$0xff]
  %v111 = vld [vmem:[%s2 + $0x8] sm:$0xff]
  %v112 = vld [vmem:[%s2 + $0x10] sm:$0xf]
  %vm113 = vcmask 531456
  %v115 = vsel %vm113, %v80, 0
  %v118 = vsel %vm113, %v82, 0
  %v121 = vsel %vm113, %v84, 0
  %vm123 = vcmask 1040384
  %v125 = vsel %vm123, %v109, 0
  %v127 = vand.u32 %v100, 4294901760
  %128 = vmatpush.msra.mxu0 %v127
  %v129 = vand.u32 %v99, 4294901760
  %130 = vmatpush.msra.mxu0 %v129
  %v131 = vand.u32 %v98, 4294901760
  %132 = vmatpush.msra.mxu0 %v131
  %v133 = vand.u32 %v97, 4294901760
  %134 = vmatpush.msra.mxu0 %v133
  %v135 = vand.u32 %v96, 4294901760
  %136 = vmatpush.msra.mxu0 %v135
  %v137 = vand.u32 %v95, 4294901760
  %138 = vmatpush.msra.mxu0 %v137
  %v139 = vand.u32 %v94, 4294901760
  %140 = vmatpush.msra.mxu0 %v139
  %v141 = vand.u32 %v93, 4294901760
  %142 = vmatpush.msra.mxu0 %v141
  %v143 = vand.u32 %v92, 4294901760
  %144 = vmatpush.msra.mxu0 %v143
  %v145 = vand.u32 %v91, 4294901760
  %146 = vmatpush.msra.mxu0 %v145
  %v147 = vand.u32 %v90, 4294901760
  %148 = vmatpush.msra.mxu0 %v147
  %v149 = vand.u32 %v89, 4294901760
  %150 = vmatpush.msra.mxu0 %v149
  %v151 = vand.u32 %v88, 4294901760
  %152 = vmatpush.msra.mxu0 %v151
  %v153 = vand.u32 %v87, 4294901760
  %154 = vmatpush.msra.mxu0 %v153
  %v155 = vand.u32 %v86, 4294901760
  %156 = vmatpush.msra.mxu0 %v155
  %v157 = vand.u32 %v85, 4294901760
  %158 = vmatpush.msra.mxu0 %v157
  %v159 = vand.u32 %v79, 4294901760
  %v160 = vsub.f32 %v79, %v159
  %v161 = vand.u32 %v160, 4294901760
  %v162 = vsub.f32 %v160, %v161
  %v163 = vand.u32 %v162, 4294901760
  %164 = vmatmul.f32.gmra.mxu0 %v163
  %v165 = vpop.f32.mrf.mxu0
  %v166 = vadd.f32 %v110, %v165
  %v167 = vand.u32 %v81, 4294901760
  %v168 = vsub.f32 %v81, %v167
  %v169 = vand.u32 %v168, 4294901760
  %v170 = vsub.f32 %v168, %v169
  %v171 = vand.u32 %v170, 4294901760
  %172 = vmatmul.f32.gmra.mxu0 %v171
  %v173 = vpop.f32.mrf.mxu0
  %v174 = vadd.f32 %v111, %v173
  %v175 = vand.u32 %v83, 4294901760
  %v176 = vsub.f32 %v83, %v175
  %v177 = vand.u32 %v176, 4294901760
  %v178 = vsub.f32 %v176, %v177
  %v179 = vand.u32 %v178, 4294901760
  %180 = vmatmul.f32.gmra.mxu0 %v179
  %v181 = vpop.f32.mrf.mxu0
  %v182 = vadd.f32 %v112, %v181
  %183 = vdwg.mxu0
  %v184 = vand.u32 %v100, 4294901760
  %v185 = vsub.f32 %v100, %v184
  %v186 = vand.u32 %v185, 4294901760
  %v187 = vsub.f32 %v185, %v186
  %v188 = vand.u32 %v187, 4294901760
  %189 = vmatpush.msra.mxu0 %v188
  %v190 = vand.u32 %v99, 4294901760
  %v191 = vsub.f32 %v99, %v190
  %v192 = vand.u32 %v191, 4294901760
  %v193 = vsub.f32 %v191, %v192
  %v194 = vand.u32 %v193, 4294901760
  %195 = vmatpush.msra.mxu0 %v194
  %v196 = vand.u32 %v98, 4294901760
  %v197 = vsub.f32 %v98, %v196
  %v198 = vand.u32 %v197, 4294901760
  %v199 = vsub.f32 %v197, %v198
  %v200 = vand.u32 %v199, 4294901760
  %201 = vmatpush.msra.mxu0 %v200
  %v202 = vand.u32 %v97, 4294901760
  %v203 = vsub.f32 %v97, %v202
  %v204 = vand.u32 %v203, 4294901760
  %v205 = vsub.f32 %v203, %v204
  %v206 = vand.u32 %v205, 4294901760
  %207 = vmatpush.msra.mxu0 %v206
  %v208 = vand.u32 %v96, 4294901760
  %v209 = vsub.f32 %v96, %v208
  %v210 = vand.u32 %v209, 4294901760
  %v211 = vsub.f32 %v209, %v210
  %v212 = vand.u32 %v211, 4294901760
  %213 = vmatpush.msra.mxu0 %v212
  %v214 = vand.u32 %v95, 4294901760
  %v215 = vsub.f32 %v95, %v214
  %v216 = vand.u32 %v215, 4294901760
  %v217 = vsub.f32 %v215, %v216
  %v218 = vand.u32 %v217, 4294901760
  %219 = vmatpush.msra.mxu0 %v218
  %v220 = vand.u32 %v94, 4294901760
  %v221 = vsub.f32 %v94, %v220
  %v222 = vand.u32 %v221, 4294901760
  %v223 = vsub.f32 %v221, %v222
  %v224 = vand.u32 %v223, 4294901760
  %225 = vmatpush.msra.mxu0 %v224
  %v226 = vand.u32 %v93, 4294901760
  %v227 = vsub.f32 %v93, %v226
  %v228 = vand.u32 %v227, 4294901760
  %v229 = vsub.f32 %v227, %v228
  %v230 = vand.u32 %v229, 4294901760
  %231 = vmatpush.msra.mxu0 %v230
  %v232 = vand.u32 %v92, 4294901760
  %v233 = vsub.f32 %v92, %v232
  %v234 = vand.u32 %v233, 4294901760
  %v235 = vsub.f32 %v233, %v234
  %v236 = vand.u32 %v235, 4294901760
  %237 = vmatpush.msra.mxu0 %v236
  %v238 = vand.u32 %v91, 4294901760
  %v239 = vsub.f32 %v91, %v238
  %v240 = vand.u32 %v239, 4294901760
  %v241 = vsub.f32 %v239, %v240
  %v242 = vand.u32 %v241, 4294901760
  %243 = vmatpush.msra.mxu0 %v242
  %v244 = vand.u32 %v90, 4294901760
  %v245 = vsub.f32 %v90, %v244
  %v246 = vand.u32 %v245, 4294901760
  %v247 = vsub.f32 %v245, %v246
  %v248 = vand.u32 %v247, 4294901760
  %249 = vmatpush.msra.mxu0 %v248
  %v250 = vand.u32 %v89, 4294901760
  %v251 = vsub.f32 %v89, %v250
  %v252 = vand.u32 %v251, 4294901760
  %v253 = vsub.f32 %v251, %v252
  %v254 = vand.u32 %v253, 4294901760
  %255 = vmatpush.msra.mxu0 %v254
  %v256 = vand.u32 %v88, 4294901760
  %v257 = vsub.f32 %v88, %v256
  %v258 = vand.u32 %v257, 4294901760
  %v259 = vsub.f32 %v257, %v258
  %v260 = vand.u32 %v259, 4294901760
  %261 = vmatpush.msra.mxu0 %v260
  %v262 = vand.u32 %v87, 4294901760
  %v263 = vsub.f32 %v87, %v262
  %v264 = vand.u32 %v263, 4294901760
  %v265 = vsub.f32 %v263, %v264
  %v266 = vand.u32 %v265, 4294901760
  %267 = vmatpush.msra.mxu0 %v266
  %v268 = vand.u32 %v86, 4294901760
  %v269 = vsub.f32 %v86, %v268
  %v270 = vand.u32 %v269, 4294901760
  %v271 = vsub.f32 %v269, %v270
  %v272 = vand.u32 %v271, 4294901760
  %273 = vmatpush.msra.mxu0 %v272
  %v274 = vand.u32 %v85, 4294901760
  %v275 = vsub.f32 %v85, %v274
  %v276 = vand.u32 %v275, 4294901760
  %v277 = vsub.f32 %v275, %v276
  %v278 = vand.u32 %v277, 4294901760
  %279 = vmatpush.msra.mxu0 %v278
  %v280 = vand.u32 %v79, 4294901760
  %281 = vmatmul.f32.gmra.mxu0 %v280
  %v282 = vpop.f32.mrf.mxu0
  %v283 = vadd.f32 %v166, %v282
  %v284 = vand.u32 %v81, 4294901760
  %285 = vmatmul.f32.gmra.mxu0 %v284
  %v286 = vpop.f32.mrf.mxu0
  %v287 = vadd.f32 %v174, %v286
  %v288 = vand.u32 %v83, 4294901760
  %289 = vmatmul.f32.gmra.mxu0 %v288
  %v290 = vpop.f32.mrf.mxu0
  %v291 = vadd.f32 %v182, %v290
  %292 = vdwg.mxu0
  %v293 = vand.u32 %v100, 4294901760
  %v294 = vsub.f32 %v100, %v293
  %295 = vmatpush.msra.mxu0 %v294
  %v296 = vand.u32 %v99, 4294901760
  %v297 = vsub.f32 %v99, %v296
  %298 = vmatpush.msra.mxu0 %v297
  %v299 = vand.u32 %v98, 4294901760
  %v300 = vsub.f32 %v98, %v299
  %301 = vmatpush.msra.mxu0 %v300
  %v302 = vand.u32 %v97, 4294901760
  %v303 = vsub.f32 %v97, %v302
  %304 = vmatpush.msra.mxu0 %v303
  %v305 = vand.u32 %v96, 4294901760
  %v306 = vsub.f32 %v96, %v305
  %307 = vmatpush.msra.mxu0 %v306
  %v308 = vand.u32 %v95, 4294901760
  %v309 = vsub.f32 %v95, %v308
  %310 = vmatpush.msra.mxu0 %v309
  %v311 = vand.u32 %v94, 4294901760
  %v312 = vsub.f32 %v94, %v311
  %313 = vmatpush.msra.mxu0 %v312
  %v314 = vand.u32 %v93, 4294901760
  %v315 = vsub.f32 %v93, %v314
  %316 = vmatpush.msra.mxu0 %v315
  %v317 = vand.u32 %v92, 4294901760
  %v318 = vsub.f32 %v92, %v317
  %319 = vmatpush.msra.mxu0 %v318
  %v320 = vand.u32 %v91, 4294901760
  %v321 = vsub.f32 %v91, %v320
  %322 = vmatpush.msra.mxu0 %v321
  %v323 = vand.u32 %v90, 4294901760
  %v324 = vsub.f32 %v90, %v323
  %325 = vmatpush.msra.mxu0 %v324
  %v326 = vand.u32 %v89, 4294901760
  %v327 = vsub.f32 %v89, %v326
  %328 = vmatpush.msra.mxu0 %v327
  %v329 = vand.u32 %v88, 4294901760
  %v330 = vsub.f32 %v88, %v329
  %331 = vmatpush.msra.mxu0 %v330
  %v332 = vand.u32 %v87, 4294901760
  %v333 = vsub.f32 %v87, %v332
  %334 = vmatpush.msra.mxu0 %v333
  %v335 = vand.u32 %v86, 4294901760
  %v336 = vsub.f32 %v86, %v335
  %337 = vmatpush.msra.mxu0 %v336
  %v338 = vand.u32 %v85, 4294901760
  %v339 = vsub.f32 %v85, %v338
  %340 = vmatpush.msra.mxu0 %v339
  %v341 = vand.u32 %v79, 4294901760
  %v342 = vsub.f32 %v79, %v341
  %343 = vmatmul.f32.gmra.mxu0 %v342
  %v344 = vpop.f32.mrf.mxu0
  %v345 = vadd.f32 %v283, %v344
  %v346 = vand.u32 %v81, 4294901760
  %v347 = vsub.f32 %v81, %v346
  %348 = vmatmul.f32.gmra.mxu0 %v347
  %v349 = vpop.f32.mrf.mxu0
  %v350 = vadd.f32 %v287, %v349
  %v351 = vand.u32 %v83, 4294901760
  %v352 = vsub.f32 %v83, %v351
  %353 = vmatmul.f32.gmra.mxu0 %v352
  %v354 = vpop.f32.mrf.mxu0
  %v355 = vadd.f32 %v291, %v354
  %356 = vdwg.mxu0
  %v357 = vand.u32 %v100, 4294901760
  %358 = vmatpush.msra.mxu0 %v357
  %v359 = vand.u32 %v99, 4294901760
  %360 = vmatpush.msra.mxu0 %v359
  %v361 = vand.u32 %v98, 4294901760
  %362 = vmatpush.msra.mxu0 %v361
  %v363 = vand.u32 %v97, 4294901760
  %364 = vmatpush.msra.mxu0 %v363
  %v365 = vand.u32 %v96, 4294901760
  %366 = vmatpush.msra.mxu0 %v365
  %v367 = vand.u32 %v95, 4294901760
  %368 = vmatpush.msra.mxu0 %v367
  %v369 = vand.u32 %v94, 4294901760
  %370 = vmatpush.msra.mxu0 %v369
  %v371 = vand.u32 %v93, 4294901760
  %372 = vmatpush.msra.mxu0 %v371
  %v373 = vand.u32 %v92, 4294901760
  %374 = vmatpush.msra.mxu0 %v373
  %v375 = vand.u32 %v91, 4294901760
  %376 = vmatpush.msra.mxu0 %v375
  %v377 = vand.u32 %v90, 4294901760
  %378 = vmatpush.msra.mxu0 %v377
  %v379 = vand.u32 %v89, 4294901760
  %380 = vmatpush.msra.mxu0 %v379
  %v381 = vand.u32 %v88, 4294901760
  %382 = vmatpush.msra.mxu0 %v381
  %v383 = vand.u32 %v87, 4294901760
  %384 = vmatpush.msra.mxu0 %v383
  %v385 = vand.u32 %v86, 4294901760
  %386 = vmatpush.msra.mxu0 %v385
  %v387 = vand.u32 %v85, 4294901760
  %388 = vmatpush.msra.mxu0 %v387
  %v389 = vand.u32 %v79, 4294901760
  %v390 = vsub.f32 %v79, %v389
  %v391 = vand.u32 %v390, 4294901760
  %392 = vmatmul.f32.gmra.mxu0 %v391
  %v393 = vpop.f32.mrf.mxu0
  %v394 = vadd.f32 %v345, %v393
  %v395 = vand.u32 %v81, 4294901760
  %v396 = vsub.f32 %v81, %v395
  %v397 = vand.u32 %v396, 4294901760
  %398 = vmatmul.f32.gmra.mxu0 %v397
  %v399 = vpop.f32.mrf.mxu0
  %v400 = vadd.f32 %v350, %v399
  %v401 = vand.u32 %v83, 4294901760
  %v402 = vsub.f32 %v83, %v401
  %v403 = vand.u32 %v402, 4294901760
  %404 = vmatmul.f32.gmra.mxu0 %v403
  %v405 = vpop.f32.mrf.mxu0
  %v406 = vadd.f32 %v355, %v405
  %407 = vdwg.mxu0
  %v408 = vand.u32 %v100, 4294901760
  %v409 = vsub.f32 %v100, %v408
  %v410 = vand.u32 %v409, 4294901760
  %411 = vmatpush.msra.mxu0 %v410
  %v412 = vand.u32 %v99, 4294901760
  %v413 = vsub.f32 %v99, %v412
  %v414 = vand.u32 %v413, 4294901760
  %415 = vmatpush.msra.mxu0 %v414
  %v416 = vand.u32 %v98, 4294901760
  %v417 = vsub.f32 %v98, %v416
  %v418 = vand.u32 %v417, 4294901760
  %419 = vmatpush.msra.mxu0 %v418
  %v420 = vand.u32 %v97, 4294901760
  %v421 = vsub.f32 %v97, %v420
  %v422 = vand.u32 %v421, 4294901760
  %423 = vmatpush.msra.mxu0 %v422
  %v424 = vand.u32 %v96, 4294901760
  %v425 = vsub.f32 %v96, %v424
  %v426 = vand.u32 %v425, 4294901760
  %427 = vmatpush.msra.mxu0 %v426
  %v428 = vand.u32 %v95, 4294901760
  %v429 = vsub.f32 %v95, %v428
  %v430 = vand.u32 %v429, 4294901760
  %431 = vmatpush.msra.mxu0 %v430
  %v432 = vand.u32 %v94, 4294901760
  %v433 = vsub.f32 %v94, %v432
  %v434 = vand.u32 %v433, 4294901760
  %435 = vmatpush.msra.mxu0 %v434
  %v436 = vand.u32 %v93, 4294901760
  %v437 = vsub.f32 %v93, %v436
  %v438 = vand.u32 %v437, 4294901760
  %439 = vmatpush.msra.mxu0 %v438
  %v440 = vand.u32 %v92, 4294901760
  %v441 = vsub.f32 %v92, %v440
  %v442 = vand.u32 %v441, 4294901760
  %443 = vmatpush.msra.mxu0 %v442
  %v444 = vand.u32 %v91, 4294901760
  %v445 = vsub.f32 %v91, %v444
  %v446 = vand.u32 %v445, 4294901760
  %447 = vmatpush.msra.mxu0 %v446
  %v448 = vand.u32 %v90, 4294901760
  %v449 = vsub.f32 %v90, %v448
  %v450 = vand.u32 %v449, 4294901760
  %451 = vmatpush.msra.mxu0 %v450
  %v452 = vand.u32 %v89, 4294901760
  %v453 = vsub.f32 %v89, %v452
  %v454 = vand.u32 %v453, 4294901760
  %455 = vmatpush.msra.mxu0 %v454
  %v456 = vand.u32 %v88, 4294901760
  %v457 = vsub.f32 %v88, %v456
  %v458 = vand.u32 %v457, 4294901760
  %459 = vmatpush.msra.mxu0 %v458
  %v460 = vand.u32 %v87, 4294901760
  %v461 = vsub.f32 %v87, %v460
  %v462 = vand.u32 %v461, 4294901760
  %463 = vmatpush.msra.mxu0 %v462
  %v464 = vand.u32 %v86, 4294901760
  %v465 = vsub.f32 %v86, %v464
  %v466 = vand.u32 %v465, 4294901760
  %467 = vmatpush.msra.mxu0 %v466
  %v468 = vand.u32 %v85, 4294901760
  %v469 = vsub.f32 %v85, %v468
  %v470 = vand.u32 %v469, 4294901760
  %471 = vmatpush.msra.mxu0 %v470
  %v472 = vand.u32 %v79, 4294901760
  %473 = vmatmul.f32.gmra.mxu0 %v472
  %v474 = vpop.f32.mrf.mxu0
  %v475 = vadd.f32 %v394, %v474
  %v476 = vand.u32 %v81, 4294901760
  %477 = vmatmul.f32.gmra.mxu0 %v476
  %v478 = vpop.f32.mrf.mxu0
  %v479 = vadd.f32 %v400, %v478
  %v480 = vand.u32 %v83, 4294901760
  %481 = vmatmul.f32.gmra.mxu0 %v480
  %v482 = vpop.f32.mrf.mxu0
  %v483 = vadd.f32 %v406, %v482
  %484 = vdwg.mxu0
  %v485 = vand.u32 %v100, 4294901760
  %486 = vmatpush.msra.mxu0 %v485
  %v487 = vand.u32 %v99, 4294901760
  %488 = vmatpush.msra.mxu0 %v487
  %v489 = vand.u32 %v98, 4294901760
  %490 = vmatpush.msra.mxu0 %v489
  %v491 = vand.u32 %v97, 4294901760
  %492 = vmatpush.msra.mxu0 %v491
  %v493 = vand.u32 %v96, 4294901760
  %494 = vmatpush.msra.mxu0 %v493
  %v495 = vand.u32 %v95, 4294901760
  %496 = vmatpush.msra.mxu0 %v495
  %v497 = vand.u32 %v94, 4294901760
  %498 = vmatpush.msra.mxu0 %v497
  %v499 = vand.u32 %v93, 4294901760
  %500 = vmatpush.msra.mxu0 %v499
  %v501 = vand.u32 %v92, 4294901760
  %502 = vmatpush.msra.mxu0 %v501
  %v503 = vand.u32 %v91, 4294901760
  %504 = vmatpush.msra.mxu0 %v503
  %v505 = vand.u32 %v90, 4294901760
  %506 = vmatpush.msra.mxu0 %v505
  %v507 = vand.u32 %v89, 4294901760
  %508 = vmatpush.msra.mxu0 %v507
  %v509 = vand.u32 %v88, 4294901760
  %510 = vmatpush.msra.mxu0 %v509
  %v511 = vand.u32 %v87, 4294901760
  %512 = vmatpush.msra.mxu0 %v511
  %v513 = vand.u32 %v86, 4294901760
  %514 = vmatpush.msra.mxu0 %v513
  %v515 = vand.u32 %v85, 4294901760
  %516 = vmatpush.msra.mxu0 %v515
  %v517 = vand.u32 %v79, 4294901760
  %518 = vmatmul.f32.gmra.mxu0 %v517
  %v519 = vpop.f32.mrf.mxu0
  %v520 = vadd.f32 %v475, %v519
  %v521 = vand.u32 %v81, 4294901760
  %522 = vmatmul.f32.gmra.mxu0 %v521
  %v523 = vpop.f32.mrf.mxu0
  %v524 = vadd.f32 %v479, %v523
  %v525 = vand.u32 %v83, 4294901760
  %526 = vmatmul.f32.gmra.mxu0 %v525
  %v527 = vpop.f32.mrf.mxu0
  %v528 = vadd.f32 %v483, %v527
  %529 = vdwg.mxu0
  %530 = vmatpush.msra.mxu0 0.0
  %531 = vmatpush.msra.mxu0 0.0
  %532 = vmatpush.msra.mxu0 0.0
  %533 = vmatpush.msra.mxu0 0.0
  %534 = vmatpush.msra.mxu0 0.0
  %535 = vmatpush.msra.mxu0 0.0
  %536 = vmatpush.msra.mxu0 0.0
  %v537 = vand.u32 %v125, 4294901760
  %538 = vmatpush.msra.mxu0 %v537
  %v539 = vand.u32 %v108, 4294901760
  %540 = vmatpush.msra.mxu0 %v539
  %v541 = vand.u32 %v107, 4294901760
  %542 = vmatpush.msra.mxu0 %v541
  %v543 = vand.u32 %v106, 4294901760
  %544 = vmatpush.msra.mxu0 %v543
  %v545 = vand.u32 %v105, 4294901760
  %546 = vmatpush.msra.mxu0 %v545
  %v547 = vand.u32 %v104, 4294901760
  %548 = vmatpush.msra.mxu0 %v547
  %v549 = vand.u32 %v103, 4294901760
  %550 = vmatpush.msra.mxu0 %v549
  %v551 = vand.u32 %v102, 4294901760
  %552 = vmatpush.msra.mxu0 %v551
  %v553 = vand.u32 %v101, 4294901760
  %554 = vmatpush.msra.mxu0 %v553
  %v555 = vand.u32 %v115, 4294901760
  %v556 = vsub.f32 %v115, %v555
  %v557 = vand.u32 %v556, 4294901760
  %v558 = vsub.f32 %v556, %v557
  %v559 = vand.u32 %v558, 4294901760
  %560 = vmatmul.f32.gmra.mxu0 %v559
  %v561 = vpop.f32.mrf.mxu0
  %v562 = vadd.f32 %v520, %v561
  %v563 = vand.u32 %v118, 4294901760
  %v564 = vsub.f32 %v118, %v563
  %v565 = vand.u32 %v564, 4294901760
  %v566 = vsub.f32 %v564, %v565
  %v567 = vand.u32 %v566, 4294901760
  %568 = vmatmul.f32.gmra.mxu0 %v567
  %v569 = vpop.f32.mrf.mxu0
  %v570 = vadd.f32 %v524, %v569
  %v571 = vand.u32 %v121, 4294901760
  %v572 = vsub.f32 %v121, %v571
  %v573 = vand.u32 %v572, 4294901760
  %v574 = vsub.f32 %v572, %v573
  %v575 = vand.u32 %v574, 4294901760
  %576 = vmatmul.f32.gmra.mxu0 %v575
  %v577 = vpop.f32.mrf.mxu0
  %v578 = vadd.f32 %v528, %v577
  %579 = vdwg.mxu0
  %580 = vmatpush.msra.mxu0 0.0
  %581 = vmatpush.msra.mxu0 0.0
  %582 = vmatpush.msra.mxu0 0.0
  %583 = vmatpush.msra.mxu0 0.0
  %584 = vmatpush.msra.mxu0 0.0
  %585 = vmatpush.msra.mxu0 0.0
  %586 = vmatpush.msra.mxu0 0.0
  %v587 = vand.u32 %v125, 4294901760
  %v588 = vsub.f32 %v125, %v587
  %v589 = vand.u32 %v588, 4294901760
  %v590 = vsub.f32 %v588, %v589
  %v591 = vand.u32 %v590, 4294901760
  %592 = vmatpush.msra.mxu0 %v591
  %v593 = vand.u32 %v108, 4294901760
  %v594 = vsub.f32 %v108, %v593
  %v595 = vand.u32 %v594, 4294901760
  %v596 = vsub.f32 %v594, %v595
  %v597 = vand.u32 %v596, 4294901760
  %598 = vmatpush.msra.mxu0 %v597
  %v599 = vand.u32 %v107, 4294901760
  %v600 = vsub.f32 %v107, %v599
  %v601 = vand.u32 %v600, 4294901760
  %v602 = vsub.f32 %v600, %v601
  %v603 = vand.u32 %v602, 4294901760
  %604 = vmatpush.msra.mxu0 %v603
  %v605 = vand.u32 %v106, 4294901760
  %v606 = vsub.f32 %v106, %v605
  %v607 = vand.u32 %v606, 4294901760
  %v608 = vsub.f32 %v606, %v607
  %v609 = vand.u32 %v608, 4294901760
  %610 = vmatpush.msra.mxu0 %v609
  %v611 = vand.u32 %v105, 4294901760
  %v612 = vsub.f32 %v105, %v611
  %v613 = vand.u32 %v612, 4294901760
  %v614 = vsub.f32 %v612, %v613
  %v615 = vand.u32 %v614, 4294901760
  %616 = vmatpush.msra.mxu0 %v615
  %v617 = vand.u32 %v104, 4294901760
  %v618 = vsub.f32 %v104, %v617
  %v619 = vand.u32 %v618, 4294901760
  %v620 = vsub.f32 %v618, %v619
  %v621 = vand.u32 %v620, 4294901760
  %622 = vmatpush.msra.mxu0 %v621
  %v623 = vand.u32 %v103, 4294901760
  %v624 = vsub.f32 %v103, %v623
  %v625 = vand.u32 %v624, 4294901760
  %v626 = vsub.f32 %v624, %v625
  %v627 = vand.u32 %v626, 4294901760
  %628 = vmatpush.msra.mxu0 %v627
  %v629 = vand.u32 %v102, 4294901760
  %v630 = vsub.f32 %v102, %v629
  %v631 = vand.u32 %v630, 4294901760
  %v632 = vsub.f32 %v630, %v631
  %v633 = vand.u32 %v632, 4294901760
  %634 = vmatpush.msra.mxu0 %v633
  %v635 = vand.u32 %v101, 4294901760
  %v636 = vsub.f32 %v101, %v635
  %v637 = vand.u32 %v636, 4294901760
  %v638 = vsub.f32 %v636, %v637
  %v639 = vand.u32 %v638, 4294901760
  %640 = vmatpush.msra.mxu0 %v639
  %v641 = vand.u32 %v115, 4294901760
  %642 = vmatmul.f32.gmra.mxu0 %v641
  %v643 = vpop.f32.mrf.mxu0
  %v644 = vadd.f32 %v562, %v643
  %v645 = vand.u32 %v118, 4294901760
  %646 = vmatmul.f32.gmra.mxu0 %v645
  %v647 = vpop.f32.mrf.mxu0
  %v648 = vadd.f32 %v570, %v647
  %v649 = vand.u32 %v121, 4294901760
  %650 = vmatmul.f32.gmra.mxu0 %v649
  %v651 = vpop.f32.mrf.mxu0
  %v652 = vadd.f32 %v578, %v651
  %653 = vdwg.mxu0
  %654 = vmatpush.msra.mxu0 0.0
  %655 = vmatpush.msra.mxu0 0.0
  %656 = vmatpush.msra.mxu0 0.0
  %657 = vmatpush.msra.mxu0 0.0
  %658 = vmatpush.msra.mxu0 0.0
  %659 = vmatpush.msra.mxu0 0.0
  %660 = vmatpush.msra.mxu0 0.0
  %v661 = vand.u32 %v125, 4294901760
  %v662 = vsub.f32 %v125, %v661
  %663 = vmatpush.msra.mxu0 %v662
  %v664 = vand.u32 %v108, 4294901760
  %v665 = vsub.f32 %v108, %v664
  %666 = vmatpush.msra.mxu0 %v665
  %v667 = vand.u32 %v107, 4294901760
  %v668 = vsub.f32 %v107, %v667
  %669 = vmatpush.msra.mxu0 %v668
  %v670 = vand.u32 %v106, 4294901760
  %v671 = vsub.f32 %v106, %v670
  %672 = vmatpush.msra.mxu0 %v671
  %v673 = vand.u32 %v105, 4294901760
  %v674 = vsub.f32 %v105, %v673
  %675 = vmatpush.msra.mxu0 %v674
  %v676 = vand.u32 %v104, 4294901760
  %v677 = vsub.f32 %v104, %v676
  %678 = vmatpush.msra.mxu0 %v677
  %v679 = vand.u32 %v103, 4294901760
  %v680 = vsub.f32 %v103, %v679
  %681 = vmatpush.msra.mxu0 %v680
  %v682 = vand.u32 %v102, 4294901760
  %v683 = vsub.f32 %v102, %v682
  %684 = vmatpush.msra.mxu0 %v683
  %v685 = vand.u32 %v101, 4294901760
  %v686 = vsub.f32 %v101, %v685
  %687 = vmatpush.msra.mxu0 %v686
  %v688 = vand.u32 %v115, 4294901760
  %v689 = vsub.f32 %v115, %v688
  %690 = vmatmul.f32.gmra.mxu0 %v689
  %v691 = vpop.f32.mrf.mxu0
  %v692 = vadd.f32 %v644, %v691
  %v693 = vand.u32 %v118, 4294901760
  %v694 = vsub.f32 %v118, %v693
  %695 = vmatmul.f32.gmra.mxu0 %v694
  %v696 = vpop.f32.mrf.mxu0
  %v697 = vadd.f32 %v648, %v696
  %v698 = vand.u32 %v121, 4294901760
  %v699 = vsub.f32 %v121, %v698
  %700 = vmatmul.f32.gmra.mxu0 %v699
  %v701 = vpop.f32.mrf.mxu0
  %v702 = vadd.f32 %v652, %v701
  %703 = vdwg.mxu0
  %704 = vmatpush.msra.mxu0 0.0
  %705 = vmatpush.msra.mxu0 0.0
  %706 = vmatpush.msra.mxu0 0.0
  %707 = vmatpush.msra.mxu0 0.0
  %708 = vmatpush.msra.mxu0 0.0
  %709 = vmatpush.msra.mxu0 0.0
  %710 = vmatpush.msra.mxu0 0.0
  %v711 = vand.u32 %v125, 4294901760
  %712 = vmatpush.msra.mxu0 %v711
  %v713 = vand.u32 %v108, 4294901760
  %714 = vmatpush.msra.mxu0 %v713
  %v715 = vand.u32 %v107, 4294901760
  %716 = vmatpush.msra.mxu0 %v715
  %v717 = vand.u32 %v106, 4294901760
  %718 = vmatpush.msra.mxu0 %v717
  %v719 = vand.u32 %v105, 4294901760
  %720 = vmatpush.msra.mxu0 %v719
  %v721 = vand.u32 %v104, 4294901760
  %722 = vmatpush.msra.mxu0 %v721
  %v723 = vand.u32 %v103, 4294901760
  %724 = vmatpush.msra.mxu0 %v723
  %v725 = vand.u32 %v102, 4294901760
  %726 = vmatpush.msra.mxu0 %v725
  %v727 = vand.u32 %v101, 4294901760
  %728 = vmatpush.msra.mxu0 %v727
  %v729 = vand.u32 %v115, 4294901760
  %v730 = vsub.f32 %v115, %v729
  %v731 = vand.u32 %v730, 4294901760
  %732 = vmatmul.f32.gmra.mxu0 %v731
  %v733 = vpop.f32.mrf.mxu0
  %v734 = vadd.f32 %v692, %v733
  %v735 = vand.u32 %v118, 4294901760
  %v736 = vsub.f32 %v118, %v735
  %v737 = vand.u32 %v736, 4294901760
  %738 = vmatmul.f32.gmra.mxu0 %v737
  %v739 = vpop.f32.mrf.mxu0
  %v740 = vadd.f32 %v697, %v739
  %v741 = vand.u32 %v121, 4294901760
  %v742 = vsub.f32 %v121, %v741
  %v743 = vand.u32 %v742, 4294901760
  %744 = vmatmul.f32.gmra.mxu0 %v743
  %v745 = vpop.f32.mrf.mxu0
  %v746 = vadd.f32 %v702, %v745
  %747 = vdwg.mxu0
  %748 = vmatpush.msra.mxu0 0.0
  %749 = vmatpush.msra.mxu0 0.0
  %750 = vmatpush.msra.mxu0 0.0
  %751 = vmatpush.msra.mxu0 0.0
  %752 = vmatpush.msra.mxu0 0.0
  %753 = vmatpush.msra.mxu0 0.0
  %754 = vmatpush.msra.mxu0 0.0
  %v755 = vand.u32 %v125, 4294901760
  %v756 = vsub.f32 %v125, %v755
  %v757 = vand.u32 %v756, 4294901760
  %758 = vmatpush.msra.mxu0 %v757
  %v759 = vand.u32 %v108, 4294901760
  %v760 = vsub.f32 %v108, %v759
  %v761 = vand.u32 %v760, 4294901760
  %762 = vmatpush.msra.mxu0 %v761
  %v763 = vand.u32 %v107, 4294901760
  %v764 = vsub.f32 %v107, %v763
  %v765 = vand.u32 %v764, 4294901760
  %766 = vmatpush.msra.mxu0 %v765
  %v767 = vand.u32 %v106, 4294901760
  %v768 = vsub.f32 %v106, %v767
  %v769 = vand.u32 %v768, 4294901760
  %770 = vmatpush.msra.mxu0 %v769
  %v771 = vand.u32 %v105, 4294901760
  %v772 = vsub.f32 %v105, %v771
  %v773 = vand.u32 %v772, 4294901760
  %774 = vmatpush.msra.mxu0 %v773
  %v775 = vand.u32 %v104, 4294901760
  %v776 = vsub.f32 %v104, %v775
  %v777 = vand.u32 %v776, 4294901760
  %778 = vmatpush.msra.mxu0 %v777
  %v779 = vand.u32 %v103, 4294901760
  %v780 = vsub.f32 %v103, %v779
  %v781 = vand.u32 %v780, 4294901760
  %782 = vmatpush.msra.mxu0 %v781
  %v783 = vand.u32 %v102, 4294901760
  %v784 = vsub.f32 %v102, %v783
  %v785 = vand.u32 %v784, 4294901760
  %786 = vmatpush.msra.mxu0 %v785
  %v787 = vand.u32 %v101, 4294901760
  %v788 = vsub.f32 %v101, %v787
  %v789 = vand.u32 %v788, 4294901760
  %790 = vmatpush.msra.mxu0 %v789
  %v791 = vand.u32 %v115, 4294901760
  %792 = vmatmul.f32.gmra.mxu0 %v791
  %v793 = vpop.f32.mrf.mxu0
  %v794 = vadd.f32 %v734, %v793
  %v795 = vand.u32 %v118, 4294901760
  %796 = vmatmul.f32.gmra.mxu0 %v795
  %v797 = vpop.f32.mrf.mxu0
  %v798 = vadd.f32 %v740, %v797
  %v799 = vand.u32 %v121, 4294901760
  %800 = vmatmul.f32.gmra.mxu0 %v799
  %v801 = vpop.f32.mrf.mxu0
  %v802 = vadd.f32 %v746, %v801
  %803 = vdwg.mxu0
  %804 = vmatpush.msra.mxu0 0.0
  %805 = vmatpush.msra.mxu0 0.0
  %806 = vmatpush.msra.mxu0 0.0
  %807 = vmatpush.msra.mxu0 0.0
  %808 = vmatpush.msra.mxu0 0.0
  %809 = vmatpush.msra.mxu0 0.0
  %810 = vmatpush.msra.mxu0 0.0
  %v811 = vand.u32 %v125, 4294901760
  %812 = vmatpush.msra.mxu0 %v811
  %v813 = vand.u32 %v108, 4294901760
  %814 = vmatpush.msra.mxu0 %v813
  %v815 = vand.u32 %v107, 4294901760
  %816 = vmatpush.msra.mxu0 %v815
  %v817 = vand.u32 %v106, 4294901760
  %818 = vmatpush.msra.mxu0 %v817
  %v819 = vand.u32 %v105, 4294901760
  %820 = vmatpush.msra.mxu0 %v819
  %v821 = vand.u32 %v104, 4294901760
  %822 = vmatpush.msra.mxu0 %v821
  %v823 = vand.u32 %v103, 4294901760
  %824 = vmatpush.msra.mxu0 %v823
  %v825 = vand.u32 %v102, 4294901760
  %826 = vmatpush.msra.mxu0 %v825
  %v827 = vand.u32 %v101, 4294901760
  %828 = vmatpush.msra.mxu0 %v827
  %v829 = vand.u32 %v115, 4294901760
  %830 = vmatmul.f32.gmra.mxu0 %v829
  %v831 = vpop.f32.mrf.mxu0
  %v832 = vadd.f32 %v794, %v831
  %v833 = vand.u32 %v118, 4294901760
  %834 = vmatmul.f32.gmra.mxu0 %v833
  %v835 = vpop.f32.mrf.mxu0
  %v836 = vadd.f32 %v798, %v835
  %v837 = vand.u32 %v121, 4294901760
  %838 = vmatmul.f32.gmra.mxu0 %v837
  %v839 = vpop.f32.mrf.mxu0
  %v840 = vadd.f32 %v802, %v839
  %841 = vdwg.mxu0
  %v842 = vld [vmem:[%s4] sm:$0x1]
  %v843 = vld [vmem:[%s5] sm:$0x1]
  %vm844 = vcmask 261120
  %v845 = vsel %vm844, %v832, 0.0
  %846 = vadd.xlane.f32.xlu0 %v845
  %v847 = vpop.xlane.xlu0 %846
  %v848 = vsel %vm844, %v836, 0.0
  %849 = vadd.xlane.f32.xlu0 %v848
  %v850 = vpop.xlane.xlu0 %849
  %vm851 = vcmask 257024
  %v852 = vsel %vm851, %v840, 0.0
  %853 = vadd.xlane.f32.xlu0 %v852
  %v854 = vpop.xlane.xlu0 %853
  %v855 = vrcp.pop 32.0
  %v856 = vmul.f32 32.0, %v855
  %v857 = vsub.f32 1.0, %v856
  %v858 = vmul.f32 %v855, %v857
  %v859 = vadd.f32 %v855, %v858
  %vm860 = vweird.f32 %v855
  %v861 = vsel %vm860, %v855, %v859
  %v862 = vmul.f32 %v847, %v861
  %v863 = vmul.f32 %v850, %v861
  %v864 = vmul.f32 %v854, %v861
  %v865 = vsub.f32 %v832, %v862
  %v866 = vsub.f32 %v836, %v863
  %v867 = vsub.f32 %v840, %v864
  %v868 = vmul.f32 %v865, %v865
  %v869 = vmul.f32 %v866, %v866
  %v870 = vmul.f32 %v867, %v867
  %v871 = vsel %vm844, %v868, 0.0
  %872 = vadd.xlane.f32.xlu0 %v871
  %v873 = vpop.xlane.xlu0 %872
  %v874 = vsel %vm844, %v869, 0.0
  %875 = vadd.xlane.f32.xlu0 %v874
  %v876 = vpop.xlane.xlu0 %875
  %v877 = vsel %vm851, %v870, 0.0
  %878 = vadd.xlane.f32.xlu0 %v877
  %v879 = vpop.xlane.xlu0 %878
  %v880 = vmul.f32 %v873, %v861
  %v881 = vmul.f32 %v876, %v861
  %v882 = vmul.f32 %v879, %v861
  %v883 = vadd.f32 %v880, 1e-12
  %v884 = vadd.f32 %v881, 1e-12
  %v885 = vadd.f32 %v882, 1e-12
  %v886 = vrsqrt.pop %v883
  %v887 = vmul.f32 %v886, %v883
  %v888 = vmul.f32 %v887, %v886
  %v889 = vmul.f32 0.5, %v888
  %v890 = vsub.f32 1.5, %v889
  %v891 = vmul.f32 %v886, %v890
  %vm892 = vweird.f32 %v883
  %vm893 = vweird.f32 %v886
  %vm894 = vmor %vm892, %vm893
  %v895 = vsel %vm894, %v886, %v891
  %v896 = vrsqrt.pop %v884
  %v897 = vmul.f32 %v896, %v884
  %v898 = vmul.f32 %v897, %v896
  %v899 = vmul.f32 0.5, %v898
  %v900 = vsub.f32 1.5, %v899
  %v901 = vmul.f32 %v896, %v900
  %vm902 = vweird.f32 %v884
  %vm903 = vweird.f32 %v896
  %vm904 = vmor %vm902, %vm903
  %v905 = vsel %vm904, %v896, %v901
  %v906 = vrsqrt.pop %v885
  %v907 = vmul.f32 %v906, %v885
  %v908 = vmul.f32 %v907, %v906
  %v909 = vmul.f32 0.5, %v908
  %v910 = vsub.f32 1.5, %v909
  %v911 = vmul.f32 %v906, %v910
  %vm912 = vweird.f32 %v885
  %vm913 = vweird.f32 %v906
  %vm914 = vmor %vm912, %vm913
  %v915 = vsel %vm914, %v906, %v911
  %v916 = vmul.f32 %v865, %v895
  %v917 = vmul.f32 %v866, %v905
  %v918 = vmul.f32 %v867, %v915
  %v920 = vperm.slane %v842, 0
  %v922 = vmul.f32 %v916, %v920
  %v923 = vmul.f32 %v917, %v920
  %v924 = vmul.f32 %v918, %v920
  %v926 = vperm.slane %v843, 0
  %v928 = vadd.f32 %v922, %v926
  %v929 = vadd.f32 %v923, %v926
  %v930 = vadd.f32 %v924, %v926
  %v931 = vld [vmem:[%s6] sm:$0xff]
  %v932 = vld [vmem:[%s6 + $0x8] sm:$0xff]
  %v933 = vld [vmem:[%s6 + $0x10] sm:$0xff]
  %v934 = vld [vmem:[%s6 + $0x18] sm:$0xff]
  %v935 = vld [vmem:[%s7] sm:$0x1]
  %v937 = vperm.slane %v935, 0
  %v940 = vsel %vm844, %v928, 0
  %v943 = vsel %vm844, %v929, 0
  %v946 = vsel %vm844, %v930, 0
  %948 = vmatpush.msra.mxu0 0.0
  %949 = vmatpush.msra.mxu0 0.0
  %950 = vmatpush.msra.mxu0 0.0
  %951 = vmatpush.msra.mxu0 0.0
  %952 = vmatpush.msra.mxu0 0.0
  %953 = vmatpush.msra.mxu0 0.0
  %954 = vmatpush.msra.mxu0 0.0
  %955 = vmatpush.msra.mxu0 0.0
  %956 = vmatpush.msra.mxu0 0.0
  %957 = vmatpush.msra.mxu0 0.0
  %958 = vmatpush.msra.mxu0 0.0
  %959 = vmatpush.msra.mxu0 0.0
  %v960 = vand.u32 %v934, 4294901760
  %961 = vmatpush.msra.mxu0 %v960
  %v962 = vand.u32 %v933, 4294901760
  %963 = vmatpush.msra.mxu0 %v962
  %v964 = vand.u32 %v932, 4294901760
  %965 = vmatpush.msra.mxu0 %v964
  %v966 = vand.u32 %v931, 4294901760
  %967 = vmatpush.msra.mxu0 %v966
  %v968 = vand.u32 %v940, 4294901760
  %v969 = vsub.f32 %v940, %v968
  %v970 = vand.u32 %v969, 4294901760
  %v971 = vsub.f32 %v969, %v970
  %v972 = vand.u32 %v971, 4294901760
  %973 = vmatmul.f32.gmra.mxu0 %v972
  %v974 = vpop.f32.mrf.mxu0
  %v975 = vadd.f32 %v937, %v974
  %v976 = vand.u32 %v943, 4294901760
  %v977 = vsub.f32 %v943, %v976
  %v978 = vand.u32 %v977, 4294901760
  %v979 = vsub.f32 %v977, %v978
  %v980 = vand.u32 %v979, 4294901760
  %981 = vmatmul.f32.gmra.mxu0 %v980
  %v982 = vpop.f32.mrf.mxu0
  %v983 = vadd.f32 %v937, %v982
  %v984 = vand.u32 %v946, 4294901760
  %v985 = vsub.f32 %v946, %v984
  %v986 = vand.u32 %v985, 4294901760
  %v987 = vsub.f32 %v985, %v986
  %v988 = vand.u32 %v987, 4294901760
  %989 = vmatmul.f32.gmra.mxu0 %v988
  %v990 = vpop.f32.mrf.mxu0
  %v991 = vadd.f32 %v937, %v990
  %992 = vdwg.mxu0
  %993 = vmatpush.msra.mxu0 0.0
  %994 = vmatpush.msra.mxu0 0.0
  %995 = vmatpush.msra.mxu0 0.0
  %996 = vmatpush.msra.mxu0 0.0
  %997 = vmatpush.msra.mxu0 0.0
  %998 = vmatpush.msra.mxu0 0.0
  %999 = vmatpush.msra.mxu0 0.0
  %1000 = vmatpush.msra.mxu0 0.0
  %1001 = vmatpush.msra.mxu0 0.0
  %1002 = vmatpush.msra.mxu0 0.0
  %1003 = vmatpush.msra.mxu0 0.0
  %1004 = vmatpush.msra.mxu0 0.0
  %v1005 = vand.u32 %v934, 4294901760
  %v1006 = vsub.f32 %v934, %v1005
  %v1007 = vand.u32 %v1006, 4294901760
  %v1008 = vsub.f32 %v1006, %v1007
  %v1009 = vand.u32 %v1008, 4294901760
  %1010 = vmatpush.msra.mxu0 %v1009
  %v1011 = vand.u32 %v933, 4294901760
  %v1012 = vsub.f32 %v933, %v1011
  %v1013 = vand.u32 %v1012, 4294901760
  %v1014 = vsub.f32 %v1012, %v1013
  %v1015 = vand.u32 %v1014, 4294901760
  %1016 = vmatpush.msra.mxu0 %v1015
  %v1017 = vand.u32 %v932, 4294901760
  %v1018 = vsub.f32 %v932, %v1017
  %v1019 = vand.u32 %v1018, 4294901760
  %v1020 = vsub.f32 %v1018, %v1019
  %v1021 = vand.u32 %v1020, 4294901760
  %1022 = vmatpush.msra.mxu0 %v1021
  %v1023 = vand.u32 %v931, 4294901760
  %v1024 = vsub.f32 %v931, %v1023
  %v1025 = vand.u32 %v1024, 4294901760
  %v1026 = vsub.f32 %v1024, %v1025
  %v1027 = vand.u32 %v1026, 4294901760
  %1028 = vmatpush.msra.mxu0 %v1027
  %v1029 = vand.u32 %v940, 4294901760
  %1030 = vmatmul.f32.gmra.mxu0 %v1029
  %v1031 = vpop.f32.mrf.mxu0
  %v1032 = vadd.f32 %v975, %v1031
  %v1033 = vand.u32 %v943, 4294901760
  %1034 = vmatmul.f32.gmra.mxu0 %v1033
  %v1035 = vpop.f32.mrf.mxu0
  %v1036 = vadd.f32 %v983, %v1035
  %v1037 = vand.u32 %v946, 4294901760
  %1038 = vmatmul.f32.gmra.mxu0 %v1037
  %v1039 = vpop.f32.mrf.mxu0
  %v1040 = vadd.f32 %v991, %v1039
  %1041 = vdwg.mxu0
  %1042 = vmatpush.msra.mxu0 0.0
  %1043 = vmatpush.msra.mxu0 0.0
  %1044 = vmatpush.msra.mxu0 0.0
  %1045 = vmatpush.msra.mxu0 0.0
  %1046 = vmatpush.msra.mxu0 0.0
  %1047 = vmatpush.msra.mxu0 0.0
  %1048 = vmatpush.msra.mxu0 0.0
  %1049 = vmatpush.msra.mxu0 0.0
  %1050 = vmatpush.msra.mxu0 0.0
  %1051 = vmatpush.msra.mxu0 0.0
  %1052 = vmatpush.msra.mxu0 0.0
  %1053 = vmatpush.msra.mxu0 0.0
  %v1054 = vand.u32 %v934, 4294901760
  %v1055 = vsub.f32 %v934, %v1054
  %1056 = vmatpush.msra.mxu0 %v1055
  %v1057 = vand.u32 %v933, 4294901760
  %v1058 = vsub.f32 %v933, %v1057
  %1059 = vmatpush.msra.mxu0 %v1058
  %v1060 = vand.u32 %v932, 4294901760
  %v1061 = vsub.f32 %v932, %v1060
  %1062 = vmatpush.msra.mxu0 %v1061
  %v1063 = vand.u32 %v931, 4294901760
  %v1064 = vsub.f32 %v931, %v1063
  %1065 = vmatpush.msra.mxu0 %v1064
  %v1066 = vand.u32 %v940, 4294901760
  %v1067 = vsub.f32 %v940, %v1066
  %1068 = vmatmul.f32.gmra.mxu0 %v1067
  %v1069 = vpop.f32.mrf.mxu0
  %v1070 = vadd.f32 %v1032, %v1069
  %v1071 = vand.u32 %v943, 4294901760
  %v1072 = vsub.f32 %v943, %v1071
  %1073 = vmatmul.f32.gmra.mxu0 %v1072
  %v1074 = vpop.f32.mrf.mxu0
  %v1075 = vadd.f32 %v1036, %v1074
  %v1076 = vand.u32 %v946, 4294901760
  %v1077 = vsub.f32 %v946, %v1076
  %1078 = vmatmul.f32.gmra.mxu0 %v1077
  %v1079 = vpop.f32.mrf.mxu0
  %v1080 = vadd.f32 %v1040, %v1079
  %1081 = vdwg.mxu0
  %1082 = vmatpush.msra.mxu0 0.0
  %1083 = vmatpush.msra.mxu0 0.0
  %1084 = vmatpush.msra.mxu0 0.0
  %1085 = vmatpush.msra.mxu0 0.0
  %1086 = vmatpush.msra.mxu0 0.0
  %1087 = vmatpush.msra.mxu0 0.0
  %1088 = vmatpush.msra.mxu0 0.0
  %1089 = vmatpush.msra.mxu0 0.0
  %1090 = vmatpush.msra.mxu0 0.0
  %1091 = vmatpush.msra.mxu0 0.0
  %1092 = vmatpush.msra.mxu0 0.0
  %1093 = vmatpush.msra.mxu0 0.0
  %v1094 = vand.u32 %v934, 4294901760
  %1095 = vmatpush.msra.mxu0 %v1094
  %v1096 = vand.u32 %v933, 4294901760
  %1097 = vmatpush.msra.mxu0 %v1096
  %v1098 = vand.u32 %v932, 4294901760
  %1099 = vmatpush.msra.mxu0 %v1098
  %v1100 = vand.u32 %v931, 4294901760
  %1101 = vmatpush.msra.mxu0 %v1100
  %v1102 = vand.u32 %v940, 4294901760
  %v1103 = vsub.f32 %v940, %v1102
  %v1104 = vand.u32 %v1103, 4294901760
  %1105 = vmatmul.f32.gmra.mxu0 %v1104
  %v1106 = vpop.f32.mrf.mxu0
  %v1107 = vadd.f32 %v1070, %v1106
  %v1108 = vand.u32 %v943, 4294901760
  %v1109 = vsub.f32 %v943, %v1108
  %v1110 = vand.u32 %v1109, 4294901760
  %1111 = vmatmul.f32.gmra.mxu0 %v1110
  %v1112 = vpop.f32.mrf.mxu0
  %v1113 = vadd.f32 %v1075, %v1112
  %v1114 = vand.u32 %v946, 4294901760
  %v1115 = vsub.f32 %v946, %v1114
  %v1116 = vand.u32 %v1115, 4294901760
  %1117 = vmatmul.f32.gmra.mxu0 %v1116
  %v1118 = vpop.f32.mrf.mxu0
  %v1119 = vadd.f32 %v1080, %v1118
  %1120 = vdwg.mxu0
  %1121 = vmatpush.msra.mxu0 0.0
  %1122 = vmatpush.msra.mxu0 0.0
  %1123 = vmatpush.msra.mxu0 0.0
  %1124 = vmatpush.msra.mxu0 0.0
  %1125 = vmatpush.msra.mxu0 0.0
  %1126 = vmatpush.msra.mxu0 0.0
  %1127 = vmatpush.msra.mxu0 0.0
  %1128 = vmatpush.msra.mxu0 0.0
  %1129 = vmatpush.msra.mxu0 0.0
  %1130 = vmatpush.msra.mxu0 0.0
  %1131 = vmatpush.msra.mxu0 0.0
  %1132 = vmatpush.msra.mxu0 0.0
  %v1133 = vand.u32 %v934, 4294901760
  %v1134 = vsub.f32 %v934, %v1133
  %v1135 = vand.u32 %v1134, 4294901760
  %1136 = vmatpush.msra.mxu0 %v1135
  %v1137 = vand.u32 %v933, 4294901760
  %v1138 = vsub.f32 %v933, %v1137
  %v1139 = vand.u32 %v1138, 4294901760
  %1140 = vmatpush.msra.mxu0 %v1139
  %v1141 = vand.u32 %v932, 4294901760
  %v1142 = vsub.f32 %v932, %v1141
  %v1143 = vand.u32 %v1142, 4294901760
  %1144 = vmatpush.msra.mxu0 %v1143
  %v1145 = vand.u32 %v931, 4294901760
  %v1146 = vsub.f32 %v931, %v1145
  %v1147 = vand.u32 %v1146, 4294901760
  %1148 = vmatpush.msra.mxu0 %v1147
  %v1149 = vand.u32 %v940, 4294901760
  %1150 = vmatmul.f32.gmra.mxu0 %v1149
  %v1151 = vpop.f32.mrf.mxu0
  %v1152 = vadd.f32 %v1107, %v1151
  %v1153 = vand.u32 %v943, 4294901760
  %1154 = vmatmul.f32.gmra.mxu0 %v1153
  %v1155 = vpop.f32.mrf.mxu0
  %v1156 = vadd.f32 %v1113, %v1155
  %v1157 = vand.u32 %v946, 4294901760
  %1158 = vmatmul.f32.gmra.mxu0 %v1157
  %v1159 = vpop.f32.mrf.mxu0
  %v1160 = vadd.f32 %v1119, %v1159
  %1161 = vdwg.mxu0
  %1162 = vmatpush.msra.mxu0 0.0
  %1163 = vmatpush.msra.mxu0 0.0
  %1164 = vmatpush.msra.mxu0 0.0
  %1165 = vmatpush.msra.mxu0 0.0
  %1166 = vmatpush.msra.mxu0 0.0
  %1167 = vmatpush.msra.mxu0 0.0
  %1168 = vmatpush.msra.mxu0 0.0
  %1169 = vmatpush.msra.mxu0 0.0
  %1170 = vmatpush.msra.mxu0 0.0
  %1171 = vmatpush.msra.mxu0 0.0
  %1172 = vmatpush.msra.mxu0 0.0
  %1173 = vmatpush.msra.mxu0 0.0
  %v1174 = vand.u32 %v934, 4294901760
  %1175 = vmatpush.msra.mxu0 %v1174
  %v1176 = vand.u32 %v933, 4294901760
  %1177 = vmatpush.msra.mxu0 %v1176
  %v1178 = vand.u32 %v932, 4294901760
  %1179 = vmatpush.msra.mxu0 %v1178
  %v1180 = vand.u32 %v931, 4294901760
  %1181 = vmatpush.msra.mxu0 %v1180
  %v1182 = vand.u32 %v940, 4294901760
  %1183 = vmatmul.f32.gmra.mxu0 %v1182
  %v1184 = vpop.f32.mrf.mxu0
  %v1185 = vadd.f32 %v1152, %v1184
  %v1186 = vand.u32 %v943, 4294901760
  %1187 = vmatmul.f32.gmra.mxu0 %v1186
  %v1188 = vpop.f32.mrf.mxu0
  %v1189 = vadd.f32 %v1156, %v1188
  %v1190 = vand.u32 %v946, 4294901760
  %1191 = vmatmul.f32.gmra.mxu0 %v1190
  %v1192 = vpop.f32.mrf.mxu0
  %v1193 = vadd.f32 %v1160, %v1192
  %1194 = vdwg.mxu0
  %v1195 = vld [vmem:[%s8] sm:$0xff]
  %v1196 = vld [vmem:[%s8 + $0x8] sm:$0xff]
  %v1197 = vld [vmem:[%s8 + $0x10] sm:$0xff]
  %v1198 = vld [vmem:[%s8 + $0x18] sm:$0xff]
  %1202 = vrot.lane.b32.xlu0 %v1185, 96
  %v1203 = vpop.permute.xlu0 %1202
  %1204 = vrot.lane.b32.xlu0 %v1189, 96
  %v1205 = vpop.permute.xlu0 %1204
  %1206 = vrot.lane.b32.xlu0 %v1193, 96
  %v1207 = vpop.permute.xlu0 %1206
  %vm1208 = vcmask 64512
  %v1209 = vsel %vm1208, %v1185, 0
  %v1211 = vsel %vm1208, %v1189, 0
  %v1213 = vsel %vm1208, %v1193, 0
  %v1215 = vsel %vm1208, %v1203, 0
  %v1217 = vsel %vm1208, %v1205, 0
  %v1219 = vsel %vm1208, %v1207, 0
  %1221 = vmatpush.xpose.msra.mxu0 0.0
  %1222 = vmatpush.xpose.msra.mxu0 0.0
  %1223 = vmatpush.xpose.msra.mxu0 0.0
  %1224 = vmatpush.xpose.msra.mxu0 0.0
  %1225 = vmatpush.xpose.msra.mxu0 0.0
  %1226 = vmatpush.xpose.msra.mxu0 0.0
  %1227 = vmatpush.xpose.msra.mxu0 0.0
  %1228 = vmatpush.xpose.msra.mxu0 0.0
  %1229 = vmatpush.xpose.msra.mxu0 0.0
  %1230 = vmatpush.xpose.msra.mxu0 0.0
  %1231 = vmatpush.xpose.msra.mxu0 0.0
  %1232 = vmatpush.xpose.msra.mxu0 0.0
  %1233 = vmatpush.xpose.msra.mxu0 0.0
  %v1234 = vand.u32 %v1219, 4294901760
  %1235 = vmatpush.xpose.msra.mxu0 %v1234
  %v1236 = vand.u32 %v1217, 4294901760
  %1237 = vmatpush.xpose.msra.mxu0 %v1236
  %v1238 = vand.u32 %v1215, 4294901760
  %1239 = vmatpush.xpose.msra.mxu0 %v1238
  %v1240 = vand.u32 %v1209, 4294901760
  %v1241 = vsub.f32 %v1209, %v1240
  %v1242 = vand.u32 %v1241, 4294901760
  %v1243 = vsub.f32 %v1241, %v1242
  %v1244 = vand.u32 %v1243, 4294901760
  %1245 = vmatmul.f32.gmra.mxu0 %v1244
  %v1246 = vpop.f32.mrf.mxu0
  %v1247 = vadd.f32 0.0, %v1246
  %v1248 = vand.u32 %v1211, 4294901760
  %v1249 = vsub.f32 %v1211, %v1248
  %v1250 = vand.u32 %v1249, 4294901760
  %v1251 = vsub.f32 %v1249, %v1250
  %v1252 = vand.u32 %v1251, 4294901760
  %1253 = vmatmul.f32.gmra.mxu0 %v1252
  %v1254 = vpop.f32.mrf.mxu0
  %v1255 = vadd.f32 0.0, %v1254
  %v1256 = vand.u32 %v1213, 4294901760
  %v1257 = vsub.f32 %v1213, %v1256
  %v1258 = vand.u32 %v1257, 4294901760
  %v1259 = vsub.f32 %v1257, %v1258
  %v1260 = vand.u32 %v1259, 4294901760
  %1261 = vmatmul.f32.gmra.mxu0 %v1260
  %v1262 = vpop.f32.mrf.mxu0
  %v1263 = vadd.f32 0.0, %v1262
  %1264 = vdwg.mxu0
  %1265 = vmatpush.xpose.msra.mxu0 0.0
  %1266 = vmatpush.xpose.msra.mxu0 0.0
  %1267 = vmatpush.xpose.msra.mxu0 0.0
  %1268 = vmatpush.xpose.msra.mxu0 0.0
  %1269 = vmatpush.xpose.msra.mxu0 0.0
  %1270 = vmatpush.xpose.msra.mxu0 0.0
  %1271 = vmatpush.xpose.msra.mxu0 0.0
  %1272 = vmatpush.xpose.msra.mxu0 0.0
  %1273 = vmatpush.xpose.msra.mxu0 0.0
  %1274 = vmatpush.xpose.msra.mxu0 0.0
  %1275 = vmatpush.xpose.msra.mxu0 0.0
  %1276 = vmatpush.xpose.msra.mxu0 0.0
  %1277 = vmatpush.xpose.msra.mxu0 0.0
  %v1278 = vand.u32 %v1219, 4294901760
  %v1279 = vsub.f32 %v1219, %v1278
  %v1280 = vand.u32 %v1279, 4294901760
  %v1281 = vsub.f32 %v1279, %v1280
  %v1282 = vand.u32 %v1281, 4294901760
  %1283 = vmatpush.xpose.msra.mxu0 %v1282
  %v1284 = vand.u32 %v1217, 4294901760
  %v1285 = vsub.f32 %v1217, %v1284
  %v1286 = vand.u32 %v1285, 4294901760
  %v1287 = vsub.f32 %v1285, %v1286
  %v1288 = vand.u32 %v1287, 4294901760
  %1289 = vmatpush.xpose.msra.mxu0 %v1288
  %v1290 = vand.u32 %v1215, 4294901760
  %v1291 = vsub.f32 %v1215, %v1290
  %v1292 = vand.u32 %v1291, 4294901760
  %v1293 = vsub.f32 %v1291, %v1292
  %v1294 = vand.u32 %v1293, 4294901760
  %1295 = vmatpush.xpose.msra.mxu0 %v1294
  %v1296 = vand.u32 %v1209, 4294901760
  %1297 = vmatmul.f32.gmra.mxu0 %v1296
  %v1298 = vpop.f32.mrf.mxu0
  %v1299 = vadd.f32 %v1247, %v1298
  %v1300 = vand.u32 %v1211, 4294901760
  %1301 = vmatmul.f32.gmra.mxu0 %v1300
  %v1302 = vpop.f32.mrf.mxu0
  %v1303 = vadd.f32 %v1255, %v1302
  %v1304 = vand.u32 %v1213, 4294901760
  %1305 = vmatmul.f32.gmra.mxu0 %v1304
  %v1306 = vpop.f32.mrf.mxu0
  %v1307 = vadd.f32 %v1263, %v1306
  %1308 = vdwg.mxu0
  %1309 = vmatpush.xpose.msra.mxu0 0.0
  %1310 = vmatpush.xpose.msra.mxu0 0.0
  %1311 = vmatpush.xpose.msra.mxu0 0.0
  %1312 = vmatpush.xpose.msra.mxu0 0.0
  %1313 = vmatpush.xpose.msra.mxu0 0.0
  %1314 = vmatpush.xpose.msra.mxu0 0.0
  %1315 = vmatpush.xpose.msra.mxu0 0.0
  %1316 = vmatpush.xpose.msra.mxu0 0.0
  %1317 = vmatpush.xpose.msra.mxu0 0.0
  %1318 = vmatpush.xpose.msra.mxu0 0.0
  %1319 = vmatpush.xpose.msra.mxu0 0.0
  %1320 = vmatpush.xpose.msra.mxu0 0.0
  %1321 = vmatpush.xpose.msra.mxu0 0.0
  %v1322 = vand.u32 %v1219, 4294901760
  %v1323 = vsub.f32 %v1219, %v1322
  %1324 = vmatpush.xpose.msra.mxu0 %v1323
  %v1325 = vand.u32 %v1217, 4294901760
  %v1326 = vsub.f32 %v1217, %v1325
  %1327 = vmatpush.xpose.msra.mxu0 %v1326
  %v1328 = vand.u32 %v1215, 4294901760
  %v1329 = vsub.f32 %v1215, %v1328
  %1330 = vmatpush.xpose.msra.mxu0 %v1329
  %v1331 = vand.u32 %v1209, 4294901760
  %v1332 = vsub.f32 %v1209, %v1331
  %1333 = vmatmul.f32.gmra.mxu0 %v1332
  %v1334 = vpop.f32.mrf.mxu0
  %v1335 = vadd.f32 %v1299, %v1334
  %v1336 = vand.u32 %v1211, 4294901760
  %v1337 = vsub.f32 %v1211, %v1336
  %1338 = vmatmul.f32.gmra.mxu0 %v1337
  %v1339 = vpop.f32.mrf.mxu0
  %v1340 = vadd.f32 %v1303, %v1339
  %v1341 = vand.u32 %v1213, 4294901760
  %v1342 = vsub.f32 %v1213, %v1341
  %1343 = vmatmul.f32.gmra.mxu0 %v1342
  %v1344 = vpop.f32.mrf.mxu0
  %v1345 = vadd.f32 %v1307, %v1344
  %1346 = vdwg.mxu0
  %1347 = vmatpush.xpose.msra.mxu0 0.0
  %1348 = vmatpush.xpose.msra.mxu0 0.0
  %1349 = vmatpush.xpose.msra.mxu0 0.0
  %1350 = vmatpush.xpose.msra.mxu0 0.0
  %1351 = vmatpush.xpose.msra.mxu0 0.0
  %1352 = vmatpush.xpose.msra.mxu0 0.0
  %1353 = vmatpush.xpose.msra.mxu0 0.0
  %1354 = vmatpush.xpose.msra.mxu0 0.0
  %1355 = vmatpush.xpose.msra.mxu0 0.0
  %1356 = vmatpush.xpose.msra.mxu0 0.0
  %1357 = vmatpush.xpose.msra.mxu0 0.0
  %1358 = vmatpush.xpose.msra.mxu0 0.0
  %1359 = vmatpush.xpose.msra.mxu0 0.0
  %v1360 = vand.u32 %v1219, 4294901760
  %1361 = vmatpush.xpose.msra.mxu0 %v1360
  %v1362 = vand.u32 %v1217, 4294901760
  %1363 = vmatpush.xpose.msra.mxu0 %v1362
  %v1364 = vand.u32 %v1215, 4294901760
  %1365 = vmatpush.xpose.msra.mxu0 %v1364
  %v1366 = vand.u32 %v1209, 4294901760
  %v1367 = vsub.f32 %v1209, %v1366
  %v1368 = vand.u32 %v1367, 4294901760
  %1369 = vmatmul.f32.gmra.mxu0 %v1368
  %v1370 = vpop.f32.mrf.mxu0
  %v1371 = vadd.f32 %v1335, %v1370
  %v1372 = vand.u32 %v1211, 4294901760
  %v1373 = vsub.f32 %v1211, %v1372
  %v1374 = vand.u32 %v1373, 4294901760
  %1375 = vmatmul.f32.gmra.mxu0 %v1374
  %v1376 = vpop.f32.mrf.mxu0
  %v1377 = vadd.f32 %v1340, %v1376
  %v1378 = vand.u32 %v1213, 4294901760
  %v1379 = vsub.f32 %v1213, %v1378
  %v1380 = vand.u32 %v1379, 4294901760
  %1381 = vmatmul.f32.gmra.mxu0 %v1380
  %v1382 = vpop.f32.mrf.mxu0
  %v1383 = vadd.f32 %v1345, %v1382
  %1384 = vdwg.mxu0
  %1385 = vmatpush.xpose.msra.mxu0 0.0
  %1386 = vmatpush.xpose.msra.mxu0 0.0
  %1387 = vmatpush.xpose.msra.mxu0 0.0
  %1388 = vmatpush.xpose.msra.mxu0 0.0
  %1389 = vmatpush.xpose.msra.mxu0 0.0
  %1390 = vmatpush.xpose.msra.mxu0 0.0
  %1391 = vmatpush.xpose.msra.mxu0 0.0
  %1392 = vmatpush.xpose.msra.mxu0 0.0
  %1393 = vmatpush.xpose.msra.mxu0 0.0
  %1394 = vmatpush.xpose.msra.mxu0 0.0
  %1395 = vmatpush.xpose.msra.mxu0 0.0
  %1396 = vmatpush.xpose.msra.mxu0 0.0
  %1397 = vmatpush.xpose.msra.mxu0 0.0
  %v1398 = vand.u32 %v1219, 4294901760
  %v1399 = vsub.f32 %v1219, %v1398
  %v1400 = vand.u32 %v1399, 4294901760
  %1401 = vmatpush.xpose.msra.mxu0 %v1400
  %v1402 = vand.u32 %v1217, 4294901760
  %v1403 = vsub.f32 %v1217, %v1402
  %v1404 = vand.u32 %v1403, 4294901760
  %1405 = vmatpush.xpose.msra.mxu0 %v1404
  %v1406 = vand.u32 %v1215, 4294901760
  %v1407 = vsub.f32 %v1215, %v1406
  %v1408 = vand.u32 %v1407, 4294901760
  %1409 = vmatpush.xpose.msra.mxu0 %v1408
  %v1410 = vand.u32 %v1209, 4294901760
  %1411 = vmatmul.f32.gmra.mxu0 %v1410
  %v1412 = vpop.f32.mrf.mxu0
  %v1413 = vadd.f32 %v1371, %v1412
  %v1414 = vand.u32 %v1211, 4294901760
  %1415 = vmatmul.f32.gmra.mxu0 %v1414
  %v1416 = vpop.f32.mrf.mxu0
  %v1417 = vadd.f32 %v1377, %v1416
  %v1418 = vand.u32 %v1213, 4294901760
  %1419 = vmatmul.f32.gmra.mxu0 %v1418
  %v1420 = vpop.f32.mrf.mxu0
  %v1421 = vadd.f32 %v1383, %v1420
  %1422 = vdwg.mxu0
  %1423 = vmatpush.xpose.msra.mxu0 0.0
  %1424 = vmatpush.xpose.msra.mxu0 0.0
  %1425 = vmatpush.xpose.msra.mxu0 0.0
  %1426 = vmatpush.xpose.msra.mxu0 0.0
  %1427 = vmatpush.xpose.msra.mxu0 0.0
  %1428 = vmatpush.xpose.msra.mxu0 0.0
  %1429 = vmatpush.xpose.msra.mxu0 0.0
  %1430 = vmatpush.xpose.msra.mxu0 0.0
  %1431 = vmatpush.xpose.msra.mxu0 0.0
  %1432 = vmatpush.xpose.msra.mxu0 0.0
  %1433 = vmatpush.xpose.msra.mxu0 0.0
  %1434 = vmatpush.xpose.msra.mxu0 0.0
  %1435 = vmatpush.xpose.msra.mxu0 0.0
  %v1436 = vand.u32 %v1219, 4294901760
  %1437 = vmatpush.xpose.msra.mxu0 %v1436
  %v1438 = vand.u32 %v1217, 4294901760
  %1439 = vmatpush.xpose.msra.mxu0 %v1438
  %v1440 = vand.u32 %v1215, 4294901760
  %1441 = vmatpush.xpose.msra.mxu0 %v1440
  %v1442 = vand.u32 %v1209, 4294901760
  %1443 = vmatmul.f32.gmra.mxu0 %v1442
  %v1444 = vpop.f32.mrf.mxu0
  %v1445 = vadd.f32 %v1413, %v1444
  %v1446 = vand.u32 %v1211, 4294901760
  %1447 = vmatmul.f32.gmra.mxu0 %v1446
  %v1448 = vpop.f32.mrf.mxu0
  %v1449 = vadd.f32 %v1417, %v1448
  %v1450 = vand.u32 %v1213, 4294901760
  %1451 = vmatmul.f32.gmra.mxu0 %v1450
  %v1452 = vpop.f32.mrf.mxu0
  %v1453 = vadd.f32 %v1421, %v1452
  %1454 = vdwg.mxu0
  %v1455 = vmul.f32 %v1445, 0.35355338
  %v1456 = vmul.f32 %v1449, 0.35355338
  %v1457 = vmul.f32 %v1453, 0.35355338
  %v1458 = vadd.f32 %v1455, %v76
  %v1459 = vadd.f32 %v1456, %v77
  %v1460 = vadd.f32 %v1457, %v78
  %vm1461 = vcmask 162816
  %v1462 = vsel %vm1461, %v1458, -inf
  %1463 = vmax.xlane.f32.xlu0 %v1462
  %v1464 = vpop.xlane.xlu0 %1463
  %v1465 = vsel %vm1461, %v1459, -inf
  %1466 = vmax.xlane.f32.xlu0 %v1465
  %v1467 = vpop.xlane.xlu0 %1466
  %vm1468 = vcmask 158720
  %v1469 = vsel %vm1468, %v1460, -inf
  %1470 = vmax.xlane.f32.xlu0 %v1469
  %v1471 = vpop.xlane.xlu0 %1470
  %v1472 = vsub.f32 %v1458, %v1464
  %v1473 = vsub.f32 %v1459, %v1467
  %v1474 = vsub.f32 %v1460, %v1471
  %v1475 = vmul.f32 %v1472, 1.442695
  %v1476 = vpow.pop %v1475
  %v1477 = vmul.f32 %v1473, 1.442695
  %v1478 = vpow.pop %v1477
  %v1479 = vmul.f32 %v1474, 1.442695
  %v1480 = vpow.pop %v1479
  %v1481 = vsel %vm1461, %v1476, 0.0
  %1482 = vadd.xlane.f32.xlu0 %v1481
  %v1483 = vpop.xlane.xlu0 %1482
  %v1484 = vsel %vm1461, %v1478, 0.0
  %1485 = vadd.xlane.f32.xlu0 %v1484
  %v1486 = vpop.xlane.xlu0 %1485
  %v1487 = vsel %vm1468, %v1480, 0.0
  %1488 = vadd.xlane.f32.xlu0 %v1487
  %v1489 = vpop.xlane.xlu0 %1488
  %v1490 = vrcp.pop %v1483
  %v1491 = vrcp.pop %v1486
  %v1492 = vrcp.pop %v1489
  %v1493 = vmul.f32 %v1476, %v1490
  %v1494 = vmul.f32 %v1478, %v1491
  %v1495 = vmul.f32 %v1480, %v1492
  %1496 = vrot.lane.b32.xlu0 %v1185, 64
  %v1497 = vpop.permute.xlu0 %1496
  %1498 = vrot.lane.b32.xlu0 %v1189, 64
  %v1499 = vpop.permute.xlu0 %1498
  %1500 = vrot.lane.b32.xlu0 %v1193, 64
  %v1501 = vpop.permute.xlu0 %1500
  %v1505 = vsel %vm1461, %v1493, 0
  %v1508 = vsel %vm1461, %v1494, 0
  %v1511 = vsel %vm1461, %v1495, 0
  %vm1513 = vcmask 1043456
  %v1514 = vsel %vm1513, %v1501, 0
  %1516 = vmatpush.msra.mxu0 0.0
  %1517 = vmatpush.msra.mxu0 0.0
  %1518 = vmatpush.msra.mxu0 0.0
  %1519 = vmatpush.msra.mxu0 0.0
  %1520 = vmatpush.msra.mxu0 0.0
  %1521 = vmatpush.msra.mxu0 0.0
  %1522 = vmatpush.msra.mxu0 0.0
  %1523 = vmatpush.msra.mxu0 0.0
  %1524 = vmatpush.msra.mxu0 0.0
  %1525 = vmatpush.msra.mxu0 0.0
  %1526 = vmatpush.msra.mxu0 0.0
  %1527 = vmatpush.msra.mxu0 0.0
  %1528 = vmatpush.msra.mxu0 0.0
  %v1529 = vand.u32 %v1514, 4294901760
  %1530 = vmatpush.msra.mxu0 %v1529
  %v1531 = vand.u32 %v1499, 4294901760
  %1532 = vmatpush.msra.mxu0 %v1531
  %v1533 = vand.u32 %v1497, 4294901760
  %1534 = vmatpush.msra.mxu0 %v1533
  %v1535 = vand.u32 %v1505, 4294901760
  %v1536 = vsub.f32 %v1505, %v1535
  %v1537 = vand.u32 %v1536, 4294901760
  %v1538 = vsub.f32 %v1536, %v1537
  %v1539 = vand.u32 %v1538, 4294901760
  %1540 = vmatmul.f32.gmra.mxu0 %v1539
  %v1541 = vpop.f32.mrf.mxu0
  %v1542 = vadd.f32 0.0, %v1541
  %v1543 = vand.u32 %v1508, 4294901760
  %v1544 = vsub.f32 %v1508, %v1543
  %v1545 = vand.u32 %v1544, 4294901760
  %v1546 = vsub.f32 %v1544, %v1545
  %v1547 = vand.u32 %v1546, 4294901760
  %1548 = vmatmul.f32.gmra.mxu0 %v1547
  %v1549 = vpop.f32.mrf.mxu0
  %v1550 = vadd.f32 0.0, %v1549
  %v1551 = vand.u32 %v1511, 4294901760
  %v1552 = vsub.f32 %v1511, %v1551
  %v1553 = vand.u32 %v1552, 4294901760
  %v1554 = vsub.f32 %v1552, %v1553
  %v1555 = vand.u32 %v1554, 4294901760
  %1556 = vmatmul.f32.gmra.mxu0 %v1555
  %v1557 = vpop.f32.mrf.mxu0
  %v1558 = vadd.f32 0.0, %v1557
  %1559 = vdwg.mxu0
  %1560 = vmatpush.msra.mxu0 0.0
  %1561 = vmatpush.msra.mxu0 0.0
  %1562 = vmatpush.msra.mxu0 0.0
  %1563 = vmatpush.msra.mxu0 0.0
  %1564 = vmatpush.msra.mxu0 0.0
  %1565 = vmatpush.msra.mxu0 0.0
  %1566 = vmatpush.msra.mxu0 0.0
  %1567 = vmatpush.msra.mxu0 0.0
  %1568 = vmatpush.msra.mxu0 0.0
  %1569 = vmatpush.msra.mxu0 0.0
  %1570 = vmatpush.msra.mxu0 0.0
  %1571 = vmatpush.msra.mxu0 0.0
  %1572 = vmatpush.msra.mxu0 0.0
  %v1573 = vand.u32 %v1514, 4294901760
  %v1574 = vsub.f32 %v1514, %v1573
  %v1575 = vand.u32 %v1574, 4294901760
  %v1576 = vsub.f32 %v1574, %v1575
  %v1577 = vand.u32 %v1576, 4294901760
  %1578 = vmatpush.msra.mxu0 %v1577
  %v1579 = vand.u32 %v1499, 4294901760
  %v1580 = vsub.f32 %v1499, %v1579
  %v1581 = vand.u32 %v1580, 4294901760
  %v1582 = vsub.f32 %v1580, %v1581
  %v1583 = vand.u32 %v1582, 4294901760
  %1584 = vmatpush.msra.mxu0 %v1583
  %v1585 = vand.u32 %v1497, 4294901760
  %v1586 = vsub.f32 %v1497, %v1585
  %v1587 = vand.u32 %v1586, 4294901760
  %v1588 = vsub.f32 %v1586, %v1587
  %v1589 = vand.u32 %v1588, 4294901760
  %1590 = vmatpush.msra.mxu0 %v1589
  %v1591 = vand.u32 %v1505, 4294901760
  %1592 = vmatmul.f32.gmra.mxu0 %v1591
  %v1593 = vpop.f32.mrf.mxu0
  %v1594 = vadd.f32 %v1542, %v1593
  %v1595 = vand.u32 %v1508, 4294901760
  %1596 = vmatmul.f32.gmra.mxu0 %v1595
  %v1597 = vpop.f32.mrf.mxu0
  %v1598 = vadd.f32 %v1550, %v1597
  %v1599 = vand.u32 %v1511, 4294901760
  %1600 = vmatmul.f32.gmra.mxu0 %v1599
  %v1601 = vpop.f32.mrf.mxu0
  %v1602 = vadd.f32 %v1558, %v1601
  %1603 = vdwg.mxu0
  %1604 = vmatpush.msra.mxu0 0.0
  %1605 = vmatpush.msra.mxu0 0.0
  %1606 = vmatpush.msra.mxu0 0.0
  %1607 = vmatpush.msra.mxu0 0.0
  %1608 = vmatpush.msra.mxu0 0.0
  %1609 = vmatpush.msra.mxu0 0.0
  %1610 = vmatpush.msra.mxu0 0.0
  %1611 = vmatpush.msra.mxu0 0.0
  %1612 = vmatpush.msra.mxu0 0.0
  %1613 = vmatpush.msra.mxu0 0.0
  %1614 = vmatpush.msra.mxu0 0.0
  %1615 = vmatpush.msra.mxu0 0.0
  %1616 = vmatpush.msra.mxu0 0.0
  %v1617 = vand.u32 %v1514, 4294901760
  %v1618 = vsub.f32 %v1514, %v1617
  %1619 = vmatpush.msra.mxu0 %v1618
  %v1620 = vand.u32 %v1499, 4294901760
  %v1621 = vsub.f32 %v1499, %v1620
  %1622 = vmatpush.msra.mxu0 %v1621
  %v1623 = vand.u32 %v1497, 4294901760
  %v1624 = vsub.f32 %v1497, %v1623
  %1625 = vmatpush.msra.mxu0 %v1624
  %v1626 = vand.u32 %v1505, 4294901760
  %v1627 = vsub.f32 %v1505, %v1626
  %1628 = vmatmul.f32.gmra.mxu0 %v1627
  %v1629 = vpop.f32.mrf.mxu0
  %v1630 = vadd.f32 %v1594, %v1629
  %v1631 = vand.u32 %v1508, 4294901760
  %v1632 = vsub.f32 %v1508, %v1631
  %1633 = vmatmul.f32.gmra.mxu0 %v1632
  %v1634 = vpop.f32.mrf.mxu0
  %v1635 = vadd.f32 %v1598, %v1634
  %v1636 = vand.u32 %v1511, 4294901760
  %v1637 = vsub.f32 %v1511, %v1636
  %1638 = vmatmul.f32.gmra.mxu0 %v1637
  %v1639 = vpop.f32.mrf.mxu0
  %v1640 = vadd.f32 %v1602, %v1639
  %1641 = vdwg.mxu0
  %1642 = vmatpush.msra.mxu0 0.0
  %1643 = vmatpush.msra.mxu0 0.0
  %1644 = vmatpush.msra.mxu0 0.0
  %1645 = vmatpush.msra.mxu0 0.0
  %1646 = vmatpush.msra.mxu0 0.0
  %1647 = vmatpush.msra.mxu0 0.0
  %1648 = vmatpush.msra.mxu0 0.0
  %1649 = vmatpush.msra.mxu0 0.0
  %1650 = vmatpush.msra.mxu0 0.0
  %1651 = vmatpush.msra.mxu0 0.0
  %1652 = vmatpush.msra.mxu0 0.0
  %1653 = vmatpush.msra.mxu0 0.0
  %1654 = vmatpush.msra.mxu0 0.0
  %v1655 = vand.u32 %v1514, 4294901760
  %1656 = vmatpush.msra.mxu0 %v1655
  %v1657 = vand.u32 %v1499, 4294901760
  %1658 = vmatpush.msra.mxu0 %v1657
  %v1659 = vand.u32 %v1497, 4294901760
  %1660 = vmatpush.msra.mxu0 %v1659
  %v1661 = vand.u32 %v1505, 4294901760
  %v1662 = vsub.f32 %v1505, %v1661
  %v1663 = vand.u32 %v1662, 4294901760
  %1664 = vmatmul.f32.gmra.mxu0 %v1663
  %v1665 = vpop.f32.mrf.mxu0
  %v1666 = vadd.f32 %v1630, %v1665
  %v1667 = vand.u32 %v1508, 4294901760
  %v1668 = vsub.f32 %v1508, %v1667
  %v1669 = vand.u32 %v1668, 4294901760
  %1670 = vmatmul.f32.gmra.mxu0 %v1669
  %v1671 = vpop.f32.mrf.mxu0
  %v1672 = vadd.f32 %v1635, %v1671
  %v1673 = vand.u32 %v1511, 4294901760
  %v1674 = vsub.f32 %v1511, %v1673
  %v1675 = vand.u32 %v1674, 4294901760
  %1676 = vmatmul.f32.gmra.mxu0 %v1675
  %v1677 = vpop.f32.mrf.mxu0
  %v1678 = vadd.f32 %v1640, %v1677
  %1679 = vdwg.mxu0
  %1680 = vmatpush.msra.mxu0 0.0
  %1681 = vmatpush.msra.mxu0 0.0
  %1682 = vmatpush.msra.mxu0 0.0
  %1683 = vmatpush.msra.mxu0 0.0
  %1684 = vmatpush.msra.mxu0 0.0
  %1685 = vmatpush.msra.mxu0 0.0
  %1686 = vmatpush.msra.mxu0 0.0
  %1687 = vmatpush.msra.mxu0 0.0
  %1688 = vmatpush.msra.mxu0 0.0
  %1689 = vmatpush.msra.mxu0 0.0
  %1690 = vmatpush.msra.mxu0 0.0
  %1691 = vmatpush.msra.mxu0 0.0
  %1692 = vmatpush.msra.mxu0 0.0
  %v1693 = vand.u32 %v1514, 4294901760
  %v1694 = vsub.f32 %v1514, %v1693
  %v1695 = vand.u32 %v1694, 4294901760
  %1696 = vmatpush.msra.mxu0 %v1695
  %v1697 = vand.u32 %v1499, 4294901760
  %v1698 = vsub.f32 %v1499, %v1697
  %v1699 = vand.u32 %v1698, 4294901760
  %1700 = vmatpush.msra.mxu0 %v1699
  %v1701 = vand.u32 %v1497, 4294901760
  %v1702 = vsub.f32 %v1497, %v1701
  %v1703 = vand.u32 %v1702, 4294901760
  %1704 = vmatpush.msra.mxu0 %v1703
  %v1705 = vand.u32 %v1505, 4294901760
  %1706 = vmatmul.f32.gmra.mxu0 %v1705
  %v1707 = vpop.f32.mrf.mxu0
  %v1708 = vadd.f32 %v1666, %v1707
  %v1709 = vand.u32 %v1508, 4294901760
  %1710 = vmatmul.f32.gmra.mxu0 %v1709
  %v1711 = vpop.f32.mrf.mxu0
  %v1712 = vadd.f32 %v1672, %v1711
  %v1713 = vand.u32 %v1511, 4294901760
  %1714 = vmatmul.f32.gmra.mxu0 %v1713
  %v1715 = vpop.f32.mrf.mxu0
  %v1716 = vadd.f32 %v1678, %v1715
  %1717 = vdwg.mxu0
  %1718 = vmatpush.msra.mxu0 0.0
  %1719 = vmatpush.msra.mxu0 0.0
  %1720 = vmatpush.msra.mxu0 0.0
  %1721 = vmatpush.msra.mxu0 0.0
  %1722 = vmatpush.msra.mxu0 0.0
  %1723 = vmatpush.msra.mxu0 0.0
  %1724 = vmatpush.msra.mxu0 0.0
  %1725 = vmatpush.msra.mxu0 0.0
  %1726 = vmatpush.msra.mxu0 0.0
  %1727 = vmatpush.msra.mxu0 0.0
  %1728 = vmatpush.msra.mxu0 0.0
  %1729 = vmatpush.msra.mxu0 0.0
  %1730 = vmatpush.msra.mxu0 0.0
  %v1731 = vand.u32 %v1514, 4294901760
  %1732 = vmatpush.msra.mxu0 %v1731
  %v1733 = vand.u32 %v1499, 4294901760
  %1734 = vmatpush.msra.mxu0 %v1733
  %v1735 = vand.u32 %v1497, 4294901760
  %1736 = vmatpush.msra.mxu0 %v1735
  %v1737 = vand.u32 %v1505, 4294901760
  %1738 = vmatmul.f32.gmra.mxu0 %v1737
  %v1739 = vpop.f32.mrf.mxu0
  %v1740 = vadd.f32 %v1708, %v1739
  %v1741 = vand.u32 %v1508, 4294901760
  %1742 = vmatmul.f32.gmra.mxu0 %v1741
  %v1743 = vpop.f32.mrf.mxu0
  %v1744 = vadd.f32 %v1712, %v1743
  %v1745 = vand.u32 %v1511, 4294901760
  %1746 = vmatmul.f32.gmra.mxu0 %v1745
  %v1747 = vpop.f32.mrf.mxu0
  %v1748 = vadd.f32 %v1716, %v1747
  %1749 = vdwg.mxu0
  %1750 = vrot.lane.b32.xlu0 %v1185, 120
  %v1751 = vpop.permute.xlu0 %1750
  %1752 = vrot.lane.b32.xlu0 %v1189, 120
  %v1753 = vpop.permute.xlu0 %1752
  %1754 = vrot.lane.b32.xlu0 %v1193, 120
  %v1755 = vpop.permute.xlu0 %1754
  %1756 = vrot.lane.b32.xlu0 %v1185, 88
  %v1757 = vpop.permute.xlu0 %1756
  %1758 = vrot.lane.b32.xlu0 %v1189, 88
  %v1759 = vpop.permute.xlu0 %1758
  %1760 = vrot.lane.b32.xlu0 %v1193, 88
  %v1761 = vpop.permute.xlu0 %1760
  %v1762 = vsel %vm1208, %v1751, 0
  %v1764 = vsel %vm1208, %v1753, 0
  %v1766 = vsel %vm1208, %v1755, 0
  %v1768 = vsel %vm1208, %v1757, 0
  %v1770 = vsel %vm1208, %v1759, 0
  %v1772 = vsel %vm1208, %v1761, 0
  %1774 = vmatpush.xpose.msra.mxu0 0.0
  %1775 = vmatpush.xpose.msra.mxu0 0.0
  %1776 = vmatpush.xpose.msra.mxu0 0.0
  %1777 = vmatpush.xpose.msra.mxu0 0.0
  %1778 = vmatpush.xpose.msra.mxu0 0.0
  %1779 = vmatpush.xpose.msra.mxu0 0.0
  %1780 = vmatpush.xpose.msra.mxu0 0.0
  %1781 = vmatpush.xpose.msra.mxu0 0.0
  %1782 = vmatpush.xpose.msra.mxu0 0.0
  %1783 = vmatpush.xpose.msra.mxu0 0.0
  %1784 = vmatpush.xpose.msra.mxu0 0.0
  %1785 = vmatpush.xpose.msra.mxu0 0.0
  %1786 = vmatpush.xpose.msra.mxu0 0.0
  %v1787 = vand.u32 %v1772, 4294901760
  %1788 = vmatpush.xpose.msra.mxu0 %v1787
  %v1789 = vand.u32 %v1770, 4294901760
  %1790 = vmatpush.xpose.msra.mxu0 %v1789
  %v1791 = vand.u32 %v1768, 4294901760
  %1792 = vmatpush.xpose.msra.mxu0 %v1791
  %v1793 = vand.u32 %v1762, 4294901760
  %v1794 = vsub.f32 %v1762, %v1793
  %v1795 = vand.u32 %v1794, 4294901760
  %v1796 = vsub.f32 %v1794, %v1795
  %v1797 = vand.u32 %v1796, 4294901760
  %1798 = vmatmul.f32.gmra.mxu0 %v1797
  %v1799 = vpop.f32.mrf.mxu0
  %v1800 = vadd.f32 0.0, %v1799
  %v1801 = vand.u32 %v1764, 4294901760
  %v1802 = vsub.f32 %v1764, %v1801
  %v1803 = vand.u32 %v1802, 4294901760
  %v1804 = vsub.f32 %v1802, %v1803
  %v1805 = vand.u32 %v1804, 4294901760
  %1806 = vmatmul.f32.gmra.mxu0 %v1805
  %v1807 = vpop.f32.mrf.mxu0
  %v1808 = vadd.f32 0.0, %v1807
  %v1809 = vand.u32 %v1766, 4294901760
  %v1810 = vsub.f32 %v1766, %v1809
  %v1811 = vand.u32 %v1810, 4294901760
  %v1812 = vsub.f32 %v1810, %v1811
  %v1813 = vand.u32 %v1812, 4294901760
  %1814 = vmatmul.f32.gmra.mxu0 %v1813
  %v1815 = vpop.f32.mrf.mxu0
  %v1816 = vadd.f32 0.0, %v1815
  %1817 = vdwg.mxu0
  %1818 = vmatpush.xpose.msra.mxu0 0.0
  %1819 = vmatpush.xpose.msra.mxu0 0.0
  %1820 = vmatpush.xpose.msra.mxu0 0.0
  %1821 = vmatpush.xpose.msra.mxu0 0.0
  %1822 = vmatpush.xpose.msra.mxu0 0.0
  %1823 = vmatpush.xpose.msra.mxu0 0.0
  %1824 = vmatpush.xpose.msra.mxu0 0.0
  %1825 = vmatpush.xpose.msra.mxu0 0.0
  %1826 = vmatpush.xpose.msra.mxu0 0.0
  %1827 = vmatpush.xpose.msra.mxu0 0.0
  %1828 = vmatpush.xpose.msra.mxu0 0.0
  %1829 = vmatpush.xpose.msra.mxu0 0.0
  %1830 = vmatpush.xpose.msra.mxu0 0.0
  %v1831 = vand.u32 %v1772, 4294901760
  %v1832 = vsub.f32 %v1772, %v1831
  %v1833 = vand.u32 %v1832, 4294901760
  %v1834 = vsub.f32 %v1832, %v1833
  %v1835 = vand.u32 %v1834, 4294901760
  %1836 = vmatpush.xpose.msra.mxu0 %v1835
  %v1837 = vand.u32 %v1770, 4294901760
  %v1838 = vsub.f32 %v1770, %v1837
  %v1839 = vand.u32 %v1838, 4294901760
  %v1840 = vsub.f32 %v1838, %v1839
  %v1841 = vand.u32 %v1840, 4294901760
  %1842 = vmatpush.xpose.msra.mxu0 %v1841
  %v1843 = vand.u32 %v1768, 4294901760
  %v1844 = vsub.f32 %v1768, %v1843
  %v1845 = vand.u32 %v1844, 4294901760
  %v1846 = vsub.f32 %v1844, %v1845
  %v1847 = vand.u32 %v1846, 4294901760
  %1848 = vmatpush.xpose.msra.mxu0 %v1847
  %v1849 = vand.u32 %v1762, 4294901760
  %1850 = vmatmul.f32.gmra.mxu0 %v1849
  %v1851 = vpop.f32.mrf.mxu0
  %v1852 = vadd.f32 %v1800, %v1851
  %v1853 = vand.u32 %v1764, 4294901760
  %1854 = vmatmul.f32.gmra.mxu0 %v1853
  %v1855 = vpop.f32.mrf.mxu0
  %v1856 = vadd.f32 %v1808, %v1855
  %v1857 = vand.u32 %v1766, 4294901760
  %1858 = vmatmul.f32.gmra.mxu0 %v1857
  %v1859 = vpop.f32.mrf.mxu0
  %v1860 = vadd.f32 %v1816, %v1859
  %1861 = vdwg.mxu0
  %1862 = vmatpush.xpose.msra.mxu0 0.0
  %1863 = vmatpush.xpose.msra.mxu0 0.0
  %1864 = vmatpush.xpose.msra.mxu0 0.0
  %1865 = vmatpush.xpose.msra.mxu0 0.0
  %1866 = vmatpush.xpose.msra.mxu0 0.0
  %1867 = vmatpush.xpose.msra.mxu0 0.0
  %1868 = vmatpush.xpose.msra.mxu0 0.0
  %1869 = vmatpush.xpose.msra.mxu0 0.0
  %1870 = vmatpush.xpose.msra.mxu0 0.0
  %1871 = vmatpush.xpose.msra.mxu0 0.0
  %1872 = vmatpush.xpose.msra.mxu0 0.0
  %1873 = vmatpush.xpose.msra.mxu0 0.0
  %1874 = vmatpush.xpose.msra.mxu0 0.0
  %v1875 = vand.u32 %v1772, 4294901760
  %v1876 = vsub.f32 %v1772, %v1875
  %1877 = vmatpush.xpose.msra.mxu0 %v1876
  %v1878 = vand.u32 %v1770, 4294901760
  %v1879 = vsub.f32 %v1770, %v1878
  %1880 = vmatpush.xpose.msra.mxu0 %v1879
  %v1881 = vand.u32 %v1768, 4294901760
  %v1882 = vsub.f32 %v1768, %v1881
  %1883 = vmatpush.xpose.msra.mxu0 %v1882
  %v1884 = vand.u32 %v1762, 4294901760
  %v1885 = vsub.f32 %v1762, %v1884
  %1886 = vmatmul.f32.gmra.mxu0 %v1885
  %v1887 = vpop.f32.mrf.mxu0
  %v1888 = vadd.f32 %v1852, %v1887
  %v1889 = vand.u32 %v1764, 4294901760
  %v1890 = vsub.f32 %v1764, %v1889
  %1891 = vmatmul.f32.gmra.mxu0 %v1890
  %v1892 = vpop.f32.mrf.mxu0
  %v1893 = vadd.f32 %v1856, %v1892
  %v1894 = vand.u32 %v1766, 4294901760
  %v1895 = vsub.f32 %v1766, %v1894
  %1896 = vmatmul.f32.gmra.mxu0 %v1895
  %v1897 = vpop.f32.mrf.mxu0
  %v1898 = vadd.f32 %v1860, %v1897
  %1899 = vdwg.mxu0
  %1900 = vmatpush.xpose.msra.mxu0 0.0
  %1901 = vmatpush.xpose.msra.mxu0 0.0
  %1902 = vmatpush.xpose.msra.mxu0 0.0
  %1903 = vmatpush.xpose.msra.mxu0 0.0
  %1904 = vmatpush.xpose.msra.mxu0 0.0
  %1905 = vmatpush.xpose.msra.mxu0 0.0
  %1906 = vmatpush.xpose.msra.mxu0 0.0
  %1907 = vmatpush.xpose.msra.mxu0 0.0
  %1908 = vmatpush.xpose.msra.mxu0 0.0
  %1909 = vmatpush.xpose.msra.mxu0 0.0
  %1910 = vmatpush.xpose.msra.mxu0 0.0
  %1911 = vmatpush.xpose.msra.mxu0 0.0
  %1912 = vmatpush.xpose.msra.mxu0 0.0
  %v1913 = vand.u32 %v1772, 4294901760
  %1914 = vmatpush.xpose.msra.mxu0 %v1913
  %v1915 = vand.u32 %v1770, 4294901760
  %1916 = vmatpush.xpose.msra.mxu0 %v1915
  %v1917 = vand.u32 %v1768, 4294901760
  %1918 = vmatpush.xpose.msra.mxu0 %v1917
  %v1919 = vand.u32 %v1762, 4294901760
  %v1920 = vsub.f32 %v1762, %v1919
  %v1921 = vand.u32 %v1920, 4294901760
  %1922 = vmatmul.f32.gmra.mxu0 %v1921
  %v1923 = vpop.f32.mrf.mxu0
  %v1924 = vadd.f32 %v1888, %v1923
  %v1925 = vand.u32 %v1764, 4294901760
  %v1926 = vsub.f32 %v1764, %v1925
  %v1927 = vand.u32 %v1926, 4294901760
  %1928 = vmatmul.f32.gmra.mxu0 %v1927
  %v1929 = vpop.f32.mrf.mxu0
  %v1930 = vadd.f32 %v1893, %v1929
  %v1931 = vand.u32 %v1766, 4294901760
  %v1932 = vsub.f32 %v1766, %v1931
  %v1933 = vand.u32 %v1932, 4294901760
  %1934 = vmatmul.f32.gmra.mxu0 %v1933
  %v1935 = vpop.f32.mrf.mxu0
  %v1936 = vadd.f32 %v1898, %v1935
  %1937 = vdwg.mxu0
  %1938 = vmatpush.xpose.msra.mxu0 0.0
  %1939 = vmatpush.xpose.msra.mxu0 0.0
  %1940 = vmatpush.xpose.msra.mxu0 0.0
  %1941 = vmatpush.xpose.msra.mxu0 0.0
  %1942 = vmatpush.xpose.msra.mxu0 0.0
  %1943 = vmatpush.xpose.msra.mxu0 0.0
  %1944 = vmatpush.xpose.msra.mxu0 0.0
  %1945 = vmatpush.xpose.msra.mxu0 0.0
  %1946 = vmatpush.xpose.msra.mxu0 0.0
  %1947 = vmatpush.xpose.msra.mxu0 0.0
  %1948 = vmatpush.xpose.msra.mxu0 0.0
  %1949 = vmatpush.xpose.msra.mxu0 0.0
  %1950 = vmatpush.xpose.msra.mxu0 0.0
  %v1951 = vand.u32 %v1772, 4294901760
  %v1952 = vsub.f32 %v1772, %v1951
  %v1953 = vand.u32 %v1952, 4294901760
  %1954 = vmatpush.xpose.msra.mxu0 %v1953
  %v1955 = vand.u32 %v1770, 4294901760
  %v1956 = vsub.f32 %v1770, %v1955
  %v1957 = vand.u32 %v1956, 4294901760
  %1958 = vmatpush.xpose.msra.mxu0 %v1957
  %v1959 = vand.u32 %v1768, 4294901760
  %v1960 = vsub.f32 %v1768, %v1959
  %v1961 = vand.u32 %v1960, 4294901760
  %1962 = vmatpush.xpose.msra.mxu0 %v1961
  %v1963 = vand.u32 %v1762, 4294901760
  %1964 = vmatmul.f32.gmra.mxu0 %v1963
  %v1965 = vpop.f32.mrf.mxu0
  %v1966 = vadd.f32 %v1924, %v1965
  %v1967 = vand.u32 %v1764, 4294901760
  %1968 = vmatmul.f32.gmra.mxu0 %v1967
  %v1969 = vpop.f32.mrf.mxu0
  %v1970 = vadd.f32 %v1930, %v1969
  %v1971 = vand.u32 %v1766, 4294901760
  %1972 = vmatmul.f32.gmra.mxu0 %v1971
  %v1973 = vpop.f32.mrf.mxu0
  %v1974 = vadd.f32 %v1936, %v1973
  %1975 = vdwg.mxu0
  %1976 = vmatpush.xpose.msra.mxu0 0.0
  %1977 = vmatpush.xpose.msra.mxu0 0.0
  %1978 = vmatpush.xpose.msra.mxu0 0.0
  %1979 = vmatpush.xpose.msra.mxu0 0.0
  %1980 = vmatpush.xpose.msra.mxu0 0.0
  %1981 = vmatpush.xpose.msra.mxu0 0.0
  %1982 = vmatpush.xpose.msra.mxu0 0.0
  %1983 = vmatpush.xpose.msra.mxu0 0.0
  %1984 = vmatpush.xpose.msra.mxu0 0.0
  %1985 = vmatpush.xpose.msra.mxu0 0.0
  %1986 = vmatpush.xpose.msra.mxu0 0.0
  %1987 = vmatpush.xpose.msra.mxu0 0.0
  %1988 = vmatpush.xpose.msra.mxu0 0.0
  %v1989 = vand.u32 %v1772, 4294901760
  %1990 = vmatpush.xpose.msra.mxu0 %v1989
  %v1991 = vand.u32 %v1770, 4294901760
  %1992 = vmatpush.xpose.msra.mxu0 %v1991
  %v1993 = vand.u32 %v1768, 4294901760
  %1994 = vmatpush.xpose.msra.mxu0 %v1993
  %v1995 = vand.u32 %v1762, 4294901760
  %1996 = vmatmul.f32.gmra.mxu0 %v1995
  %v1997 = vpop.f32.mrf.mxu0
  %v1998 = vadd.f32 %v1966, %v1997
  %v1999 = vand.u32 %v1764, 4294901760
  %2000 = vmatmul.f32.gmra.mxu0 %v1999
  %v2001 = vpop.f32.mrf.mxu0
  %v2002 = vadd.f32 %v1970, %v2001
  %v2003 = vand.u32 %v1766, 4294901760
  %2004 = vmatmul.f32.gmra.mxu0 %v2003
  %v2005 = vpop.f32.mrf.mxu0
  %v2006 = vadd.f32 %v1974, %v2005
  %2007 = vdwg.mxu0
  %v2008 = vmul.f32 %v1998, 0.35355338
  %v2009 = vmul.f32 %v2002, 0.35355338
  %v2010 = vmul.f32 %v2006, 0.35355338
  %v2011 = vadd.f32 %v2008, %v76
  %v2012 = vadd.f32 %v2009, %v77
  %v2013 = vadd.f32 %v2010, %v78
  %v2014 = vsel %vm1461, %v2011, -inf
  %2015 = vmax.xlane.f32.xlu0 %v2014
  %v2016 = vpop.xlane.xlu0 %2015
  %v2017 = vsel %vm1461, %v2012, -inf
  %2018 = vmax.xlane.f32.xlu0 %v2017
  %v2019 = vpop.xlane.xlu0 %2018
  %v2020 = vsel %vm1468, %v2013, -inf
  %2021 = vmax.xlane.f32.xlu0 %v2020
  %v2022 = vpop.xlane.xlu0 %2021
  %v2023 = vsub.f32 %v2011, %v2016
  %v2024 = vsub.f32 %v2012, %v2019
  %v2025 = vsub.f32 %v2013, %v2022
  %v2026 = vmul.f32 %v2023, 1.442695
  %v2027 = vpow.pop %v2026
  %v2028 = vmul.f32 %v2024, 1.442695
  %v2029 = vpow.pop %v2028
  %v2030 = vmul.f32 %v2025, 1.442695
  %v2031 = vpow.pop %v2030
  %v2032 = vsel %vm1461, %v2027, 0.0
  %2033 = vadd.xlane.f32.xlu0 %v2032
  %v2034 = vpop.xlane.xlu0 %2033
  %v2035 = vsel %vm1461, %v2029, 0.0
  %2036 = vadd.xlane.f32.xlu0 %v2035
  %v2037 = vpop.xlane.xlu0 %2036
  %v2038 = vsel %vm1468, %v2031, 0.0
  %2039 = vadd.xlane.f32.xlu0 %v2038
  %v2040 = vpop.xlane.xlu0 %2039
  %v2041 = vrcp.pop %v2034
  %v2042 = vrcp.pop %v2037
  %v2043 = vrcp.pop %v2040
  %v2044 = vmul.f32 %v2027, %v2041
  %v2045 = vmul.f32 %v2029, %v2042
  %v2046 = vmul.f32 %v2031, %v2043
  %2047 = vrot.lane.b32.xlu0 %v1185, 56
  %v2048 = vpop.permute.xlu0 %2047
  %2049 = vrot.lane.b32.xlu0 %v1189, 56
  %v2050 = vpop.permute.xlu0 %2049
  %2051 = vrot.lane.b32.xlu0 %v1193, 56
  %v2052 = vpop.permute.xlu0 %2051
  %v2056 = vsel %vm1461, %v2044, 0
  %v2059 = vsel %vm1461, %v2045, 0
  %v2062 = vsel %vm1461, %v2046, 0
  %v2064 = vsel %vm1513, %v2052, 0
  %2066 = vmatpush.msra.mxu0 0.0
  %2067 = vmatpush.msra.mxu0 0.0
  %2068 = vmatpush.msra.mxu0 0.0
  %2069 = vmatpush.msra.mxu0 0.0
  %2070 = vmatpush.msra.mxu0 0.0
  %2071 = vmatpush.msra.mxu0 0.0
  %2072 = vmatpush.msra.mxu0 0.0
  %2073 = vmatpush.msra.mxu0 0.0
  %2074 = vmatpush.msra.mxu0 0.0
  %2075 = vmatpush.msra.mxu0 0.0
  %2076 = vmatpush.msra.mxu0 0.0
  %2077 = vmatpush.msra.mxu0 0.0
  %2078 = vmatpush.msra.mxu0 0.0
  %v2079 = vand.u32 %v2064, 4294901760
  %2080 = vmatpush.msra.mxu0 %v2079
  %v2081 = vand.u32 %v2050, 4294901760
  %2082 = vmatpush.msra.mxu0 %v2081
  %v2083 = vand.u32 %v2048, 4294901760
  %2084 = vmatpush.msra.mxu0 %v2083
  %v2085 = vand.u32 %v2056, 4294901760
  %v2086 = vsub.f32 %v2056, %v2085
  %v2087 = vand.u32 %v2086, 4294901760
  %v2088 = vsub.f32 %v2086, %v2087
  %v2089 = vand.u32 %v2088, 4294901760
  %2090 = vmatmul.f32.gmra.mxu0 %v2089
  %v2091 = vpop.f32.mrf.mxu0
  %v2092 = vadd.f32 0.0, %v2091
  %v2093 = vand.u32 %v2059, 4294901760
  %v2094 = vsub.f32 %v2059, %v2093
  %v2095 = vand.u32 %v2094, 4294901760
  %v2096 = vsub.f32 %v2094, %v2095
  %v2097 = vand.u32 %v2096, 4294901760
  %2098 = vmatmul.f32.gmra.mxu0 %v2097
  %v2099 = vpop.f32.mrf.mxu0
  %v2100 = vadd.f32 0.0, %v2099
  %v2101 = vand.u32 %v2062, 4294901760
  %v2102 = vsub.f32 %v2062, %v2101
  %v2103 = vand.u32 %v2102, 4294901760
  %v2104 = vsub.f32 %v2102, %v2103
  %v2105 = vand.u32 %v2104, 4294901760
  %2106 = vmatmul.f32.gmra.mxu0 %v2105
  %v2107 = vpop.f32.mrf.mxu0
  %v2108 = vadd.f32 0.0, %v2107
  %2109 = vdwg.mxu0
  %2110 = vmatpush.msra.mxu0 0.0
  %2111 = vmatpush.msra.mxu0 0.0
  %2112 = vmatpush.msra.mxu0 0.0
  %2113 = vmatpush.msra.mxu0 0.0
  %2114 = vmatpush.msra.mxu0 0.0
  %2115 = vmatpush.msra.mxu0 0.0
  %2116 = vmatpush.msra.mxu0 0.0
  %2117 = vmatpush.msra.mxu0 0.0
  %2118 = vmatpush.msra.mxu0 0.0
  %2119 = vmatpush.msra.mxu0 0.0
  %2120 = vmatpush.msra.mxu0 0.0
  %2121 = vmatpush.msra.mxu0 0.0
  %2122 = vmatpush.msra.mxu0 0.0
  %v2123 = vand.u32 %v2064, 4294901760
  %v2124 = vsub.f32 %v2064, %v2123
  %v2125 = vand.u32 %v2124, 4294901760
  %v2126 = vsub.f32 %v2124, %v2125
  %v2127 = vand.u32 %v2126, 4294901760
  %2128 = vmatpush.msra.mxu0 %v2127
  %v2129 = vand.u32 %v2050, 4294901760
  %v2130 = vsub.f32 %v2050, %v2129
  %v2131 = vand.u32 %v2130, 4294901760
  %v2132 = vsub.f32 %v2130, %v2131
  %v2133 = vand.u32 %v2132, 4294901760
  %2134 = vmatpush.msra.mxu0 %v2133
  %v2135 = vand.u32 %v2048, 4294901760
  %v2136 = vsub.f32 %v2048, %v2135
  %v2137 = vand.u32 %v2136, 4294901760
  %v2138 = vsub.f32 %v2136, %v2137
  %v2139 = vand.u32 %v2138, 4294901760
  %2140 = vmatpush.msra.mxu0 %v2139
  %v2141 = vand.u32 %v2056, 4294901760
  %2142 = vmatmul.f32.gmra.mxu0 %v2141
  %v2143 = vpop.f32.mrf.mxu0
  %v2144 = vadd.f32 %v2092, %v2143
  %v2145 = vand.u32 %v2059, 4294901760
  %2146 = vmatmul.f32.gmra.mxu0 %v2145
  %v2147 = vpop.f32.mrf.mxu0
  %v2148 = vadd.f32 %v2100, %v2147
  %v2149 = vand.u32 %v2062, 4294901760
  %2150 = vmatmul.f32.gmra.mxu0 %v2149
  %v2151 = vpop.f32.mrf.mxu0
  %v2152 = vadd.f32 %v2108, %v2151
  %2153 = vdwg.mxu0
  %2154 = vmatpush.msra.mxu0 0.0
  %2155 = vmatpush.msra.mxu0 0.0
  %2156 = vmatpush.msra.mxu0 0.0
  %2157 = vmatpush.msra.mxu0 0.0
  %2158 = vmatpush.msra.mxu0 0.0
  %2159 = vmatpush.msra.mxu0 0.0
  %2160 = vmatpush.msra.mxu0 0.0
  %2161 = vmatpush.msra.mxu0 0.0
  %2162 = vmatpush.msra.mxu0 0.0
  %2163 = vmatpush.msra.mxu0 0.0
  %2164 = vmatpush.msra.mxu0 0.0
  %2165 = vmatpush.msra.mxu0 0.0
  %2166 = vmatpush.msra.mxu0 0.0
  %v2167 = vand.u32 %v2064, 4294901760
  %v2168 = vsub.f32 %v2064, %v2167
  %2169 = vmatpush.msra.mxu0 %v2168
  %v2170 = vand.u32 %v2050, 4294901760
  %v2171 = vsub.f32 %v2050, %v2170
  %2172 = vmatpush.msra.mxu0 %v2171
  %v2173 = vand.u32 %v2048, 4294901760
  %v2174 = vsub.f32 %v2048, %v2173
  %2175 = vmatpush.msra.mxu0 %v2174
  %v2176 = vand.u32 %v2056, 4294901760
  %v2177 = vsub.f32 %v2056, %v2176
  %2178 = vmatmul.f32.gmra.mxu0 %v2177
  %v2179 = vpop.f32.mrf.mxu0
  %v2180 = vadd.f32 %v2144, %v2179
  %v2181 = vand.u32 %v2059, 4294901760
  %v2182 = vsub.f32 %v2059, %v2181
  %2183 = vmatmul.f32.gmra.mxu0 %v2182
  %v2184 = vpop.f32.mrf.mxu0
  %v2185 = vadd.f32 %v2148, %v2184
  %v2186 = vand.u32 %v2062, 4294901760
  %v2187 = vsub.f32 %v2062, %v2186
  %2188 = vmatmul.f32.gmra.mxu0 %v2187
  %v2189 = vpop.f32.mrf.mxu0
  %v2190 = vadd.f32 %v2152, %v2189
  %2191 = vdwg.mxu0
  %2192 = vmatpush.msra.mxu0 0.0
  %2193 = vmatpush.msra.mxu0 0.0
  %2194 = vmatpush.msra.mxu0 0.0
  %2195 = vmatpush.msra.mxu0 0.0
  %2196 = vmatpush.msra.mxu0 0.0
  %2197 = vmatpush.msra.mxu0 0.0
  %2198 = vmatpush.msra.mxu0 0.0
  %2199 = vmatpush.msra.mxu0 0.0
  %2200 = vmatpush.msra.mxu0 0.0
  %2201 = vmatpush.msra.mxu0 0.0
  %2202 = vmatpush.msra.mxu0 0.0
  %2203 = vmatpush.msra.mxu0 0.0
  %2204 = vmatpush.msra.mxu0 0.0
  %v2205 = vand.u32 %v2064, 4294901760
  %2206 = vmatpush.msra.mxu0 %v2205
  %v2207 = vand.u32 %v2050, 4294901760
  %2208 = vmatpush.msra.mxu0 %v2207
  %v2209 = vand.u32 %v2048, 4294901760
  %2210 = vmatpush.msra.mxu0 %v2209
  %v2211 = vand.u32 %v2056, 4294901760
  %v2212 = vsub.f32 %v2056, %v2211
  %v2213 = vand.u32 %v2212, 4294901760
  %2214 = vmatmul.f32.gmra.mxu0 %v2213
  %v2215 = vpop.f32.mrf.mxu0
  %v2216 = vadd.f32 %v2180, %v2215
  %v2217 = vand.u32 %v2059, 4294901760
  %v2218 = vsub.f32 %v2059, %v2217
  %v2219 = vand.u32 %v2218, 4294901760
  %2220 = vmatmul.f32.gmra.mxu0 %v2219
  %v2221 = vpop.f32.mrf.mxu0
  %v2222 = vadd.f32 %v2185, %v2221
  %v2223 = vand.u32 %v2062, 4294901760
  %v2224 = vsub.f32 %v2062, %v2223
  %v2225 = vand.u32 %v2224, 4294901760
  %2226 = vmatmul.f32.gmra.mxu0 %v2225
  %v2227 = vpop.f32.mrf.mxu0
  %v2228 = vadd.f32 %v2190, %v2227
  %2229 = vdwg.mxu0
  %2230 = vmatpush.msra.mxu0 0.0
  %2231 = vmatpush.msra.mxu0 0.0
  %2232 = vmatpush.msra.mxu0 0.0
  %2233 = vmatpush.msra.mxu0 0.0
  %2234 = vmatpush.msra.mxu0 0.0
  %2235 = vmatpush.msra.mxu0 0.0
  %2236 = vmatpush.msra.mxu0 0.0
  %2237 = vmatpush.msra.mxu0 0.0
  %2238 = vmatpush.msra.mxu0 0.0
  %2239 = vmatpush.msra.mxu0 0.0
  %2240 = vmatpush.msra.mxu0 0.0
  %2241 = vmatpush.msra.mxu0 0.0
  %2242 = vmatpush.msra.mxu0 0.0
  %v2243 = vand.u32 %v2064, 4294901760
  %v2244 = vsub.f32 %v2064, %v2243
  %v2245 = vand.u32 %v2244, 4294901760
  %2246 = vmatpush.msra.mxu0 %v2245
  %v2247 = vand.u32 %v2050, 4294901760
  %v2248 = vsub.f32 %v2050, %v2247
  %v2249 = vand.u32 %v2248, 4294901760
  %2250 = vmatpush.msra.mxu0 %v2249
  %v2251 = vand.u32 %v2048, 4294901760
  %v2252 = vsub.f32 %v2048, %v2251
  %v2253 = vand.u32 %v2252, 4294901760
  %2254 = vmatpush.msra.mxu0 %v2253
  %v2255 = vand.u32 %v2056, 4294901760
  %2256 = vmatmul.f32.gmra.mxu0 %v2255
  %v2257 = vpop.f32.mrf.mxu0
  %v2258 = vadd.f32 %v2216, %v2257
  %v2259 = vand.u32 %v2059, 4294901760
  %2260 = vmatmul.f32.gmra.mxu0 %v2259
  %v2261 = vpop.f32.mrf.mxu0
  %v2262 = vadd.f32 %v2222, %v2261
  %v2263 = vand.u32 %v2062, 4294901760
  %2264 = vmatmul.f32.gmra.mxu0 %v2263
  %v2265 = vpop.f32.mrf.mxu0
  %v2266 = vadd.f32 %v2228, %v2265
  %2267 = vdwg.mxu0
  %2268 = vmatpush.msra.mxu0 0.0
  %2269 = vmatpush.msra.mxu0 0.0
  %2270 = vmatpush.msra.mxu0 0.0
  %2271 = vmatpush.msra.mxu0 0.0
  %2272 = vmatpush.msra.mxu0 0.0
  %2273 = vmatpush.msra.mxu0 0.0
  %2274 = vmatpush.msra.mxu0 0.0
  %2275 = vmatpush.msra.mxu0 0.0
  %2276 = vmatpush.msra.mxu0 0.0
  %2277 = vmatpush.msra.mxu0 0.0
  %2278 = vmatpush.msra.mxu0 0.0
  %2279 = vmatpush.msra.mxu0 0.0
  %2280 = vmatpush.msra.mxu0 0.0
  %v2281 = vand.u32 %v2064, 4294901760
  %2282 = vmatpush.msra.mxu0 %v2281
  %v2283 = vand.u32 %v2050, 4294901760
  %2284 = vmatpush.msra.mxu0 %v2283
  %v2285 = vand.u32 %v2048, 4294901760
  %2286 = vmatpush.msra.mxu0 %v2285
  %v2287 = vand.u32 %v2056, 4294901760
  %2288 = vmatmul.f32.gmra.mxu0 %v2287
  %v2289 = vpop.f32.mrf.mxu0
  %v2290 = vadd.f32 %v2258, %v2289
  %v2291 = vand.u32 %v2059, 4294901760
  %2292 = vmatmul.f32.gmra.mxu0 %v2291
  %v2293 = vpop.f32.mrf.mxu0
  %v2294 = vadd.f32 %v2262, %v2293
  %v2295 = vand.u32 %v2062, 4294901760
  %2296 = vmatmul.f32.gmra.mxu0 %v2295
  %v2297 = vpop.f32.mrf.mxu0
  %v2298 = vadd.f32 %v2266, %v2297
  %2299 = vdwg.mxu0
  %v2301 = vsel %vm1208, %v2290, 0
  %v2304 = vsel %vm1208, %v2294, 0
  %v2307 = vsel %vm1208, %v2298, 0
  %2309 = vmatpush.msra.mxu0 0.0
  %2310 = vmatpush.msra.mxu0 0.0
  %2311 = vmatpush.msra.mxu0 0.0
  %2312 = vmatpush.msra.mxu0 0.0
  %2313 = vmatpush.msra.mxu0 0.0
  %2314 = vmatpush.msra.mxu0 0.0
  %2315 = vmatpush.msra.mxu0 0.0
  %2316 = vmatpush.msra.mxu0 0.0
  %2317 = vmatpush.msra.mxu0 0.0
  %2318 = vmatpush.msra.mxu0 0.0
  %2319 = vmatpush.msra.mxu0 0.0
  %2320 = vmatpush.msra.mxu0 0.0
  %2321 = vmatpush.msra.mxu0 0.0
  %2322 = vmatpush.msra.mxu0 0.0
  %2323 = vmatpush.msra.mxu0 0.0
  %v2324 = vand.u32 %v1196, 4294901760
  %2325 = vmatpush.msra.mxu0 %v2324
  %v2326 = vand.u32 %v2301, 4294901760
  %v2327 = vsub.f32 %v2301, %v2326
  %v2328 = vand.u32 %v2327, 4294901760
  %v2329 = vsub.f32 %v2327, %v2328
  %v2330 = vand.u32 %v2329, 4294901760
  %2331 = vmatmul.f32.gmra.mxu0 %v2330
  %v2332 = vpop.f32.mrf.mxu0
  %v2333 = vadd.f32 0.0, %v2332
  %v2334 = vand.u32 %v2304, 4294901760
  %v2335 = vsub.f32 %v2304, %v2334
  %v2336 = vand.u32 %v2335, 4294901760
  %v2337 = vsub.f32 %v2335, %v2336
  %v2338 = vand.u32 %v2337, 4294901760
  %2339 = vmatmul.f32.gmra.mxu0 %v2338
  %v2340 = vpop.f32.mrf.mxu0
  %v2341 = vadd.f32 0.0, %v2340
  %v2342 = vand.u32 %v2307, 4294901760
  %v2343 = vsub.f32 %v2307, %v2342
  %v2344 = vand.u32 %v2343, 4294901760
  %v2345 = vsub.f32 %v2343, %v2344
  %v2346 = vand.u32 %v2345, 4294901760
  %2347 = vmatmul.f32.gmra.mxu0 %v2346
  %v2348 = vpop.f32.mrf.mxu0
  %v2349 = vadd.f32 0.0, %v2348
  %2350 = vdwg.mxu0
  %2351 = vmatpush.msra.mxu0 0.0
  %2352 = vmatpush.msra.mxu0 0.0
  %2353 = vmatpush.msra.mxu0 0.0
  %2354 = vmatpush.msra.mxu0 0.0
  %2355 = vmatpush.msra.mxu0 0.0
  %2356 = vmatpush.msra.mxu0 0.0
  %2357 = vmatpush.msra.mxu0 0.0
  %2358 = vmatpush.msra.mxu0 0.0
  %2359 = vmatpush.msra.mxu0 0.0
  %2360 = vmatpush.msra.mxu0 0.0
  %2361 = vmatpush.msra.mxu0 0.0
  %2362 = vmatpush.msra.mxu0 0.0
  %2363 = vmatpush.msra.mxu0 0.0
  %2364 = vmatpush.msra.mxu0 0.0
  %2365 = vmatpush.msra.mxu0 0.0
  %v2366 = vand.u32 %v1196, 4294901760
  %v2367 = vsub.f32 %v1196, %v2366
  %v2368 = vand.u32 %v2367, 4294901760
  %v2369 = vsub.f32 %v2367, %v2368
  %v2370 = vand.u32 %v2369, 4294901760
  %2371 = vmatpush.msra.mxu0 %v2370
  %v2372 = vand.u32 %v2301, 4294901760
  %2373 = vmatmul.f32.gmra.mxu0 %v2372
  %v2374 = vpop.f32.mrf.mxu0
  %v2375 = vadd.f32 %v2333, %v2374
  %v2376 = vand.u32 %v2304, 4294901760
  %2377 = vmatmul.f32.gmra.mxu0 %v2376
  %v2378 = vpop.f32.mrf.mxu0
  %v2379 = vadd.f32 %v2341, %v2378
  %v2380 = vand.u32 %v2307, 4294901760
  %2381 = vmatmul.f32.gmra.mxu0 %v2380
  %v2382 = vpop.f32.mrf.mxu0
  %v2383 = vadd.f32 %v2349, %v2382
  %2384 = vdwg.mxu0
  %2385 = vmatpush.msra.mxu0 0.0
  %2386 = vmatpush.msra.mxu0 0.0
  %2387 = vmatpush.msra.mxu0 0.0
  %2388 = vmatpush.msra.mxu0 0.0
  %2389 = vmatpush.msra.mxu0 0.0
  %2390 = vmatpush.msra.mxu0 0.0
  %2391 = vmatpush.msra.mxu0 0.0
  %2392 = vmatpush.msra.mxu0 0.0
  %2393 = vmatpush.msra.mxu0 0.0
  %2394 = vmatpush.msra.mxu0 0.0
  %2395 = vmatpush.msra.mxu0 0.0
  %2396 = vmatpush.msra.mxu0 0.0
  %2397 = vmatpush.msra.mxu0 0.0
  %2398 = vmatpush.msra.mxu0 0.0
  %2399 = vmatpush.msra.mxu0 0.0
  %v2400 = vand.u32 %v1196, 4294901760
  %v2401 = vsub.f32 %v1196, %v2400
  %2402 = vmatpush.msra.mxu0 %v2401
  %v2403 = vand.u32 %v2301, 4294901760
  %v2404 = vsub.f32 %v2301, %v2403
  %2405 = vmatmul.f32.gmra.mxu0 %v2404
  %v2406 = vpop.f32.mrf.mxu0
  %v2407 = vadd.f32 %v2375, %v2406
  %v2408 = vand.u32 %v2304, 4294901760
  %v2409 = vsub.f32 %v2304, %v2408
  %2410 = vmatmul.f32.gmra.mxu0 %v2409
  %v2411 = vpop.f32.mrf.mxu0
  %v2412 = vadd.f32 %v2379, %v2411
  %v2413 = vand.u32 %v2307, 4294901760
  %v2414 = vsub.f32 %v2307, %v2413
  %2415 = vmatmul.f32.gmra.mxu0 %v2414
  %v2416 = vpop.f32.mrf.mxu0
  %v2417 = vadd.f32 %v2383, %v2416
  %2418 = vdwg.mxu0
  %2419 = vmatpush.msra.mxu0 0.0
  %2420 = vmatpush.msra.mxu0 0.0
  %2421 = vmatpush.msra.mxu0 0.0
  %2422 = vmatpush.msra.mxu0 0.0
  %2423 = vmatpush.msra.mxu0 0.0
  %2424 = vmatpush.msra.mxu0 0.0
  %2425 = vmatpush.msra.mxu0 0.0
  %2426 = vmatpush.msra.mxu0 0.0
  %2427 = vmatpush.msra.mxu0 0.0
  %2428 = vmatpush.msra.mxu0 0.0
  %2429 = vmatpush.msra.mxu0 0.0
  %2430 = vmatpush.msra.mxu0 0.0
  %2431 = vmatpush.msra.mxu0 0.0
  %2432 = vmatpush.msra.mxu0 0.0
  %2433 = vmatpush.msra.mxu0 0.0
  %v2434 = vand.u32 %v1196, 4294901760
  %2435 = vmatpush.msra.mxu0 %v2434
  %v2436 = vand.u32 %v2301, 4294901760
  %v2437 = vsub.f32 %v2301, %v2436
  %v2438 = vand.u32 %v2437, 4294901760
  %2439 = vmatmul.f32.gmra.mxu0 %v2438
  %v2440 = vpop.f32.mrf.mxu0
  %v2441 = vadd.f32 %v2407, %v2440
  %v2442 = vand.u32 %v2304, 4294901760
  %v2443 = vsub.f32 %v2304, %v2442
  %v2444 = vand.u32 %v2443, 4294901760
  %2445 = vmatmul.f32.gmra.mxu0 %v2444
  %v2446 = vpop.f32.mrf.mxu0
  %v2447 = vadd.f32 %v2412, %v2446
  %v2448 = vand.u32 %v2307, 4294901760
  %v2449 = vsub.f32 %v2307, %v2448
  %v2450 = vand.u32 %v2449, 4294901760
  %2451 = vmatmul.f32.gmra.mxu0 %v2450
  %v2452 = vpop.f32.mrf.mxu0
  %v2453 = vadd.f32 %v2417, %v2452
  %2454 = vdwg.mxu0
  %2455 = vmatpush.msra.mxu0 0.0
  %2456 = vmatpush.msra.mxu0 0.0
  %2457 = vmatpush.msra.mxu0 0.0
  %2458 = vmatpush.msra.mxu0 0.0
  %2459 = vmatpush.msra.mxu0 0.0
  %2460 = vmatpush.msra.mxu0 0.0
  %2461 = vmatpush.msra.mxu0 0.0
  %2462 = vmatpush.msra.mxu0 0.0
  %2463 = vmatpush.msra.mxu0 0.0
  %2464 = vmatpush.msra.mxu0 0.0
  %2465 = vmatpush.msra.mxu0 0.0
  %2466 = vmatpush.msra.mxu0 0.0
  %2467 = vmatpush.msra.mxu0 0.0
  %2468 = vmatpush.msra.mxu0 0.0
  %2469 = vmatpush.msra.mxu0 0.0
  %v2470 = vand.u32 %v1196, 4294901760
  %v2471 = vsub.f32 %v1196, %v2470
  %v2472 = vand.u32 %v2471, 4294901760
  %2473 = vmatpush.msra.mxu0 %v2472
  %v2474 = vand.u32 %v2301, 4294901760
  %2475 = vmatmul.f32.gmra.mxu0 %v2474
  %v2476 = vpop.f32.mrf.mxu0
  %v2477 = vadd.f32 %v2441, %v2476
  %v2478 = vand.u32 %v2304, 4294901760
  %2479 = vmatmul.f32.gmra.mxu0 %v2478
  %v2480 = vpop.f32.mrf.mxu0
  %v2481 = vadd.f32 %v2447, %v2480
  %v2482 = vand.u32 %v2307, 4294901760
  %2483 = vmatmul.f32.gmra.mxu0 %v2482
  %v2484 = vpop.f32.mrf.mxu0
  %v2485 = vadd.f32 %v2453, %v2484
  %2486 = vdwg.mxu0
  %2487 = vmatpush.msra.mxu0 0.0
  %2488 = vmatpush.msra.mxu0 0.0
  %2489 = vmatpush.msra.mxu0 0.0
  %2490 = vmatpush.msra.mxu0 0.0
  %2491 = vmatpush.msra.mxu0 0.0
  %2492 = vmatpush.msra.mxu0 0.0
  %2493 = vmatpush.msra.mxu0 0.0
  %2494 = vmatpush.msra.mxu0 0.0
  %2495 = vmatpush.msra.mxu0 0.0
  %2496 = vmatpush.msra.mxu0 0.0
  %2497 = vmatpush.msra.mxu0 0.0
  %2498 = vmatpush.msra.mxu0 0.0
  %2499 = vmatpush.msra.mxu0 0.0
  %2500 = vmatpush.msra.mxu0 0.0
  %2501 = vmatpush.msra.mxu0 0.0
  %v2502 = vand.u32 %v1196, 4294901760
  %2503 = vmatpush.msra.mxu0 %v2502
  %v2504 = vand.u32 %v2301, 4294901760
  %2505 = vmatmul.f32.gmra.mxu0 %v2504
  %v2506 = vpop.f32.mrf.mxu0
  %v2507 = vadd.f32 %v2477, %v2506
  %v2508 = vand.u32 %v2304, 4294901760
  %2509 = vmatmul.f32.gmra.mxu0 %v2508
  %v2510 = vpop.f32.mrf.mxu0
  %v2511 = vadd.f32 %v2481, %v2510
  %v2512 = vand.u32 %v2307, 4294901760
  %2513 = vmatmul.f32.gmra.mxu0 %v2512
  %v2514 = vpop.f32.mrf.mxu0
  %v2515 = vadd.f32 %v2485, %v2514
  %2516 = vdwg.mxu0
  %v2518 = vsel %vm1208, %v1740, 0
  %v2521 = vsel %vm1208, %v1744, 0
  %v2524 = vsel %vm1208, %v1748, 0
  %2526 = vmatpush.msra.mxu0 0.0
  %2527 = vmatpush.msra.mxu0 0.0
  %2528 = vmatpush.msra.mxu0 0.0
  %2529 = vmatpush.msra.mxu0 0.0
  %2530 = vmatpush.msra.mxu0 0.0
  %2531 = vmatpush.msra.mxu0 0.0
  %2532 = vmatpush.msra.mxu0 0.0
  %2533 = vmatpush.msra.mxu0 0.0
  %2534 = vmatpush.msra.mxu0 0.0
  %2535 = vmatpush.msra.mxu0 0.0
  %2536 = vmatpush.msra.mxu0 0.0
  %2537 = vmatpush.msra.mxu0 0.0
  %2538 = vmatpush.msra.mxu0 0.0
  %2539 = vmatpush.msra.mxu0 0.0
  %2540 = vmatpush.msra.mxu0 0.0
  %v2541 = vand.u32 %v1195, 4294901760
  %2542 = vmatpush.msra.mxu0 %v2541
  %v2543 = vand.u32 %v2518, 4294901760
  %v2544 = vsub.f32 %v2518, %v2543
  %v2545 = vand.u32 %v2544, 4294901760
  %v2546 = vsub.f32 %v2544, %v2545
  %v2547 = vand.u32 %v2546, 4294901760
  %2548 = vmatmul.f32.gmra.mxu0 %v2547
  %v2549 = vpop.f32.mrf.mxu0
  %v2550 = vadd.f32 %v2507, %v2549
  %v2551 = vand.u32 %v2521, 4294901760
  %v2552 = vsub.f32 %v2521, %v2551
  %v2553 = vand.u32 %v2552, 4294901760
  %v2554 = vsub.f32 %v2552, %v2553
  %v2555 = vand.u32 %v2554, 4294901760
  %2556 = vmatmul.f32.gmra.mxu0 %v2555
  %v2557 = vpop.f32.mrf.mxu0
  %v2558 = vadd.f32 %v2511, %v2557
  %v2559 = vand.u32 %v2524, 4294901760
  %v2560 = vsub.f32 %v2524, %v2559
  %v2561 = vand.u32 %v2560, 4294901760
  %v2562 = vsub.f32 %v2560, %v2561
  %v2563 = vand.u32 %v2562, 4294901760
  %2564 = vmatmul.f32.gmra.mxu0 %v2563
  %v2565 = vpop.f32.mrf.mxu0
  %v2566 = vadd.f32 %v2515, %v2565
  %2567 = vdwg.mxu0
  %2568 = vmatpush.msra.mxu0 0.0
  %2569 = vmatpush.msra.mxu0 0.0
  %2570 = vmatpush.msra.mxu0 0.0
  %2571 = vmatpush.msra.mxu0 0.0
  %2572 = vmatpush.msra.mxu0 0.0
  %2573 = vmatpush.msra.mxu0 0.0
  %2574 = vmatpush.msra.mxu0 0.0
  %2575 = vmatpush.msra.mxu0 0.0
  %2576 = vmatpush.msra.mxu0 0.0
  %2577 = vmatpush.msra.mxu0 0.0
  %2578 = vmatpush.msra.mxu0 0.0
  %2579 = vmatpush.msra.mxu0 0.0
  %2580 = vmatpush.msra.mxu0 0.0
  %2581 = vmatpush.msra.mxu0 0.0
  %2582 = vmatpush.msra.mxu0 0.0
  %v2583 = vand.u32 %v1195, 4294901760
  %v2584 = vsub.f32 %v1195, %v2583
  %v2585 = vand.u32 %v2584, 4294901760
  %v2586 = vsub.f32 %v2584, %v2585
  %v2587 = vand.u32 %v2586, 4294901760
  %2588 = vmatpush.msra.mxu0 %v2587
  %v2589 = vand.u32 %v2518, 4294901760
  %2590 = vmatmul.f32.gmra.mxu0 %v2589
  %v2591 = vpop.f32.mrf.mxu0
  %v2592 = vadd.f32 %v2550, %v2591
  %v2593 = vand.u32 %v2521, 4294901760
  %2594 = vmatmul.f32.gmra.mxu0 %v2593
  %v2595 = vpop.f32.mrf.mxu0
  %v2596 = vadd.f32 %v2558, %v2595
  %v2597 = vand.u32 %v2524, 4294901760
  %2598 = vmatmul.f32.gmra.mxu0 %v2597
  %v2599 = vpop.f32.mrf.mxu0
  %v2600 = vadd.f32 %v2566, %v2599
  %2601 = vdwg.mxu0
  %2602 = vmatpush.msra.mxu0 0.0
  %2603 = vmatpush.msra.mxu0 0.0
  %2604 = vmatpush.msra.mxu0 0.0
  %2605 = vmatpush.msra.mxu0 0.0
  %2606 = vmatpush.msra.mxu0 0.0
  %2607 = vmatpush.msra.mxu0 0.0
  %2608 = vmatpush.msra.mxu0 0.0
  %2609 = vmatpush.msra.mxu0 0.0
  %2610 = vmatpush.msra.mxu0 0.0
  %2611 = vmatpush.msra.mxu0 0.0
  %2612 = vmatpush.msra.mxu0 0.0
  %2613 = vmatpush.msra.mxu0 0.0
  %2614 = vmatpush.msra.mxu0 0.0
  %2615 = vmatpush.msra.mxu0 0.0
  %2616 = vmatpush.msra.mxu0 0.0
  %v2617 = vand.u32 %v1195, 4294901760
  %v2618 = vsub.f32 %v1195, %v2617
  %2619 = vmatpush.msra.mxu0 %v2618
  %v2620 = vand.u32 %v2518, 4294901760
  %v2621 = vsub.f32 %v2518, %v2620
  %2622 = vmatmul.f32.gmra.mxu0 %v2621
  %v2623 = vpop.f32.mrf.mxu0
  %v2624 = vadd.f32 %v2592, %v2623
  %v2625 = vand.u32 %v2521, 4294901760
  %v2626 = vsub.f32 %v2521, %v2625
  %2627 = vmatmul.f32.gmra.mxu0 %v2626
  %v2628 = vpop.f32.mrf.mxu0
  %v2629 = vadd.f32 %v2596, %v2628
  %v2630 = vand.u32 %v2524, 4294901760
  %v2631 = vsub.f32 %v2524, %v2630
  %2632 = vmatmul.f32.gmra.mxu0 %v2631
  %v2633 = vpop.f32.mrf.mxu0
  %v2634 = vadd.f32 %v2600, %v2633
  %2635 = vdwg.mxu0
  %2636 = vmatpush.msra.mxu0 0.0
  %2637 = vmatpush.msra.mxu0 0.0
  %2638 = vmatpush.msra.mxu0 0.0
  %2639 = vmatpush.msra.mxu0 0.0
  %2640 = vmatpush.msra.mxu0 0.0
  %2641 = vmatpush.msra.mxu0 0.0
  %2642 = vmatpush.msra.mxu0 0.0
  %2643 = vmatpush.msra.mxu0 0.0
  %2644 = vmatpush.msra.mxu0 0.0
  %2645 = vmatpush.msra.mxu0 0.0
  %2646 = vmatpush.msra.mxu0 0.0
  %2647 = vmatpush.msra.mxu0 0.0
  %2648 = vmatpush.msra.mxu0 0.0
  %2649 = vmatpush.msra.mxu0 0.0
  %2650 = vmatpush.msra.mxu0 0.0
  %v2651 = vand.u32 %v1195, 4294901760
  %2652 = vmatpush.msra.mxu0 %v2651
  %v2653 = vand.u32 %v2518, 4294901760
  %v2654 = vsub.f32 %v2518, %v2653
  %v2655 = vand.u32 %v2654, 4294901760
  %2656 = vmatmul.f32.gmra.mxu0 %v2655
  %v2657 = vpop.f32.mrf.mxu0
  %v2658 = vadd.f32 %v2624, %v2657
  %v2659 = vand.u32 %v2521, 4294901760
  %v2660 = vsub.f32 %v2521, %v2659
  %v2661 = vand.u32 %v2660, 4294901760
  %2662 = vmatmul.f32.gmra.mxu0 %v2661
  %v2663 = vpop.f32.mrf.mxu0
  %v2664 = vadd.f32 %v2629, %v2663
  %v2665 = vand.u32 %v2524, 4294901760
  %v2666 = vsub.f32 %v2524, %v2665
  %v2667 = vand.u32 %v2666, 4294901760
  %2668 = vmatmul.f32.gmra.mxu0 %v2667
  %v2669 = vpop.f32.mrf.mxu0
  %v2670 = vadd.f32 %v2634, %v2669
  %2671 = vdwg.mxu0
  %2672 = vmatpush.msra.mxu0 0.0
  %2673 = vmatpush.msra.mxu0 0.0
  %2674 = vmatpush.msra.mxu0 0.0
  %2675 = vmatpush.msra.mxu0 0.0
  %2676 = vmatpush.msra.mxu0 0.0
  %2677 = vmatpush.msra.mxu0 0.0
  %2678 = vmatpush.msra.mxu0 0.0
  %2679 = vmatpush.msra.mxu0 0.0
  %2680 = vmatpush.msra.mxu0 0.0
  %2681 = vmatpush.msra.mxu0 0.0
  %2682 = vmatpush.msra.mxu0 0.0
  %2683 = vmatpush.msra.mxu0 0.0
  %2684 = vmatpush.msra.mxu0 0.0
  %2685 = vmatpush.msra.mxu0 0.0
  %2686 = vmatpush.msra.mxu0 0.0
  %v2687 = vand.u32 %v1195, 4294901760
  %v2688 = vsub.f32 %v1195, %v2687
  %v2689 = vand.u32 %v2688, 4294901760
  %2690 = vmatpush.msra.mxu0 %v2689
  %v2691 = vand.u32 %v2518, 4294901760
  %2692 = vmatmul.f32.gmra.mxu0 %v2691
  %v2693 = vpop.f32.mrf.mxu0
  %v2694 = vadd.f32 %v2658, %v2693
  %v2695 = vand.u32 %v2521, 4294901760
  %2696 = vmatmul.f32.gmra.mxu0 %v2695
  %v2697 = vpop.f32.mrf.mxu0
  %v2698 = vadd.f32 %v2664, %v2697
  %v2699 = vand.u32 %v2524, 4294901760
  %2700 = vmatmul.f32.gmra.mxu0 %v2699
  %v2701 = vpop.f32.mrf.mxu0
  %v2702 = vadd.f32 %v2670, %v2701
  %2703 = vdwg.mxu0
  %2704 = vmatpush.msra.mxu0 0.0
  %2705 = vmatpush.msra.mxu0 0.0
  %2706 = vmatpush.msra.mxu0 0.0
  %2707 = vmatpush.msra.mxu0 0.0
  %2708 = vmatpush.msra.mxu0 0.0
  %2709 = vmatpush.msra.mxu0 0.0
  %2710 = vmatpush.msra.mxu0 0.0
  %2711 = vmatpush.msra.mxu0 0.0
  %2712 = vmatpush.msra.mxu0 0.0
  %2713 = vmatpush.msra.mxu0 0.0
  %2714 = vmatpush.msra.mxu0 0.0
  %2715 = vmatpush.msra.mxu0 0.0
  %2716 = vmatpush.msra.mxu0 0.0
  %2717 = vmatpush.msra.mxu0 0.0
  %2718 = vmatpush.msra.mxu0 0.0
  %v2719 = vand.u32 %v1195, 4294901760
  %2720 = vmatpush.msra.mxu0 %v2719
  %v2721 = vand.u32 %v2518, 4294901760
  %2722 = vmatmul.f32.gmra.mxu0 %v2721
  %v2723 = vpop.f32.mrf.mxu0
  %v2724 = vadd.f32 %v2694, %v2723
  %v2725 = vand.u32 %v2521, 4294901760
  %2726 = vmatmul.f32.gmra.mxu0 %v2725
  %v2727 = vpop.f32.mrf.mxu0
  %v2728 = vadd.f32 %v2698, %v2727
  %v2729 = vand.u32 %v2524, 4294901760
  %2730 = vmatmul.f32.gmra.mxu0 %v2729
  %v2731 = vpop.f32.mrf.mxu0
  %v2732 = vadd.f32 %v2702, %v2731
  %2733 = vdwg.mxu0
  %2734 = vrot.lane.b32.xlu0 %v1185, 112
  %v2735 = vpop.permute.xlu0 %2734
  %2736 = vrot.lane.b32.xlu0 %v1189, 112
  %v2737 = vpop.permute.xlu0 %2736
  %2738 = vrot.lane.b32.xlu0 %v1193, 112
  %v2739 = vpop.permute.xlu0 %2738
  %2740 = vrot.lane.b32.xlu0 %v1185, 80
  %v2741 = vpop.permute.xlu0 %2740
  %2742 = vrot.lane.b32.xlu0 %v1189, 80
  %v2743 = vpop.permute.xlu0 %2742
  %2744 = vrot.lane.b32.xlu0 %v1193, 80
  %v2745 = vpop.permute.xlu0 %2744
  %v2746 = vsel %vm1208, %v2735, 0
  %v2748 = vsel %vm1208, %v2737, 0
  %v2750 = vsel %vm1208, %v2739, 0
  %v2752 = vsel %vm1208, %v2741, 0
  %v2754 = vsel %vm1208, %v2743, 0
  %v2756 = vsel %vm1208, %v2745, 0
  %2758 = vmatpush.xpose.msra.mxu0 0.0
  %2759 = vmatpush.xpose.msra.mxu0 0.0
  %2760 = vmatpush.xpose.msra.mxu0 0.0
  %2761 = vmatpush.xpose.msra.mxu0 0.0
  %2762 = vmatpush.xpose.msra.mxu0 0.0
  %2763 = vmatpush.xpose.msra.mxu0 0.0
  %2764 = vmatpush.xpose.msra.mxu0 0.0
  %2765 = vmatpush.xpose.msra.mxu0 0.0
  %2766 = vmatpush.xpose.msra.mxu0 0.0
  %2767 = vmatpush.xpose.msra.mxu0 0.0
  %2768 = vmatpush.xpose.msra.mxu0 0.0
  %2769 = vmatpush.xpose.msra.mxu0 0.0
  %2770 = vmatpush.xpose.msra.mxu0 0.0
  %v2771 = vand.u32 %v2756, 4294901760
  %2772 = vmatpush.xpose.msra.mxu0 %v2771
  %v2773 = vand.u32 %v2754, 4294901760
  %2774 = vmatpush.xpose.msra.mxu0 %v2773
  %v2775 = vand.u32 %v2752, 4294901760
  %2776 = vmatpush.xpose.msra.mxu0 %v2775
  %v2777 = vand.u32 %v2746, 4294901760
  %v2778 = vsub.f32 %v2746, %v2777
  %v2779 = vand.u32 %v2778, 4294901760
  %v2780 = vsub.f32 %v2778, %v2779
  %v2781 = vand.u32 %v2780, 4294901760
  %2782 = vmatmul.f32.gmra.mxu0 %v2781
  %v2783 = vpop.f32.mrf.mxu0
  %v2784 = vadd.f32 0.0, %v2783
  %v2785 = vand.u32 %v2748, 4294901760
  %v2786 = vsub.f32 %v2748, %v2785
  %v2787 = vand.u32 %v2786, 4294901760
  %v2788 = vsub.f32 %v2786, %v2787
  %v2789 = vand.u32 %v2788, 4294901760
  %2790 = vmatmul.f32.gmra.mxu0 %v2789
  %v2791 = vpop.f32.mrf.mxu0
  %v2792 = vadd.f32 0.0, %v2791
  %v2793 = vand.u32 %v2750, 4294901760
  %v2794 = vsub.f32 %v2750, %v2793
  %v2795 = vand.u32 %v2794, 4294901760
  %v2796 = vsub.f32 %v2794, %v2795
  %v2797 = vand.u32 %v2796, 4294901760
  %2798 = vmatmul.f32.gmra.mxu0 %v2797
  %v2799 = vpop.f32.mrf.mxu0
  %v2800 = vadd.f32 0.0, %v2799
  %2801 = vdwg.mxu0
  %2802 = vmatpush.xpose.msra.mxu0 0.0
  %2803 = vmatpush.xpose.msra.mxu0 0.0
  %2804 = vmatpush.xpose.msra.mxu0 0.0
  %2805 = vmatpush.xpose.msra.mxu0 0.0
  %2806 = vmatpush.xpose.msra.mxu0 0.0
  %2807 = vmatpush.xpose.msra.mxu0 0.0
  %2808 = vmatpush.xpose.msra.mxu0 0.0
  %2809 = vmatpush.xpose.msra.mxu0 0.0
  %2810 = vmatpush.xpose.msra.mxu0 0.0
  %2811 = vmatpush.xpose.msra.mxu0 0.0
  %2812 = vmatpush.xpose.msra.mxu0 0.0
  %2813 = vmatpush.xpose.msra.mxu0 0.0
  %2814 = vmatpush.xpose.msra.mxu0 0.0
  %v2815 = vand.u32 %v2756, 4294901760
  %v2816 = vsub.f32 %v2756, %v2815
  %v2817 = vand.u32 %v2816, 4294901760
  %v2818 = vsub.f32 %v2816, %v2817
  %v2819 = vand.u32 %v2818, 4294901760
  %2820 = vmatpush.xpose.msra.mxu0 %v2819
  %v2821 = vand.u32 %v2754, 4294901760
  %v2822 = vsub.f32 %v2754, %v2821
  %v2823 = vand.u32 %v2822, 4294901760
  %v2824 = vsub.f32 %v2822, %v2823
  %v2825 = vand.u32 %v2824, 4294901760
  %2826 = vmatpush.xpose.msra.mxu0 %v2825
  %v2827 = vand.u32 %v2752, 4294901760
  %v2828 = vsub.f32 %v2752, %v2827
  %v2829 = vand.u32 %v2828, 4294901760
  %v2830 = vsub.f32 %v2828, %v2829
  %v2831 = vand.u32 %v2830, 4294901760
  %2832 = vmatpush.xpose.msra.mxu0 %v2831
  %v2833 = vand.u32 %v2746, 4294901760
  %2834 = vmatmul.f32.gmra.mxu0 %v2833
  %v2835 = vpop.f32.mrf.mxu0
  %v2836 = vadd.f32 %v2784, %v2835
  %v2837 = vand.u32 %v2748, 4294901760
  %2838 = vmatmul.f32.gmra.mxu0 %v2837
  %v2839 = vpop.f32.mrf.mxu0
  %v2840 = vadd.f32 %v2792, %v2839
  %v2841 = vand.u32 %v2750, 4294901760
  %2842 = vmatmul.f32.gmra.mxu0 %v2841
  %v2843 = vpop.f32.mrf.mxu0
  %v2844 = vadd.f32 %v2800, %v2843
  %2845 = vdwg.mxu0
  %2846 = vmatpush.xpose.msra.mxu0 0.0
  %2847 = vmatpush.xpose.msra.mxu0 0.0
  %2848 = vmatpush.xpose.msra.mxu0 0.0
  %2849 = vmatpush.xpose.msra.mxu0 0.0
  %2850 = vmatpush.xpose.msra.mxu0 0.0
  %2851 = vmatpush.xpose.msra.mxu0 0.0
  %2852 = vmatpush.xpose.msra.mxu0 0.0
  %2853 = vmatpush.xpose.msra.mxu0 0.0
  %2854 = vmatpush.xpose.msra.mxu0 0.0
  %2855 = vmatpush.xpose.msra.mxu0 0.0
  %2856 = vmatpush.xpose.msra.mxu0 0.0
  %2857 = vmatpush.xpose.msra.mxu0 0.0
  %2858 = vmatpush.xpose.msra.mxu0 0.0
  %v2859 = vand.u32 %v2756, 4294901760
  %v2860 = vsub.f32 %v2756, %v2859
  %2861 = vmatpush.xpose.msra.mxu0 %v2860
  %v2862 = vand.u32 %v2754, 4294901760
  %v2863 = vsub.f32 %v2754, %v2862
  %2864 = vmatpush.xpose.msra.mxu0 %v2863
  %v2865 = vand.u32 %v2752, 4294901760
  %v2866 = vsub.f32 %v2752, %v2865
  %2867 = vmatpush.xpose.msra.mxu0 %v2866
  %v2868 = vand.u32 %v2746, 4294901760
  %v2869 = vsub.f32 %v2746, %v2868
  %2870 = vmatmul.f32.gmra.mxu0 %v2869
  %v2871 = vpop.f32.mrf.mxu0
  %v2872 = vadd.f32 %v2836, %v2871
  %v2873 = vand.u32 %v2748, 4294901760
  %v2874 = vsub.f32 %v2748, %v2873
  %2875 = vmatmul.f32.gmra.mxu0 %v2874
  %v2876 = vpop.f32.mrf.mxu0
  %v2877 = vadd.f32 %v2840, %v2876
  %v2878 = vand.u32 %v2750, 4294901760
  %v2879 = vsub.f32 %v2750, %v2878
  %2880 = vmatmul.f32.gmra.mxu0 %v2879
  %v2881 = vpop.f32.mrf.mxu0
  %v2882 = vadd.f32 %v2844, %v2881
  %2883 = vdwg.mxu0
  %2884 = vmatpush.xpose.msra.mxu0 0.0
  %2885 = vmatpush.xpose.msra.mxu0 0.0
  %2886 = vmatpush.xpose.msra.mxu0 0.0
  %2887 = vmatpush.xpose.msra.mxu0 0.0
  %2888 = vmatpush.xpose.msra.mxu0 0.0
  %2889 = vmatpush.xpose.msra.mxu0 0.0
  %2890 = vmatpush.xpose.msra.mxu0 0.0
  %2891 = vmatpush.xpose.msra.mxu0 0.0
  %2892 = vmatpush.xpose.msra.mxu0 0.0
  %2893 = vmatpush.xpose.msra.mxu0 0.0
  %2894 = vmatpush.xpose.msra.mxu0 0.0
  %2895 = vmatpush.xpose.msra.mxu0 0.0
  %2896 = vmatpush.xpose.msra.mxu0 0.0
  %v2897 = vand.u32 %v2756, 4294901760
  %2898 = vmatpush.xpose.msra.mxu0 %v2897
  %v2899 = vand.u32 %v2754, 4294901760
  %2900 = vmatpush.xpose.msra.mxu0 %v2899
  %v2901 = vand.u32 %v2752, 4294901760
  %2902 = vmatpush.xpose.msra.mxu0 %v2901
  %v2903 = vand.u32 %v2746, 4294901760
  %v2904 = vsub.f32 %v2746, %v2903
  %v2905 = vand.u32 %v2904, 4294901760
  %2906 = vmatmul.f32.gmra.mxu0 %v2905
  %v2907 = vpop.f32.mrf.mxu0
  %v2908 = vadd.f32 %v2872, %v2907
  %v2909 = vand.u32 %v2748, 4294901760
  %v2910 = vsub.f32 %v2748, %v2909
  %v2911 = vand.u32 %v2910, 4294901760
  %2912 = vmatmul.f32.gmra.mxu0 %v2911
  %v2913 = vpop.f32.mrf.mxu0
  %v2914 = vadd.f32 %v2877, %v2913
  %v2915 = vand.u32 %v2750, 4294901760
  %v2916 = vsub.f32 %v2750, %v2915
  %v2917 = vand.u32 %v2916, 4294901760
  %2918 = vmatmul.f32.gmra.mxu0 %v2917
  %v2919 = vpop.f32.mrf.mxu0
  %v2920 = vadd.f32 %v2882, %v2919
  %2921 = vdwg.mxu0
  %2922 = vmatpush.xpose.msra.mxu0 0.0
  %2923 = vmatpush.xpose.msra.mxu0 0.0
  %2924 = vmatpush.xpose.msra.mxu0 0.0
  %2925 = vmatpush.xpose.msra.mxu0 0.0
  %2926 = vmatpush.xpose.msra.mxu0 0.0
  %2927 = vmatpush.xpose.msra.mxu0 0.0
  %2928 = vmatpush.xpose.msra.mxu0 0.0
  %2929 = vmatpush.xpose.msra.mxu0 0.0
  %2930 = vmatpush.xpose.msra.mxu0 0.0
  %2931 = vmatpush.xpose.msra.mxu0 0.0
  %2932 = vmatpush.xpose.msra.mxu0 0.0
  %2933 = vmatpush.xpose.msra.mxu0 0.0
  %2934 = vmatpush.xpose.msra.mxu0 0.0
  %v2935 = vand.u32 %v2756, 4294901760
  %v2936 = vsub.f32 %v2756, %v2935
  %v2937 = vand.u32 %v2936, 4294901760
  %2938 = vmatpush.xpose.msra.mxu0 %v2937
  %v2939 = vand.u32 %v2754, 4294901760
  %v2940 = vsub.f32 %v2754, %v2939
  %v2941 = vand.u32 %v2940, 4294901760
  %2942 = vmatpush.xpose.msra.mxu0 %v2941
  %v2943 = vand.u32 %v2752, 4294901760
  %v2944 = vsub.f32 %v2752, %v2943
  %v2945 = vand.u32 %v2944, 4294901760
  %2946 = vmatpush.xpose.msra.mxu0 %v2945
  %v2947 = vand.u32 %v2746, 4294901760
  %2948 = vmatmul.f32.gmra.mxu0 %v2947
  %v2949 = vpop.f32.mrf.mxu0
  %v2950 = vadd.f32 %v2908, %v2949
  %v2951 = vand.u32 %v2748, 4294901760
  %2952 = vmatmul.f32.gmra.mxu0 %v2951
  %v2953 = vpop.f32.mrf.mxu0
  %v2954 = vadd.f32 %v2914, %v2953
  %v2955 = vand.u32 %v2750, 4294901760
  %2956 = vmatmul.f32.gmra.mxu0 %v2955
  %v2957 = vpop.f32.mrf.mxu0
  %v2958 = vadd.f32 %v2920, %v2957
  %2959 = vdwg.mxu0
  %2960 = vmatpush.xpose.msra.mxu0 0.0
  %2961 = vmatpush.xpose.msra.mxu0 0.0
  %2962 = vmatpush.xpose.msra.mxu0 0.0
  %2963 = vmatpush.xpose.msra.mxu0 0.0
  %2964 = vmatpush.xpose.msra.mxu0 0.0
  %2965 = vmatpush.xpose.msra.mxu0 0.0
  %2966 = vmatpush.xpose.msra.mxu0 0.0
  %2967 = vmatpush.xpose.msra.mxu0 0.0
  %2968 = vmatpush.xpose.msra.mxu0 0.0
  %2969 = vmatpush.xpose.msra.mxu0 0.0
  %2970 = vmatpush.xpose.msra.mxu0 0.0
  %2971 = vmatpush.xpose.msra.mxu0 0.0
  %2972 = vmatpush.xpose.msra.mxu0 0.0
  %v2973 = vand.u32 %v2756, 4294901760
  %2974 = vmatpush.xpose.msra.mxu0 %v2973
  %v2975 = vand.u32 %v2754, 4294901760
  %2976 = vmatpush.xpose.msra.mxu0 %v2975
  %v2977 = vand.u32 %v2752, 4294901760
  %2978 = vmatpush.xpose.msra.mxu0 %v2977
  %v2979 = vand.u32 %v2746, 4294901760
  %2980 = vmatmul.f32.gmra.mxu0 %v2979
  %v2981 = vpop.f32.mrf.mxu0
  %v2982 = vadd.f32 %v2950, %v2981
  %v2983 = vand.u32 %v2748, 4294901760
  %2984 = vmatmul.f32.gmra.mxu0 %v2983
  %v2985 = vpop.f32.mrf.mxu0
  %v2986 = vadd.f32 %v2954, %v2985
  %v2987 = vand.u32 %v2750, 4294901760
  %2988 = vmatmul.f32.gmra.mxu0 %v2987
  %v2989 = vpop.f32.mrf.mxu0
  %v2990 = vadd.f32 %v2958, %v2989
  %2991 = vdwg.mxu0
  %v2992 = vmul.f32 %v2982, 0.35355338
  %v2993 = vmul.f32 %v2986, 0.35355338
  %v2994 = vmul.f32 %v2990, 0.35355338
  %v2995 = vadd.f32 %v2992, %v76
  %v2996 = vadd.f32 %v2993, %v77
  %v2997 = vadd.f32 %v2994, %v78
  %v2998 = vsel %vm1461, %v2995, -inf
  %2999 = vmax.xlane.f32.xlu0 %v2998
  %v3000 = vpop.xlane.xlu0 %2999
  %v3001 = vsel %vm1461, %v2996, -inf
  %3002 = vmax.xlane.f32.xlu0 %v3001
  %v3003 = vpop.xlane.xlu0 %3002
  %v3004 = vsel %vm1468, %v2997, -inf
  %3005 = vmax.xlane.f32.xlu0 %v3004
  %v3006 = vpop.xlane.xlu0 %3005
  %v3007 = vsub.f32 %v2995, %v3000
  %v3008 = vsub.f32 %v2996, %v3003
  %v3009 = vsub.f32 %v2997, %v3006
  %v3010 = vmul.f32 %v3007, 1.442695
  %v3011 = vpow.pop %v3010
  %v3012 = vmul.f32 %v3008, 1.442695
  %v3013 = vpow.pop %v3012
  %v3014 = vmul.f32 %v3009, 1.442695
  %v3015 = vpow.pop %v3014
  %v3016 = vsel %vm1461, %v3011, 0.0
  %3017 = vadd.xlane.f32.xlu0 %v3016
  %v3018 = vpop.xlane.xlu0 %3017
  %v3019 = vsel %vm1461, %v3013, 0.0
  %3020 = vadd.xlane.f32.xlu0 %v3019
  %v3021 = vpop.xlane.xlu0 %3020
  %v3022 = vsel %vm1468, %v3015, 0.0
  %3023 = vadd.xlane.f32.xlu0 %v3022
  %v3024 = vpop.xlane.xlu0 %3023
  %v3025 = vrcp.pop %v3018
  %v3026 = vrcp.pop %v3021
  %v3027 = vrcp.pop %v3024
  %v3028 = vmul.f32 %v3011, %v3025
  %v3029 = vmul.f32 %v3013, %v3026
  %v3030 = vmul.f32 %v3015, %v3027
  %3031 = vrot.lane.b32.xlu0 %v1185, 48
  %v3032 = vpop.permute.xlu0 %3031
  %3033 = vrot.lane.b32.xlu0 %v1189, 48
  %v3034 = vpop.permute.xlu0 %3033
  %3035 = vrot.lane.b32.xlu0 %v1193, 48
  %v3036 = vpop.permute.xlu0 %3035
  %v3040 = vsel %vm1461, %v3028, 0
  %v3043 = vsel %vm1461, %v3029, 0
  %v3046 = vsel %vm1461, %v3030, 0
  %v3048 = vsel %vm1513, %v3036, 0
  %3050 = vmatpush.msra.mxu0 0.0
  %3051 = vmatpush.msra.mxu0 0.0
  %3052 = vmatpush.msra.mxu0 0.0
  %3053 = vmatpush.msra.mxu0 0.0
  %3054 = vmatpush.msra.mxu0 0.0
  %3055 = vmatpush.msra.mxu0 0.0
  %3056 = vmatpush.msra.mxu0 0.0
  %3057 = vmatpush.msra.mxu0 0.0
  %3058 = vmatpush.msra.mxu0 0.0
  %3059 = vmatpush.msra.mxu0 0.0
  %3060 = vmatpush.msra.mxu0 0.0
  %3061 = vmatpush.msra.mxu0 0.0
  %3062 = vmatpush.msra.mxu0 0.0
  %v3063 = vand.u32 %v3048, 4294901760
  %3064 = vmatpush.msra.mxu0 %v3063
  %v3065 = vand.u32 %v3034, 4294901760
  %3066 = vmatpush.msra.mxu0 %v3065
  %v3067 = vand.u32 %v3032, 4294901760
  %3068 = vmatpush.msra.mxu0 %v3067
  %v3069 = vand.u32 %v3040, 4294901760
  %v3070 = vsub.f32 %v3040, %v3069
  %v3071 = vand.u32 %v3070, 4294901760
  %v3072 = vsub.f32 %v3070, %v3071
  %v3073 = vand.u32 %v3072, 4294901760
  %3074 = vmatmul.f32.gmra.mxu0 %v3073
  %v3075 = vpop.f32.mrf.mxu0
  %v3076 = vadd.f32 0.0, %v3075
  %v3077 = vand.u32 %v3043, 4294901760
  %v3078 = vsub.f32 %v3043, %v3077
  %v3079 = vand.u32 %v3078, 4294901760
  %v3080 = vsub.f32 %v3078, %v3079
  %v3081 = vand.u32 %v3080, 4294901760
  %3082 = vmatmul.f32.gmra.mxu0 %v3081
  %v3083 = vpop.f32.mrf.mxu0
  %v3084 = vadd.f32 0.0, %v3083
  %v3085 = vand.u32 %v3046, 4294901760
  %v3086 = vsub.f32 %v3046, %v3085
  %v3087 = vand.u32 %v3086, 4294901760
  %v3088 = vsub.f32 %v3086, %v3087
  %v3089 = vand.u32 %v3088, 4294901760
  %3090 = vmatmul.f32.gmra.mxu0 %v3089
  %v3091 = vpop.f32.mrf.mxu0
  %v3092 = vadd.f32 0.0, %v3091
  %3093 = vdwg.mxu0
  %3094 = vmatpush.msra.mxu0 0.0
  %3095 = vmatpush.msra.mxu0 0.0
  %3096 = vmatpush.msra.mxu0 0.0
  %3097 = vmatpush.msra.mxu0 0.0
  %3098 = vmatpush.msra.mxu0 0.0
  %3099 = vmatpush.msra.mxu0 0.0
  %3100 = vmatpush.msra.mxu0 0.0
  %3101 = vmatpush.msra.mxu0 0.0
  %3102 = vmatpush.msra.mxu0 0.0
  %3103 = vmatpush.msra.mxu0 0.0
  %3104 = vmatpush.msra.mxu0 0.0
  %3105 = vmatpush.msra.mxu0 0.0
  %3106 = vmatpush.msra.mxu0 0.0
  %v3107 = vand.u32 %v3048, 4294901760
  %v3108 = vsub.f32 %v3048, %v3107
  %v3109 = vand.u32 %v3108, 4294901760
  %v3110 = vsub.f32 %v3108, %v3109
  %v3111 = vand.u32 %v3110, 4294901760
  %3112 = vmatpush.msra.mxu0 %v3111
  %v3113 = vand.u32 %v3034, 4294901760
  %v3114 = vsub.f32 %v3034, %v3113
  %v3115 = vand.u32 %v3114, 4294901760
  %v3116 = vsub.f32 %v3114, %v3115
  %v3117 = vand.u32 %v3116, 4294901760
  %3118 = vmatpush.msra.mxu0 %v3117
  %v3119 = vand.u32 %v3032, 4294901760
  %v3120 = vsub.f32 %v3032, %v3119
  %v3121 = vand.u32 %v3120, 4294901760
  %v3122 = vsub.f32 %v3120, %v3121
  %v3123 = vand.u32 %v3122, 4294901760
  %3124 = vmatpush.msra.mxu0 %v3123
  %v3125 = vand.u32 %v3040, 4294901760
  %3126 = vmatmul.f32.gmra.mxu0 %v3125
  %v3127 = vpop.f32.mrf.mxu0
  %v3128 = vadd.f32 %v3076, %v3127
  %v3129 = vand.u32 %v3043, 4294901760
  %3130 = vmatmul.f32.gmra.mxu0 %v3129
  %v3131 = vpop.f32.mrf.mxu0
  %v3132 = vadd.f32 %v3084, %v3131
  %v3133 = vand.u32 %v3046, 4294901760
  %3134 = vmatmul.f32.gmra.mxu0 %v3133
  %v3135 = vpop.f32.mrf.mxu0
  %v3136 = vadd.f32 %v3092, %v3135
  %3137 = vdwg.mxu0
  %3138 = vmatpush.msra.mxu0 0.0
  %3139 = vmatpush.msra.mxu0 0.0
  %3140 = vmatpush.msra.mxu0 0.0
  %3141 = vmatpush.msra.mxu0 0.0
  %3142 = vmatpush.msra.mxu0 0.0
  %3143 = vmatpush.msra.mxu0 0.0
  %3144 = vmatpush.msra.mxu0 0.0
  %3145 = vmatpush.msra.mxu0 0.0
  %3146 = vmatpush.msra.mxu0 0.0
  %3147 = vmatpush.msra.mxu0 0.0
  %3148 = vmatpush.msra.mxu0 0.0
  %3149 = vmatpush.msra.mxu0 0.0
  %3150 = vmatpush.msra.mxu0 0.0
  %v3151 = vand.u32 %v3048, 4294901760
  %v3152 = vsub.f32 %v3048, %v3151
  %3153 = vmatpush.msra.mxu0 %v3152
  %v3154 = vand.u32 %v3034, 4294901760
  %v3155 = vsub.f32 %v3034, %v3154
  %3156 = vmatpush.msra.mxu0 %v3155
  %v3157 = vand.u32 %v3032, 4294901760
  %v3158 = vsub.f32 %v3032, %v3157
  %3159 = vmatpush.msra.mxu0 %v3158
  %v3160 = vand.u32 %v3040, 4294901760
  %v3161 = vsub.f32 %v3040, %v3160
  %3162 = vmatmul.f32.gmra.mxu0 %v3161
  %v3163 = vpop.f32.mrf.mxu0
  %v3164 = vadd.f32 %v3128, %v3163
  %v3165 = vand.u32 %v3043, 4294901760
  %v3166 = vsub.f32 %v3043, %v3165
  %3167 = vmatmul.f32.gmra.mxu0 %v3166
  %v3168 = vpop.f32.mrf.mxu0
  %v3169 = vadd.f32 %v3132, %v3168
  %v3170 = vand.u32 %v3046, 4294901760
  %v3171 = vsub.f32 %v3046, %v3170
  %3172 = vmatmul.f32.gmra.mxu0 %v3171
  %v3173 = vpop.f32.mrf.mxu0
  %v3174 = vadd.f32 %v3136, %v3173
  %3175 = vdwg.mxu0
  %3176 = vmatpush.msra.mxu0 0.0
  %3177 = vmatpush.msra.mxu0 0.0
  %3178 = vmatpush.msra.mxu0 0.0
  %3179 = vmatpush.msra.mxu0 0.0
  %3180 = vmatpush.msra.mxu0 0.0
  %3181 = vmatpush.msra.mxu0 0.0
  %3182 = vmatpush.msra.mxu0 0.0
  %3183 = vmatpush.msra.mxu0 0.0
  %3184 = vmatpush.msra.mxu0 0.0
  %3185 = vmatpush.msra.mxu0 0.0
  %3186 = vmatpush.msra.mxu0 0.0
  %3187 = vmatpush.msra.mxu0 0.0
  %3188 = vmatpush.msra.mxu0 0.0
  %v3189 = vand.u32 %v3048, 4294901760
  %3190 = vmatpush.msra.mxu0 %v3189
  %v3191 = vand.u32 %v3034, 4294901760
  %3192 = vmatpush.msra.mxu0 %v3191
  %v3193 = vand.u32 %v3032, 4294901760
  %3194 = vmatpush.msra.mxu0 %v3193
  %v3195 = vand.u32 %v3040, 4294901760
  %v3196 = vsub.f32 %v3040, %v3195
  %v3197 = vand.u32 %v3196, 4294901760
  %3198 = vmatmul.f32.gmra.mxu0 %v3197
  %v3199 = vpop.f32.mrf.mxu0
  %v3200 = vadd.f32 %v3164, %v3199
  %v3201 = vand.u32 %v3043, 4294901760
  %v3202 = vsub.f32 %v3043, %v3201
  %v3203 = vand.u32 %v3202, 4294901760
  %3204 = vmatmul.f32.gmra.mxu0 %v3203
  %v3205 = vpop.f32.mrf.mxu0
  %v3206 = vadd.f32 %v3169, %v3205
  %v3207 = vand.u32 %v3046, 4294901760
  %v3208 = vsub.f32 %v3046, %v3207
  %v3209 = vand.u32 %v3208, 4294901760
  %3210 = vmatmul.f32.gmra.mxu0 %v3209
  %v3211 = vpop.f32.mrf.mxu0
  %v3212 = vadd.f32 %v3174, %v3211
  %3213 = vdwg.mxu0
  %3214 = vmatpush.msra.mxu0 0.0
  %3215 = vmatpush.msra.mxu0 0.0
  %3216 = vmatpush.msra.mxu0 0.0
  %3217 = vmatpush.msra.mxu0 0.0
  %3218 = vmatpush.msra.mxu0 0.0
  %3219 = vmatpush.msra.mxu0 0.0
  %3220 = vmatpush.msra.mxu0 0.0
  %3221 = vmatpush.msra.mxu0 0.0
  %3222 = vmatpush.msra.mxu0 0.0
  %3223 = vmatpush.msra.mxu0 0.0
  %3224 = vmatpush.msra.mxu0 0.0
  %3225 = vmatpush.msra.mxu0 0.0
  %3226 = vmatpush.msra.mxu0 0.0
  %v3227 = vand.u32 %v3048, 4294901760
  %v3228 = vsub.f32 %v3048, %v3227
  %v3229 = vand.u32 %v3228, 4294901760
  %3230 = vmatpush.msra.mxu0 %v3229
  %v3231 = vand.u32 %v3034, 4294901760
  %v3232 = vsub.f32 %v3034, %v3231
  %v3233 = vand.u32 %v3232, 4294901760
  %3234 = vmatpush.msra.mxu0 %v3233
  %v3235 = vand.u32 %v3032, 4294901760
  %v3236 = vsub.f32 %v3032, %v3235
  %v3237 = vand.u32 %v3236, 4294901760
  %3238 = vmatpush.msra.mxu0 %v3237
  %v3239 = vand.u32 %v3040, 4294901760
  %3240 = vmatmul.f32.gmra.mxu0 %v3239
  %v3241 = vpop.f32.mrf.mxu0
  %v3242 = vadd.f32 %v3200, %v3241
  %v3243 = vand.u32 %v3043, 4294901760
  %3244 = vmatmul.f32.gmra.mxu0 %v3243
  %v3245 = vpop.f32.mrf.mxu0
  %v3246 = vadd.f32 %v3206, %v3245
  %v3247 = vand.u32 %v3046, 4294901760
  %3248 = vmatmul.f32.gmra.mxu0 %v3247
  %v3249 = vpop.f32.mrf.mxu0
  %v3250 = vadd.f32 %v3212, %v3249
  %3251 = vdwg.mxu0
  %3252 = vmatpush.msra.mxu0 0.0
  %3253 = vmatpush.msra.mxu0 0.0
  %3254 = vmatpush.msra.mxu0 0.0
  %3255 = vmatpush.msra.mxu0 0.0
  %3256 = vmatpush.msra.mxu0 0.0
  %3257 = vmatpush.msra.mxu0 0.0
  %3258 = vmatpush.msra.mxu0 0.0
  %3259 = vmatpush.msra.mxu0 0.0
  %3260 = vmatpush.msra.mxu0 0.0
  %3261 = vmatpush.msra.mxu0 0.0
  %3262 = vmatpush.msra.mxu0 0.0
  %3263 = vmatpush.msra.mxu0 0.0
  %3264 = vmatpush.msra.mxu0 0.0
  %v3265 = vand.u32 %v3048, 4294901760
  %3266 = vmatpush.msra.mxu0 %v3265
  %v3267 = vand.u32 %v3034, 4294901760
  %3268 = vmatpush.msra.mxu0 %v3267
  %v3269 = vand.u32 %v3032, 4294901760
  %3270 = vmatpush.msra.mxu0 %v3269
  %v3271 = vand.u32 %v3040, 4294901760
  %3272 = vmatmul.f32.gmra.mxu0 %v3271
  %v3273 = vpop.f32.mrf.mxu0
  %v3274 = vadd.f32 %v3242, %v3273
  %v3275 = vand.u32 %v3043, 4294901760
  %3276 = vmatmul.f32.gmra.mxu0 %v3275
  %v3277 = vpop.f32.mrf.mxu0
  %v3278 = vadd.f32 %v3246, %v3277
  %v3279 = vand.u32 %v3046, 4294901760
  %3280 = vmatmul.f32.gmra.mxu0 %v3279
  %v3281 = vpop.f32.mrf.mxu0
  %v3282 = vadd.f32 %v3250, %v3281
  %3283 = vdwg.mxu0
  %v3285 = vsel %vm1208, %v3274, 0
  %v3288 = vsel %vm1208, %v3278, 0
  %v3291 = vsel %vm1208, %v3282, 0
  %3293 = vmatpush.msra.mxu0 0.0
  %3294 = vmatpush.msra.mxu0 0.0
  %3295 = vmatpush.msra.mxu0 0.0
  %3296 = vmatpush.msra.mxu0 0.0
  %3297 = vmatpush.msra.mxu0 0.0
  %3298 = vmatpush.msra.mxu0 0.0
  %3299 = vmatpush.msra.mxu0 0.0
  %3300 = vmatpush.msra.mxu0 0.0
  %3301 = vmatpush.msra.mxu0 0.0
  %3302 = vmatpush.msra.mxu0 0.0
  %3303 = vmatpush.msra.mxu0 0.0
  %3304 = vmatpush.msra.mxu0 0.0
  %3305 = vmatpush.msra.mxu0 0.0
  %3306 = vmatpush.msra.mxu0 0.0
  %3307 = vmatpush.msra.mxu0 0.0
  %v3308 = vand.u32 %v1197, 4294901760
  %3309 = vmatpush.msra.mxu0 %v3308
  %v3310 = vand.u32 %v3285, 4294901760
  %v3311 = vsub.f32 %v3285, %v3310
  %v3312 = vand.u32 %v3311, 4294901760
  %v3313 = vsub.f32 %v3311, %v3312
  %v3314 = vand.u32 %v3313, 4294901760
  %3315 = vmatmul.f32.gmra.mxu0 %v3314
  %v3316 = vpop.f32.mrf.mxu0
  %v3317 = vadd.f32 0.0, %v3316
  %v3318 = vand.u32 %v3288, 4294901760
  %v3319 = vsub.f32 %v3288, %v3318
  %v3320 = vand.u32 %v3319, 4294901760
  %v3321 = vsub.f32 %v3319, %v3320
  %v3322 = vand.u32 %v3321, 4294901760
  %3323 = vmatmul.f32.gmra.mxu0 %v3322
  %v3324 = vpop.f32.mrf.mxu0
  %v3325 = vadd.f32 0.0, %v3324
  %v3326 = vand.u32 %v3291, 4294901760
  %v3327 = vsub.f32 %v3291, %v3326
  %v3328 = vand.u32 %v3327, 4294901760
  %v3329 = vsub.f32 %v3327, %v3328
  %v3330 = vand.u32 %v3329, 4294901760
  %3331 = vmatmul.f32.gmra.mxu0 %v3330
  %v3332 = vpop.f32.mrf.mxu0
  %v3333 = vadd.f32 0.0, %v3332
  %3334 = vdwg.mxu0
  %3335 = vmatpush.msra.mxu0 0.0
  %3336 = vmatpush.msra.mxu0 0.0
  %3337 = vmatpush.msra.mxu0 0.0
  %3338 = vmatpush.msra.mxu0 0.0
  %3339 = vmatpush.msra.mxu0 0.0
  %3340 = vmatpush.msra.mxu0 0.0
  %3341 = vmatpush.msra.mxu0 0.0
  %3342 = vmatpush.msra.mxu0 0.0
  %3343 = vmatpush.msra.mxu0 0.0
  %3344 = vmatpush.msra.mxu0 0.0
  %3345 = vmatpush.msra.mxu0 0.0
  %3346 = vmatpush.msra.mxu0 0.0
  %3347 = vmatpush.msra.mxu0 0.0
  %3348 = vmatpush.msra.mxu0 0.0
  %3349 = vmatpush.msra.mxu0 0.0
  %v3350 = vand.u32 %v1197, 4294901760
  %v3351 = vsub.f32 %v1197, %v3350
  %v3352 = vand.u32 %v3351, 4294901760
  %v3353 = vsub.f32 %v3351, %v3352
  %v3354 = vand.u32 %v3353, 4294901760
  %3355 = vmatpush.msra.mxu0 %v3354
  %v3356 = vand.u32 %v3285, 4294901760
  %3357 = vmatmul.f32.gmra.mxu0 %v3356
  %v3358 = vpop.f32.mrf.mxu0
  %v3359 = vadd.f32 %v3317, %v3358
  %v3360 = vand.u32 %v3288, 4294901760
  %3361 = vmatmul.f32.gmra.mxu0 %v3360
  %v3362 = vpop.f32.mrf.mxu0
  %v3363 = vadd.f32 %v3325, %v3362
  %v3364 = vand.u32 %v3291, 4294901760
  %3365 = vmatmul.f32.gmra.mxu0 %v3364
  %v3366 = vpop.f32.mrf.mxu0
  %v3367 = vadd.f32 %v3333, %v3366
  %3368 = vdwg.mxu0
  %3369 = vmatpush.msra.mxu0 0.0
  %3370 = vmatpush.msra.mxu0 0.0
  %3371 = vmatpush.msra.mxu0 0.0
  %3372 = vmatpush.msra.mxu0 0.0
  %3373 = vmatpush.msra.mxu0 0.0
  %3374 = vmatpush.msra.mxu0 0.0
  %3375 = vmatpush.msra.mxu0 0.0
  %3376 = vmatpush.msra.mxu0 0.0
  %3377 = vmatpush.msra.mxu0 0.0
  %3378 = vmatpush.msra.mxu0 0.0
  %3379 = vmatpush.msra.mxu0 0.0
  %3380 = vmatpush.msra.mxu0 0.0
  %3381 = vmatpush.msra.mxu0 0.0
  %3382 = vmatpush.msra.mxu0 0.0
  %3383 = vmatpush.msra.mxu0 0.0
  %v3384 = vand.u32 %v1197, 4294901760
  %v3385 = vsub.f32 %v1197, %v3384
  %3386 = vmatpush.msra.mxu0 %v3385
  %v3387 = vand.u32 %v3285, 4294901760
  %v3388 = vsub.f32 %v3285, %v3387
  %3389 = vmatmul.f32.gmra.mxu0 %v3388
  %v3390 = vpop.f32.mrf.mxu0
  %v3391 = vadd.f32 %v3359, %v3390
  %v3392 = vand.u32 %v3288, 4294901760
  %v3393 = vsub.f32 %v3288, %v3392
  %3394 = vmatmul.f32.gmra.mxu0 %v3393
  %v3395 = vpop.f32.mrf.mxu0
  %v3396 = vadd.f32 %v3363, %v3395
  %v3397 = vand.u32 %v3291, 4294901760
  %v3398 = vsub.f32 %v3291, %v3397
  %3399 = vmatmul.f32.gmra.mxu0 %v3398
  %v3400 = vpop.f32.mrf.mxu0
  %v3401 = vadd.f32 %v3367, %v3400
  %3402 = vdwg.mxu0
  %3403 = vmatpush.msra.mxu0 0.0
  %3404 = vmatpush.msra.mxu0 0.0
  %3405 = vmatpush.msra.mxu0 0.0
  %3406 = vmatpush.msra.mxu0 0.0
  %3407 = vmatpush.msra.mxu0 0.0
  %3408 = vmatpush.msra.mxu0 0.0
  %3409 = vmatpush.msra.mxu0 0.0
  %3410 = vmatpush.msra.mxu0 0.0
  %3411 = vmatpush.msra.mxu0 0.0
  %3412 = vmatpush.msra.mxu0 0.0
  %3413 = vmatpush.msra.mxu0 0.0
  %3414 = vmatpush.msra.mxu0 0.0
  %3415 = vmatpush.msra.mxu0 0.0
  %3416 = vmatpush.msra.mxu0 0.0
  %3417 = vmatpush.msra.mxu0 0.0
  %v3418 = vand.u32 %v1197, 4294901760
  %3419 = vmatpush.msra.mxu0 %v3418
  %v3420 = vand.u32 %v3285, 4294901760
  %v3421 = vsub.f32 %v3285, %v3420
  %v3422 = vand.u32 %v3421, 4294901760
  %3423 = vmatmul.f32.gmra.mxu0 %v3422
  %v3424 = vpop.f32.mrf.mxu0
  %v3425 = vadd.f32 %v3391, %v3424
  %v3426 = vand.u32 %v3288, 4294901760
  %v3427 = vsub.f32 %v3288, %v3426
  %v3428 = vand.u32 %v3427, 4294901760
  %3429 = vmatmul.f32.gmra.mxu0 %v3428
  %v3430 = vpop.f32.mrf.mxu0
  %v3431 = vadd.f32 %v3396, %v3430
  %v3432 = vand.u32 %v3291, 4294901760
  %v3433 = vsub.f32 %v3291, %v3432
  %v3434 = vand.u32 %v3433, 4294901760
  %3435 = vmatmul.f32.gmra.mxu0 %v3434
  %v3436 = vpop.f32.mrf.mxu0
  %v3437 = vadd.f32 %v3401, %v3436
  %3438 = vdwg.mxu0
  %3439 = vmatpush.msra.mxu0 0.0
  %3440 = vmatpush.msra.mxu0 0.0
  %3441 = vmatpush.msra.mxu0 0.0
  %3442 = vmatpush.msra.mxu0 0.0
  %3443 = vmatpush.msra.mxu0 0.0
  %3444 = vmatpush.msra.mxu0 0.0
  %3445 = vmatpush.msra.mxu0 0.0
  %3446 = vmatpush.msra.mxu0 0.0
  %3447 = vmatpush.msra.mxu0 0.0
  %3448 = vmatpush.msra.mxu0 0.0
  %3449 = vmatpush.msra.mxu0 0.0
  %3450 = vmatpush.msra.mxu0 0.0
  %3451 = vmatpush.msra.mxu0 0.0
  %3452 = vmatpush.msra.mxu0 0.0
  %3453 = vmatpush.msra.mxu0 0.0
  %v3454 = vand.u32 %v1197, 4294901760
  %v3455 = vsub.f32 %v1197, %v3454
  %v3456 = vand.u32 %v3455, 4294901760
  %3457 = vmatpush.msra.mxu0 %v3456
  %v3458 = vand.u32 %v3285, 4294901760
  %3459 = vmatmul.f32.gmra.mxu0 %v3458
  %v3460 = vpop.f32.mrf.mxu0
  %v3461 = vadd.f32 %v3425, %v3460
  %v3462 = vand.u32 %v3288, 4294901760
  %3463 = vmatmul.f32.gmra.mxu0 %v3462
  %v3464 = vpop.f32.mrf.mxu0
  %v3465 = vadd.f32 %v3431, %v3464
  %v3466 = vand.u32 %v3291, 4294901760
  %3467 = vmatmul.f32.gmra.mxu0 %v3466
  %v3468 = vpop.f32.mrf.mxu0
  %v3469 = vadd.f32 %v3437, %v3468
  %3470 = vdwg.mxu0
  %3471 = vmatpush.msra.mxu0 0.0
  %3472 = vmatpush.msra.mxu0 0.0
  %3473 = vmatpush.msra.mxu0 0.0
  %3474 = vmatpush.msra.mxu0 0.0
  %3475 = vmatpush.msra.mxu0 0.0
  %3476 = vmatpush.msra.mxu0 0.0
  %3477 = vmatpush.msra.mxu0 0.0
  %3478 = vmatpush.msra.mxu0 0.0
  %3479 = vmatpush.msra.mxu0 0.0
  %3480 = vmatpush.msra.mxu0 0.0
  %3481 = vmatpush.msra.mxu0 0.0
  %3482 = vmatpush.msra.mxu0 0.0
  %3483 = vmatpush.msra.mxu0 0.0
  %3484 = vmatpush.msra.mxu0 0.0
  %3485 = vmatpush.msra.mxu0 0.0
  %v3486 = vand.u32 %v1197, 4294901760
  %3487 = vmatpush.msra.mxu0 %v3486
  %v3488 = vand.u32 %v3285, 4294901760
  %3489 = vmatmul.f32.gmra.mxu0 %v3488
  %v3490 = vpop.f32.mrf.mxu0
  %v3491 = vadd.f32 %v3461, %v3490
  %v3492 = vand.u32 %v3288, 4294901760
  %3493 = vmatmul.f32.gmra.mxu0 %v3492
  %v3494 = vpop.f32.mrf.mxu0
  %v3495 = vadd.f32 %v3465, %v3494
  %v3496 = vand.u32 %v3291, 4294901760
  %3497 = vmatmul.f32.gmra.mxu0 %v3496
  %v3498 = vpop.f32.mrf.mxu0
  %v3499 = vadd.f32 %v3469, %v3498
  %3500 = vdwg.mxu0
  %v3501 = vadd.f32 %v2724, %v3491
  %v3502 = vadd.f32 %v2728, %v3495
  %v3503 = vadd.f32 %v2732, %v3499
  %3504 = vrot.lane.b32.xlu0 %v1185, 104
  %v3505 = vpop.permute.xlu0 %3504
  %3506 = vrot.lane.b32.xlu0 %v1189, 104
  %v3507 = vpop.permute.xlu0 %3506
  %3508 = vrot.lane.b32.xlu0 %v1193, 104
  %v3509 = vpop.permute.xlu0 %3508
  %3510 = vrot.lane.b32.xlu0 %v1185, 72
  %v3511 = vpop.permute.xlu0 %3510
  %3512 = vrot.lane.b32.xlu0 %v1189, 72
  %v3513 = vpop.permute.xlu0 %3512
  %3514 = vrot.lane.b32.xlu0 %v1193, 72
  %v3515 = vpop.permute.xlu0 %3514
  %v3516 = vsel %vm1208, %v3505, 0
  %v3518 = vsel %vm1208, %v3507, 0
  %v3520 = vsel %vm1208, %v3509, 0
  %v3522 = vsel %vm1208, %v3511, 0
  %v3524 = vsel %vm1208, %v3513, 0
  %v3526 = vsel %vm1208, %v3515, 0
  %3528 = vmatpush.xpose.msra.mxu0 0.0
  %3529 = vmatpush.xpose.msra.mxu0 0.0
  %3530 = vmatpush.xpose.msra.mxu0 0.0
  %3531 = vmatpush.xpose.msra.mxu0 0.0
  %3532 = vmatpush.xpose.msra.mxu0 0.0
  %3533 = vmatpush.xpose.msra.mxu0 0.0
  %3534 = vmatpush.xpose.msra.mxu0 0.0
  %3535 = vmatpush.xpose.msra.mxu0 0.0
  %3536 = vmatpush.xpose.msra.mxu0 0.0
  %3537 = vmatpush.xpose.msra.mxu0 0.0
  %3538 = vmatpush.xpose.msra.mxu0 0.0
  %3539 = vmatpush.xpose.msra.mxu0 0.0
  %3540 = vmatpush.xpose.msra.mxu0 0.0
  %v3541 = vand.u32 %v3526, 4294901760
  %3542 = vmatpush.xpose.msra.mxu0 %v3541
  %v3543 = vand.u32 %v3524, 4294901760
  %3544 = vmatpush.xpose.msra.mxu0 %v3543
  %v3545 = vand.u32 %v3522, 4294901760
  %3546 = vmatpush.xpose.msra.mxu0 %v3545
  %v3547 = vand.u32 %v3516, 4294901760
  %v3548 = vsub.f32 %v3516, %v3547
  %v3549 = vand.u32 %v3548, 4294901760
  %v3550 = vsub.f32 %v3548, %v3549
  %v3551 = vand.u32 %v3550, 4294901760
  %3552 = vmatmul.f32.gmra.mxu0 %v3551
  %v3553 = vpop.f32.mrf.mxu0
  %v3554 = vadd.f32 0.0, %v3553
  %v3555 = vand.u32 %v3518, 4294901760
  %v3556 = vsub.f32 %v3518, %v3555
  %v3557 = vand.u32 %v3556, 4294901760
  %v3558 = vsub.f32 %v3556, %v3557
  %v3559 = vand.u32 %v3558, 4294901760
  %3560 = vmatmul.f32.gmra.mxu0 %v3559
  %v3561 = vpop.f32.mrf.mxu0
  %v3562 = vadd.f32 0.0, %v3561
  %v3563 = vand.u32 %v3520, 4294901760
  %v3564 = vsub.f32 %v3520, %v3563
  %v3565 = vand.u32 %v3564, 4294901760
  %v3566 = vsub.f32 %v3564, %v3565
  %v3567 = vand.u32 %v3566, 4294901760
  %3568 = vmatmul.f32.gmra.mxu0 %v3567
  %v3569 = vpop.f32.mrf.mxu0
  %v3570 = vadd.f32 0.0, %v3569
  %3571 = vdwg.mxu0
  %3572 = vmatpush.xpose.msra.mxu0 0.0
  %3573 = vmatpush.xpose.msra.mxu0 0.0
  %3574 = vmatpush.xpose.msra.mxu0 0.0
  %3575 = vmatpush.xpose.msra.mxu0 0.0
  %3576 = vmatpush.xpose.msra.mxu0 0.0
  %3577 = vmatpush.xpose.msra.mxu0 0.0
  %3578 = vmatpush.xpose.msra.mxu0 0.0
  %3579 = vmatpush.xpose.msra.mxu0 0.0
  %3580 = vmatpush.xpose.msra.mxu0 0.0
  %3581 = vmatpush.xpose.msra.mxu0 0.0
  %3582 = vmatpush.xpose.msra.mxu0 0.0
  %3583 = vmatpush.xpose.msra.mxu0 0.0
  %3584 = vmatpush.xpose.msra.mxu0 0.0
  %v3585 = vand.u32 %v3526, 4294901760
  %v3586 = vsub.f32 %v3526, %v3585
  %v3587 = vand.u32 %v3586, 4294901760
  %v3588 = vsub.f32 %v3586, %v3587
  %v3589 = vand.u32 %v3588, 4294901760
  %3590 = vmatpush.xpose.msra.mxu0 %v3589
  %v3591 = vand.u32 %v3524, 4294901760
  %v3592 = vsub.f32 %v3524, %v3591
  %v3593 = vand.u32 %v3592, 4294901760
  %v3594 = vsub.f32 %v3592, %v3593
  %v3595 = vand.u32 %v3594, 4294901760
  %3596 = vmatpush.xpose.msra.mxu0 %v3595
  %v3597 = vand.u32 %v3522, 4294901760
  %v3598 = vsub.f32 %v3522, %v3597
  %v3599 = vand.u32 %v3598, 4294901760
  %v3600 = vsub.f32 %v3598, %v3599
  %v3601 = vand.u32 %v3600, 4294901760
  %3602 = vmatpush.xpose.msra.mxu0 %v3601
  %v3603 = vand.u32 %v3516, 4294901760
  %3604 = vmatmul.f32.gmra.mxu0 %v3603
  %v3605 = vpop.f32.mrf.mxu0
  %v3606 = vadd.f32 %v3554, %v3605
  %v3607 = vand.u32 %v3518, 4294901760
  %3608 = vmatmul.f32.gmra.mxu0 %v3607
  %v3609 = vpop.f32.mrf.mxu0
  %v3610 = vadd.f32 %v3562, %v3609
  %v3611 = vand.u32 %v3520, 4294901760
  %3612 = vmatmul.f32.gmra.mxu0 %v3611
  %v3613 = vpop.f32.mrf.mxu0
  %v3614 = vadd.f32 %v3570, %v3613
  %3615 = vdwg.mxu0
  %3616 = vmatpush.xpose.msra.mxu0 0.0
  %3617 = vmatpush.xpose.msra.mxu0 0.0
  %3618 = vmatpush.xpose.msra.mxu0 0.0
  %3619 = vmatpush.xpose.msra.mxu0 0.0
  %3620 = vmatpush.xpose.msra.mxu0 0.0
  %3621 = vmatpush.xpose.msra.mxu0 0.0
  %3622 = vmatpush.xpose.msra.mxu0 0.0
  %3623 = vmatpush.xpose.msra.mxu0 0.0
  %3624 = vmatpush.xpose.msra.mxu0 0.0
  %3625 = vmatpush.xpose.msra.mxu0 0.0
  %3626 = vmatpush.xpose.msra.mxu0 0.0
  %3627 = vmatpush.xpose.msra.mxu0 0.0
  %3628 = vmatpush.xpose.msra.mxu0 0.0
  %v3629 = vand.u32 %v3526, 4294901760
  %v3630 = vsub.f32 %v3526, %v3629
  %3631 = vmatpush.xpose.msra.mxu0 %v3630
  %v3632 = vand.u32 %v3524, 4294901760
  %v3633 = vsub.f32 %v3524, %v3632
  %3634 = vmatpush.xpose.msra.mxu0 %v3633
  %v3635 = vand.u32 %v3522, 4294901760
  %v3636 = vsub.f32 %v3522, %v3635
  %3637 = vmatpush.xpose.msra.mxu0 %v3636
  %v3638 = vand.u32 %v3516, 4294901760
  %v3639 = vsub.f32 %v3516, %v3638
  %3640 = vmatmul.f32.gmra.mxu0 %v3639
  %v3641 = vpop.f32.mrf.mxu0
  %v3642 = vadd.f32 %v3606, %v3641
  %v3643 = vand.u32 %v3518, 4294901760
  %v3644 = vsub.f32 %v3518, %v3643
  %3645 = vmatmul.f32.gmra.mxu0 %v3644
  %v3646 = vpop.f32.mrf.mxu0
  %v3647 = vadd.f32 %v3610, %v3646
  %v3648 = vand.u32 %v3520, 4294901760
  %v3649 = vsub.f32 %v3520, %v3648
  %3650 = vmatmul.f32.gmra.mxu0 %v3649
  %v3651 = vpop.f32.mrf.mxu0
  %v3652 = vadd.f32 %v3614, %v3651
  %3653 = vdwg.mxu0
  %3654 = vmatpush.xpose.msra.mxu0 0.0
  %3655 = vmatpush.xpose.msra.mxu0 0.0
  %3656 = vmatpush.xpose.msra.mxu0 0.0
  %3657 = vmatpush.xpose.msra.mxu0 0.0
  %3658 = vmatpush.xpose.msra.mxu0 0.0
  %3659 = vmatpush.xpose.msra.mxu0 0.0
  %3660 = vmatpush.xpose.msra.mxu0 0.0
  %3661 = vmatpush.xpose.msra.mxu0 0.0
  %3662 = vmatpush.xpose.msra.mxu0 0.0
  %3663 = vmatpush.xpose.msra.mxu0 0.0
  %3664 = vmatpush.xpose.msra.mxu0 0.0
  %3665 = vmatpush.xpose.msra.mxu0 0.0
  %3666 = vmatpush.xpose.msra.mxu0 0.0
  %v3667 = vand.u32 %v3526, 4294901760
  %3668 = vmatpush.xpose.msra.mxu0 %v3667
  %v3669 = vand.u32 %v3524, 4294901760
  %3670 = vmatpush.xpose.msra.mxu0 %v3669
  %v3671 = vand.u32 %v3522, 4294901760
  %3672 = vmatpush.xpose.msra.mxu0 %v3671
  %v3673 = vand.u32 %v3516, 4294901760
  %v3674 = vsub.f32 %v3516, %v3673
  %v3675 = vand.u32 %v3674, 4294901760
  %3676 = vmatmul.f32.gmra.mxu0 %v3675
  %v3677 = vpop.f32.mrf.mxu0
  %v3678 = vadd.f32 %v3642, %v3677
  %v3679 = vand.u32 %v3518, 4294901760
  %v3680 = vsub.f32 %v3518, %v3679
  %v3681 = vand.u32 %v3680, 4294901760
  %3682 = vmatmul.f32.gmra.mxu0 %v3681
  %v3683 = vpop.f32.mrf.mxu0
  %v3684 = vadd.f32 %v3647, %v3683
  %v3685 = vand.u32 %v3520, 4294901760
  %v3686 = vsub.f32 %v3520, %v3685
  %v3687 = vand.u32 %v3686, 4294901760
  %3688 = vmatmul.f32.gmra.mxu0 %v3687
  %v3689 = vpop.f32.mrf.mxu0
  %v3690 = vadd.f32 %v3652, %v3689
  %3691 = vdwg.mxu0
  %3692 = vmatpush.xpose.msra.mxu0 0.0
  %3693 = vmatpush.xpose.msra.mxu0 0.0
  %3694 = vmatpush.xpose.msra.mxu0 0.0
  %3695 = vmatpush.xpose.msra.mxu0 0.0
  %3696 = vmatpush.xpose.msra.mxu0 0.0
  %3697 = vmatpush.xpose.msra.mxu0 0.0
  %3698 = vmatpush.xpose.msra.mxu0 0.0
  %3699 = vmatpush.xpose.msra.mxu0 0.0
  %3700 = vmatpush.xpose.msra.mxu0 0.0
  %3701 = vmatpush.xpose.msra.mxu0 0.0
  %3702 = vmatpush.xpose.msra.mxu0 0.0
  %3703 = vmatpush.xpose.msra.mxu0 0.0
  %3704 = vmatpush.xpose.msra.mxu0 0.0
  %v3705 = vand.u32 %v3526, 4294901760
  %v3706 = vsub.f32 %v3526, %v3705
  %v3707 = vand.u32 %v3706, 4294901760
  %3708 = vmatpush.xpose.msra.mxu0 %v3707
  %v3709 = vand.u32 %v3524, 4294901760
  %v3710 = vsub.f32 %v3524, %v3709
  %v3711 = vand.u32 %v3710, 4294901760
  %3712 = vmatpush.xpose.msra.mxu0 %v3711
  %v3713 = vand.u32 %v3522, 4294901760
  %v3714 = vsub.f32 %v3522, %v3713
  %v3715 = vand.u32 %v3714, 4294901760
  %3716 = vmatpush.xpose.msra.mxu0 %v3715
  %v3717 = vand.u32 %v3516, 4294901760
  %3718 = vmatmul.f32.gmra.mxu0 %v3717
  %v3719 = vpop.f32.mrf.mxu0
  %v3720 = vadd.f32 %v3678, %v3719
  %v3721 = vand.u32 %v3518, 4294901760
  %3722 = vmatmul.f32.gmra.mxu0 %v3721
  %v3723 = vpop.f32.mrf.mxu0
  %v3724 = vadd.f32 %v3684, %v3723
  %v3725 = vand.u32 %v3520, 4294901760
  %3726 = vmatmul.f32.gmra.mxu0 %v3725
  %v3727 = vpop.f32.mrf.mxu0
  %v3728 = vadd.f32 %v3690, %v3727
  %3729 = vdwg.mxu0
  %3730 = vmatpush.xpose.msra.mxu0 0.0
  %3731 = vmatpush.xpose.msra.mxu0 0.0
  %3732 = vmatpush.xpose.msra.mxu0 0.0
  %3733 = vmatpush.xpose.msra.mxu0 0.0
  %3734 = vmatpush.xpose.msra.mxu0 0.0
  %3735 = vmatpush.xpose.msra.mxu0 0.0
  %3736 = vmatpush.xpose.msra.mxu0 0.0
  %3737 = vmatpush.xpose.msra.mxu0 0.0
  %3738 = vmatpush.xpose.msra.mxu0 0.0
  %3739 = vmatpush.xpose.msra.mxu0 0.0
  %3740 = vmatpush.xpose.msra.mxu0 0.0
  %3741 = vmatpush.xpose.msra.mxu0 0.0
  %3742 = vmatpush.xpose.msra.mxu0 0.0
  %v3743 = vand.u32 %v3526, 4294901760
  %3744 = vmatpush.xpose.msra.mxu0 %v3743
  %v3745 = vand.u32 %v3524, 4294901760
  %3746 = vmatpush.xpose.msra.mxu0 %v3745
  %v3747 = vand.u32 %v3522, 4294901760
  %3748 = vmatpush.xpose.msra.mxu0 %v3747
  %v3749 = vand.u32 %v3516, 4294901760
  %3750 = vmatmul.f32.gmra.mxu0 %v3749
  %v3751 = vpop.f32.mrf.mxu0
  %v3752 = vadd.f32 %v3720, %v3751
  %v3753 = vand.u32 %v3518, 4294901760
  %3754 = vmatmul.f32.gmra.mxu0 %v3753
  %v3755 = vpop.f32.mrf.mxu0
  %v3756 = vadd.f32 %v3724, %v3755
  %v3757 = vand.u32 %v3520, 4294901760
  %3758 = vmatmul.f32.gmra.mxu0 %v3757
  %v3759 = vpop.f32.mrf.mxu0
  %v3760 = vadd.f32 %v3728, %v3759
  %3761 = vdwg.mxu0
  %v3762 = vmul.f32 %v3752, 0.35355338
  %v3763 = vmul.f32 %v3756, 0.35355338
  %v3764 = vmul.f32 %v3760, 0.35355338
  %v3765 = vadd.f32 %v3762, %v76
  %v3766 = vadd.f32 %v3763, %v77
  %v3767 = vadd.f32 %v3764, %v78
  %v3768 = vsel %vm1461, %v3765, -inf
  %3769 = vmax.xlane.f32.xlu0 %v3768
  %v3770 = vpop.xlane.xlu0 %3769
  %v3771 = vsel %vm1461, %v3766, -inf
  %3772 = vmax.xlane.f32.xlu0 %v3771
  %v3773 = vpop.xlane.xlu0 %3772
  %v3774 = vsel %vm1468, %v3767, -inf
  %3775 = vmax.xlane.f32.xlu0 %v3774
  %v3776 = vpop.xlane.xlu0 %3775
  %v3777 = vsub.f32 %v3765, %v3770
  %v3778 = vsub.f32 %v3766, %v3773
  %v3779 = vsub.f32 %v3767, %v3776
  %v3780 = vmul.f32 %v3777, 1.442695
  %v3781 = vpow.pop %v3780
  %v3782 = vmul.f32 %v3778, 1.442695
  %v3783 = vpow.pop %v3782
  %v3784 = vmul.f32 %v3779, 1.442695
  %v3785 = vpow.pop %v3784
  %v3786 = vsel %vm1461, %v3781, 0.0
  %3787 = vadd.xlane.f32.xlu0 %v3786
  %v3788 = vpop.xlane.xlu0 %3787
  %v3789 = vsel %vm1461, %v3783, 0.0
  %3790 = vadd.xlane.f32.xlu0 %v3789
  %v3791 = vpop.xlane.xlu0 %3790
  %v3792 = vsel %vm1468, %v3785, 0.0
  %3793 = vadd.xlane.f32.xlu0 %v3792
  %v3794 = vpop.xlane.xlu0 %3793
  %v3795 = vrcp.pop %v3788
  %v3796 = vrcp.pop %v3791
  %v3797 = vrcp.pop %v3794
  %v3798 = vmul.f32 %v3781, %v3795
  %v3799 = vmul.f32 %v3783, %v3796
  %v3800 = vmul.f32 %v3785, %v3797
  %3801 = vrot.lane.b32.xlu0 %v1185, 40
  %v3802 = vpop.permute.xlu0 %3801
  %3803 = vrot.lane.b32.xlu0 %v1189, 40
  %v3804 = vpop.permute.xlu0 %3803
  %3805 = vrot.lane.b32.xlu0 %v1193, 40
  %v3806 = vpop.permute.xlu0 %3805
  %v3810 = vsel %vm1461, %v3798, 0
  %v3813 = vsel %vm1461, %v3799, 0
  %v3816 = vsel %vm1461, %v3800, 0
  %v3818 = vsel %vm1513, %v3806, 0
  %3820 = vmatpush.msra.mxu0 0.0
  %3821 = vmatpush.msra.mxu0 0.0
  %3822 = vmatpush.msra.mxu0 0.0
  %3823 = vmatpush.msra.mxu0 0.0
  %3824 = vmatpush.msra.mxu0 0.0
  %3825 = vmatpush.msra.mxu0 0.0
  %3826 = vmatpush.msra.mxu0 0.0
  %3827 = vmatpush.msra.mxu0 0.0
  %3828 = vmatpush.msra.mxu0 0.0
  %3829 = vmatpush.msra.mxu0 0.0
  %3830 = vmatpush.msra.mxu0 0.0
  %3831 = vmatpush.msra.mxu0 0.0
  %3832 = vmatpush.msra.mxu0 0.0
  %v3833 = vand.u32 %v3818, 4294901760
  %3834 = vmatpush.msra.mxu0 %v3833
  %v3835 = vand.u32 %v3804, 4294901760
  %3836 = vmatpush.msra.mxu0 %v3835
  %v3837 = vand.u32 %v3802, 4294901760
  %3838 = vmatpush.msra.mxu0 %v3837
  %v3839 = vand.u32 %v3810, 4294901760
  %v3840 = vsub.f32 %v3810, %v3839
  %v3841 = vand.u32 %v3840, 4294901760
  %v3842 = vsub.f32 %v3840, %v3841
  %v3843 = vand.u32 %v3842, 4294901760
  %3844 = vmatmul.f32.gmra.mxu0 %v3843
  %v3845 = vpop.f32.mrf.mxu0
  %v3846 = vadd.f32 0.0, %v3845
  %v3847 = vand.u32 %v3813, 4294901760
  %v3848 = vsub.f32 %v3813, %v3847
  %v3849 = vand.u32 %v3848, 4294901760
  %v3850 = vsub.f32 %v3848, %v3849
  %v3851 = vand.u32 %v3850, 4294901760
  %3852 = vmatmul.f32.gmra.mxu0 %v3851
  %v3853 = vpop.f32.mrf.mxu0
  %v3854 = vadd.f32 0.0, %v3853
  %v3855 = vand.u32 %v3816, 4294901760
  %v3856 = vsub.f32 %v3816, %v3855
  %v3857 = vand.u32 %v3856, 4294901760
  %v3858 = vsub.f32 %v3856, %v3857
  %v3859 = vand.u32 %v3858, 4294901760
  %3860 = vmatmul.f32.gmra.mxu0 %v3859
  %v3861 = vpop.f32.mrf.mxu0
  %v3862 = vadd.f32 0.0, %v3861
  %3863 = vdwg.mxu0
  %3864 = vmatpush.msra.mxu0 0.0
  %3865 = vmatpush.msra.mxu0 0.0
  %3866 = vmatpush.msra.mxu0 0.0
  %3867 = vmatpush.msra.mxu0 0.0
  %3868 = vmatpush.msra.mxu0 0.0
  %3869 = vmatpush.msra.mxu0 0.0
  %3870 = vmatpush.msra.mxu0 0.0
  %3871 = vmatpush.msra.mxu0 0.0
  %3872 = vmatpush.msra.mxu0 0.0
  %3873 = vmatpush.msra.mxu0 0.0
  %3874 = vmatpush.msra.mxu0 0.0
  %3875 = vmatpush.msra.mxu0 0.0
  %3876 = vmatpush.msra.mxu0 0.0
  %v3877 = vand.u32 %v3818, 4294901760
  %v3878 = vsub.f32 %v3818, %v3877
  %v3879 = vand.u32 %v3878, 4294901760
  %v3880 = vsub.f32 %v3878, %v3879
  %v3881 = vand.u32 %v3880, 4294901760
  %3882 = vmatpush.msra.mxu0 %v3881
  %v3883 = vand.u32 %v3804, 4294901760
  %v3884 = vsub.f32 %v3804, %v3883
  %v3885 = vand.u32 %v3884, 4294901760
  %v3886 = vsub.f32 %v3884, %v3885
  %v3887 = vand.u32 %v3886, 4294901760
  %3888 = vmatpush.msra.mxu0 %v3887
  %v3889 = vand.u32 %v3802, 4294901760
  %v3890 = vsub.f32 %v3802, %v3889
  %v3891 = vand.u32 %v3890, 4294901760
  %v3892 = vsub.f32 %v3890, %v3891
  %v3893 = vand.u32 %v3892, 4294901760
  %3894 = vmatpush.msra.mxu0 %v3893
  %v3895 = vand.u32 %v3810, 4294901760
  %3896 = vmatmul.f32.gmra.mxu0 %v3895
  %v3897 = vpop.f32.mrf.mxu0
  %v3898 = vadd.f32 %v3846, %v3897
  %v3899 = vand.u32 %v3813, 4294901760
  %3900 = vmatmul.f32.gmra.mxu0 %v3899
  %v3901 = vpop.f32.mrf.mxu0
  %v3902 = vadd.f32 %v3854, %v3901
  %v3903 = vand.u32 %v3816, 4294901760
  %3904 = vmatmul.f32.gmra.mxu0 %v3903
  %v3905 = vpop.f32.mrf.mxu0
  %v3906 = vadd.f32 %v3862, %v3905
  %3907 = vdwg.mxu0
  %3908 = vmatpush.msra.mxu0 0.0
  %3909 = vmatpush.msra.mxu0 0.0
  %3910 = vmatpush.msra.mxu0 0.0
  %3911 = vmatpush.msra.mxu0 0.0
  %3912 = vmatpush.msra.mxu0 0.0
  %3913 = vmatpush.msra.mxu0 0.0
  %3914 = vmatpush.msra.mxu0 0.0
  %3915 = vmatpush.msra.mxu0 0.0
  %3916 = vmatpush.msra.mxu0 0.0
  %3917 = vmatpush.msra.mxu0 0.0
  %3918 = vmatpush.msra.mxu0 0.0
  %3919 = vmatpush.msra.mxu0 0.0
  %3920 = vmatpush.msra.mxu0 0.0
  %v3921 = vand.u32 %v3818, 4294901760
  %v3922 = vsub.f32 %v3818, %v3921
  %3923 = vmatpush.msra.mxu0 %v3922
  %v3924 = vand.u32 %v3804, 4294901760
  %v3925 = vsub.f32 %v3804, %v3924
  %3926 = vmatpush.msra.mxu0 %v3925
  %v3927 = vand.u32 %v3802, 4294901760
  %v3928 = vsub.f32 %v3802, %v3927
  %3929 = vmatpush.msra.mxu0 %v3928
  %v3930 = vand.u32 %v3810, 4294901760
  %v3931 = vsub.f32 %v3810, %v3930
  %3932 = vmatmul.f32.gmra.mxu0 %v3931
  %v3933 = vpop.f32.mrf.mxu0
  %v3934 = vadd.f32 %v3898, %v3933
  %v3935 = vand.u32 %v3813, 4294901760
  %v3936 = vsub.f32 %v3813, %v3935
  %3937 = vmatmul.f32.gmra.mxu0 %v3936
  %v3938 = vpop.f32.mrf.mxu0
  %v3939 = vadd.f32 %v3902, %v3938
  %v3940 = vand.u32 %v3816, 4294901760
  %v3941 = vsub.f32 %v3816, %v3940
  %3942 = vmatmul.f32.gmra.mxu0 %v3941
  %v3943 = vpop.f32.mrf.mxu0
  %v3944 = vadd.f32 %v3906, %v3943
  %3945 = vdwg.mxu0
  %3946 = vmatpush.msra.mxu0 0.0
  %3947 = vmatpush.msra.mxu0 0.0
  %3948 = vmatpush.msra.mxu0 0.0
  %3949 = vmatpush.msra.mxu0 0.0
  %3950 = vmatpush.msra.mxu0 0.0
  %3951 = vmatpush.msra.mxu0 0.0
  %3952 = vmatpush.msra.mxu0 0.0
  %3953 = vmatpush.msra.mxu0 0.0
  %3954 = vmatpush.msra.mxu0 0.0
  %3955 = vmatpush.msra.mxu0 0.0
  %3956 = vmatpush.msra.mxu0 0.0
  %3957 = vmatpush.msra.mxu0 0.0
  %3958 = vmatpush.msra.mxu0 0.0
  %v3959 = vand.u32 %v3818, 4294901760
  %3960 = vmatpush.msra.mxu0 %v3959
  %v3961 = vand.u32 %v3804, 4294901760
  %3962 = vmatpush.msra.mxu0 %v3961
  %v3963 = vand.u32 %v3802, 4294901760
  %3964 = vmatpush.msra.mxu0 %v3963
  %v3965 = vand.u32 %v3810, 4294901760
  %v3966 = vsub.f32 %v3810, %v3965
  %v3967 = vand.u32 %v3966, 4294901760
  %3968 = vmatmul.f32.gmra.mxu0 %v3967
  %v3969 = vpop.f32.mrf.mxu0
  %v3970 = vadd.f32 %v3934, %v3969
  %v3971 = vand.u32 %v3813, 4294901760
  %v3972 = vsub.f32 %v3813, %v3971
  %v3973 = vand.u32 %v3972, 4294901760
  %3974 = vmatmul.f32.gmra.mxu0 %v3973
  %v3975 = vpop.f32.mrf.mxu0
  %v3976 = vadd.f32 %v3939, %v3975
  %v3977 = vand.u32 %v3816, 4294901760
  %v3978 = vsub.f32 %v3816, %v3977
  %v3979 = vand.u32 %v3978, 4294901760
  %3980 = vmatmul.f32.gmra.mxu0 %v3979
  %v3981 = vpop.f32.mrf.mxu0
  %v3982 = vadd.f32 %v3944, %v3981
  %3983 = vdwg.mxu0
  %3984 = vmatpush.msra.mxu0 0.0
  %3985 = vmatpush.msra.mxu0 0.0
  %3986 = vmatpush.msra.mxu0 0.0
  %3987 = vmatpush.msra.mxu0 0.0
  %3988 = vmatpush.msra.mxu0 0.0
  %3989 = vmatpush.msra.mxu0 0.0
  %3990 = vmatpush.msra.mxu0 0.0
  %3991 = vmatpush.msra.mxu0 0.0
  %3992 = vmatpush.msra.mxu0 0.0
  %3993 = vmatpush.msra.mxu0 0.0
  %3994 = vmatpush.msra.mxu0 0.0
  %3995 = vmatpush.msra.mxu0 0.0
  %3996 = vmatpush.msra.mxu0 0.0
  %v3997 = vand.u32 %v3818, 4294901760
  %v3998 = vsub.f32 %v3818, %v3997
  %v3999 = vand.u32 %v3998, 4294901760
  %4000 = vmatpush.msra.mxu0 %v3999
  %v4001 = vand.u32 %v3804, 4294901760
  %v4002 = vsub.f32 %v3804, %v4001
  %v4003 = vand.u32 %v4002, 4294901760
  %4004 = vmatpush.msra.mxu0 %v4003
  %v4005 = vand.u32 %v3802, 4294901760
  %v4006 = vsub.f32 %v3802, %v4005
  %v4007 = vand.u32 %v4006, 4294901760
  %4008 = vmatpush.msra.mxu0 %v4007
  %v4009 = vand.u32 %v3810, 4294901760
  %4010 = vmatmul.f32.gmra.mxu0 %v4009
  %v4011 = vpop.f32.mrf.mxu0
  %v4012 = vadd.f32 %v3970, %v4011
  %v4013 = vand.u32 %v3813, 4294901760
  %4014 = vmatmul.f32.gmra.mxu0 %v4013
  %v4015 = vpop.f32.mrf.mxu0
  %v4016 = vadd.f32 %v3976, %v4015
  %v4017 = vand.u32 %v3816, 4294901760
  %4018 = vmatmul.f32.gmra.mxu0 %v4017
  %v4019 = vpop.f32.mrf.mxu0
  %v4020 = vadd.f32 %v3982, %v4019
  %4021 = vdwg.mxu0
  %4022 = vmatpush.msra.mxu0 0.0
  %4023 = vmatpush.msra.mxu0 0.0
  %4024 = vmatpush.msra.mxu0 0.0
  %4025 = vmatpush.msra.mxu0 0.0
  %4026 = vmatpush.msra.mxu0 0.0
  %4027 = vmatpush.msra.mxu0 0.0
  %4028 = vmatpush.msra.mxu0 0.0
  %4029 = vmatpush.msra.mxu0 0.0
  %4030 = vmatpush.msra.mxu0 0.0
  %4031 = vmatpush.msra.mxu0 0.0
  %4032 = vmatpush.msra.mxu0 0.0
  %4033 = vmatpush.msra.mxu0 0.0
  %4034 = vmatpush.msra.mxu0 0.0
  %v4035 = vand.u32 %v3818, 4294901760
  %4036 = vmatpush.msra.mxu0 %v4035
  %v4037 = vand.u32 %v3804, 4294901760
  %4038 = vmatpush.msra.mxu0 %v4037
  %v4039 = vand.u32 %v3802, 4294901760
  %4040 = vmatpush.msra.mxu0 %v4039
  %v4041 = vand.u32 %v3810, 4294901760
  %4042 = vmatmul.f32.gmra.mxu0 %v4041
  %v4043 = vpop.f32.mrf.mxu0
  %v4044 = vadd.f32 %v4012, %v4043
  %v4045 = vand.u32 %v3813, 4294901760
  %4046 = vmatmul.f32.gmra.mxu0 %v4045
  %v4047 = vpop.f32.mrf.mxu0
  %v4048 = vadd.f32 %v4016, %v4047
  %v4049 = vand.u32 %v3816, 4294901760
  %4050 = vmatmul.f32.gmra.mxu0 %v4049
  %v4051 = vpop.f32.mrf.mxu0
  %v4052 = vadd.f32 %v4020, %v4051
  %4053 = vdwg.mxu0
  %v4055 = vsel %vm1208, %v4044, 0
  %v4058 = vsel %vm1208, %v4048, 0
  %v4061 = vsel %vm1208, %v4052, 0
  %4063 = vmatpush.msra.mxu0 0.0
  %4064 = vmatpush.msra.mxu0 0.0
  %4065 = vmatpush.msra.mxu0 0.0
  %4066 = vmatpush.msra.mxu0 0.0
  %4067 = vmatpush.msra.mxu0 0.0
  %4068 = vmatpush.msra.mxu0 0.0
  %4069 = vmatpush.msra.mxu0 0.0
  %4070 = vmatpush.msra.mxu0 0.0
  %4071 = vmatpush.msra.mxu0 0.0
  %4072 = vmatpush.msra.mxu0 0.0
  %4073 = vmatpush.msra.mxu0 0.0
  %4074 = vmatpush.msra.mxu0 0.0
  %4075 = vmatpush.msra.mxu0 0.0
  %4076 = vmatpush.msra.mxu0 0.0
  %4077 = vmatpush.msra.mxu0 0.0
  %v4078 = vand.u32 %v1198, 4294901760
  %4079 = vmatpush.msra.mxu0 %v4078
  %v4080 = vand.u32 %v4055, 4294901760
  %v4081 = vsub.f32 %v4055, %v4080
  %v4082 = vand.u32 %v4081, 4294901760
  %v4083 = vsub.f32 %v4081, %v4082
  %v4084 = vand.u32 %v4083, 4294901760
  %4085 = vmatmul.f32.gmra.mxu0 %v4084
  %v4086 = vpop.f32.mrf.mxu0
  %v4087 = vadd.f32 0.0, %v4086
  %v4088 = vand.u32 %v4058, 4294901760
  %v4089 = vsub.f32 %v4058, %v4088
  %v4090 = vand.u32 %v4089, 4294901760
  %v4091 = vsub.f32 %v4089, %v4090
  %v4092 = vand.u32 %v4091, 4294901760
  %4093 = vmatmul.f32.gmra.mxu0 %v4092
  %v4094 = vpop.f32.mrf.mxu0
  %v4095 = vadd.f32 0.0, %v4094
  %v4096 = vand.u32 %v4061, 4294901760
  %v4097 = vsub.f32 %v4061, %v4096
  %v4098 = vand.u32 %v4097, 4294901760
  %v4099 = vsub.f32 %v4097, %v4098
  %v4100 = vand.u32 %v4099, 4294901760
  %4101 = vmatmul.f32.gmra.mxu0 %v4100
  %v4102 = vpop.f32.mrf.mxu0
  %v4103 = vadd.f32 0.0, %v4102
  %4104 = vdwg.mxu0
  %4105 = vmatpush.msra.mxu0 0.0
  %4106 = vmatpush.msra.mxu0 0.0
  %4107 = vmatpush.msra.mxu0 0.0
  %4108 = vmatpush.msra.mxu0 0.0
  %4109 = vmatpush.msra.mxu0 0.0
  %4110 = vmatpush.msra.mxu0 0.0
  %4111 = vmatpush.msra.mxu0 0.0
  %4112 = vmatpush.msra.mxu0 0.0
  %4113 = vmatpush.msra.mxu0 0.0
  %4114 = vmatpush.msra.mxu0 0.0
  %4115 = vmatpush.msra.mxu0 0.0
  %4116 = vmatpush.msra.mxu0 0.0
  %4117 = vmatpush.msra.mxu0 0.0
  %4118 = vmatpush.msra.mxu0 0.0
  %4119 = vmatpush.msra.mxu0 0.0
  %v4120 = vand.u32 %v1198, 4294901760
  %v4121 = vsub.f32 %v1198, %v4120
  %v4122 = vand.u32 %v4121, 4294901760
  %v4123 = vsub.f32 %v4121, %v4122
  %v4124 = vand.u32 %v4123, 4294901760
  %4125 = vmatpush.msra.mxu0 %v4124
  %v4126 = vand.u32 %v4055, 4294901760
  %4127 = vmatmul.f32.gmra.mxu0 %v4126
  %v4128 = vpop.f32.mrf.mxu0
  %v4129 = vadd.f32 %v4087, %v4128
  %v4130 = vand.u32 %v4058, 4294901760
  %4131 = vmatmul.f32.gmra.mxu0 %v4130
  %v4132 = vpop.f32.mrf.mxu0
  %v4133 = vadd.f32 %v4095, %v4132
  %v4134 = vand.u32 %v4061, 4294901760
  %4135 = vmatmul.f32.gmra.mxu0 %v4134
  %v4136 = vpop.f32.mrf.mxu0
  %v4137 = vadd.f32 %v4103, %v4136
  %4138 = vdwg.mxu0
  %4139 = vmatpush.msra.mxu0 0.0
  %4140 = vmatpush.msra.mxu0 0.0
  %4141 = vmatpush.msra.mxu0 0.0
  %4142 = vmatpush.msra.mxu0 0.0
  %4143 = vmatpush.msra.mxu0 0.0
  %4144 = vmatpush.msra.mxu0 0.0
  %4145 = vmatpush.msra.mxu0 0.0
  %4146 = vmatpush.msra.mxu0 0.0
  %4147 = vmatpush.msra.mxu0 0.0
  %4148 = vmatpush.msra.mxu0 0.0
  %4149 = vmatpush.msra.mxu0 0.0
  %4150 = vmatpush.msra.mxu0 0.0
  %4151 = vmatpush.msra.mxu0 0.0
  %4152 = vmatpush.msra.mxu0 0.0
  %4153 = vmatpush.msra.mxu0 0.0
  %v4154 = vand.u32 %v1198, 4294901760
  %v4155 = vsub.f32 %v1198, %v4154
  %4156 = vmatpush.msra.mxu0 %v4155
  %v4157 = vand.u32 %v4055, 4294901760
  %v4158 = vsub.f32 %v4055, %v4157
  %4159 = vmatmul.f32.gmra.mxu0 %v4158
  %v4160 = vpop.f32.mrf.mxu0
  %v4161 = vadd.f32 %v4129, %v4160
  %v4162 = vand.u32 %v4058, 4294901760
  %v4163 = vsub.f32 %v4058, %v4162
  %4164 = vmatmul.f32.gmra.mxu0 %v4163
  %v4165 = vpop.f32.mrf.mxu0
  %v4166 = vadd.f32 %v4133, %v4165
  %v4167 = vand.u32 %v4061, 4294901760
  %v4168 = vsub.f32 %v4061, %v4167
  %4169 = vmatmul.f32.gmra.mxu0 %v4168
  %v4170 = vpop.f32.mrf.mxu0
  %v4171 = vadd.f32 %v4137, %v4170
  %4172 = vdwg.mxu0
  %4173 = vmatpush.msra.mxu0 0.0
  %4174 = vmatpush.msra.mxu0 0.0
  %4175 = vmatpush.msra.mxu0 0.0
  %4176 = vmatpush.msra.mxu0 0.0
  %4177 = vmatpush.msra.mxu0 0.0
  %4178 = vmatpush.msra.mxu0 0.0
  %4179 = vmatpush.msra.mxu0 0.0
  %4180 = vmatpush.msra.mxu0 0.0
  %4181 = vmatpush.msra.mxu0 0.0
  %4182 = vmatpush.msra.mxu0 0.0
  %4183 = vmatpush.msra.mxu0 0.0
  %4184 = vmatpush.msra.mxu0 0.0
  %4185 = vmatpush.msra.mxu0 0.0
  %4186 = vmatpush.msra.mxu0 0.0
  %4187 = vmatpush.msra.mxu0 0.0
  %v4188 = vand.u32 %v1198, 4294901760
  %4189 = vmatpush.msra.mxu0 %v4188
  %v4190 = vand.u32 %v4055, 4294901760
  %v4191 = vsub.f32 %v4055, %v4190
  %v4192 = vand.u32 %v4191, 4294901760
  %4193 = vmatmul.f32.gmra.mxu0 %v4192
  %v4194 = vpop.f32.mrf.mxu0
  %v4195 = vadd.f32 %v4161, %v4194
  %v4196 = vand.u32 %v4058, 4294901760
  %v4197 = vsub.f32 %v4058, %v4196
  %v4198 = vand.u32 %v4197, 4294901760
  %4199 = vmatmul.f32.gmra.mxu0 %v4198
  %v4200 = vpop.f32.mrf.mxu0
  %v4201 = vadd.f32 %v4166, %v4200
  %v4202 = vand.u32 %v4061, 4294901760
  %v4203 = vsub.f32 %v4061, %v4202
  %v4204 = vand.u32 %v4203, 4294901760
  %4205 = vmatmul.f32.gmra.mxu0 %v4204
  %v4206 = vpop.f32.mrf.mxu0
  %v4207 = vadd.f32 %v4171, %v4206
  %4208 = vdwg.mxu0
  %4209 = vmatpush.msra.mxu0 0.0
  %4210 = vmatpush.msra.mxu0 0.0
  %4211 = vmatpush.msra.mxu0 0.0
  %4212 = vmatpush.msra.mxu0 0.0
  %4213 = vmatpush.msra.mxu0 0.0
  %4214 = vmatpush.msra.mxu0 0.0
  %4215 = vmatpush.msra.mxu0 0.0
  %4216 = vmatpush.msra.mxu0 0.0
  %4217 = vmatpush.msra.mxu0 0.0
  %4218 = vmatpush.msra.mxu0 0.0
  %4219 = vmatpush.msra.mxu0 0.0
  %4220 = vmatpush.msra.mxu0 0.0
  %4221 = vmatpush.msra.mxu0 0.0
  %4222 = vmatpush.msra.mxu0 0.0
  %4223 = vmatpush.msra.mxu0 0.0
  %v4224 = vand.u32 %v1198, 4294901760
  %v4225 = vsub.f32 %v1198, %v4224
  %v4226 = vand.u32 %v4225, 4294901760
  %4227 = vmatpush.msra.mxu0 %v4226
  %v4228 = vand.u32 %v4055, 4294901760
  %4229 = vmatmul.f32.gmra.mxu0 %v4228
  %v4230 = vpop.f32.mrf.mxu0
  %v4231 = vadd.f32 %v4195, %v4230
  %v4232 = vand.u32 %v4058, 4294901760
  %4233 = vmatmul.f32.gmra.mxu0 %v4232
  %v4234 = vpop.f32.mrf.mxu0
  %v4235 = vadd.f32 %v4201, %v4234
  %v4236 = vand.u32 %v4061, 4294901760
  %4237 = vmatmul.f32.gmra.mxu0 %v4236
  %v4238 = vpop.f32.mrf.mxu0
  %v4239 = vadd.f32 %v4207, %v4238
  %4240 = vdwg.mxu0
  %4241 = vmatpush.msra.mxu0 0.0
  %4242 = vmatpush.msra.mxu0 0.0
  %4243 = vmatpush.msra.mxu0 0.0
  %4244 = vmatpush.msra.mxu0 0.0
  %4245 = vmatpush.msra.mxu0 0.0
  %4246 = vmatpush.msra.mxu0 0.0
  %4247 = vmatpush.msra.mxu0 0.0
  %4248 = vmatpush.msra.mxu0 0.0
  %4249 = vmatpush.msra.mxu0 0.0
  %4250 = vmatpush.msra.mxu0 0.0
  %4251 = vmatpush.msra.mxu0 0.0
  %4252 = vmatpush.msra.mxu0 0.0
  %4253 = vmatpush.msra.mxu0 0.0
  %4254 = vmatpush.msra.mxu0 0.0
  %4255 = vmatpush.msra.mxu0 0.0
  %v4256 = vand.u32 %v1198, 4294901760
  %4257 = vmatpush.msra.mxu0 %v4256
  %v4258 = vand.u32 %v4055, 4294901760
  %4259 = vmatmul.f32.gmra.mxu0 %v4258
  %v4260 = vpop.f32.mrf.mxu0
  %v4261 = vadd.f32 %v4231, %v4260
  %v4262 = vand.u32 %v4058, 4294901760
  %4263 = vmatmul.f32.gmra.mxu0 %v4262
  %v4264 = vpop.f32.mrf.mxu0
  %v4265 = vadd.f32 %v4235, %v4264
  %v4266 = vand.u32 %v4061, 4294901760
  %4267 = vmatmul.f32.gmra.mxu0 %v4266
  %v4268 = vpop.f32.mrf.mxu0
  %v4269 = vadd.f32 %v4239, %v4268
  %4270 = vdwg.mxu0
  %v4271 = vadd.f32 %v3501, %v4261
  %v4272 = vadd.f32 %v3502, %v4265
  %v4273 = vadd.f32 %v3503, %v4269
  %v4274 = vadd.f32 %v832, %v4271
  %v4275 = vadd.f32 %v836, %v4272
  %v4276 = vadd.f32 %v840, %v4273
  %v4277 = vld [vmem:[%s9] sm:$0x1]
  %v4279 = vperm.slane %v4277, 0
  %v4281 = vadd.f32 %v4274, %v4279
  %v4282 = vadd.f32 %v4275, %v4279
  %v4283 = vadd.f32 %v4276, %v4279
  %v4284 = vld [vmem:[%s10] sm:$0x1]
  %v4285 = vld [vmem:[%s11] sm:$0x1]
  %v4286 = vsel %vm844, %v4281, 0.0
  %4287 = vadd.xlane.f32.xlu0 %v4286
  %v4288 = vpop.xlane.xlu0 %4287
  %v4289 = vsel %vm844, %v4282, 0.0
  %4290 = vadd.xlane.f32.xlu0 %v4289
  %v4291 = vpop.xlane.xlu0 %4290
  %v4292 = vsel %vm851, %v4283, 0.0
  %4293 = vadd.xlane.f32.xlu0 %v4292
  %v4294 = vpop.xlane.xlu0 %4293
  %v4295 = vmul.f32 %v4288, %v861
  %v4296 = vmul.f32 %v4291, %v861
  %v4297 = vmul.f32 %v4294, %v861
  %v4298 = vsub.f32 %v4281, %v4295
  %v4299 = vsub.f32 %v4282, %v4296
  %v4300 = vsub.f32 %v4283, %v4297
  %v4301 = vmul.f32 %v4298, %v4298
  %v4302 = vmul.f32 %v4299, %v4299
  %v4303 = vmul.f32 %v4300, %v4300
  %v4304 = vsel %vm844, %v4301, 0.0
  %4305 = vadd.xlane.f32.xlu0 %v4304
  %v4306 = vpop.xlane.xlu0 %4305
  %v4307 = vsel %vm844, %v4302, 0.0
  %4308 = vadd.xlane.f32.xlu0 %v4307
  %v4309 = vpop.xlane.xlu0 %4308
  %v4310 = vsel %vm851, %v4303, 0.0
  %4311 = vadd.xlane.f32.xlu0 %v4310
  %v4312 = vpop.xlane.xlu0 %4311
  %v4313 = vmul.f32 %v4306, %v861
  %v4314 = vmul.f32 %v4309, %v861
  %v4315 = vmul.f32 %v4312, %v861
  %v4316 = vadd.f32 %v4313, 1e-12
  %v4317 = vadd.f32 %v4314, 1e-12
  %v4318 = vadd.f32 %v4315, 1e-12
  %v4319 = vrsqrt.pop %v4316
  %v4320 = vmul.f32 %v4319, %v4316
  %v4321 = vmul.f32 %v4320, %v4319
  %v4322 = vmul.f32 0.5, %v4321
  %v4323 = vsub.f32 1.5, %v4322
  %v4324 = vmul.f32 %v4319, %v4323
  %vm4325 = vweird.f32 %v4316
  %vm4326 = vweird.f32 %v4319
  %vm4327 = vmor %vm4325, %vm4326
  %v4328 = vsel %vm4327, %v4319, %v4324
  %v4329 = vrsqrt.pop %v4317
  %v4330 = vmul.f32 %v4329, %v4317
  %v4331 = vmul.f32 %v4330, %v4329
  %v4332 = vmul.f32 0.5, %v4331
  %v4333 = vsub.f32 1.5, %v4332
  %v4334 = vmul.f32 %v4329, %v4333
  %vm4335 = vweird.f32 %v4317
  %vm4336 = vweird.f32 %v4329
  %vm4337 = vmor %vm4335, %vm4336
  %v4338 = vsel %vm4337, %v4329, %v4334
  %v4339 = vrsqrt.pop %v4318
  %v4340 = vmul.f32 %v4339, %v4318
  %v4341 = vmul.f32 %v4340, %v4339
  %v4342 = vmul.f32 0.5, %v4341
  %v4343 = vsub.f32 1.5, %v4342
  %v4344 = vmul.f32 %v4339, %v4343
  %vm4345 = vweird.f32 %v4318
  %vm4346 = vweird.f32 %v4339
  %vm4347 = vmor %vm4345, %vm4346
  %v4348 = vsel %vm4347, %v4339, %v4344
  %v4349 = vmul.f32 %v4298, %v4328
  %v4350 = vmul.f32 %v4299, %v4338
  %v4351 = vmul.f32 %v4300, %v4348
  %v4353 = vperm.slane %v4284, 0
  %v4355 = vmul.f32 %v4349, %v4353
  %v4356 = vmul.f32 %v4350, %v4353
  %v4357 = vmul.f32 %v4351, %v4353
  %v4359 = vperm.slane %v4285, 0
  %v4361 = vadd.f32 %v4355, %v4359
  %v4362 = vadd.f32 %v4356, %v4359
  %v4363 = vadd.f32 %v4357, %v4359
  %v4364 = vld [vmem:[%s12] sm:$0xff]
  %v4365 = vld [vmem:[%s12 + $0x8] sm:$0xff]
  %v4366 = vld [vmem:[%s12 + $0x10] sm:$0xff]
  %v4367 = vld [vmem:[%s12 + $0x18] sm:$0xff]
  %v4368 = vld [vmem:[%s13] sm:$0x1]
  %v4370 = vperm.slane %v4368, 0
  %v4373 = vsel %vm844, %v4361, 0
  %v4376 = vsel %vm844, %v4362, 0
  %v4379 = vsel %vm844, %v4363, 0
  %4381 = vmatpush.msra.mxu0 0.0
  %4382 = vmatpush.msra.mxu0 0.0
  %4383 = vmatpush.msra.mxu0 0.0
  %4384 = vmatpush.msra.mxu0 0.0
  %4385 = vmatpush.msra.mxu0 0.0
  %4386 = vmatpush.msra.mxu0 0.0
  %4387 = vmatpush.msra.mxu0 0.0
  %4388 = vmatpush.msra.mxu0 0.0
  %4389 = vmatpush.msra.mxu0 0.0
  %4390 = vmatpush.msra.mxu0 0.0
  %4391 = vmatpush.msra.mxu0 0.0
  %4392 = vmatpush.msra.mxu0 0.0
  %v4393 = vand.u32 %v4367, 4294901760
  %4394 = vmatpush.msra.mxu0 %v4393
  %v4395 = vand.u32 %v4366, 4294901760
  %4396 = vmatpush.msra.mxu0 %v4395
  %v4397 = vand.u32 %v4365, 4294901760
  %4398 = vmatpush.msra.mxu0 %v4397
  %v4399 = vand.u32 %v4364, 4294901760
  %4400 = vmatpush.msra.mxu0 %v4399
  %v4401 = vand.u32 %v4373, 4294901760
  %v4402 = vsub.f32 %v4373, %v4401
  %v4403 = vand.u32 %v4402, 4294901760
  %v4404 = vsub.f32 %v4402, %v4403
  %v4405 = vand.u32 %v4404, 4294901760
  %4406 = vmatmul.f32.gmra.mxu0 %v4405
  %v4407 = vpop.f32.mrf.mxu0
  %v4408 = vadd.f32 %v4370, %v4407
  %v4409 = vand.u32 %v4376, 4294901760
  %v4410 = vsub.f32 %v4376, %v4409
  %v4411 = vand.u32 %v4410, 4294901760
  %v4412 = vsub.f32 %v4410, %v4411
  %v4413 = vand.u32 %v4412, 4294901760
  %4414 = vmatmul.f32.gmra.mxu0 %v4413
  %v4415 = vpop.f32.mrf.mxu0
  %v4416 = vadd.f32 %v4370, %v4415
  %v4417 = vand.u32 %v4379, 4294901760
  %v4418 = vsub.f32 %v4379, %v4417
  %v4419 = vand.u32 %v4418, 4294901760
  %v4420 = vsub.f32 %v4418, %v4419
  %v4421 = vand.u32 %v4420, 4294901760
  %4422 = vmatmul.f32.gmra.mxu0 %v4421
  %v4423 = vpop.f32.mrf.mxu0
  %v4424 = vadd.f32 %v4370, %v4423
  %4425 = vdwg.mxu0
  %4426 = vmatpush.msra.mxu0 0.0
  %4427 = vmatpush.msra.mxu0 0.0
  %4428 = vmatpush.msra.mxu0 0.0
  %4429 = vmatpush.msra.mxu0 0.0
  %4430 = vmatpush.msra.mxu0 0.0
  %4431 = vmatpush.msra.mxu0 0.0
  %4432 = vmatpush.msra.mxu0 0.0
  %4433 = vmatpush.msra.mxu0 0.0
  %4434 = vmatpush.msra.mxu0 0.0
  %4435 = vmatpush.msra.mxu0 0.0
  %4436 = vmatpush.msra.mxu0 0.0
  %4437 = vmatpush.msra.mxu0 0.0
  %v4438 = vand.u32 %v4367, 4294901760
  %v4439 = vsub.f32 %v4367, %v4438
  %v4440 = vand.u32 %v4439, 4294901760
  %v4441 = vsub.f32 %v4439, %v4440
  %v4442 = vand.u32 %v4441, 4294901760
  %4443 = vmatpush.msra.mxu0 %v4442
  %v4444 = vand.u32 %v4366, 4294901760
  %v4445 = vsub.f32 %v4366, %v4444
  %v4446 = vand.u32 %v4445, 4294901760
  %v4447 = vsub.f32 %v4445, %v4446
  %v4448 = vand.u32 %v4447, 4294901760
  %4449 = vmatpush.msra.mxu0 %v4448
  %v4450 = vand.u32 %v4365, 4294901760
  %v4451 = vsub.f32 %v4365, %v4450
  %v4452 = vand.u32 %v4451, 4294901760
  %v4453 = vsub.f32 %v4451, %v4452
  %v4454 = vand.u32 %v4453, 4294901760
  %4455 = vmatpush.msra.mxu0 %v4454
  %v4456 = vand.u32 %v4364, 4294901760
  %v4457 = vsub.f32 %v4364, %v4456
  %v4458 = vand.u32 %v4457, 4294901760
  %v4459 = vsub.f32 %v4457, %v4458
  %v4460 = vand.u32 %v4459, 4294901760
  %4461 = vmatpush.msra.mxu0 %v4460
  %v4462 = vand.u32 %v4373, 4294901760
  %4463 = vmatmul.f32.gmra.mxu0 %v4462
  %v4464 = vpop.f32.mrf.mxu0
  %v4465 = vadd.f32 %v4408, %v4464
  %v4466 = vand.u32 %v4376, 4294901760
  %4467 = vmatmul.f32.gmra.mxu0 %v4466
  %v4468 = vpop.f32.mrf.mxu0
  %v4469 = vadd.f32 %v4416, %v4468
  %v4470 = vand.u32 %v4379, 4294901760
  %4471 = vmatmul.f32.gmra.mxu0 %v4470
  %v4472 = vpop.f32.mrf.mxu0
  %v4473 = vadd.f32 %v4424, %v4472
  %4474 = vdwg.mxu0
  %4475 = vmatpush.msra.mxu0 0.0
  %4476 = vmatpush.msra.mxu0 0.0
  %4477 = vmatpush.msra.mxu0 0.0
  %4478 = vmatpush.msra.mxu0 0.0
  %4479 = vmatpush.msra.mxu0 0.0
  %4480 = vmatpush.msra.mxu0 0.0
  %4481 = vmatpush.msra.mxu0 0.0
  %4482 = vmatpush.msra.mxu0 0.0
  %4483 = vmatpush.msra.mxu0 0.0
  %4484 = vmatpush.msra.mxu0 0.0
  %4485 = vmatpush.msra.mxu0 0.0
  %4486 = vmatpush.msra.mxu0 0.0
  %v4487 = vand.u32 %v4367, 4294901760
  %v4488 = vsub.f32 %v4367, %v4487
  %4489 = vmatpush.msra.mxu0 %v4488
  %v4490 = vand.u32 %v4366, 4294901760
  %v4491 = vsub.f32 %v4366, %v4490
  %4492 = vmatpush.msra.mxu0 %v4491
  %v4493 = vand.u32 %v4365, 4294901760
  %v4494 = vsub.f32 %v4365, %v4493
  %4495 = vmatpush.msra.mxu0 %v4494
  %v4496 = vand.u32 %v4364, 4294901760
  %v4497 = vsub.f32 %v4364, %v4496
  %4498 = vmatpush.msra.mxu0 %v4497
  %v4499 = vand.u32 %v4373, 4294901760
  %v4500 = vsub.f32 %v4373, %v4499
  %4501 = vmatmul.f32.gmra.mxu0 %v4500
  %v4502 = vpop.f32.mrf.mxu0
  %v4503 = vadd.f32 %v4465, %v4502
  %v4504 = vand.u32 %v4376, 4294901760
  %v4505 = vsub.f32 %v4376, %v4504
  %4506 = vmatmul.f32.gmra.mxu0 %v4505
  %v4507 = vpop.f32.mrf.mxu0
  %v4508 = vadd.f32 %v4469, %v4507
  %v4509 = vand.u32 %v4379, 4294901760
  %v4510 = vsub.f32 %v4379, %v4509
  %4511 = vmatmul.f32.gmra.mxu0 %v4510
  %v4512 = vpop.f32.mrf.mxu0
  %v4513 = vadd.f32 %v4473, %v4512
  %4514 = vdwg.mxu0
  %4515 = vmatpush.msra.mxu0 0.0
  %4516 = vmatpush.msra.mxu0 0.0
  %4517 = vmatpush.msra.mxu0 0.0
  %4518 = vmatpush.msra.mxu0 0.0
  %4519 = vmatpush.msra.mxu0 0.0
  %4520 = vmatpush.msra.mxu0 0.0
  %4521 = vmatpush.msra.mxu0 0.0
  %4522 = vmatpush.msra.mxu0 0.0
  %4523 = vmatpush.msra.mxu0 0.0
  %4524 = vmatpush.msra.mxu0 0.0
  %4525 = vmatpush.msra.mxu0 0.0
  %4526 = vmatpush.msra.mxu0 0.0
  %v4527 = vand.u32 %v4367, 4294901760
  %4528 = vmatpush.msra.mxu0 %v4527
  %v4529 = vand.u32 %v4366, 4294901760
  %4530 = vmatpush.msra.mxu0 %v4529
  %v4531 = vand.u32 %v4365, 4294901760
  %4532 = vmatpush.msra.mxu0 %v4531
  %v4533 = vand.u32 %v4364, 4294901760
  %4534 = vmatpush.msra.mxu0 %v4533
  %v4535 = vand.u32 %v4373, 4294901760
  %v4536 = vsub.f32 %v4373, %v4535
  %v4537 = vand.u32 %v4536, 4294901760
  %4538 = vmatmul.f32.gmra.mxu0 %v4537
  %v4539 = vpop.f32.mrf.mxu0
  %v4540 = vadd.f32 %v4503, %v4539
  %v4541 = vand.u32 %v4376, 4294901760
  %v4542 = vsub.f32 %v4376, %v4541
  %v4543 = vand.u32 %v4542, 4294901760
  %4544 = vmatmul.f32.gmra.mxu0 %v4543
  %v4545 = vpop.f32.mrf.mxu0
  %v4546 = vadd.f32 %v4508, %v4545
  %v4547 = vand.u32 %v4379, 4294901760
  %v4548 = vsub.f32 %v4379, %v4547
  %v4549 = vand.u32 %v4548, 4294901760
  %4550 = vmatmul.f32.gmra.mxu0 %v4549
  %v4551 = vpop.f32.mrf.mxu0
  %v4552 = vadd.f32 %v4513, %v4551
  %4553 = vdwg.mxu0
  %4554 = vmatpush.msra.mxu0 0.0
  %4555 = vmatpush.msra.mxu0 0.0
  %4556 = vmatpush.msra.mxu0 0.0
  %4557 = vmatpush.msra.mxu0 0.0
  %4558 = vmatpush.msra.mxu0 0.0
  %4559 = vmatpush.msra.mxu0 0.0
  %4560 = vmatpush.msra.mxu0 0.0
  %4561 = vmatpush.msra.mxu0 0.0
  %4562 = vmatpush.msra.mxu0 0.0
  %4563 = vmatpush.msra.mxu0 0.0
  %4564 = vmatpush.msra.mxu0 0.0
  %4565 = vmatpush.msra.mxu0 0.0
  %v4566 = vand.u32 %v4367, 4294901760
  %v4567 = vsub.f32 %v4367, %v4566
  %v4568 = vand.u32 %v4567, 4294901760
  %4569 = vmatpush.msra.mxu0 %v4568
  %v4570 = vand.u32 %v4366, 4294901760
  %v4571 = vsub.f32 %v4366, %v4570
  %v4572 = vand.u32 %v4571, 4294901760
  %4573 = vmatpush.msra.mxu0 %v4572
  %v4574 = vand.u32 %v4365, 4294901760
  %v4575 = vsub.f32 %v4365, %v4574
  %v4576 = vand.u32 %v4575, 4294901760
  %4577 = vmatpush.msra.mxu0 %v4576
  %v4578 = vand.u32 %v4364, 4294901760
  %v4579 = vsub.f32 %v4364, %v4578
  %v4580 = vand.u32 %v4579, 4294901760
  %4581 = vmatpush.msra.mxu0 %v4580
  %v4582 = vand.u32 %v4373, 4294901760
  %4583 = vmatmul.f32.gmra.mxu0 %v4582
  %v4584 = vpop.f32.mrf.mxu0
  %v4585 = vadd.f32 %v4540, %v4584
  %v4586 = vand.u32 %v4376, 4294901760
  %4587 = vmatmul.f32.gmra.mxu0 %v4586
  %v4588 = vpop.f32.mrf.mxu0
  %v4589 = vadd.f32 %v4546, %v4588
  %v4590 = vand.u32 %v4379, 4294901760
  %4591 = vmatmul.f32.gmra.mxu0 %v4590
  %v4592 = vpop.f32.mrf.mxu0
  %v4593 = vadd.f32 %v4552, %v4592
  %4594 = vdwg.mxu0
  %4595 = vmatpush.msra.mxu0 0.0
  %4596 = vmatpush.msra.mxu0 0.0
  %4597 = vmatpush.msra.mxu0 0.0
  %4598 = vmatpush.msra.mxu0 0.0
  %4599 = vmatpush.msra.mxu0 0.0
  %4600 = vmatpush.msra.mxu0 0.0
  %4601 = vmatpush.msra.mxu0 0.0
  %4602 = vmatpush.msra.mxu0 0.0
  %4603 = vmatpush.msra.mxu0 0.0
  %4604 = vmatpush.msra.mxu0 0.0
  %4605 = vmatpush.msra.mxu0 0.0
  %4606 = vmatpush.msra.mxu0 0.0
  %v4607 = vand.u32 %v4367, 4294901760
  %4608 = vmatpush.msra.mxu0 %v4607
  %v4609 = vand.u32 %v4366, 4294901760
  %4610 = vmatpush.msra.mxu0 %v4609
  %v4611 = vand.u32 %v4365, 4294901760
  %4612 = vmatpush.msra.mxu0 %v4611
  %v4613 = vand.u32 %v4364, 4294901760
  %4614 = vmatpush.msra.mxu0 %v4613
  %v4615 = vand.u32 %v4373, 4294901760
  %4616 = vmatmul.f32.gmra.mxu0 %v4615
  %v4617 = vpop.f32.mrf.mxu0
  %v4618 = vadd.f32 %v4585, %v4617
  %v4619 = vand.u32 %v4376, 4294901760
  %4620 = vmatmul.f32.gmra.mxu0 %v4619
  %v4621 = vpop.f32.mrf.mxu0
  %v4622 = vadd.f32 %v4589, %v4621
  %v4623 = vand.u32 %v4379, 4294901760
  %4624 = vmatmul.f32.gmra.mxu0 %v4623
  %v4625 = vpop.f32.mrf.mxu0
  %v4626 = vadd.f32 %v4593, %v4625
  %4627 = vdwg.mxu0
  %v4628 = vmul.f32 %v4618, 0.5
  %v4629 = vmul.f32 %v4622, 0.5
  %v4630 = vmul.f32 %v4626, 0.5
  %v4631 = vmul.f32 %v4618, 0.044715
  %v4632 = vmul.f32 %v4622, 0.044715
  %v4633 = vmul.f32 %v4626, 0.044715
  %v4634 = vmul.f32 %v4631, %v4618
  %v4635 = vmul.f32 %v4632, %v4622
  %v4636 = vmul.f32 %v4633, %v4626
  %v4637 = vmul.f32 %v4634, %v4618
  %v4638 = vmul.f32 %v4635, %v4622
  %v4639 = vmul.f32 %v4636, %v4626
  %v4640 = vadd.f32 %v4618, %v4637
  %v4641 = vadd.f32 %v4622, %v4638
  %v4642 = vadd.f32 %v4626, %v4639
  %v4643 = vmul.f32 %v4640, 0.7978846
  %v4644 = vmul.f32 %v4641, 0.7978846
  %v4645 = vmul.f32 %v4642, 0.7978846
  %v4646 = vtanh.pop %v4643
  %v4647 = vtanh.pop %v4644
  %v4648 = vtanh.pop %v4645
  %v4649 = vadd.f32 %v4646, 1.0
  %v4650 = vadd.f32 %v4647, 1.0
  %v4651 = vadd.f32 %v4648, 1.0
  %v4652 = vmul.f32 %v4628, %v4649
  %v4653 = vmul.f32 %v4629, %v4650
  %v4654 = vmul.f32 %v4630, %v4651
  %v4655 = vld [vmem:[%s14] sm:$0xff]
  %v4656 = vld [vmem:[%s14 + $0x8] sm:$0xff]
  %v4657 = vld [vmem:[%s14 + $0x10] sm:$0xff]
  %v4658 = vld [vmem:[%s14 + $0x18] sm:$0xff]
  %v4659 = vld [vmem:[%s14 + $0x20] sm:$0xff]
  %v4660 = vld [vmem:[%s14 + $0x28] sm:$0xff]
  %v4661 = vld [vmem:[%s14 + $0x30] sm:$0xff]
  %v4662 = vld [vmem:[%s14 + $0x38] sm:$0xff]
  %vm4663 = vcmask 523264
  %v4665 = vsel %vm4663, %v4652, 0
  %v4668 = vsel %vm4663, %v4653, 0
  %v4671 = vsel %vm4663, %v4654, 0
  %4673 = vmatpush.msra.mxu0 0.0
  %4674 = vmatpush.msra.mxu0 0.0
  %4675 = vmatpush.msra.mxu0 0.0
  %4676 = vmatpush.msra.mxu0 0.0
  %4677 = vmatpush.msra.mxu0 0.0
  %4678 = vmatpush.msra.mxu0 0.0
  %4679 = vmatpush.msra.mxu0 0.0
  %4680 = vmatpush.msra.mxu0 0.0
  %v4681 = vand.u32 %v4662, 4294901760
  %4682 = vmatpush.msra.mxu0 %v4681
  %v4683 = vand.u32 %v4661, 4294901760
  %4684 = vmatpush.msra.mxu0 %v4683
  %v4685 = vand.u32 %v4660, 4294901760
  %4686 = vmatpush.msra.mxu0 %v4685
  %v4687 = vand.u32 %v4659, 4294901760
  %4688 = vmatpush.msra.mxu0 %v4687
  %v4689 = vand.u32 %v4658, 4294901760
  %4690 = vmatpush.msra.mxu0 %v4689
  %v4691 = vand.u32 %v4657, 4294901760
  %4692 = vmatpush.msra.mxu0 %v4691
  %v4693 = vand.u32 %v4656, 4294901760
  %4694 = vmatpush.msra.mxu0 %v4693
  %v4695 = vand.u32 %v4655, 4294901760
  %4696 = vmatpush.msra.mxu0 %v4695
  %v4697 = vand.u32 %v4665, 4294901760
  %v4698 = vsub.f32 %v4665, %v4697
  %v4699 = vand.u32 %v4698, 4294901760
  %v4700 = vsub.f32 %v4698, %v4699
  %v4701 = vand.u32 %v4700, 4294901760
  %4702 = vmatmul.f32.gmra.mxu0 %v4701
  %v4703 = vpop.f32.mrf.mxu0
  %v4704 = vadd.f32 0.0, %v4703
  %v4705 = vand.u32 %v4668, 4294901760
  %v4706 = vsub.f32 %v4668, %v4705
  %v4707 = vand.u32 %v4706, 4294901760
  %v4708 = vsub.f32 %v4706, %v4707
  %v4709 = vand.u32 %v4708, 4294901760
  %4710 = vmatmul.f32.gmra.mxu0 %v4709
  %v4711 = vpop.f32.mrf.mxu0
  %v4712 = vadd.f32 0.0, %v4711
  %v4713 = vand.u32 %v4671, 4294901760
  %v4714 = vsub.f32 %v4671, %v4713
  %v4715 = vand.u32 %v4714, 4294901760
  %v4716 = vsub.f32 %v4714, %v4715
  %v4717 = vand.u32 %v4716, 4294901760
  %4718 = vmatmul.f32.gmra.mxu0 %v4717
  %v4719 = vpop.f32.mrf.mxu0
  %v4720 = vadd.f32 0.0, %v4719
  %4721 = vdwg.mxu0
  %4722 = vmatpush.msra.mxu0 0.0
  %4723 = vmatpush.msra.mxu0 0.0
  %4724 = vmatpush.msra.mxu0 0.0
  %4725 = vmatpush.msra.mxu0 0.0
  %4726 = vmatpush.msra.mxu0 0.0
  %4727 = vmatpush.msra.mxu0 0.0
  %4728 = vmatpush.msra.mxu0 0.0
  %4729 = vmatpush.msra.mxu0 0.0
  %v4730 = vand.u32 %v4662, 4294901760
  %v4731 = vsub.f32 %v4662, %v4730
  %v4732 = vand.u32 %v4731, 4294901760
  %v4733 = vsub.f32 %v4731, %v4732
  %v4734 = vand.u32 %v4733, 4294901760
  %4735 = vmatpush.msra.mxu0 %v4734
  %v4736 = vand.u32 %v4661, 4294901760
  %v4737 = vsub.f32 %v4661, %v4736
  %v4738 = vand.u32 %v4737, 4294901760
  %v4739 = vsub.f32 %v4737, %v4738
  %v4740 = vand.u32 %v4739, 4294901760
  %4741 = vmatpush.msra.mxu0 %v4740
  %v4742 = vand.u32 %v4660, 4294901760
  %v4743 = vsub.f32 %v4660, %v4742
  %v4744 = vand.u32 %v4743, 4294901760
  %v4745 = vsub.f32 %v4743, %v4744
  %v4746 = vand.u32 %v4745, 4294901760
  %4747 = vmatpush.msra.mxu0 %v4746
  %v4748 = vand.u32 %v4659, 4294901760
  %v4749 = vsub.f32 %v4659, %v4748
  %v4750 = vand.u32 %v4749, 4294901760
  %v4751 = vsub.f32 %v4749, %v4750
  %v4752 = vand.u32 %v4751, 4294901760
  %4753 = vmatpush.msra.mxu0 %v4752
  %v4754 = vand.u32 %v4658, 4294901760
  %v4755 = vsub.f32 %v4658, %v4754
  %v4756 = vand.u32 %v4755, 4294901760
  %v4757 = vsub.f32 %v4755, %v4756
  %v4758 = vand.u32 %v4757, 4294901760
  %4759 = vmatpush.msra.mxu0 %v4758
  %v4760 = vand.u32 %v4657, 4294901760
  %v4761 = vsub.f32 %v4657, %v4760
  %v4762 = vand.u32 %v4761, 4294901760
  %v4763 = vsub.f32 %v4761, %v4762
  %v4764 = vand.u32 %v4763, 4294901760
  %4765 = vmatpush.msra.mxu0 %v4764
  %v4766 = vand.u32 %v4656, 4294901760
  %v4767 = vsub.f32 %v4656, %v4766
  %v4768 = vand.u32 %v4767, 4294901760
  %v4769 = vsub.f32 %v4767, %v4768
  %v4770 = vand.u32 %v4769, 4294901760
  %4771 = vmatpush.msra.mxu0 %v4770
  %v4772 = vand.u32 %v4655, 4294901760
  %v4773 = vsub.f32 %v4655, %v4772
  %v4774 = vand.u32 %v4773, 4294901760
  %v4775 = vsub.f32 %v4773, %v4774
  %v4776 = vand.u32 %v4775, 4294901760
  %4777 = vmatpush.msra.mxu0 %v4776
  %v4778 = vand.u32 %v4665, 4294901760
  %4779 = vmatmul.f32.gmra.mxu0 %v4778
  %v4780 = vpop.f32.mrf.mxu0
  %v4781 = vadd.f32 %v4704, %v4780
  %v4782 = vand.u32 %v4668, 4294901760
  %4783 = vmatmul.f32.gmra.mxu0 %v4782
  %v4784 = vpop.f32.mrf.mxu0
  %v4785 = vadd.f32 %v4712, %v4784
  %v4786 = vand.u32 %v4671, 4294901760
  %4787 = vmatmul.f32.gmra.mxu0 %v4786
  %v4788 = vpop.f32.mrf.mxu0
  %v4789 = vadd.f32 %v4720, %v4788
  %4790 = vdwg.mxu0
  %4791 = vmatpush.msra.mxu0 0.0
  %4792 = vmatpush.msra.mxu0 0.0
  %4793 = vmatpush.msra.mxu0 0.0
  %4794 = vmatpush.msra.mxu0 0.0
  %4795 = vmatpush.msra.mxu0 0.0
  %4796 = vmatpush.msra.mxu0 0.0
  %4797 = vmatpush.msra.mxu0 0.0
  %4798 = vmatpush.msra.mxu0 0.0
  %v4799 = vand.u32 %v4662, 4294901760
  %v4800 = vsub.f32 %v4662, %v4799
  %4801 = vmatpush.msra.mxu0 %v4800
  %v4802 = vand.u32 %v4661, 4294901760
  %v4803 = vsub.f32 %v4661, %v4802
  %4804 = vmatpush.msra.mxu0 %v4803
  %v4805 = vand.u32 %v4660, 4294901760
  %v4806 = vsub.f32 %v4660, %v4805
  %4807 = vmatpush.msra.mxu0 %v4806
  %v4808 = vand.u32 %v4659, 4294901760
  %v4809 = vsub.f32 %v4659, %v4808
  %4810 = vmatpush.msra.mxu0 %v4809
  %v4811 = vand.u32 %v4658, 4294901760
  %v4812 = vsub.f32 %v4658, %v4811
  %4813 = vmatpush.msra.mxu0 %v4812
  %v4814 = vand.u32 %v4657, 4294901760
  %v4815 = vsub.f32 %v4657, %v4814
  %4816 = vmatpush.msra.mxu0 %v4815
  %v4817 = vand.u32 %v4656, 4294901760
  %v4818 = vsub.f32 %v4656, %v4817
  %4819 = vmatpush.msra.mxu0 %v4818
  %v4820 = vand.u32 %v4655, 4294901760
  %v4821 = vsub.f32 %v4655, %v4820
  %4822 = vmatpush.msra.mxu0 %v4821
  %v4823 = vand.u32 %v4665, 4294901760
  %v4824 = vsub.f32 %v4665, %v4823
  %4825 = vmatmul.f32.gmra.mxu0 %v4824
  %v4826 = vpop.f32.mrf.mxu0
  %v4827 = vadd.f32 %v4781, %v4826
  %v4828 = vand.u32 %v4668, 4294901760
  %v4829 = vsub.f32 %v4668, %v4828
  %4830 = vmatmul.f32.gmra.mxu0 %v4829
  %v4831 = vpop.f32.mrf.mxu0
  %v4832 = vadd.f32 %v4785, %v4831
  %v4833 = vand.u32 %v4671, 4294901760
  %v4834 = vsub.f32 %v4671, %v4833
  %4835 = vmatmul.f32.gmra.mxu0 %v4834
  %v4836 = vpop.f32.mrf.mxu0
  %v4837 = vadd.f32 %v4789, %v4836
  %4838 = vdwg.mxu0
  %4839 = vmatpush.msra.mxu0 0.0
  %4840 = vmatpush.msra.mxu0 0.0
  %4841 = vmatpush.msra.mxu0 0.0
  %4842 = vmatpush.msra.mxu0 0.0
  %4843 = vmatpush.msra.mxu0 0.0
  %4844 = vmatpush.msra.mxu0 0.0
  %4845 = vmatpush.msra.mxu0 0.0
  %4846 = vmatpush.msra.mxu0 0.0
  %v4847 = vand.u32 %v4662, 4294901760
  %4848 = vmatpush.msra.mxu0 %v4847
  %v4849 = vand.u32 %v4661, 4294901760
  %4850 = vmatpush.msra.mxu0 %v4849
  %v4851 = vand.u32 %v4660, 4294901760
  %4852 = vmatpush.msra.mxu0 %v4851
  %v4853 = vand.u32 %v4659, 4294901760
  %4854 = vmatpush.msra.mxu0 %v4853
  %v4855 = vand.u32 %v4658, 4294901760
  %4856 = vmatpush.msra.mxu0 %v4855
  %v4857 = vand.u32 %v4657, 4294901760
  %4858 = vmatpush.msra.mxu0 %v4857
  %v4859 = vand.u32 %v4656, 4294901760
  %4860 = vmatpush.msra.mxu0 %v4859
  %v4861 = vand.u32 %v4655, 4294901760
  %4862 = vmatpush.msra.mxu0 %v4861
  %v4863 = vand.u32 %v4665, 4294901760
  %v4864 = vsub.f32 %v4665, %v4863
  %v4865 = vand.u32 %v4864, 4294901760
  %4866 = vmatmul.f32.gmra.mxu0 %v4865
  %v4867 = vpop.f32.mrf.mxu0
  %v4868 = vadd.f32 %v4827, %v4867
  %v4869 = vand.u32 %v4668, 4294901760
  %v4870 = vsub.f32 %v4668, %v4869
  %v4871 = vand.u32 %v4870, 4294901760
  %4872 = vmatmul.f32.gmra.mxu0 %v4871
  %v4873 = vpop.f32.mrf.mxu0
  %v4874 = vadd.f32 %v4832, %v4873
  %v4875 = vand.u32 %v4671, 4294901760
  %v4876 = vsub.f32 %v4671, %v4875
  %v4877 = vand.u32 %v4876, 4294901760
  %4878 = vmatmul.f32.gmra.mxu0 %v4877
  %v4879 = vpop.f32.mrf.mxu0
  %v4880 = vadd.f32 %v4837, %v4879
  %4881 = vdwg.mxu0
  %4882 = vmatpush.msra.mxu0 0.0
  %4883 = vmatpush.msra.mxu0 0.0
  %4884 = vmatpush.msra.mxu0 0.0
  %4885 = vmatpush.msra.mxu0 0.0
  %4886 = vmatpush.msra.mxu0 0.0
  %4887 = vmatpush.msra.mxu0 0.0
  %4888 = vmatpush.msra.mxu0 0.0
  %4889 = vmatpush.msra.mxu0 0.0
  %v4890 = vand.u32 %v4662, 4294901760
  %v4891 = vsub.f32 %v4662, %v4890
  %v4892 = vand.u32 %v4891, 4294901760
  %4893 = vmatpush.msra.mxu0 %v4892
  %v4894 = vand.u32 %v4661, 4294901760
  %v4895 = vsub.f32 %v4661, %v4894
  %v4896 = vand.u32 %v4895, 4294901760
  %4897 = vmatpush.msra.mxu0 %v4896
  %v4898 = vand.u32 %v4660, 4294901760
  %v4899 = vsub.f32 %v4660, %v4898
  %v4900 = vand.u32 %v4899, 4294901760
  %4901 = vmatpush.msra.mxu0 %v4900
  %v4902 = vand.u32 %v4659, 4294901760
  %v4903 = vsub.f32 %v4659, %v4902
  %v4904 = vand.u32 %v4903, 4294901760
  %4905 = vmatpush.msra.mxu0 %v4904
  %v4906 = vand.u32 %v4658, 4294901760
  %v4907 = vsub.f32 %v4658, %v4906
  %v4908 = vand.u32 %v4907, 4294901760
  %4909 = vmatpush.msra.mxu0 %v4908
  %v4910 = vand.u32 %v4657, 4294901760
  %v4911 = vsub.f32 %v4657, %v4910
  %v4912 = vand.u32 %v4911, 4294901760
  %4913 = vmatpush.msra.mxu0 %v4912
  %v4914 = vand.u32 %v4656, 4294901760
  %v4915 = vsub.f32 %v4656, %v4914
  %v4916 = vand.u32 %v4915, 4294901760
  %4917 = vmatpush.msra.mxu0 %v4916
  %v4918 = vand.u32 %v4655, 4294901760
  %v4919 = vsub.f32 %v4655, %v4918
  %v4920 = vand.u32 %v4919, 4294901760
  %4921 = vmatpush.msra.mxu0 %v4920
  %v4922 = vand.u32 %v4665, 4294901760
  %4923 = vmatmul.f32.gmra.mxu0 %v4922
  %v4924 = vpop.f32.mrf.mxu0
  %v4925 = vadd.f32 %v4868, %v4924
  %v4926 = vand.u32 %v4668, 4294901760
  %4927 = vmatmul.f32.gmra.mxu0 %v4926
  %v4928 = vpop.f32.mrf.mxu0
  %v4929 = vadd.f32 %v4874, %v4928
  %v4930 = vand.u32 %v4671, 4294901760
  %4931 = vmatmul.f32.gmra.mxu0 %v4930
  %v4932 = vpop.f32.mrf.mxu0
  %v4933 = vadd.f32 %v4880, %v4932
  %4934 = vdwg.mxu0
  %4935 = vmatpush.msra.mxu0 0.0
  %4936 = vmatpush.msra.mxu0 0.0
  %4937 = vmatpush.msra.mxu0 0.0
  %4938 = vmatpush.msra.mxu0 0.0
  %4939 = vmatpush.msra.mxu0 0.0
  %4940 = vmatpush.msra.mxu0 0.0
  %4941 = vmatpush.msra.mxu0 0.0
  %4942 = vmatpush.msra.mxu0 0.0
  %v4943 = vand.u32 %v4662, 4294901760
  %4944 = vmatpush.msra.mxu0 %v4943
  %v4945 = vand.u32 %v4661, 4294901760
  %4946 = vmatpush.msra.mxu0 %v4945
  %v4947 = vand.u32 %v4660, 4294901760
  %4948 = vmatpush.msra.mxu0 %v4947
  %v4949 = vand.u32 %v4659, 4294901760
  %4950 = vmatpush.msra.mxu0 %v4949
  %v4951 = vand.u32 %v4658, 4294901760
  %4952 = vmatpush.msra.mxu0 %v4951
  %v4953 = vand.u32 %v4657, 4294901760
  %4954 = vmatpush.msra.mxu0 %v4953
  %v4955 = vand.u32 %v4656, 4294901760
  %4956 = vmatpush.msra.mxu0 %v4955
  %v4957 = vand.u32 %v4655, 4294901760
  %4958 = vmatpush.msra.mxu0 %v4957
  %v4959 = vand.u32 %v4665, 4294901760
  %4960 = vmatmul.f32.gmra.mxu0 %v4959
  %v4961 = vpop.f32.mrf.mxu0
  %v4962 = vadd.f32 %v4925, %v4961
  %v4963 = vand.u32 %v4668, 4294901760
  %4964 = vmatmul.f32.gmra.mxu0 %v4963
  %v4965 = vpop.f32.mrf.mxu0
  %v4966 = vadd.f32 %v4929, %v4965
  %v4967 = vand.u32 %v4671, 4294901760
  %4968 = vmatmul.f32.gmra.mxu0 %v4967
  %v4969 = vpop.f32.mrf.mxu0
  %v4970 = vadd.f32 %v4933, %v4969
  %4971 = vdwg.mxu0
  %v4972 = vadd.f32 %v4281, %v4962
  %v4973 = vadd.f32 %v4282, %v4966
  %v4974 = vadd.f32 %v4283, %v4970
  %v4975 = vld [vmem:[%s15] sm:$0x1]
  %v4977 = vperm.slane %v4975, 0
  %v4979 = vadd.f32 %v4972, %v4977
  %v4980 = vadd.f32 %v4973, %v4977
  %v4981 = vadd.f32 %v4974, %v4977
  %s4982 = scalar_lea.vmem %s4, 1
  %v4983 = vld [vmem:[%s4982] sm:$0x1]
  %s4984 = scalar_lea.vmem %s5, 1
  %v4985 = vld [vmem:[%s4984] sm:$0x1]
  %v4986 = vsel %vm844, %v4979, 0.0
  %4987 = vadd.xlane.f32.xlu0 %v4986
  %v4988 = vpop.xlane.xlu0 %4987
  %v4989 = vsel %vm844, %v4980, 0.0
  %4990 = vadd.xlane.f32.xlu0 %v4989
  %v4991 = vpop.xlane.xlu0 %4990
  %v4992 = vsel %vm851, %v4981, 0.0
  %4993 = vadd.xlane.f32.xlu0 %v4992
  %v4994 = vpop.xlane.xlu0 %4993
  %v4995 = vmul.f32 %v4988, %v861
  %v4996 = vmul.f32 %v4991, %v861
  %v4997 = vmul.f32 %v4994, %v861
  %v4998 = vsub.f32 %v4979, %v4995
  %v4999 = vsub.f32 %v4980, %v4996
  %v5000 = vsub.f32 %v4981, %v4997
  %v5001 = vmul.f32 %v4998, %v4998
  %v5002 = vmul.f32 %v4999, %v4999
  %v5003 = vmul.f32 %v5000, %v5000
  %v5004 = vsel %vm844, %v5001, 0.0
  %5005 = vadd.xlane.f32.xlu0 %v5004
  %v5006 = vpop.xlane.xlu0 %5005
  %v5007 = vsel %vm844, %v5002, 0.0
  %5008 = vadd.xlane.f32.xlu0 %v5007
  %v5009 = vpop.xlane.xlu0 %5008
  %v5010 = vsel %vm851, %v5003, 0.0
  %5011 = vadd.xlane.f32.xlu0 %v5010
  %v5012 = vpop.xlane.xlu0 %5011
  %v5013 = vmul.f32 %v5006, %v861
  %v5014 = vmul.f32 %v5009, %v861
  %v5015 = vmul.f32 %v5012, %v861
  %v5016 = vadd.f32 %v5013, 1e-12
  %v5017 = vadd.f32 %v5014, 1e-12
  %v5018 = vadd.f32 %v5015, 1e-12
  %v5019 = vrsqrt.pop %v5016
  %v5020 = vmul.f32 %v5019, %v5016
  %v5021 = vmul.f32 %v5020, %v5019
  %v5022 = vmul.f32 0.5, %v5021
  %v5023 = vsub.f32 1.5, %v5022
  %v5024 = vmul.f32 %v5019, %v5023
  %vm5025 = vweird.f32 %v5016
  %vm5026 = vweird.f32 %v5019
  %vm5027 = vmor %vm5025, %vm5026
  %v5028 = vsel %vm5027, %v5019, %v5024
  %v5029 = vrsqrt.pop %v5017
  %v5030 = vmul.f32 %v5029, %v5017
  %v5031 = vmul.f32 %v5030, %v5029
  %v5032 = vmul.f32 0.5, %v5031
  %v5033 = vsub.f32 1.5, %v5032
  %v5034 = vmul.f32 %v5029, %v5033
  %vm5035 = vweird.f32 %v5017
  %vm5036 = vweird.f32 %v5029
  %vm5037 = vmor %vm5035, %vm5036
  %v5038 = vsel %vm5037, %v5029, %v5034
  %v5039 = vrsqrt.pop %v5018
  %v5040 = vmul.f32 %v5039, %v5018
  %v5041 = vmul.f32 %v5040, %v5039
  %v5042 = vmul.f32 0.5, %v5041
  %v5043 = vsub.f32 1.5, %v5042
  %v5044 = vmul.f32 %v5039, %v5043
  %vm5045 = vweird.f32 %v5018
  %vm5046 = vweird.f32 %v5039
  %vm5047 = vmor %vm5045, %vm5046
  %v5048 = vsel %vm5047, %v5039, %v5044
  %v5049 = vmul.f32 %v4998, %v5028
  %v5050 = vmul.f32 %v4999, %v5038
  %v5051 = vmul.f32 %v5000, %v5048
  %v5053 = vperm.slane %v4983, 0
  %v5055 = vmul.f32 %v5049, %v5053
  %v5056 = vmul.f32 %v5050, %v5053
  %v5057 = vmul.f32 %v5051, %v5053
  %v5059 = vperm.slane %v4985, 0
  %v5061 = vadd.f32 %v5055, %v5059
  %v5062 = vadd.f32 %v5056, %v5059
  %v5063 = vadd.f32 %v5057, %v5059
  %s5064 = scalar_lea.vmem %s6, 32
  %v5065 = vld [vmem:[%s5064] sm:$0xff]
  %v5066 = vld [vmem:[%s5064 + $0x8] sm:$0xff]
  %v5067 = vld [vmem:[%s5064 + $0x10] sm:$0xff]
  %v5068 = vld [vmem:[%s5064 + $0x18] sm:$0xff]
  %s5069 = scalar_lea.vmem %s7, 1
  %v5070 = vld [vmem:[%s5069] sm:$0x1]
  %v5072 = vperm.slane %v5070, 0
  %v5075 = vsel %vm844, %v5061, 0
  %v5078 = vsel %vm844, %v5062, 0
  %v5081 = vsel %vm844, %v5063, 0
  %5083 = vmatpush.msra.mxu0 0.0
  %5084 = vmatpush.msra.mxu0 0.0
  %5085 = vmatpush.msra.mxu0 0.0
  %5086 = vmatpush.msra.mxu0 0.0
  %5087 = vmatpush.msra.mxu0 0.0
  %5088 = vmatpush.msra.mxu0 0.0
  %5089 = vmatpush.msra.mxu0 0.0
  %5090 = vmatpush.msra.mxu0 0.0
  %5091 = vmatpush.msra.mxu0 0.0
  %5092 = vmatpush.msra.mxu0 0.0
  %5093 = vmatpush.msra.mxu0 0.0
  %5094 = vmatpush.msra.mxu0 0.0
  %v5095 = vand.u32 %v5068, 4294901760
  %5096 = vmatpush.msra.mxu0 %v5095
  %v5097 = vand.u32 %v5067, 4294901760
  %5098 = vmatpush.msra.mxu0 %v5097
  %v5099 = vand.u32 %v5066, 4294901760
  %5100 = vmatpush.msra.mxu0 %v5099
  %v5101 = vand.u32 %v5065, 4294901760
  %5102 = vmatpush.msra.mxu0 %v5101
  %v5103 = vand.u32 %v5075, 4294901760
  %v5104 = vsub.f32 %v5075, %v5103
  %v5105 = vand.u32 %v5104, 4294901760
  %v5106 = vsub.f32 %v5104, %v5105
  %v5107 = vand.u32 %v5106, 4294901760
  %5108 = vmatmul.f32.gmra.mxu0 %v5107
  %v5109 = vpop.f32.mrf.mxu0
  %v5110 = vadd.f32 %v5072, %v5109
  %v5111 = vand.u32 %v5078, 4294901760
  %v5112 = vsub.f32 %v5078, %v5111
  %v5113 = vand.u32 %v5112, 4294901760
  %v5114 = vsub.f32 %v5112, %v5113
  %v5115 = vand.u32 %v5114, 4294901760
  %5116 = vmatmul.f32.gmra.mxu0 %v5115
  %v5117 = vpop.f32.mrf.mxu0
  %v5118 = vadd.f32 %v5072, %v5117
  %v5119 = vand.u32 %v5081, 4294901760
  %v5120 = vsub.f32 %v5081, %v5119
  %v5121 = vand.u32 %v5120, 4294901760
  %v5122 = vsub.f32 %v5120, %v5121
  %v5123 = vand.u32 %v5122, 4294901760
  %5124 = vmatmul.f32.gmra.mxu0 %v5123
  %v5125 = vpop.f32.mrf.mxu0
  %v5126 = vadd.f32 %v5072, %v5125
  %5127 = vdwg.mxu0
  %5128 = vmatpush.msra.mxu0 0.0
  %5129 = vmatpush.msra.mxu0 0.0
  %5130 = vmatpush.msra.mxu0 0.0
  %5131 = vmatpush.msra.mxu0 0.0
  %5132 = vmatpush.msra.mxu0 0.0
  %5133 = vmatpush.msra.mxu0 0.0
  %5134 = vmatpush.msra.mxu0 0.0
  %5135 = vmatpush.msra.mxu0 0.0
  %5136 = vmatpush.msra.mxu0 0.0
  %5137 = vmatpush.msra.mxu0 0.0
  %5138 = vmatpush.msra.mxu0 0.0
  %5139 = vmatpush.msra.mxu0 0.0
  %v5140 = vand.u32 %v5068, 4294901760
  %v5141 = vsub.f32 %v5068, %v5140
  %v5142 = vand.u32 %v5141, 4294901760
  %v5143 = vsub.f32 %v5141, %v5142
  %v5144 = vand.u32 %v5143, 4294901760
  %5145 = vmatpush.msra.mxu0 %v5144
  %v5146 = vand.u32 %v5067, 4294901760
  %v5147 = vsub.f32 %v5067, %v5146
  %v5148 = vand.u32 %v5147, 4294901760
  %v5149 = vsub.f32 %v5147, %v5148
  %v5150 = vand.u32 %v5149, 4294901760
  %5151 = vmatpush.msra.mxu0 %v5150
  %v5152 = vand.u32 %v5066, 4294901760
  %v5153 = vsub.f32 %v5066, %v5152
  %v5154 = vand.u32 %v5153, 4294901760
  %v5155 = vsub.f32 %v5153, %v5154
  %v5156 = vand.u32 %v5155, 4294901760
  %5157 = vmatpush.msra.mxu0 %v5156
  %v5158 = vand.u32 %v5065, 4294901760
  %v5159 = vsub.f32 %v5065, %v5158
  %v5160 = vand.u32 %v5159, 4294901760
  %v5161 = vsub.f32 %v5159, %v5160
  %v5162 = vand.u32 %v5161, 4294901760
  %5163 = vmatpush.msra.mxu0 %v5162
  %v5164 = vand.u32 %v5075, 4294901760
  %5165 = vmatmul.f32.gmra.mxu0 %v5164
  %v5166 = vpop.f32.mrf.mxu0
  %v5167 = vadd.f32 %v5110, %v5166
  %v5168 = vand.u32 %v5078, 4294901760
  %5169 = vmatmul.f32.gmra.mxu0 %v5168
  %v5170 = vpop.f32.mrf.mxu0
  %v5171 = vadd.f32 %v5118, %v5170
  %v5172 = vand.u32 %v5081, 4294901760
  %5173 = vmatmul.f32.gmra.mxu0 %v5172
  %v5174 = vpop.f32.mrf.mxu0
  %v5175 = vadd.f32 %v5126, %v5174
  %5176 = vdwg.mxu0
  %5177 = vmatpush.msra.mxu0 0.0
  %5178 = vmatpush.msra.mxu0 0.0
  %5179 = vmatpush.msra.mxu0 0.0
  %5180 = vmatpush.msra.mxu0 0.0
  %5181 = vmatpush.msra.mxu0 0.0
  %5182 = vmatpush.msra.mxu0 0.0
  %5183 = vmatpush.msra.mxu0 0.0
  %5184 = vmatpush.msra.mxu0 0.0
  %5185 = vmatpush.msra.mxu0 0.0
  %5186 = vmatpush.msra.mxu0 0.0
  %5187 = vmatpush.msra.mxu0 0.0
  %5188 = vmatpush.msra.mxu0 0.0
  %v5189 = vand.u32 %v5068, 4294901760
  %v5190 = vsub.f32 %v5068, %v5189
  %5191 = vmatpush.msra.mxu0 %v5190
  %v5192 = vand.u32 %v5067, 4294901760
  %v5193 = vsub.f32 %v5067, %v5192
  %5194 = vmatpush.msra.mxu0 %v5193
  %v5195 = vand.u32 %v5066, 4294901760
  %v5196 = vsub.f32 %v5066, %v5195
  %5197 = vmatpush.msra.mxu0 %v5196
  %v5198 = vand.u32 %v5065, 4294901760
  %v5199 = vsub.f32 %v5065, %v5198
  %5200 = vmatpush.msra.mxu0 %v5199
  %v5201 = vand.u32 %v5075, 4294901760
  %v5202 = vsub.f32 %v5075, %v5201
  %5203 = vmatmul.f32.gmra.mxu0 %v5202
  %v5204 = vpop.f32.mrf.mxu0
  %v5205 = vadd.f32 %v5167, %v5204
  %v5206 = vand.u32 %v5078, 4294901760
  %v5207 = vsub.f32 %v5078, %v5206
  %5208 = vmatmul.f32.gmra.mxu0 %v5207
  %v5209 = vpop.f32.mrf.mxu0
  %v5210 = vadd.f32 %v5171, %v5209
  %v5211 = vand.u32 %v5081, 4294901760
  %v5212 = vsub.f32 %v5081, %v5211
  %5213 = vmatmul.f32.gmra.mxu0 %v5212
  %v5214 = vpop.f32.mrf.mxu0
  %v5215 = vadd.f32 %v5175, %v5214
  %5216 = vdwg.mxu0
  %5217 = vmatpush.msra.mxu0 0.0
  %5218 = vmatpush.msra.mxu0 0.0
  %5219 = vmatpush.msra.mxu0 0.0
  %5220 = vmatpush.msra.mxu0 0.0
  %5221 = vmatpush.msra.mxu0 0.0
  %5222 = vmatpush.msra.mxu0 0.0
  %5223 = vmatpush.msra.mxu0 0.0
  %5224 = vmatpush.msra.mxu0 0.0
  %5225 = vmatpush.msra.mxu0 0.0
  %5226 = vmatpush.msra.mxu0 0.0
  %5227 = vmatpush.msra.mxu0 0.0
  %5228 = vmatpush.msra.mxu0 0.0
  %v5229 = vand.u32 %v5068, 4294901760
  %5230 = vmatpush.msra.mxu0 %v5229
  %v5231 = vand.u32 %v5067, 4294901760
  %5232 = vmatpush.msra.mxu0 %v5231
  %v5233 = vand.u32 %v5066, 4294901760
  %5234 = vmatpush.msra.mxu0 %v5233
  %v5235 = vand.u32 %v5065, 4294901760
  %5236 = vmatpush.msra.mxu0 %v5235
  %v5237 = vand.u32 %v5075, 4294901760
  %v5238 = vsub.f32 %v5075, %v5237
  %v5239 = vand.u32 %v5238, 4294901760
  %5240 = vmatmul.f32.gmra.mxu0 %v5239
  %v5241 = vpop.f32.mrf.mxu0
  %v5242 = vadd.f32 %v5205, %v5241
  %v5243 = vand.u32 %v5078, 4294901760
  %v5244 = vsub.f32 %v5078, %v5243
  %v5245 = vand.u32 %v5244, 4294901760
  %5246 = vmatmul.f32.gmra.mxu0 %v5245
  %v5247 = vpop.f32.mrf.mxu0
  %v5248 = vadd.f32 %v5210, %v5247
  %v5249 = vand.u32 %v5081, 4294901760
  %v5250 = vsub.f32 %v5081, %v5249
  %v5251 = vand.u32 %v5250, 4294901760
  %5252 = vmatmul.f32.gmra.mxu0 %v5251
  %v5253 = vpop.f32.mrf.mxu0
  %v5254 = vadd.f32 %v5215, %v5253
  %5255 = vdwg.mxu0
  %5256 = vmatpush.msra.mxu0 0.0
  %5257 = vmatpush.msra.mxu0 0.0
  %5258 = vmatpush.msra.mxu0 0.0
  %5259 = vmatpush.msra.mxu0 0.0
  %5260 = vmatpush.msra.mxu0 0.0
  %5261 = vmatpush.msra.mxu0 0.0
  %5262 = vmatpush.msra.mxu0 0.0
  %5263 = vmatpush.msra.mxu0 0.0
  %5264 = vmatpush.msra.mxu0 0.0
  %5265 = vmatpush.msra.mxu0 0.0
  %5266 = vmatpush.msra.mxu0 0.0
  %5267 = vmatpush.msra.mxu0 0.0
  %v5268 = vand.u32 %v5068, 4294901760
  %v5269 = vsub.f32 %v5068, %v5268
  %v5270 = vand.u32 %v5269, 4294901760
  %5271 = vmatpush.msra.mxu0 %v5270
  %v5272 = vand.u32 %v5067, 4294901760
  %v5273 = vsub.f32 %v5067, %v5272
  %v5274 = vand.u32 %v5273, 4294901760
  %5275 = vmatpush.msra.mxu0 %v5274
  %v5276 = vand.u32 %v5066, 4294901760
  %v5277 = vsub.f32 %v5066, %v5276
  %v5278 = vand.u32 %v5277, 4294901760
  %5279 = vmatpush.msra.mxu0 %v5278
  %v5280 = vand.u32 %v5065, 4294901760
  %v5281 = vsub.f32 %v5065, %v5280
  %v5282 = vand.u32 %v5281, 4294901760
  %5283 = vmatpush.msra.mxu0 %v5282
  %v5284 = vand.u32 %v5075, 4294901760
  %5285 = vmatmul.f32.gmra.mxu0 %v5284
  %v5286 = vpop.f32.mrf.mxu0
  %v5287 = vadd.f32 %v5242, %v5286
  %v5288 = vand.u32 %v5078, 4294901760
  %5289 = vmatmul.f32.gmra.mxu0 %v5288
  %v5290 = vpop.f32.mrf.mxu0
  %v5291 = vadd.f32 %v5248, %v5290
  %v5292 = vand.u32 %v5081, 4294901760
  %5293 = vmatmul.f32.gmra.mxu0 %v5292
  %v5294 = vpop.f32.mrf.mxu0
  %v5295 = vadd.f32 %v5254, %v5294
  %5296 = vdwg.mxu0
  %5297 = vmatpush.msra.mxu0 0.0
  %5298 = vmatpush.msra.mxu0 0.0
  %5299 = vmatpush.msra.mxu0 0.0
  %5300 = vmatpush.msra.mxu0 0.0
  %5301 = vmatpush.msra.mxu0 0.0
  %5302 = vmatpush.msra.mxu0 0.0
  %5303 = vmatpush.msra.mxu0 0.0
  %5304 = vmatpush.msra.mxu0 0.0
  %5305 = vmatpush.msra.mxu0 0.0
  %5306 = vmatpush.msra.mxu0 0.0
  %5307 = vmatpush.msra.mxu0 0.0
  %5308 = vmatpush.msra.mxu0 0.0
  %v5309 = vand.u32 %v5068, 4294901760
  %5310 = vmatpush.msra.mxu0 %v5309
  %v5311 = vand.u32 %v5067, 4294901760
  %5312 = vmatpush.msra.mxu0 %v5311
  %v5313 = vand.u32 %v5066, 4294901760
  %5314 = vmatpush.msra.mxu0 %v5313
  %v5315 = vand.u32 %v5065, 4294901760
  %5316 = vmatpush.msra.mxu0 %v5315
  %v5317 = vand.u32 %v5075, 4294901760
  %5318 = vmatmul.f32.gmra.mxu0 %v5317
  %v5319 = vpop.f32.mrf.mxu0
  %v5320 = vadd.f32 %v5287, %v5319
  %v5321 = vand.u32 %v5078, 4294901760
  %5322 = vmatmul.f32.gmra.mxu0 %v5321
  %v5323 = vpop.f32.mrf.mxu0
  %v5324 = vadd.f32 %v5291, %v5323
  %v5325 = vand.u32 %v5081, 4294901760
  %5326 = vmatmul.f32.gmra.mxu0 %v5325
  %v5327 = vpop.f32.mrf.mxu0
  %v5328 = vadd.f32 %v5295, %v5327
  %5329 = vdwg.mxu0
  %s5330 = scalar_lea.vmem %s8, 32
  %v5331 = vld [vmem:[%s5330] sm:$0xff]
  %v5332 = vld [vmem:[%s5330 + $0x8] sm:$0xff]
  %v5333 = vld [vmem:[%s5330 + $0x10] sm:$0xff]
  %v5334 = vld [vmem:[%s5330 + $0x18] sm:$0xff]
  %5338 = vrot.lane.b32.xlu0 %v5320, 96
  %v5339 = vpop.permute.xlu0 %5338
  %5340 = vrot.lane.b32.xlu0 %v5324, 96
  %v5341 = vpop.permute.xlu0 %5340
  %5342 = vrot.lane.b32.xlu0 %v5328, 96
  %v5343 = vpop.permute.xlu0 %5342
  %v5344 = vsel %vm1208, %v5320, 0
  %v5346 = vsel %vm1208, %v5324, 0
  %v5348 = vsel %vm1208, %v5328, 0
  %v5350 = vsel %vm1208, %v5339, 0
  %v5352 = vsel %vm1208, %v5341, 0
  %v5354 = vsel %vm1208, %v5343, 0
  %5356 = vmatpush.xpose.msra.mxu0 0.0
  %5357 = vmatpush.xpose.msra.mxu0 0.0
  %5358 = vmatpush.xpose.msra.mxu0 0.0
  %5359 = vmatpush.xpose.msra.mxu0 0.0
  %5360 = vmatpush.xpose.msra.mxu0 0.0
  %5361 = vmatpush.xpose.msra.mxu0 0.0
  %5362 = vmatpush.xpose.msra.mxu0 0.0
  %5363 = vmatpush.xpose.msra.mxu0 0.0
  %5364 = vmatpush.xpose.msra.mxu0 0.0
  %5365 = vmatpush.xpose.msra.mxu0 0.0
  %5366 = vmatpush.xpose.msra.mxu0 0.0
  %5367 = vmatpush.xpose.msra.mxu0 0.0
  %5368 = vmatpush.xpose.msra.mxu0 0.0
  %v5369 = vand.u32 %v5354, 4294901760
  %5370 = vmatpush.xpose.msra.mxu0 %v5369
  %v5371 = vand.u32 %v5352, 4294901760
  %5372 = vmatpush.xpose.msra.mxu0 %v5371
  %v5373 = vand.u32 %v5350, 4294901760
  %5374 = vmatpush.xpose.msra.mxu0 %v5373
  %v5375 = vand.u32 %v5344, 4294901760
  %v5376 = vsub.f32 %v5344, %v5375
  %v5377 = vand.u32 %v5376, 4294901760
  %v5378 = vsub.f32 %v5376, %v5377
  %v5379 = vand.u32 %v5378, 4294901760
  %5380 = vmatmul.f32.gmra.mxu0 %v5379
  %v5381 = vpop.f32.mrf.mxu0
  %v5382 = vadd.f32 0.0, %v5381
  %v5383 = vand.u32 %v5346, 4294901760
  %v5384 = vsub.f32 %v5346, %v5383
  %v5385 = vand.u32 %v5384, 4294901760
  %v5386 = vsub.f32 %v5384, %v5385
  %v5387 = vand.u32 %v5386, 4294901760
  %5388 = vmatmul.f32.gmra.mxu0 %v5387
  %v5389 = vpop.f32.mrf.mxu0
  %v5390 = vadd.f32 0.0, %v5389
  %v5391 = vand.u32 %v5348, 4294901760
  %v5392 = vsub.f32 %v5348, %v5391
  %v5393 = vand.u32 %v5392, 4294901760
  %v5394 = vsub.f32 %v5392, %v5393
  %v5395 = vand.u32 %v5394, 4294901760
  %5396 = vmatmul.f32.gmra.mxu0 %v5395
  %v5397 = vpop.f32.mrf.mxu0
  %v5398 = vadd.f32 0.0, %v5397
  %5399 = vdwg.mxu0
  %5400 = vmatpush.xpose.msra.mxu0 0.0
  %5401 = vmatpush.xpose.msra.mxu0 0.0
  %5402 = vmatpush.xpose.msra.mxu0 0.0
  %5403 = vmatpush.xpose.msra.mxu0 0.0
  %5404 = vmatpush.xpose.msra.mxu0 0.0
  %5405 = vmatpush.xpose.msra.mxu0 0.0
  %5406 = vmatpush.xpose.msra.mxu0 0.0
  %5407 = vmatpush.xpose.msra.mxu0 0.0
  %5408 = vmatpush.xpose.msra.mxu0 0.0
  %5409 = vmatpush.xpose.msra.mxu0 0.0
  %5410 = vmatpush.xpose.msra.mxu0 0.0
  %5411 = vmatpush.xpose.msra.mxu0 0.0
  %5412 = vmatpush.xpose.msra.mxu0 0.0
  %v5413 = vand.u32 %v5354, 4294901760
  %v5414 = vsub.f32 %v5354, %v5413
  %v5415 = vand.u32 %v5414, 4294901760
  %v5416 = vsub.f32 %v5414, %v5415
  %v5417 = vand.u32 %v5416, 4294901760
  %5418 = vmatpush.xpose.msra.mxu0 %v5417
  %v5419 = vand.u32 %v5352, 4294901760
  %v5420 = vsub.f32 %v5352, %v5419
  %v5421 = vand.u32 %v5420, 4294901760
  %v5422 = vsub.f32 %v5420, %v5421
  %v5423 = vand.u32 %v5422, 4294901760
  %5424 = vmatpush.xpose.msra.mxu0 %v5423
  %v5425 = vand.u32 %v5350, 4294901760
  %v5426 = vsub.f32 %v5350, %v5425
  %v5427 = vand.u32 %v5426, 4294901760
  %v5428 = vsub.f32 %v5426, %v5427
  %v5429 = vand.u32 %v5428, 4294901760
  %5430 = vmatpush.xpose.msra.mxu0 %v5429
  %v5431 = vand.u32 %v5344, 4294901760
  %5432 = vmatmul.f32.gmra.mxu0 %v5431
  %v5433 = vpop.f32.mrf.mxu0
  %v5434 = vadd.f32 %v5382, %v5433
  %v5435 = vand.u32 %v5346, 4294901760
  %5436 = vmatmul.f32.gmra.mxu0 %v5435
  %v5437 = vpop.f32.mrf.mxu0
  %v5438 = vadd.f32 %v5390, %v5437
  %v5439 = vand.u32 %v5348, 4294901760
  %5440 = vmatmul.f32.gmra.mxu0 %v5439
  %v5441 = vpop.f32.mrf.mxu0
  %v5442 = vadd.f32 %v5398, %v5441
  %5443 = vdwg.mxu0
  %5444 = vmatpush.xpose.msra.mxu0 0.0
  %5445 = vmatpush.xpose.msra.mxu0 0.0
  %5446 = vmatpush.xpose.msra.mxu0 0.0
  %5447 = vmatpush.xpose.msra.mxu0 0.0
  %5448 = vmatpush.xpose.msra.mxu0 0.0
  %5449 = vmatpush.xpose.msra.mxu0 0.0
  %5450 = vmatpush.xpose.msra.mxu0 0.0
  %5451 = vmatpush.xpose.msra.mxu0 0.0
  %5452 = vmatpush.xpose.msra.mxu0 0.0
  %5453 = vmatpush.xpose.msra.mxu0 0.0
  %5454 = vmatpush.xpose.msra.mxu0 0.0
  %5455 = vmatpush.xpose.msra.mxu0 0.0
  %5456 = vmatpush.xpose.msra.mxu0 0.0
  %v5457 = vand.u32 %v5354, 4294901760
  %v5458 = vsub.f32 %v5354, %v5457
  %5459 = vmatpush.xpose.msra.mxu0 %v5458
  %v5460 = vand.u32 %v5352, 4294901760
  %v5461 = vsub.f32 %v5352, %v5460
  %5462 = vmatpush.xpose.msra.mxu0 %v5461
  %v5463 = vand.u32 %v5350, 4294901760
  %v5464 = vsub.f32 %v5350, %v5463
  %5465 = vmatpush.xpose.msra.mxu0 %v5464
  %v5466 = vand.u32 %v5344, 4294901760
  %v5467 = vsub.f32 %v5344, %v5466
  %5468 = vmatmul.f32.gmra.mxu0 %v5467
  %v5469 = vpop.f32.mrf.mxu0
  %v5470 = vadd.f32 %v5434, %v5469
  %v5471 = vand.u32 %v5346, 4294901760
  %v5472 = vsub.f32 %v5346, %v5471
  %5473 = vmatmul.f32.gmra.mxu0 %v5472
  %v5474 = vpop.f32.mrf.mxu0
  %v5475 = vadd.f32 %v5438, %v5474
  %v5476 = vand.u32 %v5348, 4294901760
  %v5477 = vsub.f32 %v5348, %v5476
  %5478 = vmatmul.f32.gmra.mxu0 %v5477
  %v5479 = vpop.f32.mrf.mxu0
  %v5480 = vadd.f32 %v5442, %v5479
  %5481 = vdwg.mxu0
  %5482 = vmatpush.xpose.msra.mxu0 0.0
  %5483 = vmatpush.xpose.msra.mxu0 0.0
  %5484 = vmatpush.xpose.msra.mxu0 0.0
  %5485 = vmatpush.xpose.msra.mxu0 0.0
  %5486 = vmatpush.xpose.msra.mxu0 0.0
  %5487 = vmatpush.xpose.msra.mxu0 0.0
  %5488 = vmatpush.xpose.msra.mxu0 0.0
  %5489 = vmatpush.xpose.msra.mxu0 0.0
  %5490 = vmatpush.xpose.msra.mxu0 0.0
  %5491 = vmatpush.xpose.msra.mxu0 0.0
  %5492 = vmatpush.xpose.msra.mxu0 0.0
  %5493 = vmatpush.xpose.msra.mxu0 0.0
  %5494 = vmatpush.xpose.msra.mxu0 0.0
  %v5495 = vand.u32 %v5354, 4294901760
  %5496 = vmatpush.xpose.msra.mxu0 %v5495
  %v5497 = vand.u32 %v5352, 4294901760
  %5498 = vmatpush.xpose.msra.mxu0 %v5497
  %v5499 = vand.u32 %v5350, 4294901760
  %5500 = vmatpush.xpose.msra.mxu0 %v5499
  %v5501 = vand.u32 %v5344, 4294901760
  %v5502 = vsub.f32 %v5344, %v5501
  %v5503 = vand.u32 %v5502, 4294901760
  %5504 = vmatmul.f32.gmra.mxu0 %v5503
  %v5505 = vpop.f32.mrf.mxu0
  %v5506 = vadd.f32 %v5470, %v5505
  %v5507 = vand.u32 %v5346, 4294901760
  %v5508 = vsub.f32 %v5346, %v5507
  %v5509 = vand.u32 %v5508, 4294901760
  %5510 = vmatmul.f32.gmra.mxu0 %v5509
  %v5511 = vpop.f32.mrf.mxu0
  %v5512 = vadd.f32 %v5475, %v5511
  %v5513 = vand.u32 %v5348, 4294901760
  %v5514 = vsub.f32 %v5348, %v5513
  %v5515 = vand.u32 %v5514, 4294901760
  %5516 = vmatmul.f32.gmra.mxu0 %v5515
  %v5517 = vpop.f32.mrf.mxu0
  %v5518 = vadd.f32 %v5480, %v5517
  %5519 = vdwg.mxu0
  %5520 = vmatpush.xpose.msra.mxu0 0.0
  %5521 = vmatpush.xpose.msra.mxu0 0.0
  %5522 = vmatpush.xpose.msra.mxu0 0.0
  %5523 = vmatpush.xpose.msra.mxu0 0.0
  %5524 = vmatpush.xpose.msra.mxu0 0.0
  %5525 = vmatpush.xpose.msra.mxu0 0.0
  %5526 = vmatpush.xpose.msra.mxu0 0.0
  %5527 = vmatpush.xpose.msra.mxu0 0.0
  %5528 = vmatpush.xpose.msra.mxu0 0.0
  %5529 = vmatpush.xpose.msra.mxu0 0.0
  %5530 = vmatpush.xpose.msra.mxu0 0.0
  %5531 = vmatpush.xpose.msra.mxu0 0.0
  %5532 = vmatpush.xpose.msra.mxu0 0.0
  %v5533 = vand.u32 %v5354, 4294901760
  %v5534 = vsub.f32 %v5354, %v5533
  %v5535 = vand.u32 %v5534, 4294901760
  %5536 = vmatpush.xpose.msra.mxu0 %v5535
  %v5537 = vand.u32 %v5352, 4294901760
  %v5538 = vsub.f32 %v5352, %v5537
  %v5539 = vand.u32 %v5538, 4294901760
  %5540 = vmatpush.xpose.msra.mxu0 %v5539
  %v5541 = vand.u32 %v5350, 4294901760
  %v5542 = vsub.f32 %v5350, %v5541
  %v5543 = vand.u32 %v5542, 4294901760
  %5544 = vmatpush.xpose.msra.mxu0 %v5543
  %v5545 = vand.u32 %v5344, 4294901760
  %5546 = vmatmul.f32.gmra.mxu0 %v5545
  %v5547 = vpop.f32.mrf.mxu0
  %v5548 = vadd.f32 %v5506, %v5547
  %v5549 = vand.u32 %v5346, 4294901760
  %5550 = vmatmul.f32.gmra.mxu0 %v5549
  %v5551 = vpop.f32.mrf.mxu0
  %v5552 = vadd.f32 %v5512, %v5551
  %v5553 = vand.u32 %v5348, 4294901760
  %5554 = vmatmul.f32.gmra.mxu0 %v5553
  %v5555 = vpop.f32.mrf.mxu0
  %v5556 = vadd.f32 %v5518, %v5555
  %5557 = vdwg.mxu0
  %5558 = vmatpush.xpose.msra.mxu0 0.0
  %5559 = vmatpush.xpose.msra.mxu0 0.0
  %5560 = vmatpush.xpose.msra.mxu0 0.0
  %5561 = vmatpush.xpose.msra.mxu0 0.0
  %5562 = vmatpush.xpose.msra.mxu0 0.0
  %5563 = vmatpush.xpose.msra.mxu0 0.0
  %5564 = vmatpush.xpose.msra.mxu0 0.0
  %5565 = vmatpush.xpose.msra.mxu0 0.0
  %5566 = vmatpush.xpose.msra.mxu0 0.0
  %5567 = vmatpush.xpose.msra.mxu0 0.0
  %5568 = vmatpush.xpose.msra.mxu0 0.0
  %5569 = vmatpush.xpose.msra.mxu0 0.0
  %5570 = vmatpush.xpose.msra.mxu0 0.0
  %v5571 = vand.u32 %v5354, 4294901760
  %5572 = vmatpush.xpose.msra.mxu0 %v5571
  %v5573 = vand.u32 %v5352, 4294901760
  %5574 = vmatpush.xpose.msra.mxu0 %v5573
  %v5575 = vand.u32 %v5350, 4294901760
  %5576 = vmatpush.xpose.msra.mxu0 %v5575
  %v5577 = vand.u32 %v5344, 4294901760
  %5578 = vmatmul.f32.gmra.mxu0 %v5577
  %v5579 = vpop.f32.mrf.mxu0
  %v5580 = vadd.f32 %v5548, %v5579
  %v5581 = vand.u32 %v5346, 4294901760
  %5582 = vmatmul.f32.gmra.mxu0 %v5581
  %v5583 = vpop.f32.mrf.mxu0
  %v5584 = vadd.f32 %v5552, %v5583
  %v5585 = vand.u32 %v5348, 4294901760
  %5586 = vmatmul.f32.gmra.mxu0 %v5585
  %v5587 = vpop.f32.mrf.mxu0
  %v5588 = vadd.f32 %v5556, %v5587
  %5589 = vdwg.mxu0
  %v5590 = vmul.f32 %v5580, 0.35355338
  %v5591 = vmul.f32 %v5584, 0.35355338
  %v5592 = vmul.f32 %v5588, 0.35355338
  %v5593 = vadd.f32 %v5590, %v76
  %v5594 = vadd.f32 %v5591, %v77
  %v5595 = vadd.f32 %v5592, %v78
  %v5596 = vsel %vm1461, %v5593, -inf
  %5597 = vmax.xlane.f32.xlu0 %v5596
  %v5598 = vpop.xlane.xlu0 %5597
  %v5599 = vsel %vm1461, %v5594, -inf
  %5600 = vmax.xlane.f32.xlu0 %v5599
  %v5601 = vpop.xlane.xlu0 %5600
  %v5602 = vsel %vm1468, %v5595, -inf
  %5603 = vmax.xlane.f32.xlu0 %v5602
  %v5604 = vpop.xlane.xlu0 %5603
  %v5605 = vsub.f32 %v5593, %v5598
  %v5606 = vsub.f32 %v5594, %v5601
  %v5607 = vsub.f32 %v5595, %v5604
  %v5608 = vmul.f32 %v5605, 1.442695
  %v5609 = vpow.pop %v5608
  %v5610 = vmul.f32 %v5606, 1.442695
  %v5611 = vpow.pop %v5610
  %v5612 = vmul.f32 %v5607, 1.442695
  %v5613 = vpow.pop %v5612
  %v5614 = vsel %vm1461, %v5609, 0.0
  %5615 = vadd.xlane.f32.xlu0 %v5614
  %v5616 = vpop.xlane.xlu0 %5615
  %v5617 = vsel %vm1461, %v5611, 0.0
  %5618 = vadd.xlane.f32.xlu0 %v5617
  %v5619 = vpop.xlane.xlu0 %5618
  %v5620 = vsel %vm1468, %v5613, 0.0
  %5621 = vadd.xlane.f32.xlu0 %v5620
  %v5622 = vpop.xlane.xlu0 %5621
  %v5623 = vrcp.pop %v5616
  %v5624 = vrcp.pop %v5619
  %v5625 = vrcp.pop %v5622
  %v5626 = vmul.f32 %v5609, %v5623
  %v5627 = vmul.f32 %v5611, %v5624
  %v5628 = vmul.f32 %v5613, %v5625
  %5629 = vrot.lane.b32.xlu0 %v5320, 64
  %v5630 = vpop.permute.xlu0 %5629
  %5631 = vrot.lane.b32.xlu0 %v5324, 64
  %v5632 = vpop.permute.xlu0 %5631
  %5633 = vrot.lane.b32.xlu0 %v5328, 64
  %v5634 = vpop.permute.xlu0 %5633
  %v5638 = vsel %vm1461, %v5626, 0
  %v5641 = vsel %vm1461, %v5627, 0
  %v5644 = vsel %vm1461, %v5628, 0
  %v5646 = vsel %vm1513, %v5634, 0
  %5648 = vmatpush.msra.mxu0 0.0
  %5649 = vmatpush.msra.mxu0 0.0
  %5650 = vmatpush.msra.mxu0 0.0
  %5651 = vmatpush.msra.mxu0 0.0
  %5652 = vmatpush.msra.mxu0 0.0
  %5653 = vmatpush.msra.mxu0 0.0
  %5654 = vmatpush.msra.mxu0 0.0
  %5655 = vmatpush.msra.mxu0 0.0
  %5656 = vmatpush.msra.mxu0 0.0
  %5657 = vmatpush.msra.mxu0 0.0
  %5658 = vmatpush.msra.mxu0 0.0
  %5659 = vmatpush.msra.mxu0 0.0
  %5660 = vmatpush.msra.mxu0 0.0
  %v5661 = vand.u32 %v5646, 4294901760
  %5662 = vmatpush.msra.mxu0 %v5661
  %v5663 = vand.u32 %v5632, 4294901760
  %5664 = vmatpush.msra.mxu0 %v5663
  %v5665 = vand.u32 %v5630, 4294901760
  %5666 = vmatpush.msra.mxu0 %v5665
  %v5667 = vand.u32 %v5638, 4294901760
  %v5668 = vsub.f32 %v5638, %v5667
  %v5669 = vand.u32 %v5668, 4294901760
  %v5670 = vsub.f32 %v5668, %v5669
  %v5671 = vand.u32 %v5670, 4294901760
  %5672 = vmatmul.f32.gmra.mxu0 %v5671
  %v5673 = vpop.f32.mrf.mxu0
  %v5674 = vadd.f32 0.0, %v5673
  %v5675 = vand.u32 %v5641, 4294901760
  %v5676 = vsub.f32 %v5641, %v5675
  %v5677 = vand.u32 %v5676, 4294901760
  %v5678 = vsub.f32 %v5676, %v5677
  %v5679 = vand.u32 %v5678, 4294901760
  %5680 = vmatmul.f32.gmra.mxu0 %v5679
  %v5681 = vpop.f32.mrf.mxu0
  %v5682 = vadd.f32 0.0, %v5681
  %v5683 = vand.u32 %v5644, 4294901760
  %v5684 = vsub.f32 %v5644, %v5683
  %v5685 = vand.u32 %v5684, 4294901760
  %v5686 = vsub.f32 %v5684, %v5685
  %v5687 = vand.u32 %v5686, 4294901760
  %5688 = vmatmul.f32.gmra.mxu0 %v5687
  %v5689 = vpop.f32.mrf.mxu0
  %v5690 = vadd.f32 0.0, %v5689
  %5691 = vdwg.mxu0
  %5692 = vmatpush.msra.mxu0 0.0
  %5693 = vmatpush.msra.mxu0 0.0
  %5694 = vmatpush.msra.mxu0 0.0
  %5695 = vmatpush.msra.mxu0 0.0
  %5696 = vmatpush.msra.mxu0 0.0
  %5697 = vmatpush.msra.mxu0 0.0
  %5698 = vmatpush.msra.mxu0 0.0
  %5699 = vmatpush.msra.mxu0 0.0
  %5700 = vmatpush.msra.mxu0 0.0
  %5701 = vmatpush.msra.mxu0 0.0
  %5702 = vmatpush.msra.mxu0 0.0
  %5703 = vmatpush.msra.mxu0 0.0
  %5704 = vmatpush.msra.mxu0 0.0
  %v5705 = vand.u32 %v5646, 4294901760
  %v5706 = vsub.f32 %v5646, %v5705
  %v5707 = vand.u32 %v5706, 4294901760
  %v5708 = vsub.f32 %v5706, %v5707
  %v5709 = vand.u32 %v5708, 4294901760
  %5710 = vmatpush.msra.mxu0 %v5709
  %v5711 = vand.u32 %v5632, 4294901760
  %v5712 = vsub.f32 %v5632, %v5711
  %v5713 = vand.u32 %v5712, 4294901760
  %v5714 = vsub.f32 %v5712, %v5713
  %v5715 = vand.u32 %v5714, 4294901760
  %5716 = vmatpush.msra.mxu0 %v5715
  %v5717 = vand.u32 %v5630, 4294901760
  %v5718 = vsub.f32 %v5630, %v5717
  %v5719 = vand.u32 %v5718, 4294901760
  %v5720 = vsub.f32 %v5718, %v5719
  %v5721 = vand.u32 %v5720, 4294901760
  %5722 = vmatpush.msra.mxu0 %v5721
  %v5723 = vand.u32 %v5638, 4294901760
  %5724 = vmatmul.f32.gmra.mxu0 %v5723
  %v5725 = vpop.f32.mrf.mxu0
  %v5726 = vadd.f32 %v5674, %v5725
  %v5727 = vand.u32 %v5641, 4294901760
  %5728 = vmatmul.f32.gmra.mxu0 %v5727
  %v5729 = vpop.f32.mrf.mxu0
  %v5730 = vadd.f32 %v5682, %v5729
  %v5731 = vand.u32 %v5644, 4294901760
  %5732 = vmatmul.f32.gmra.mxu0 %v5731
  %v5733 = vpop.f32.mrf.mxu0
  %v5734 = vadd.f32 %v5690, %v5733
  %5735 = vdwg.mxu0
  %5736 = vmatpush.msra.mxu0 0.0
  %5737 = vmatpush.msra.mxu0 0.0
  %5738 = vmatpush.msra.mxu0 0.0
  %5739 = vmatpush.msra.mxu0 0.0
  %5740 = vmatpush.msra.mxu0 0.0
  %5741 = vmatpush.msra.mxu0 0.0
  %5742 = vmatpush.msra.mxu0 0.0
  %5743 = vmatpush.msra.mxu0 0.0
  %5744 = vmatpush.msra.mxu0 0.0
  %5745 = vmatpush.msra.mxu0 0.0
  %5746 = vmatpush.msra.mxu0 0.0
  %5747 = vmatpush.msra.mxu0 0.0
  %5748 = vmatpush.msra.mxu0 0.0
  %v5749 = vand.u32 %v5646, 4294901760
  %v5750 = vsub.f32 %v5646, %v5749
  %5751 = vmatpush.msra.mxu0 %v5750
  %v5752 = vand.u32 %v5632, 4294901760
  %v5753 = vsub.f32 %v5632, %v5752
  %5754 = vmatpush.msra.mxu0 %v5753
  %v5755 = vand.u32 %v5630, 4294901760
  %v5756 = vsub.f32 %v5630, %v5755
  %5757 = vmatpush.msra.mxu0 %v5756
  %v5758 = vand.u32 %v5638, 4294901760
  %v5759 = vsub.f32 %v5638, %v5758
  %5760 = vmatmul.f32.gmra.mxu0 %v5759
  %v5761 = vpop.f32.mrf.mxu0
  %v5762 = vadd.f32 %v5726, %v5761
  %v5763 = vand.u32 %v5641, 4294901760
  %v5764 = vsub.f32 %v5641, %v5763
  %5765 = vmatmul.f32.gmra.mxu0 %v5764
  %v5766 = vpop.f32.mrf.mxu0
  %v5767 = vadd.f32 %v5730, %v5766
  %v5768 = vand.u32 %v5644, 4294901760
  %v5769 = vsub.f32 %v5644, %v5768
  %5770 = vmatmul.f32.gmra.mxu0 %v5769
  %v5771 = vpop.f32.mrf.mxu0
  %v5772 = vadd.f32 %v5734, %v5771
  %5773 = vdwg.mxu0
  %5774 = vmatpush.msra.mxu0 0.0
  %5775 = vmatpush.msra.mxu0 0.0
  %5776 = vmatpush.msra.mxu0 0.0
  %5777 = vmatpush.msra.mxu0 0.0
  %5778 = vmatpush.msra.mxu0 0.0
  %5779 = vmatpush.msra.mxu0 0.0
  %5780 = vmatpush.msra.mxu0 0.0
  %5781 = vmatpush.msra.mxu0 0.0
  %5782 = vmatpush.msra.mxu0 0.0
  %5783 = vmatpush.msra.mxu0 0.0
  %5784 = vmatpush.msra.mxu0 0.0
  %5785 = vmatpush.msra.mxu0 0.0
  %5786 = vmatpush.msra.mxu0 0.0
  %v5787 = vand.u32 %v5646, 4294901760
  %5788 = vmatpush.msra.mxu0 %v5787
  %v5789 = vand.u32 %v5632, 4294901760
  %5790 = vmatpush.msra.mxu0 %v5789
  %v5791 = vand.u32 %v5630, 4294901760
  %5792 = vmatpush.msra.mxu0 %v5791
  %v5793 = vand.u32 %v5638, 4294901760
  %v5794 = vsub.f32 %v5638, %v5793
  %v5795 = vand.u32 %v5794, 4294901760
  %5796 = vmatmul.f32.gmra.mxu0 %v5795
  %v5797 = vpop.f32.mrf.mxu0
  %v5798 = vadd.f32 %v5762, %v5797
  %v5799 = vand.u32 %v5641, 4294901760
  %v5800 = vsub.f32 %v5641, %v5799
  %v5801 = vand.u32 %v5800, 4294901760
  %5802 = vmatmul.f32.gmra.mxu0 %v5801
  %v5803 = vpop.f32.mrf.mxu0
  %v5804 = vadd.f32 %v5767, %v5803
  %v5805 = vand.u32 %v5644, 4294901760
  %v5806 = vsub.f32 %v5644, %v5805
  %v5807 = vand.u32 %v5806, 4294901760
  %5808 = vmatmul.f32.gmra.mxu0 %v5807
  %v5809 = vpop.f32.mrf.mxu0
  %v5810 = vadd.f32 %v5772, %v5809
  %5811 = vdwg.mxu0
  %5812 = vmatpush.msra.mxu0 0.0
  %5813 = vmatpush.msra.mxu0 0.0
  %5814 = vmatpush.msra.mxu0 0.0
  %5815 = vmatpush.msra.mxu0 0.0
  %5816 = vmatpush.msra.mxu0 0.0
  %5817 = vmatpush.msra.mxu0 0.0
  %5818 = vmatpush.msra.mxu0 0.0
  %5819 = vmatpush.msra.mxu0 0.0
  %5820 = vmatpush.msra.mxu0 0.0
  %5821 = vmatpush.msra.mxu0 0.0
  %5822 = vmatpush.msra.mxu0 0.0
  %5823 = vmatpush.msra.mxu0 0.0
  %5824 = vmatpush.msra.mxu0 0.0
  %v5825 = vand.u32 %v5646, 4294901760
  %v5826 = vsub.f32 %v5646, %v5825
  %v5827 = vand.u32 %v5826, 4294901760
  %5828 = vmatpush.msra.mxu0 %v5827
  %v5829 = vand.u32 %v5632, 4294901760
  %v5830 = vsub.f32 %v5632, %v5829
  %v5831 = vand.u32 %v5830, 4294901760
  %5832 = vmatpush.msra.mxu0 %v5831
  %v5833 = vand.u32 %v5630, 4294901760
  %v5834 = vsub.f32 %v5630, %v5833
  %v5835 = vand.u32 %v5834, 4294901760
  %5836 = vmatpush.msra.mxu0 %v5835
  %v5837 = vand.u32 %v5638, 4294901760
  %5838 = vmatmul.f32.gmra.mxu0 %v5837
  %v5839 = vpop.f32.mrf.mxu0
  %v5840 = vadd.f32 %v5798, %v5839
  %v5841 = vand.u32 %v5641, 4294901760
  %5842 = vmatmul.f32.gmra.mxu0 %v5841
  %v5843 = vpop.f32.mrf.mxu0
  %v5844 = vadd.f32 %v5804, %v5843
  %v5845 = vand.u32 %v5644, 4294901760
  %5846 = vmatmul.f32.gmra.mxu0 %v5845
  %v5847 = vpop.f32.mrf.mxu0
  %v5848 = vadd.f32 %v5810, %v5847
  %5849 = vdwg.mxu0
  %5850 = vmatpush.msra.mxu0 0.0
  %5851 = vmatpush.msra.mxu0 0.0
  %5852 = vmatpush.msra.mxu0 0.0
  %5853 = vmatpush.msra.mxu0 0.0
  %5854 = vmatpush.msra.mxu0 0.0
  %5855 = vmatpush.msra.mxu0 0.0
  %5856 = vmatpush.msra.mxu0 0.0
  %5857 = vmatpush.msra.mxu0 0.0
  %5858 = vmatpush.msra.mxu0 0.0
  %5859 = vmatpush.msra.mxu0 0.0
  %5860 = vmatpush.msra.mxu0 0.0
  %5861 = vmatpush.msra.mxu0 0.0
  %5862 = vmatpush.msra.mxu0 0.0
  %v5863 = vand.u32 %v5646, 4294901760
  %5864 = vmatpush.msra.mxu0 %v5863
  %v5865 = vand.u32 %v5632, 4294901760
  %5866 = vmatpush.msra.mxu0 %v5865
  %v5867 = vand.u32 %v5630, 4294901760
  %5868 = vmatpush.msra.mxu0 %v5867
  %v5869 = vand.u32 %v5638, 4294901760
  %5870 = vmatmul.f32.gmra.mxu0 %v5869
  %v5871 = vpop.f32.mrf.mxu0
  %v5872 = vadd.f32 %v5840, %v5871
  %v5873 = vand.u32 %v5641, 4294901760
  %5874 = vmatmul.f32.gmra.mxu0 %v5873
  %v5875 = vpop.f32.mrf.mxu0
  %v5876 = vadd.f32 %v5844, %v5875
  %v5877 = vand.u32 %v5644, 4294901760
  %5878 = vmatmul.f32.gmra.mxu0 %v5877
  %v5879 = vpop.f32.mrf.mxu0
  %v5880 = vadd.f32 %v5848, %v5879
  %5881 = vdwg.mxu0
  %5882 = vrot.lane.b32.xlu0 %v5320, 120
  %v5883 = vpop.permute.xlu0 %5882
  %5884 = vrot.lane.b32.xlu0 %v5324, 120
  %v5885 = vpop.permute.xlu0 %5884
  %5886 = vrot.lane.b32.xlu0 %v5328, 120
  %v5887 = vpop.permute.xlu0 %5886
  %5888 = vrot.lane.b32.xlu0 %v5320, 88
  %v5889 = vpop.permute.xlu0 %5888
  %5890 = vrot.lane.b32.xlu0 %v5324, 88
  %v5891 = vpop.permute.xlu0 %5890
  %5892 = vrot.lane.b32.xlu0 %v5328, 88
  %v5893 = vpop.permute.xlu0 %5892
  %v5894 = vsel %vm1208, %v5883, 0
  %v5896 = vsel %vm1208, %v5885, 0
  %v5898 = vsel %vm1208, %v5887, 0
  %v5900 = vsel %vm1208, %v5889, 0
  %v5902 = vsel %vm1208, %v5891, 0
  %v5904 = vsel %vm1208, %v5893, 0
  %5906 = vmatpush.xpose.msra.mxu0 0.0
  %5907 = vmatpush.xpose.msra.mxu0 0.0
  %5908 = vmatpush.xpose.msra.mxu0 0.0
  %5909 = vmatpush.xpose.msra.mxu0 0.0
  %5910 = vmatpush.xpose.msra.mxu0 0.0
  %5911 = vmatpush.xpose.msra.mxu0 0.0
  %5912 = vmatpush.xpose.msra.mxu0 0.0
  %5913 = vmatpush.xpose.msra.mxu0 0.0
  %5914 = vmatpush.xpose.msra.mxu0 0.0
  %5915 = vmatpush.xpose.msra.mxu0 0.0
  %5916 = vmatpush.xpose.msra.mxu0 0.0
  %5917 = vmatpush.xpose.msra.mxu0 0.0
  %5918 = vmatpush.xpose.msra.mxu0 0.0
  %v5919 = vand.u32 %v5904, 4294901760
  %5920 = vmatpush.xpose.msra.mxu0 %v5919
  %v5921 = vand.u32 %v5902, 4294901760
  %5922 = vmatpush.xpose.msra.mxu0 %v5921
  %v5923 = vand.u32 %v5900, 4294901760
  %5924 = vmatpush.xpose.msra.mxu0 %v5923
  %v5925 = vand.u32 %v5894, 4294901760
  %v5926 = vsub.f32 %v5894, %v5925
  %v5927 = vand.u32 %v5926, 4294901760
  %v5928 = vsub.f32 %v5926, %v5927
  %v5929 = vand.u32 %v5928, 4294901760
  %5930 = vmatmul.f32.gmra.mxu0 %v5929
  %v5931 = vpop.f32.mrf.mxu0
  %v5932 = vadd.f32 0.0, %v5931
  %v5933 = vand.u32 %v5896, 4294901760
  %v5934 = vsub.f32 %v5896, %v5933
  %v5935 = vand.u32 %v5934, 4294901760
  %v5936 = vsub.f32 %v5934, %v5935
  %v5937 = vand.u32 %v5936, 4294901760
  %5938 = vmatmul.f32.gmra.mxu0 %v5937
  %v5939 = vpop.f32.mrf.mxu0
  %v5940 = vadd.f32 0.0, %v5939
  %v5941 = vand.u32 %v5898, 4294901760
  %v5942 = vsub.f32 %v5898, %v5941
  %v5943 = vand.u32 %v5942, 4294901760
  %v5944 = vsub.f32 %v5942, %v5943
  %v5945 = vand.u32 %v5944, 4294901760
  %5946 = vmatmul.f32.gmra.mxu0 %v5945
  %v5947 = vpop.f32.mrf.mxu0
  %v5948 = vadd.f32 0.0, %v5947
  %5949 = vdwg.mxu0
  %5950 = vmatpush.xpose.msra.mxu0 0.0
  %5951 = vmatpush.xpose.msra.mxu0 0.0
  %5952 = vmatpush.xpose.msra.mxu0 0.0
  %5953 = vmatpush.xpose.msra.mxu0 0.0
  %5954 = vmatpush.xpose.msra.mxu0 0.0
  %5955 = vmatpush.xpose.msra.mxu0 0.0
  %5956 = vmatpush.xpose.msra.mxu0 0.0
  %5957 = vmatpush.xpose.msra.mxu0 0.0
  %5958 = vmatpush.xpose.msra.mxu0 0.0
  %5959 = vmatpush.xpose.msra.mxu0 0.0
  %5960 = vmatpush.xpose.msra.mxu0 0.0
  %5961 = vmatpush.xpose.msra.mxu0 0.0
  %5962 = vmatpush.xpose.msra.mxu0 0.0
  %v5963 = vand.u32 %v5904, 4294901760
  %v5964 = vsub.f32 %v5904, %v5963
  %v5965 = vand.u32 %v5964, 4294901760
  %v5966 = vsub.f32 %v5964, %v5965
  %v5967 = vand.u32 %v5966, 4294901760
  %5968 = vmatpush.xpose.msra.mxu0 %v5967
  %v5969 = vand.u32 %v5902, 4294901760
  %v5970 = vsub.f32 %v5902, %v5969
  %v5971 = vand.u32 %v5970, 4294901760
  %v5972 = vsub.f32 %v5970, %v5971
  %v5973 = vand.u32 %v5972, 4294901760
  %5974 = vmatpush.xpose.msra.mxu0 %v5973
  %v5975 = vand.u32 %v5900, 4294901760
  %v5976 = vsub.f32 %v5900, %v5975
  %v5977 = vand.u32 %v5976, 4294901760
  %v5978 = vsub.f32 %v5976, %v5977
  %v5979 = vand.u32 %v5978, 4294901760
  %5980 = vmatpush.xpose.msra.mxu0 %v5979
  %v5981 = vand.u32 %v5894, 4294901760
  %5982 = vmatmul.f32.gmra.mxu0 %v5981
  %v5983 = vpop.f32.mrf.mxu0
  %v5984 = vadd.f32 %v5932, %v5983
  %v5985 = vand.u32 %v5896, 4294901760
  %5986 = vmatmul.f32.gmra.mxu0 %v5985
  %v5987 = vpop.f32.mrf.mxu0
  %v5988 = vadd.f32 %v5940, %v5987
  %v5989 = vand.u32 %v5898, 4294901760
  %5990 = vmatmul.f32.gmra.mxu0 %v5989
  %v5991 = vpop.f32.mrf.mxu0
  %v5992 = vadd.f32 %v5948, %v5991
  %5993 = vdwg.mxu0
  %5994 = vmatpush.xpose.msra.mxu0 0.0
  %5995 = vmatpush.xpose.msra.mxu0 0.0
  %5996 = vmatpush.xpose.msra.mxu0 0.0
  %5997 = vmatpush.xpose.msra.mxu0 0.0
  %5998 = vmatpush.xpose.msra.mxu0 0.0
  %5999 = vmatpush.xpose.msra.mxu0 0.0
  %6000 = vmatpush.xpose.msra.mxu0 0.0
  %6001 = vmatpush.xpose.msra.mxu0 0.0
  %6002 = vmatpush.xpose.msra.mxu0 0.0
  %6003 = vmatpush.xpose.msra.mxu0 0.0
  %6004 = vmatpush.xpose.msra.mxu0 0.0
  %6005 = vmatpush.xpose.msra.mxu0 0.0
  %6006 = vmatpush.xpose.msra.mxu0 0.0
  %v6007 = vand.u32 %v5904, 4294901760
  %v6008 = vsub.f32 %v5904, %v6007
  %6009 = vmatpush.xpose.msra.mxu0 %v6008
  %v6010 = vand.u32 %v5902, 4294901760
  %v6011 = vsub.f32 %v5902, %v6010
  %6012 = vmatpush.xpose.msra.mxu0 %v6011
  %v6013 = vand.u32 %v5900, 4294901760
  %v6014 = vsub.f32 %v5900, %v6013
  %6015 = vmatpush.xpose.msra.mxu0 %v6014
  %v6016 = vand.u32 %v5894, 4294901760
  %v6017 = vsub.f32 %v5894, %v6016
  %6018 = vmatmul.f32.gmra.mxu0 %v6017
  %v6019 = vpop.f32.mrf.mxu0
  %v6020 = vadd.f32 %v5984, %v6019
  %v6021 = vand.u32 %v5896, 4294901760
  %v6022 = vsub.f32 %v5896, %v6021
  %6023 = vmatmul.f32.gmra.mxu0 %v6022
  %v6024 = vpop.f32.mrf.mxu0
  %v6025 = vadd.f32 %v5988, %v6024
  %v6026 = vand.u32 %v5898, 4294901760
  %v6027 = vsub.f32 %v5898, %v6026
  %6028 = vmatmul.f32.gmra.mxu0 %v6027
  %v6029 = vpop.f32.mrf.mxu0
  %v6030 = vadd.f32 %v5992, %v6029
  %6031 = vdwg.mxu0
  %6032 = vmatpush.xpose.msra.mxu0 0.0
  %6033 = vmatpush.xpose.msra.mxu0 0.0
  %6034 = vmatpush.xpose.msra.mxu0 0.0
  %6035 = vmatpush.xpose.msra.mxu0 0.0
  %6036 = vmatpush.xpose.msra.mxu0 0.0
  %6037 = vmatpush.xpose.msra.mxu0 0.0
  %6038 = vmatpush.xpose.msra.mxu0 0.0
  %6039 = vmatpush.xpose.msra.mxu0 0.0
  %6040 = vmatpush.xpose.msra.mxu0 0.0
  %6041 = vmatpush.xpose.msra.mxu0 0.0
  %6042 = vmatpush.xpose.msra.mxu0 0.0
  %6043 = vmatpush.xpose.msra.mxu0 0.0
  %6044 = vmatpush.xpose.msra.mxu0 0.0
  %v6045 = vand.u32 %v5904, 4294901760
  %6046 = vmatpush.xpose.msra.mxu0 %v6045
  %v6047 = vand.u32 %v5902, 4294901760
  %6048 = vmatpush.xpose.msra.mxu0 %v6047
  %v6049 = vand.u32 %v5900, 4294901760
  %6050 = vmatpush.xpose.msra.mxu0 %v6049
  %v6051 = vand.u32 %v5894, 4294901760
  %v6052 = vsub.f32 %v5894, %v6051
  %v6053 = vand.u32 %v6052, 4294901760
  %6054 = vmatmul.f32.gmra.mxu0 %v6053
  %v6055 = vpop.f32.mrf.mxu0
  %v6056 = vadd.f32 %v6020, %v6055
  %v6057 = vand.u32 %v5896, 4294901760
  %v6058 = vsub.f32 %v5896, %v6057
  %v6059 = vand.u32 %v6058, 4294901760
  %6060 = vmatmul.f32.gmra.mxu0 %v6059
  %v6061 = vpop.f32.mrf.mxu0
  %v6062 = vadd.f32 %v6025, %v6061
  %v6063 = vand.u32 %v5898, 4294901760
  %v6064 = vsub.f32 %v5898, %v6063
  %v6065 = vand.u32 %v6064, 4294901760
  %6066 = vmatmul.f32.gmra.mxu0 %v6065
  %v6067 = vpop.f32.mrf.mxu0
  %v6068 = vadd.f32 %v6030, %v6067
  %6069 = vdwg.mxu0
  %6070 = vmatpush.xpose.msra.mxu0 0.0
  %6071 = vmatpush.xpose.msra.mxu0 0.0
  %6072 = vmatpush.xpose.msra.mxu0 0.0
  %6073 = vmatpush.xpose.msra.mxu0 0.0
  %6074 = vmatpush.xpose.msra.mxu0 0.0
  %6075 = vmatpush.xpose.msra.mxu0 0.0
  %6076 = vmatpush.xpose.msra.mxu0 0.0
  %6077 = vmatpush.xpose.msra.mxu0 0.0
  %6078 = vmatpush.xpose.msra.mxu0 0.0
  %6079 = vmatpush.xpose.msra.mxu0 0.0
  %6080 = vmatpush.xpose.msra.mxu0 0.0
  %6081 = vmatpush.xpose.msra.mxu0 0.0
  %6082 = vmatpush.xpose.msra.mxu0 0.0
  %v6083 = vand.u32 %v5904, 4294901760
  %v6084 = vsub.f32 %v5904, %v6083
  %v6085 = vand.u32 %v6084, 4294901760
  %6086 = vmatpush.xpose.msra.mxu0 %v6085
  %v6087 = vand.u32 %v5902, 4294901760
  %v6088 = vsub.f32 %v5902, %v6087
  %v6089 = vand.u32 %v6088, 4294901760
  %6090 = vmatpush.xpose.msra.mxu0 %v6089
  %v6091 = vand.u32 %v5900, 4294901760
  %v6092 = vsub.f32 %v5900, %v6091
  %v6093 = vand.u32 %v6092, 4294901760
  %6094 = vmatpush.xpose.msra.mxu0 %v6093
  %v6095 = vand.u32 %v5894, 4294901760
  %6096 = vmatmul.f32.gmra.mxu0 %v6095
  %v6097 = vpop.f32.mrf.mxu0
  %v6098 = vadd.f32 %v6056, %v6097
  %v6099 = vand.u32 %v5896, 4294901760
  %6100 = vmatmul.f32.gmra.mxu0 %v6099
  %v6101 = vpop.f32.mrf.mxu0
  %v6102 = vadd.f32 %v6062, %v6101
  %v6103 = vand.u32 %v5898, 4294901760
  %6104 = vmatmul.f32.gmra.mxu0 %v6103
  %v6105 = vpop.f32.mrf.mxu0
  %v6106 = vadd.f32 %v6068, %v6105
  %6107 = vdwg.mxu0
  %6108 = vmatpush.xpose.msra.mxu0 0.0
  %6109 = vmatpush.xpose.msra.mxu0 0.0
  %6110 = vmatpush.xpose.msra.mxu0 0.0
  %6111 = vmatpush.xpose.msra.mxu0 0.0
  %6112 = vmatpush.xpose.msra.mxu0 0.0
  %6113 = vmatpush.xpose.msra.mxu0 0.0
  %6114 = vmatpush.xpose.msra.mxu0 0.0
  %6115 = vmatpush.xpose.msra.mxu0 0.0
  %6116 = vmatpush.xpose.msra.mxu0 0.0
  %6117 = vmatpush.xpose.msra.mxu0 0.0
  %6118 = vmatpush.xpose.msra.mxu0 0.0
  %6119 = vmatpush.xpose.msra.mxu0 0.0
  %6120 = vmatpush.xpose.msra.mxu0 0.0
  %v6121 = vand.u32 %v5904, 4294901760
  %6122 = vmatpush.xpose.msra.mxu0 %v6121
  %v6123 = vand.u32 %v5902, 4294901760
  %6124 = vmatpush.xpose.msra.mxu0 %v6123
  %v6125 = vand.u32 %v5900, 4294901760
  %6126 = vmatpush.xpose.msra.mxu0 %v6125
  %v6127 = vand.u32 %v5894, 4294901760
  %6128 = vmatmul.f32.gmra.mxu0 %v6127
  %v6129 = vpop.f32.mrf.mxu0
  %v6130 = vadd.f32 %v6098, %v6129
  %v6131 = vand.u32 %v5896, 4294901760
  %6132 = vmatmul.f32.gmra.mxu0 %v6131
  %v6133 = vpop.f32.mrf.mxu0
  %v6134 = vadd.f32 %v6102, %v6133
  %v6135 = vand.u32 %v5898, 4294901760
  %6136 = vmatmul.f32.gmra.mxu0 %v6135
  %v6137 = vpop.f32.mrf.mxu0
  %v6138 = vadd.f32 %v6106, %v6137
  %6139 = vdwg.mxu0
  %v6140 = vmul.f32 %v6130, 0.35355338
  %v6141 = vmul.f32 %v6134, 0.35355338
  %v6142 = vmul.f32 %v6138, 0.35355338
  %v6143 = vadd.f32 %v6140, %v76
  %v6144 = vadd.f32 %v6141, %v77
  %v6145 = vadd.f32 %v6142, %v78
  %v6146 = vsel %vm1461, %v6143, -inf
  %6147 = vmax.xlane.f32.xlu0 %v6146
  %v6148 = vpop.xlane.xlu0 %6147
  %v6149 = vsel %vm1461, %v6144, -inf
  %6150 = vmax.xlane.f32.xlu0 %v6149
  %v6151 = vpop.xlane.xlu0 %6150
  %v6152 = vsel %vm1468, %v6145, -inf
  %6153 = vmax.xlane.f32.xlu0 %v6152
  %v6154 = vpop.xlane.xlu0 %6153
  %v6155 = vsub.f32 %v6143, %v6148
  %v6156 = vsub.f32 %v6144, %v6151
  %v6157 = vsub.f32 %v6145, %v6154
  %v6158 = vmul.f32 %v6155, 1.442695
  %v6159 = vpow.pop %v6158
  %v6160 = vmul.f32 %v6156, 1.442695
  %v6161 = vpow.pop %v6160
  %v6162 = vmul.f32 %v6157, 1.442695
  %v6163 = vpow.pop %v6162
  %v6164 = vsel %vm1461, %v6159, 0.0
  %6165 = vadd.xlane.f32.xlu0 %v6164
  %v6166 = vpop.xlane.xlu0 %6165
  %v6167 = vsel %vm1461, %v6161, 0.0
  %6168 = vadd.xlane.f32.xlu0 %v6167
  %v6169 = vpop.xlane.xlu0 %6168
  %v6170 = vsel %vm1468, %v6163, 0.0
  %6171 = vadd.xlane.f32.xlu0 %v6170
  %v6172 = vpop.xlane.xlu0 %6171
  %v6173 = vrcp.pop %v6166
  %v6174 = vrcp.pop %v6169
  %v6175 = vrcp.pop %v6172
  %v6176 = vmul.f32 %v6159, %v6173
  %v6177 = vmul.f32 %v6161, %v6174
  %v6178 = vmul.f32 %v6163, %v6175
  %6179 = vrot.lane.b32.xlu0 %v5320, 56
  %v6180 = vpop.permute.xlu0 %6179
  %6181 = vrot.lane.b32.xlu0 %v5324, 56
  %v6182 = vpop.permute.xlu0 %6181
  %6183 = vrot.lane.b32.xlu0 %v5328, 56
  %v6184 = vpop.permute.xlu0 %6183
  %v6188 = vsel %vm1461, %v6176, 0
  %v6191 = vsel %vm1461, %v6177, 0
  %v6194 = vsel %vm1461, %v6178, 0
  %v6196 = vsel %vm1513, %v6184, 0
  %6198 = vmatpush.msra.mxu0 0.0
  %6199 = vmatpush.msra.mxu0 0.0
  %6200 = vmatpush.msra.mxu0 0.0
  %6201 = vmatpush.msra.mxu0 0.0
  %6202 = vmatpush.msra.mxu0 0.0
  %6203 = vmatpush.msra.mxu0 0.0
  %6204 = vmatpush.msra.mxu0 0.0
  %6205 = vmatpush.msra.mxu0 0.0
  %6206 = vmatpush.msra.mxu0 0.0
  %6207 = vmatpush.msra.mxu0 0.0
  %6208 = vmatpush.msra.mxu0 0.0
  %6209 = vmatpush.msra.mxu0 0.0
  %6210 = vmatpush.msra.mxu0 0.0
  %v6211 = vand.u32 %v6196, 4294901760
  %6212 = vmatpush.msra.mxu0 %v6211
  %v6213 = vand.u32 %v6182, 4294901760
  %6214 = vmatpush.msra.mxu0 %v6213
  %v6215 = vand.u32 %v6180, 4294901760
  %6216 = vmatpush.msra.mxu0 %v6215
  %v6217 = vand.u32 %v6188, 4294901760
  %v6218 = vsub.f32 %v6188, %v6217
  %v6219 = vand.u32 %v6218, 4294901760
  %v6220 = vsub.f32 %v6218, %v6219
  %v6221 = vand.u32 %v6220, 4294901760
  %6222 = vmatmul.f32.gmra.mxu0 %v6221
  %v6223 = vpop.f32.mrf.mxu0
  %v6224 = vadd.f32 0.0, %v6223
  %v6225 = vand.u32 %v6191, 4294901760
  %v6226 = vsub.f32 %v6191, %v6225
  %v6227 = vand.u32 %v6226, 4294901760
  %v6228 = vsub.f32 %v6226, %v6227
  %v6229 = vand.u32 %v6228, 4294901760
  %6230 = vmatmul.f32.gmra.mxu0 %v6229
  %v6231 = vpop.f32.mrf.mxu0
  %v6232 = vadd.f32 0.0, %v6231
  %v6233 = vand.u32 %v6194, 4294901760
  %v6234 = vsub.f32 %v6194, %v6233
  %v6235 = vand.u32 %v6234, 4294901760
  %v6236 = vsub.f32 %v6234, %v6235
  %v6237 = vand.u32 %v6236, 4294901760
  %6238 = vmatmul.f32.gmra.mxu0 %v6237
  %v6239 = vpop.f32.mrf.mxu0
  %v6240 = vadd.f32 0.0, %v6239
  %6241 = vdwg.mxu0
  %6242 = vmatpush.msra.mxu0 0.0
  %6243 = vmatpush.msra.mxu0 0.0
  %6244 = vmatpush.msra.mxu0 0.0
  %6245 = vmatpush.msra.mxu0 0.0
  %6246 = vmatpush.msra.mxu0 0.0
  %6247 = vmatpush.msra.mxu0 0.0
  %6248 = vmatpush.msra.mxu0 0.0
  %6249 = vmatpush.msra.mxu0 0.0
  %6250 = vmatpush.msra.mxu0 0.0
  %6251 = vmatpush.msra.mxu0 0.0
  %6252 = vmatpush.msra.mxu0 0.0
  %6253 = vmatpush.msra.mxu0 0.0
  %6254 = vmatpush.msra.mxu0 0.0
  %v6255 = vand.u32 %v6196, 4294901760
  %v6256 = vsub.f32 %v6196, %v6255
  %v6257 = vand.u32 %v6256, 4294901760
  %v6258 = vsub.f32 %v6256, %v6257
  %v6259 = vand.u32 %v6258, 4294901760
  %6260 = vmatpush.msra.mxu0 %v6259
  %v6261 = vand.u32 %v6182, 4294901760
  %v6262 = vsub.f32 %v6182, %v6261
  %v6263 = vand.u32 %v6262, 4294901760
  %v6264 = vsub.f32 %v6262, %v6263
  %v6265 = vand.u32 %v6264, 4294901760
  %6266 = vmatpush.msra.mxu0 %v6265
  %v6267 = vand.u32 %v6180, 4294901760
  %v6268 = vsub.f32 %v6180, %v6267
  %v6269 = vand.u32 %v6268, 4294901760
  %v6270 = vsub.f32 %v6268, %v6269
  %v6271 = vand.u32 %v6270, 4294901760
  %6272 = vmatpush.msra.mxu0 %v6271
  %v6273 = vand.u32 %v6188, 4294901760
  %6274 = vmatmul.f32.gmra.mxu0 %v6273
  %v6275 = vpop.f32.mrf.mxu0
  %v6276 = vadd.f32 %v6224, %v6275
  %v6277 = vand.u32 %v6191, 4294901760
  %6278 = vmatmul.f32.gmra.mxu0 %v6277
  %v6279 = vpop.f32.mrf.mxu0
  %v6280 = vadd.f32 %v6232, %v6279
  %v6281 = vand.u32 %v6194, 4294901760
  %6282 = vmatmul.f32.gmra.mxu0 %v6281
  %v6283 = vpop.f32.mrf.mxu0
  %v6284 = vadd.f32 %v6240, %v6283
  %6285 = vdwg.mxu0
  %6286 = vmatpush.msra.mxu0 0.0
  %6287 = vmatpush.msra.mxu0 0.0
  %6288 = vmatpush.msra.mxu0 0.0
  %6289 = vmatpush.msra.mxu0 0.0
  %6290 = vmatpush.msra.mxu0 0.0
  %6291 = vmatpush.msra.mxu0 0.0
  %6292 = vmatpush.msra.mxu0 0.0
  %6293 = vmatpush.msra.mxu0 0.0
  %6294 = vmatpush.msra.mxu0 0.0
  %6295 = vmatpush.msra.mxu0 0.0
  %6296 = vmatpush.msra.mxu0 0.0
  %6297 = vmatpush.msra.mxu0 0.0
  %6298 = vmatpush.msra.mxu0 0.0
  %v6299 = vand.u32 %v6196, 4294901760
  %v6300 = vsub.f32 %v6196, %v6299
  %6301 = vmatpush.msra.mxu0 %v6300
  %v6302 = vand.u32 %v6182, 4294901760
  %v6303 = vsub.f32 %v6182, %v6302
  %6304 = vmatpush.msra.mxu0 %v6303
  %v6305 = vand.u32 %v6180, 4294901760
  %v6306 = vsub.f32 %v6180, %v6305
  %6307 = vmatpush.msra.mxu0 %v6306
  %v6308 = vand.u32 %v6188, 4294901760
  %v6309 = vsub.f32 %v6188, %v6308
  %6310 = vmatmul.f32.gmra.mxu0 %v6309
  %v6311 = vpop.f32.mrf.mxu0
  %v6312 = vadd.f32 %v6276, %v6311
  %v6313 = vand.u32 %v6191, 4294901760
  %v6314 = vsub.f32 %v6191, %v6313
  %6315 = vmatmul.f32.gmra.mxu0 %v6314
  %v6316 = vpop.f32.mrf.mxu0
  %v6317 = vadd.f32 %v6280, %v6316
  %v6318 = vand.u32 %v6194, 4294901760
  %v6319 = vsub.f32 %v6194, %v6318
  %6320 = vmatmul.f32.gmra.mxu0 %v6319
  %v6321 = vpop.f32.mrf.mxu0
  %v6322 = vadd.f32 %v6284, %v6321
  %6323 = vdwg.mxu0
  %6324 = vmatpush.msra.mxu0 0.0
  %6325 = vmatpush.msra.mxu0 0.0
  %6326 = vmatpush.msra.mxu0 0.0
  %6327 = vmatpush.msra.mxu0 0.0
  %6328 = vmatpush.msra.mxu0 0.0
  %6329 = vmatpush.msra.mxu0 0.0
  %6330 = vmatpush.msra.mxu0 0.0
  %6331 = vmatpush.msra.mxu0 0.0
  %6332 = vmatpush.msra.mxu0 0.0
  %6333 = vmatpush.msra.mxu0 0.0
  %6334 = vmatpush.msra.mxu0 0.0
  %6335 = vmatpush.msra.mxu0 0.0
  %6336 = vmatpush.msra.mxu0 0.0
  %v6337 = vand.u32 %v6196, 4294901760
  %6338 = vmatpush.msra.mxu0 %v6337
  %v6339 = vand.u32 %v6182, 4294901760
  %6340 = vmatpush.msra.mxu0 %v6339
  %v6341 = vand.u32 %v6180, 4294901760
  %6342 = vmatpush.msra.mxu0 %v6341
  %v6343 = vand.u32 %v6188, 4294901760
  %v6344 = vsub.f32 %v6188, %v6343
  %v6345 = vand.u32 %v6344, 4294901760
  %6346 = vmatmul.f32.gmra.mxu0 %v6345
  %v6347 = vpop.f32.mrf.mxu0
  %v6348 = vadd.f32 %v6312, %v6347
  %v6349 = vand.u32 %v6191, 4294901760
  %v6350 = vsub.f32 %v6191, %v6349
  %v6351 = vand.u32 %v6350, 4294901760
  %6352 = vmatmul.f32.gmra.mxu0 %v6351
  %v6353 = vpop.f32.mrf.mxu0
  %v6354 = vadd.f32 %v6317, %v6353
  %v6355 = vand.u32 %v6194, 4294901760
  %v6356 = vsub.f32 %v6194, %v6355
  %v6357 = vand.u32 %v6356, 4294901760
  %6358 = vmatmul.f32.gmra.mxu0 %v6357
  %v6359 = vpop.f32.mrf.mxu0
  %v6360 = vadd.f32 %v6322, %v6359
  %6361 = vdwg.mxu0
  %6362 = vmatpush.msra.mxu0 0.0
  %6363 = vmatpush.msra.mxu0 0.0
  %6364 = vmatpush.msra.mxu0 0.0
  %6365 = vmatpush.msra.mxu0 0.0
  %6366 = vmatpush.msra.mxu0 0.0
  %6367 = vmatpush.msra.mxu0 0.0
  %6368 = vmatpush.msra.mxu0 0.0
  %6369 = vmatpush.msra.mxu0 0.0
  %6370 = vmatpush.msra.mxu0 0.0
  %6371 = vmatpush.msra.mxu0 0.0
  %6372 = vmatpush.msra.mxu0 0.0
  %6373 = vmatpush.msra.mxu0 0.0
  %6374 = vmatpush.msra.mxu0 0.0
  %v6375 = vand.u32 %v6196, 4294901760
  %v6376 = vsub.f32 %v6196, %v6375
  %v6377 = vand.u32 %v6376, 4294901760
  %6378 = vmatpush.msra.mxu0 %v6377
  %v6379 = vand.u32 %v6182, 4294901760
  %v6380 = vsub.f32 %v6182, %v6379
  %v6381 = vand.u32 %v6380, 4294901760
  %6382 = vmatpush.msra.mxu0 %v6381
  %v6383 = vand.u32 %v6180, 4294901760
  %v6384 = vsub.f32 %v6180, %v6383
  %v6385 = vand.u32 %v6384, 4294901760
  %6386 = vmatpush.msra.mxu0 %v6385
  %v6387 = vand.u32 %v6188, 4294901760
  %6388 = vmatmul.f32.gmra.mxu0 %v6387
  %v6389 = vpop.f32.mrf.mxu0
  %v6390 = vadd.f32 %v6348, %v6389
  %v6391 = vand.u32 %v6191, 4294901760
  %6392 = vmatmul.f32.gmra.mxu0 %v6391
  %v6393 = vpop.f32.mrf.mxu0
  %v6394 = vadd.f32 %v6354, %v6393
  %v6395 = vand.u32 %v6194, 4294901760
  %6396 = vmatmul.f32.gmra.mxu0 %v6395
  %v6397 = vpop.f32.mrf.mxu0
  %v6398 = vadd.f32 %v6360, %v6397
  %6399 = vdwg.mxu0
  %6400 = vmatpush.msra.mxu0 0.0
  %6401 = vmatpush.msra.mxu0 0.0
  %6402 = vmatpush.msra.mxu0 0.0
  %6403 = vmatpush.msra.mxu0 0.0
  %6404 = vmatpush.msra.mxu0 0.0
  %6405 = vmatpush.msra.mxu0 0.0
  %6406 = vmatpush.msra.mxu0 0.0
  %6407 = vmatpush.msra.mxu0 0.0
  %6408 = vmatpush.msra.mxu0 0.0
  %6409 = vmatpush.msra.mxu0 0.0
  %6410 = vmatpush.msra.mxu0 0.0
  %6411 = vmatpush.msra.mxu0 0.0
  %6412 = vmatpush.msra.mxu0 0.0
  %v6413 = vand.u32 %v6196, 4294901760
  %6414 = vmatpush.msra.mxu0 %v6413
  %v6415 = vand.u32 %v6182, 4294901760
  %6416 = vmatpush.msra.mxu0 %v6415
  %v6417 = vand.u32 %v6180, 4294901760
  %6418 = vmatpush.msra.mxu0 %v6417
  %v6419 = vand.u32 %v6188, 4294901760
  %6420 = vmatmul.f32.gmra.mxu0 %v6419
  %v6421 = vpop.f32.mrf.mxu0
  %v6422 = vadd.f32 %v6390, %v6421
  %v6423 = vand.u32 %v6191, 4294901760
  %6424 = vmatmul.f32.gmra.mxu0 %v6423
  %v6425 = vpop.f32.mrf.mxu0
  %v6426 = vadd.f32 %v6394, %v6425
  %v6427 = vand.u32 %v6194, 4294901760
  %6428 = vmatmul.f32.gmra.mxu0 %v6427
  %v6429 = vpop.f32.mrf.mxu0
  %v6430 = vadd.f32 %v6398, %v6429
  %6431 = vdwg.mxu0
  %v6433 = vsel %vm1208, %v6422, 0
  %v6436 = vsel %vm1208, %v6426, 0
  %v6439 = vsel %vm1208, %v6430, 0
  %6441 = vmatpush.msra.mxu0 0.0
  %6442 = vmatpush.msra.mxu0 0.0
  %6443 = vmatpush.msra.mxu0 0.0
  %6444 = vmatpush.msra.mxu0 0.0
  %6445 = vmatpush.msra.mxu0 0.0
  %6446 = vmatpush.msra.mxu0 0.0
  %6447 = vmatpush.msra.mxu0 0.0
  %6448 = vmatpush.msra.mxu0 0.0
  %6449 = vmatpush.msra.mxu0 0.0
  %6450 = vmatpush.msra.mxu0 0.0
  %6451 = vmatpush.msra.mxu0 0.0
  %6452 = vmatpush.msra.mxu0 0.0
  %6453 = vmatpush.msra.mxu0 0.0
  %6454 = vmatpush.msra.mxu0 0.0
  %6455 = vmatpush.msra.mxu0 0.0
  %v6456 = vand.u32 %v5332, 4294901760
  %6457 = vmatpush.msra.mxu0 %v6456
  %v6458 = vand.u32 %v6433, 4294901760
  %v6459 = vsub.f32 %v6433, %v6458
  %v6460 = vand.u32 %v6459, 4294901760
  %v6461 = vsub.f32 %v6459, %v6460
  %v6462 = vand.u32 %v6461, 4294901760
  %6463 = vmatmul.f32.gmra.mxu0 %v6462
  %v6464 = vpop.f32.mrf.mxu0
  %v6465 = vadd.f32 0.0, %v6464
  %v6466 = vand.u32 %v6436, 4294901760
  %v6467 = vsub.f32 %v6436, %v6466
  %v6468 = vand.u32 %v6467, 4294901760
  %v6469 = vsub.f32 %v6467, %v6468
  %v6470 = vand.u32 %v6469, 4294901760
  %6471 = vmatmul.f32.gmra.mxu0 %v6470
  %v6472 = vpop.f32.mrf.mxu0
  %v6473 = vadd.f32 0.0, %v6472
  %v6474 = vand.u32 %v6439, 4294901760
  %v6475 = vsub.f32 %v6439, %v6474
  %v6476 = vand.u32 %v6475, 4294901760
  %v6477 = vsub.f32 %v6475, %v6476
  %v6478 = vand.u32 %v6477, 4294901760
  %6479 = vmatmul.f32.gmra.mxu0 %v6478
  %v6480 = vpop.f32.mrf.mxu0
  %v6481 = vadd.f32 0.0, %v6480
  %6482 = vdwg.mxu0
  %6483 = vmatpush.msra.mxu0 0.0
  %6484 = vmatpush.msra.mxu0 0.0
  %6485 = vmatpush.msra.mxu0 0.0
  %6486 = vmatpush.msra.mxu0 0.0
  %6487 = vmatpush.msra.mxu0 0.0
  %6488 = vmatpush.msra.mxu0 0.0
  %6489 = vmatpush.msra.mxu0 0.0
  %6490 = vmatpush.msra.mxu0 0.0
  %6491 = vmatpush.msra.mxu0 0.0
  %6492 = vmatpush.msra.mxu0 0.0
  %6493 = vmatpush.msra.mxu0 0.0
  %6494 = vmatpush.msra.mxu0 0.0
  %6495 = vmatpush.msra.mxu0 0.0
  %6496 = vmatpush.msra.mxu0 0.0
  %6497 = vmatpush.msra.mxu0 0.0
  %v6498 = vand.u32 %v5332, 4294901760
  %v6499 = vsub.f32 %v5332, %v6498
  %v6500 = vand.u32 %v6499, 4294901760
  %v6501 = vsub.f32 %v6499, %v6500
  %v6502 = vand.u32 %v6501, 4294901760
  %6503 = vmatpush.msra.mxu0 %v6502
  %v6504 = vand.u32 %v6433, 4294901760
  %6505 = vmatmul.f32.gmra.mxu0 %v6504
  %v6506 = vpop.f32.mrf.mxu0
  %v6507 = vadd.f32 %v6465, %v6506
  %v6508 = vand.u32 %v6436, 4294901760
  %6509 = vmatmul.f32.gmra.mxu0 %v6508
  %v6510 = vpop.f32.mrf.mxu0
  %v6511 = vadd.f32 %v6473, %v6510
  %v6512 = vand.u32 %v6439, 4294901760
  %6513 = vmatmul.f32.gmra.mxu0 %v6512
  %v6514 = vpop.f32.mrf.mxu0
  %v6515 = vadd.f32 %v6481, %v6514
  %6516 = vdwg.mxu0
  %6517 = vmatpush.msra.mxu0 0.0
  %6518 = vmatpush.msra.mxu0 0.0
  %6519 = vmatpush.msra.mxu0 0.0
  %6520 = vmatpush.msra.mxu0 0.0
  %6521 = vmatpush.msra.mxu0 0.0
  %6522 = vmatpush.msra.mxu0 0.0
  %6523 = vmatpush.msra.mxu0 0.0
  %6524 = vmatpush.msra.mxu0 0.0
  %6525 = vmatpush.msra.mxu0 0.0
  %6526 = vmatpush.msra.mxu0 0.0
  %6527 = vmatpush.msra.mxu0 0.0
  %6528 = vmatpush.msra.mxu0 0.0
  %6529 = vmatpush.msra.mxu0 0.0
  %6530 = vmatpush.msra.mxu0 0.0
  %6531 = vmatpush.msra.mxu0 0.0
  %v6532 = vand.u32 %v5332, 4294901760
  %v6533 = vsub.f32 %v5332, %v6532
  %6534 = vmatpush.msra.mxu0 %v6533
  %v6535 = vand.u32 %v6433, 4294901760
  %v6536 = vsub.f32 %v6433, %v6535
  %6537 = vmatmul.f32.gmra.mxu0 %v6536
  %v6538 = vpop.f32.mrf.mxu0
  %v6539 = vadd.f32 %v6507, %v6538
  %v6540 = vand.u32 %v6436, 4294901760
  %v6541 = vsub.f32 %v6436, %v6540
  %6542 = vmatmul.f32.gmra.mxu0 %v6541
  %v6543 = vpop.f32.mrf.mxu0
  %v6544 = vadd.f32 %v6511, %v6543
  %v6545 = vand.u32 %v6439, 4294901760
  %v6546 = vsub.f32 %v6439, %v6545
  %6547 = vmatmul.f32.gmra.mxu0 %v6546
  %v6548 = vpop.f32.mrf.mxu0
  %v6549 = vadd.f32 %v6515, %v6548
  %6550 = vdwg.mxu0
  %6551 = vmatpush.msra.mxu0 0.0
  %6552 = vmatpush.msra.mxu0 0.0
  %6553 = vmatpush.msra.mxu0 0.0
  %6554 = vmatpush.msra.mxu0 0.0
  %6555 = vmatpush.msra.mxu0 0.0
  %6556 = vmatpush.msra.mxu0 0.0
  %6557 = vmatpush.msra.mxu0 0.0
  %6558 = vmatpush.msra.mxu0 0.0
  %6559 = vmatpush.msra.mxu0 0.0
  %6560 = vmatpush.msra.mxu0 0.0
  %6561 = vmatpush.msra.mxu0 0.0
  %6562 = vmatpush.msra.mxu0 0.0
  %6563 = vmatpush.msra.mxu0 0.0
  %6564 = vmatpush.msra.mxu0 0.0
  %6565 = vmatpush.msra.mxu0 0.0
  %v6566 = vand.u32 %v5332, 4294901760
  %6567 = vmatpush.msra.mxu0 %v6566
  %v6568 = vand.u32 %v6433, 4294901760
  %v6569 = vsub.f32 %v6433, %v6568
  %v6570 = vand.u32 %v6569, 4294901760
  %6571 = vmatmul.f32.gmra.mxu0 %v6570
  %v6572 = vpop.f32.mrf.mxu0
  %v6573 = vadd.f32 %v6539, %v6572
  %v6574 = vand.u32 %v6436, 4294901760
  %v6575 = vsub.f32 %v6436, %v6574
  %v6576 = vand.u32 %v6575, 4294901760
  %6577 = vmatmul.f32.gmra.mxu0 %v6576
  %v6578 = vpop.f32.mrf.mxu0
  %v6579 = vadd.f32 %v6544, %v6578
  %v6580 = vand.u32 %v6439, 4294901760
  %v6581 = vsub.f32 %v6439, %v6580
  %v6582 = vand.u32 %v6581, 4294901760
  %6583 = vmatmul.f32.gmra.mxu0 %v6582
  %v6584 = vpop.f32.mrf.mxu0
  %v6585 = vadd.f32 %v6549, %v6584
  %6586 = vdwg.mxu0
  %6587 = vmatpush.msra.mxu0 0.0
  %6588 = vmatpush.msra.mxu0 0.0
  %6589 = vmatpush.msra.mxu0 0.0
  %6590 = vmatpush.msra.mxu0 0.0
  %6591 = vmatpush.msra.mxu0 0.0
  %6592 = vmatpush.msra.mxu0 0.0
  %6593 = vmatpush.msra.mxu0 0.0
  %6594 = vmatpush.msra.mxu0 0.0
  %6595 = vmatpush.msra.mxu0 0.0
  %6596 = vmatpush.msra.mxu0 0.0
  %6597 = vmatpush.msra.mxu0 0.0
  %6598 = vmatpush.msra.mxu0 0.0
  %6599 = vmatpush.msra.mxu0 0.0
  %6600 = vmatpush.msra.mxu0 0.0
  %6601 = vmatpush.msra.mxu0 0.0
  %v6602 = vand.u32 %v5332, 4294901760
  %v6603 = vsub.f32 %v5332, %v6602
  %v6604 = vand.u32 %v6603, 4294901760
  %6605 = vmatpush.msra.mxu0 %v6604
  %v6606 = vand.u32 %v6433, 4294901760
  %6607 = vmatmul.f32.gmra.mxu0 %v6606
  %v6608 = vpop.f32.mrf.mxu0
  %v6609 = vadd.f32 %v6573, %v6608
  %v6610 = vand.u32 %v6436, 4294901760
  %6611 = vmatmul.f32.gmra.mxu0 %v6610
  %v6612 = vpop.f32.mrf.mxu0
  %v6613 = vadd.f32 %v6579, %v6612
  %v6614 = vand.u32 %v6439, 4294901760
  %6615 = vmatmul.f32.gmra.mxu0 %v6614
  %v6616 = vpop.f32.mrf.mxu0
  %v6617 = vadd.f32 %v6585, %v6616
  %6618 = vdwg.mxu0
  %6619 = vmatpush.msra.mxu0 0.0
  %6620 = vmatpush.msra.mxu0 0.0
  %6621 = vmatpush.msra.mxu0 0.0
  %6622 = vmatpush.msra.mxu0 0.0
  %6623 = vmatpush.msra.mxu0 0.0
  %6624 = vmatpush.msra.mxu0 0.0
  %6625 = vmatpush.msra.mxu0 0.0
  %6626 = vmatpush.msra.mxu0 0.0
  %6627 = vmatpush.msra.mxu0 0.0
  %6628 = vmatpush.msra.mxu0 0.0
  %6629 = vmatpush.msra.mxu0 0.0
  %6630 = vmatpush.msra.mxu0 0.0
  %6631 = vmatpush.msra.mxu0 0.0
  %6632 = vmatpush.msra.mxu0 0.0
  %6633 = vmatpush.msra.mxu0 0.0
  %v6634 = vand.u32 %v5332, 4294901760
  %6635 = vmatpush.msra.mxu0 %v6634
  %v6636 = vand.u32 %v6433, 4294901760
  %6637 = vmatmul.f32.gmra.mxu0 %v6636
  %v6638 = vpop.f32.mrf.mxu0
  %v6639 = vadd.f32 %v6609, %v6638
  %v6640 = vand.u32 %v6436, 4294901760
  %6641 = vmatmul.f32.gmra.mxu0 %v6640
  %v6642 = vpop.f32.mrf.mxu0
  %v6643 = vadd.f32 %v6613, %v6642
  %v6644 = vand.u32 %v6439, 4294901760
  %6645 = vmatmul.f32.gmra.mxu0 %v6644
  %v6646 = vpop.f32.mrf.mxu0
  %v6647 = vadd.f32 %v6617, %v6646
  %6648 = vdwg.mxu0
  %v6650 = vsel %vm1208, %v5872, 0
  %v6653 = vsel %vm1208, %v5876, 0
  %v6656 = vsel %vm1208, %v5880, 0
  %6658 = vmatpush.msra.mxu0 0.0
  %6659 = vmatpush.msra.mxu0 0.0
  %6660 = vmatpush.msra.mxu0 0.0
  %6661 = vmatpush.msra.mxu0 0.0
  %6662 = vmatpush.msra.mxu0 0.0
  %6663 = vmatpush.msra.mxu0 0.0
  %6664 = vmatpush.msra.mxu0 0.0
  %6665 = vmatpush.msra.mxu0 0.0
  %6666 = vmatpush.msra.mxu0 0.0
  %6667 = vmatpush.msra.mxu0 0.0
  %6668 = vmatpush.msra.mxu0 0.0
  %6669 = vmatpush.msra.mxu0 0.0
  %6670 = vmatpush.msra.mxu0 0.0
  %6671 = vmatpush.msra.mxu0 0.0
  %6672 = vmatpush.msra.mxu0 0.0
  %v6673 = vand.u32 %v5331, 4294901760
  %6674 = vmatpush.msra.mxu0 %v6673
  %v6675 = vand.u32 %v6650, 4294901760
  %v6676 = vsub.f32 %v6650, %v6675
  %v6677 = vand.u32 %v6676, 4294901760
  %v6678 = vsub.f32 %v6676, %v6677
  %v6679 = vand.u32 %v6678, 4294901760
  %6680 = vmatmul.f32.gmra.mxu0 %v6679
  %v6681 = vpop.f32.mrf.mxu0
  %v6682 = vadd.f32 %v6639, %v6681
  %v6683 = vand.u32 %v6653, 4294901760
  %v6684 = vsub.f32 %v6653, %v6683
  %v6685 = vand.u32 %v6684, 4294901760
  %v6686 = vsub.f32 %v6684, %v6685
  %v6687 = vand.u32 %v6686, 4294901760
  %6688 = vmatmul.f32.gmra.mxu0 %v6687
  %v6689 = vpop.f32.mrf.mxu0
  %v6690 = vadd.f32 %v6643, %v6689
  %v6691 = vand.u32 %v6656, 4294901760
  %v6692 = vsub.f32 %v6656, %v6691
  %v6693 = vand.u32 %v6692, 4294901760
  %v6694 = vsub.f32 %v6692, %v6693
  %v6695 = vand.u32 %v6694, 4294901760
  %6696 = vmatmul.f32.gmra.mxu0 %v6695
  %v6697 = vpop.f32.mrf.mxu0
  %v6698 = vadd.f32 %v6647, %v6697
  %6699 = vdwg.mxu0
  %6700 = vmatpush.msra.mxu0 0.0
  %6701 = vmatpush.msra.mxu0 0.0
  %6702 = vmatpush.msra.mxu0 0.0
  %6703 = vmatpush.msra.mxu0 0.0
  %6704 = vmatpush.msra.mxu0 0.0
  %6705 = vmatpush.msra.mxu0 0.0
  %6706 = vmatpush.msra.mxu0 0.0
  %6707 = vmatpush.msra.mxu0 0.0
  %6708 = vmatpush.msra.mxu0 0.0
  %6709 = vmatpush.msra.mxu0 0.0
  %6710 = vmatpush.msra.mxu0 0.0
  %6711 = vmatpush.msra.mxu0 0.0
  %6712 = vmatpush.msra.mxu0 0.0
  %6713 = vmatpush.msra.mxu0 0.0
  %6714 = vmatpush.msra.mxu0 0.0
  %v6715 = vand.u32 %v5331, 4294901760
  %v6716 = vsub.f32 %v5331, %v6715
  %v6717 = vand.u32 %v6716, 4294901760
  %v6718 = vsub.f32 %v6716, %v6717
  %v6719 = vand.u32 %v6718, 4294901760
  %6720 = vmatpush.msra.mxu0 %v6719
  %v6721 = vand.u32 %v6650, 4294901760
  %6722 = vmatmul.f32.gmra.mxu0 %v6721
  %v6723 = vpop.f32.mrf.mxu0
  %v6724 = vadd.f32 %v6682, %v6723
  %v6725 = vand.u32 %v6653, 4294901760
  %6726 = vmatmul.f32.gmra.mxu0 %v6725
  %v6727 = vpop.f32.mrf.mxu0
  %v6728 = vadd.f32 %v6690, %v6727
  %v6729 = vand.u32 %v6656, 4294901760
  %6730 = vmatmul.f32.gmra.mxu0 %v6729
  %v6731 = vpop.f32.mrf.mxu0
  %v6732 = vadd.f32 %v6698, %v6731
  %6733 = vdwg.mxu0
  %6734 = vmatpush.msra.mxu0 0.0
  %6735 = vmatpush.msra.mxu0 0.0
  %6736 = vmatpush.msra.mxu0 0.0
  %6737 = vmatpush.msra.mxu0 0.0
  %6738 = vmatpush.msra.mxu0 0.0
  %6739 = vmatpush.msra.mxu0 0.0
  %6740 = vmatpush.msra.mxu0 0.0
  %6741 = vmatpush.msra.mxu0 0.0
  %6742 = vmatpush.msra.mxu0 0.0
  %6743 = vmatpush.msra.mxu0 0.0
  %6744 = vmatpush.msra.mxu0 0.0
  %6745 = vmatpush.msra.mxu0 0.0
  %6746 = vmatpush.msra.mxu0 0.0
  %6747 = vmatpush.msra.mxu0 0.0
  %6748 = vmatpush.msra.mxu0 0.0
  %v6749 = vand.u32 %v5331, 4294901760
  %v6750 = vsub.f32 %v5331, %v6749
  %6751 = vmatpush.msra.mxu0 %v6750
  %v6752 = vand.u32 %v6650, 4294901760
  %v6753 = vsub.f32 %v6650, %v6752
  %6754 = vmatmul.f32.gmra.mxu0 %v6753
  %v6755 = vpop.f32.mrf.mxu0
  %v6756 = vadd.f32 %v6724, %v6755
  %v6757 = vand.u32 %v6653, 4294901760
  %v6758 = vsub.f32 %v6653, %v6757
  %6759 = vmatmul.f32.gmra.mxu0 %v6758
  %v6760 = vpop.f32.mrf.mxu0
  %v6761 = vadd.f32 %v6728, %v6760
  %v6762 = vand.u32 %v6656, 4294901760
  %v6763 = vsub.f32 %v6656, %v6762
  %6764 = vmatmul.f32.gmra.mxu0 %v6763
  %v6765 = vpop.f32.mrf.mxu0
  %v6766 = vadd.f32 %v6732, %v6765
  %6767 = vdwg.mxu0
  %6768 = vmatpush.msra.mxu0 0.0
  %6769 = vmatpush.msra.mxu0 0.0
  %6770 = vmatpush.msra.mxu0 0.0
  %6771 = vmatpush.msra.mxu0 0.0
  %6772 = vmatpush.msra.mxu0 0.0
  %6773 = vmatpush.msra.mxu0 0.0
  %6774 = vmatpush.msra.mxu0 0.0
  %6775 = vmatpush.msra.mxu0 0.0
  %6776 = vmatpush.msra.mxu0 0.0
  %6777 = vmatpush.msra.mxu0 0.0
  %6778 = vmatpush.msra.mxu0 0.0
  %6779 = vmatpush.msra.mxu0 0.0
  %6780 = vmatpush.msra.mxu0 0.0
  %6781 = vmatpush.msra.mxu0 0.0
  %6782 = vmatpush.msra.mxu0 0.0
  %v6783 = vand.u32 %v5331, 4294901760
  %6784 = vmatpush.msra.mxu0 %v6783
  %v6785 = vand.u32 %v6650, 4294901760
  %v6786 = vsub.f32 %v6650, %v6785
  %v6787 = vand.u32 %v6786, 4294901760
  %6788 = vmatmul.f32.gmra.mxu0 %v6787
  %v6789 = vpop.f32.mrf.mxu0
  %v6790 = vadd.f32 %v6756, %v6789
  %v6791 = vand.u32 %v6653, 4294901760
  %v6792 = vsub.f32 %v6653, %v6791
  %v6793 = vand.u32 %v6792, 4294901760
  %6794 = vmatmul.f32.gmra.mxu0 %v6793
  %v6795 = vpop.f32.mrf.mxu0
  %v6796 = vadd.f32 %v6761, %v6795
  %v6797 = vand.u32 %v6656, 4294901760
  %v6798 = vsub.f32 %v6656, %v6797
  %v6799 = vand.u32 %v6798, 4294901760
  %6800 = vmatmul.f32.gmra.mxu0 %v6799
  %v6801 = vpop.f32.mrf.mxu0
  %v6802 = vadd.f32 %v6766, %v6801
  %6803 = vdwg.mxu0
  %6804 = vmatpush.msra.mxu0 0.0
  %6805 = vmatpush.msra.mxu0 0.0
  %6806 = vmatpush.msra.mxu0 0.0
  %6807 = vmatpush.msra.mxu0 0.0
  %6808 = vmatpush.msra.mxu0 0.0
  %6809 = vmatpush.msra.mxu0 0.0
  %6810 = vmatpush.msra.mxu0 0.0
  %6811 = vmatpush.msra.mxu0 0.0
  %6812 = vmatpush.msra.mxu0 0.0
  %6813 = vmatpush.msra.mxu0 0.0
  %6814 = vmatpush.msra.mxu0 0.0
  %6815 = vmatpush.msra.mxu0 0.0
  %6816 = vmatpush.msra.mxu0 0.0
  %6817 = vmatpush.msra.mxu0 0.0
  %6818 = vmatpush.msra.mxu0 0.0
  %v6819 = vand.u32 %v5331, 4294901760
  %v6820 = vsub.f32 %v5331, %v6819
  %v6821 = vand.u32 %v6820, 4294901760
  %6822 = vmatpush.msra.mxu0 %v6821
  %v6823 = vand.u32 %v6650, 4294901760
  %6824 = vmatmul.f32.gmra.mxu0 %v6823
  %v6825 = vpop.f32.mrf.mxu0
  %v6826 = vadd.f32 %v6790, %v6825
  %v6827 = vand.u32 %v6653, 4294901760
  %6828 = vmatmul.f32.gmra.mxu0 %v6827
  %v6829 = vpop.f32.mrf.mxu0
  %v6830 = vadd.f32 %v6796, %v6829
  %v6831 = vand.u32 %v6656, 4294901760
  %6832 = vmatmul.f32.gmra.mxu0 %v6831
  %v6833 = vpop.f32.mrf.mxu0
  %v6834 = vadd.f32 %v6802, %v6833
  %6835 = vdwg.mxu0
  %6836 = vmatpush.msra.mxu0 0.0
  %6837 = vmatpush.msra.mxu0 0.0
  %6838 = vmatpush.msra.mxu0 0.0
  %6839 = vmatpush.msra.mxu0 0.0
  %6840 = vmatpush.msra.mxu0 0.0
  %6841 = vmatpush.msra.mxu0 0.0
  %6842 = vmatpush.msra.mxu0 0.0
  %6843 = vmatpush.msra.mxu0 0.0
  %6844 = vmatpush.msra.mxu0 0.0
  %6845 = vmatpush.msra.mxu0 0.0
  %6846 = vmatpush.msra.mxu0 0.0
  %6847 = vmatpush.msra.mxu0 0.0
  %6848 = vmatpush.msra.mxu0 0.0
  %6849 = vmatpush.msra.mxu0 0.0
  %6850 = vmatpush.msra.mxu0 0.0
  %v6851 = vand.u32 %v5331, 4294901760
  %6852 = vmatpush.msra.mxu0 %v6851
  %v6853 = vand.u32 %v6650, 4294901760
  %6854 = vmatmul.f32.gmra.mxu0 %v6853
  %v6855 = vpop.f32.mrf.mxu0
  %v6856 = vadd.f32 %v6826, %v6855
  %v6857 = vand.u32 %v6653, 4294901760
  %6858 = vmatmul.f32.gmra.mxu0 %v6857
  %v6859 = vpop.f32.mrf.mxu0
  %v6860 = vadd.f32 %v6830, %v6859
  %v6861 = vand.u32 %v6656, 4294901760
  %6862 = vmatmul.f32.gmra.mxu0 %v6861
  %v6863 = vpop.f32.mrf.mxu0
  %v6864 = vadd.f32 %v6834, %v6863
  %6865 = vdwg.mxu0
  %6866 = vrot.lane.b32.xlu0 %v5320, 112
  %v6867 = vpop.permute.xlu0 %6866
  %6868 = vrot.lane.b32.xlu0 %v5324, 112
  %v6869 = vpop.permute.xlu0 %6868
  %6870 = vrot.lane.b32.xlu0 %v5328, 112
  %v6871 = vpop.permute.xlu0 %6870
  %6872 = vrot.lane.b32.xlu0 %v5320, 80
  %v6873 = vpop.permute.xlu0 %6872
  %6874 = vrot.lane.b32.xlu0 %v5324, 80
  %v6875 = vpop.permute.xlu0 %6874
  %6876 = vrot.lane.b32.xlu0 %v5328, 80
  %v6877 = vpop.permute.xlu0 %6876
  %v6878 = vsel %vm1208, %v6867, 0
  %v6880 = vsel %vm1208, %v6869, 0
  %v6882 = vsel %vm1208, %v6871, 0
  %v6884 = vsel %vm1208, %v6873, 0
  %v6886 = vsel %vm1208, %v6875, 0
  %v6888 = vsel %vm1208, %v6877, 0
  %6890 = vmatpush.xpose.msra.mxu0 0.0
  %6891 = vmatpush.xpose.msra.mxu0 0.0
  %6892 = vmatpush.xpose.msra.mxu0 0.0
  %6893 = vmatpush.xpose.msra.mxu0 0.0
  %6894 = vmatpush.xpose.msra.mxu0 0.0
  %6895 = vmatpush.xpose.msra.mxu0 0.0
  %6896 = vmatpush.xpose.msra.mxu0 0.0
  %6897 = vmatpush.xpose.msra.mxu0 0.0
  %6898 = vmatpush.xpose.msra.mxu0 0.0
  %6899 = vmatpush.xpose.msra.mxu0 0.0
  %6900 = vmatpush.xpose.msra.mxu0 0.0
  %6901 = vmatpush.xpose.msra.mxu0 0.0
  %6902 = vmatpush.xpose.msra.mxu0 0.0
  %v6903 = vand.u32 %v6888, 4294901760
  %6904 = vmatpush.xpose.msra.mxu0 %v6903
  %v6905 = vand.u32 %v6886, 4294901760
  %6906 = vmatpush.xpose.msra.mxu0 %v6905
  %v6907 = vand.u32 %v6884, 4294901760
  %6908 = vmatpush.xpose.msra.mxu0 %v6907
  %v6909 = vand.u32 %v6878, 4294901760
  %v6910 = vsub.f32 %v6878, %v6909
  %v6911 = vand.u32 %v6910, 4294901760
  %v6912 = vsub.f32 %v6910, %v6911
  %v6913 = vand.u32 %v6912, 4294901760
  %6914 = vmatmul.f32.gmra.mxu0 %v6913
  %v6915 = vpop.f32.mrf.mxu0
  %v6916 = vadd.f32 0.0, %v6915
  %v6917 = vand.u32 %v6880, 4294901760
  %v6918 = vsub.f32 %v6880, %v6917
  %v6919 = vand.u32 %v6918, 4294901760
  %v6920 = vsub.f32 %v6918, %v6919
  %v6921 = vand.u32 %v6920, 4294901760
  %6922 = vmatmul.f32.gmra.mxu0 %v6921
  %v6923 = vpop.f32.mrf.mxu0
  %v6924 = vadd.f32 0.0, %v6923
  %v6925 = vand.u32 %v6882, 4294901760
  %v6926 = vsub.f32 %v6882, %v6925
  %v6927 = vand.u32 %v6926, 4294901760
  %v6928 = vsub.f32 %v6926, %v6927
  %v6929 = vand.u32 %v6928, 4294901760
  %6930 = vmatmul.f32.gmra.mxu0 %v6929
  %v6931 = vpop.f32.mrf.mxu0
  %v6932 = vadd.f32 0.0, %v6931
  %6933 = vdwg.mxu0
  %6934 = vmatpush.xpose.msra.mxu0 0.0
  %6935 = vmatpush.xpose.msra.mxu0 0.0
  %6936 = vmatpush.xpose.msra.mxu0 0.0
  %6937 = vmatpush.xpose.msra.mxu0 0.0
  %6938 = vmatpush.xpose.msra.mxu0 0.0
  %6939 = vmatpush.xpose.msra.mxu0 0.0
  %6940 = vmatpush.xpose.msra.mxu0 0.0
  %6941 = vmatpush.xpose.msra.mxu0 0.0
  %6942 = vmatpush.xpose.msra.mxu0 0.0
  %6943 = vmatpush.xpose.msra.mxu0 0.0
  %6944 = vmatpush.xpose.msra.mxu0 0.0
  %6945 = vmatpush.xpose.msra.mxu0 0.0
  %6946 = vmatpush.xpose.msra.mxu0 0.0
  %v6947 = vand.u32 %v6888, 4294901760
  %v6948 = vsub.f32 %v6888, %v6947
  %v6949 = vand.u32 %v6948, 4294901760
  %v6950 = vsub.f32 %v6948, %v6949
  %v6951 = vand.u32 %v6950, 4294901760
  %6952 = vmatpush.xpose.msra.mxu0 %v6951
  %v6953 = vand.u32 %v6886, 4294901760
  %v6954 = vsub.f32 %v6886, %v6953
  %v6955 = vand.u32 %v6954, 4294901760
  %v6956 = vsub.f32 %v6954, %v6955
  %v6957 = vand.u32 %v6956, 4294901760
  %6958 = vmatpush.xpose.msra.mxu0 %v6957
  %v6959 = vand.u32 %v6884, 4294901760
  %v6960 = vsub.f32 %v6884, %v6959
  %v6961 = vand.u32 %v6960, 4294901760
  %v6962 = vsub.f32 %v6960, %v6961
  %v6963 = vand.u32 %v6962, 4294901760
  %6964 = vmatpush.xpose.msra.mxu0 %v6963
  %v6965 = vand.u32 %v6878, 4294901760
  %6966 = vmatmul.f32.gmra.mxu0 %v6965
  %v6967 = vpop.f32.mrf.mxu0
  %v6968 = vadd.f32 %v6916, %v6967
  %v6969 = vand.u32 %v6880, 4294901760
  %6970 = vmatmul.f32.gmra.mxu0 %v6969
  %v6971 = vpop.f32.mrf.mxu0
  %v6972 = vadd.f32 %v6924, %v6971
  %v6973 = vand.u32 %v6882, 4294901760
  %6974 = vmatmul.f32.gmra.mxu0 %v6973
  %v6975 = vpop.f32.mrf.mxu0
  %v6976 = vadd.f32 %v6932, %v6975
  %6977 = vdwg.mxu0
  %6978 = vmatpush.xpose.msra.mxu0 0.0
  %6979 = vmatpush.xpose.msra.mxu0 0.0
  %6980 = vmatpush.xpose.msra.mxu0 0.0
  %6981 = vmatpush.xpose.msra.mxu0 0.0
  %6982 = vmatpush.xpose.msra.mxu0 0.0
  %6983 = vmatpush.xpose.msra.mxu0 0.0
  %6984 = vmatpush.xpose.msra.mxu0 0.0
  %6985 = vmatpush.xpose.msra.mxu0 0.0
  %6986 = vmatpush.xpose.msra.mxu0 0.0
  %6987 = vmatpush.xpose.msra.mxu0 0.0
  %6988 = vmatpush.xpose.msra.mxu0 0.0
  %6989 = vmatpush.xpose.msra.mxu0 0.0
  %6990 = vmatpush.xpose.msra.mxu0 0.0
  %v6991 = vand.u32 %v6888, 4294901760
  %v6992 = vsub.f32 %v6888, %v6991
  %6993 = vmatpush.xpose.msra.mxu0 %v6992
  %v6994 = vand.u32 %v6886, 4294901760
  %v6995 = vsub.f32 %v6886, %v6994
  %6996 = vmatpush.xpose.msra.mxu0 %v6995
  %v6997 = vand.u32 %v6884, 4294901760
  %v6998 = vsub.f32 %v6884, %v6997
  %6999 = vmatpush.xpose.msra.mxu0 %v6998
  %v7000 = vand.u32 %v6878, 4294901760
  %v7001 = vsub.f32 %v6878, %v7000
  %7002 = vmatmul.f32.gmra.mxu0 %v7001
  %v7003 = vpop.f32.mrf.mxu0
  %v7004 = vadd.f32 %v6968, %v7003
  %v7005 = vand.u32 %v6880, 4294901760
  %v7006 = vsub.f32 %v6880, %v7005
  %7007 = vmatmul.f32.gmra.mxu0 %v7006
  %v7008 = vpop.f32.mrf.mxu0
  %v7009 = vadd.f32 %v6972, %v7008
  %v7010 = vand.u32 %v6882, 4294901760
  %v7011 = vsub.f32 %v6882, %v7010
  %7012 = vmatmul.f32.gmra.mxu0 %v7011
  %v7013 = vpop.f32.mrf.mxu0
  %v7014 = vadd.f32 %v6976, %v7013
  %7015 = vdwg.mxu0
  %7016 = vmatpush.xpose.msra.mxu0 0.0
  %7017 = vmatpush.xpose.msra.mxu0 0.0
  %7018 = vmatpush.xpose.msra.mxu0 0.0
  %7019 = vmatpush.xpose.msra.mxu0 0.0
  %7020 = vmatpush.xpose.msra.mxu0 0.0
  %7021 = vmatpush.xpose.msra.mxu0 0.0
  %7022 = vmatpush.xpose.msra.mxu0 0.0
  %7023 = vmatpush.xpose.msra.mxu0 0.0
  %7024 = vmatpush.xpose.msra.mxu0 0.0
  %7025 = vmatpush.xpose.msra.mxu0 0.0
  %7026 = vmatpush.xpose.msra.mxu0 0.0
  %7027 = vmatpush.xpose.msra.mxu0 0.0
  %7028 = vmatpush.xpose.msra.mxu0 0.0
  %v7029 = vand.u32 %v6888, 4294901760
  %7030 = vmatpush.xpose.msra.mxu0 %v7029
  %v7031 = vand.u32 %v6886, 4294901760
  %7032 = vmatpush.xpose.msra.mxu0 %v7031
  %v7033 = vand.u32 %v6884, 4294901760
  %7034 = vmatpush.xpose.msra.mxu0 %v7033
  %v7035 = vand.u32 %v6878, 4294901760
  %v7036 = vsub.f32 %v6878, %v7035
  %v7037 = vand.u32 %v7036, 4294901760
  %7038 = vmatmul.f32.gmra.mxu0 %v7037
  %v7039 = vpop.f32.mrf.mxu0
  %v7040 = vadd.f32 %v7004, %v7039
  %v7041 = vand.u32 %v6880, 4294901760
  %v7042 = vsub.f32 %v6880, %v7041
  %v7043 = vand.u32 %v7042, 4294901760
  %7044 = vmatmul.f32.gmra.mxu0 %v7043
  %v7045 = vpop.f32.mrf.mxu0
  %v7046 = vadd.f32 %v7009, %v7045
  %v7047 = vand.u32 %v6882, 4294901760
  %v7048 = vsub.f32 %v6882, %v7047
  %v7049 = vand.u32 %v7048, 4294901760
  %7050 = vmatmul.f32.gmra.mxu0 %v7049
  %v7051 = vpop.f32.mrf.mxu0
  %v7052 = vadd.f32 %v7014, %v7051
  %7053 = vdwg.mxu0
  %7054 = vmatpush.xpose.msra.mxu0 0.0
  %7055 = vmatpush.xpose.msra.mxu0 0.0
  %7056 = vmatpush.xpose.msra.mxu0 0.0
  %7057 = vmatpush.xpose.msra.mxu0 0.0
  %7058 = vmatpush.xpose.msra.mxu0 0.0
  %7059 = vmatpush.xpose.msra.mxu0 0.0
  %7060 = vmatpush.xpose.msra.mxu0 0.0
  %7061 = vmatpush.xpose.msra.mxu0 0.0
  %7062 = vmatpush.xpose.msra.mxu0 0.0
  %7063 = vmatpush.xpose.msra.mxu0 0.0
  %7064 = vmatpush.xpose.msra.mxu0 0.0
  %7065 = vmatpush.xpose.msra.mxu0 0.0
  %7066 = vmatpush.xpose.msra.mxu0 0.0
  %v7067 = vand.u32 %v6888, 4294901760
  %v7068 = vsub.f32 %v6888, %v7067
  %v7069 = vand.u32 %v7068, 4294901760
  %7070 = vmatpush.xpose.msra.mxu0 %v7069
  %v7071 = vand.u32 %v6886, 4294901760
  %v7072 = vsub.f32 %v6886, %v7071
  %v7073 = vand.u32 %v7072, 4294901760
  %7074 = vmatpush.xpose.msra.mxu0 %v7073
  %v7075 = vand.u32 %v6884, 4294901760
  %v7076 = vsub.f32 %v6884, %v7075
  %v7077 = vand.u32 %v7076, 4294901760
  %7078 = vmatpush.xpose.msra.mxu0 %v7077
  %v7079 = vand.u32 %v6878, 4294901760
  %7080 = vmatmul.f32.gmra.mxu0 %v7079
  %v7081 = vpop.f32.mrf.mxu0
  %v7082 = vadd.f32 %v7040, %v7081
  %v7083 = vand.u32 %v6880, 4294901760
  %7084 = vmatmul.f32.gmra.mxu0 %v7083
  %v7085 = vpop.f32.mrf.mxu0
  %v7086 = vadd.f32 %v7046, %v7085
  %v7087 = vand.u32 %v6882, 4294901760
  %7088 = vmatmul.f32.gmra.mxu0 %v7087
  %v7089 = vpop.f32.mrf.mxu0
  %v7090 = vadd.f32 %v7052, %v7089
  %7091 = vdwg.mxu0
  %7092 = vmatpush.xpose.msra.mxu0 0.0
  %7093 = vmatpush.xpose.msra.mxu0 0.0
  %7094 = vmatpush.xpose.msra.mxu0 0.0
  %7095 = vmatpush.xpose.msra.mxu0 0.0
  %7096 = vmatpush.xpose.msra.mxu0 0.0
  %7097 = vmatpush.xpose.msra.mxu0 0.0
  %7098 = vmatpush.xpose.msra.mxu0 0.0
  %7099 = vmatpush.xpose.msra.mxu0 0.0
  %7100 = vmatpush.xpose.msra.mxu0 0.0
  %7101 = vmatpush.xpose.msra.mxu0 0.0
  %7102 = vmatpush.xpose.msra.mxu0 0.0
  %7103 = vmatpush.xpose.msra.mxu0 0.0
  %7104 = vmatpush.xpose.msra.mxu0 0.0
  %v7105 = vand.u32 %v6888, 4294901760
  %7106 = vmatpush.xpose.msra.mxu0 %v7105
  %v7107 = vand.u32 %v6886, 4294901760
  %7108 = vmatpush.xpose.msra.mxu0 %v7107
  %v7109 = vand.u32 %v6884, 4294901760
  %7110 = vmatpush.xpose.msra.mxu0 %v7109
  %v7111 = vand.u32 %v6878, 4294901760
  %7112 = vmatmul.f32.gmra.mxu0 %v7111
  %v7113 = vpop.f32.mrf.mxu0
  %v7114 = vadd.f32 %v7082, %v7113
  %v7115 = vand.u32 %v6880, 4294901760
  %7116 = vmatmul.f32.gmra.mxu0 %v7115
  %v7117 = vpop.f32.mrf.mxu0
  %v7118 = vadd.f32 %v7086, %v7117
  %v7119 = vand.u32 %v6882, 4294901760
  %7120 = vmatmul.f32.gmra.mxu0 %v7119
  %v7121 = vpop.f32.mrf.mxu0
  %v7122 = vadd.f32 %v7090, %v7121
  %7123 = vdwg.mxu0
  %v7124 = vmul.f32 %v7114, 0.35355338
  %v7125 = vmul.f32 %v7118, 0.35355338
  %v7126 = vmul.f32 %v7122, 0.35355338
  %v7127 = vadd.f32 %v7124, %v76
  %v7128 = vadd.f32 %v7125, %v77
  %v7129 = vadd.f32 %v7126, %v78
  %v7130 = vsel %vm1461, %v7127, -inf
  %7131 = vmax.xlane.f32.xlu0 %v7130
  %v7132 = vpop.xlane.xlu0 %7131
  %v7133 = vsel %vm1461, %v7128, -inf
  %7134 = vmax.xlane.f32.xlu0 %v7133
  %v7135 = vpop.xlane.xlu0 %7134
  %v7136 = vsel %vm1468, %v7129, -inf
  %7137 = vmax.xlane.f32.xlu0 %v7136
  %v7138 = vpop.xlane.xlu0 %7137
  %v7139 = vsub.f32 %v7127, %v7132
  %v7140 = vsub.f32 %v7128, %v7135
  %v7141 = vsub.f32 %v7129, %v7138
  %v7142 = vmul.f32 %v7139, 1.442695
  %v7143 = vpow.pop %v7142
  %v7144 = vmul.f32 %v7140, 1.442695
  %v7145 = vpow.pop %v7144
  %v7146 = vmul.f32 %v7141, 1.442695
  %v7147 = vpow.pop %v7146
  %v7148 = vsel %vm1461, %v7143, 0.0
  %7149 = vadd.xlane.f32.xlu0 %v7148
  %v7150 = vpop.xlane.xlu0 %7149
  %v7151 = vsel %vm1461, %v7145, 0.0
  %7152 = vadd.xlane.f32.xlu0 %v7151
  %v7153 = vpop.xlane.xlu0 %7152
  %v7154 = vsel %vm1468, %v7147, 0.0
  %7155 = vadd.xlane.f32.xlu0 %v7154
  %v7156 = vpop.xlane.xlu0 %7155
  %v7157 = vrcp.pop %v7150
  %v7158 = vrcp.pop %v7153
  %v7159 = vrcp.pop %v7156
  %v7160 = vmul.f32 %v7143, %v7157
  %v7161 = vmul.f32 %v7145, %v7158
  %v7162 = vmul.f32 %v7147, %v7159
  %7163 = vrot.lane.b32.xlu0 %v5320, 48
  %v7164 = vpop.permute.xlu0 %7163
  %7165 = vrot.lane.b32.xlu0 %v5324, 48
  %v7166 = vpop.permute.xlu0 %7165
  %7167 = vrot.lane.b32.xlu0 %v5328, 48
  %v7168 = vpop.permute.xlu0 %7167
  %v7172 = vsel %vm1461, %v7160, 0
  %v7175 = vsel %vm1461, %v7161, 0
  %v7178 = vsel %vm1461, %v7162, 0
  %v7180 = vsel %vm1513, %v7168, 0
  %7182 = vmatpush.msra.mxu0 0.0
  %7183 = vmatpush.msra.mxu0 0.0
  %7184 = vmatpush.msra.mxu0 0.0
  %7185 = vmatpush.msra.mxu0 0.0
  %7186 = vmatpush.msra.mxu0 0.0
  %7187 = vmatpush.msra.mxu0 0.0
  %7188 = vmatpush.msra.mxu0 0.0
  %7189 = vmatpush.msra.mxu0 0.0
  %7190 = vmatpush.msra.mxu0 0.0
  %7191 = vmatpush.msra.mxu0 0.0
  %7192 = vmatpush.msra.mxu0 0.0
  %7193 = vmatpush.msra.mxu0 0.0
  %7194 = vmatpush.msra.mxu0 0.0
  %v7195 = vand.u32 %v7180, 4294901760
  %7196 = vmatpush.msra.mxu0 %v7195
  %v7197 = vand.u32 %v7166, 4294901760
  %7198 = vmatpush.msra.mxu0 %v7197
  %v7199 = vand.u32 %v7164, 4294901760
  %7200 = vmatpush.msra.mxu0 %v7199
  %v7201 = vand.u32 %v7172, 4294901760
  %v7202 = vsub.f32 %v7172, %v7201
  %v7203 = vand.u32 %v7202, 4294901760
  %v7204 = vsub.f32 %v7202, %v7203
  %v7205 = vand.u32 %v7204, 4294901760
  %7206 = vmatmul.f32.gmra.mxu0 %v7205
  %v7207 = vpop.f32.mrf.mxu0
  %v7208 = vadd.f32 0.0, %v7207
  %v7209 = vand.u32 %v7175, 4294901760
  %v7210 = vsub.f32 %v7175, %v7209
  %v7211 = vand.u32 %v7210, 4294901760
  %v7212 = vsub.f32 %v7210, %v7211
  %v7213 = vand.u32 %v7212, 4294901760
  %7214 = vmatmul.f32.gmra.mxu0 %v7213
  %v7215 = vpop.f32.mrf.mxu0
  %v7216 = vadd.f32 0.0, %v7215
  %v7217 = vand.u32 %v7178, 4294901760
  %v7218 = vsub.f32 %v7178, %v7217
  %v7219 = vand.u32 %v7218, 4294901760
  %v7220 = vsub.f32 %v7218, %v7219
  %v7221 = vand.u32 %v7220, 4294901760
  %7222 = vmatmul.f32.gmra.mxu0 %v7221
  %v7223 = vpop.f32.mrf.mxu0
  %v7224 = vadd.f32 0.0, %v7223
  %7225 = vdwg.mxu0
  %7226 = vmatpush.msra.mxu0 0.0
  %7227 = vmatpush.msra.mxu0 0.0
  %7228 = vmatpush.msra.mxu0 0.0
  %7229 = vmatpush.msra.mxu0 0.0
  %7230 = vmatpush.msra.mxu0 0.0
  %7231 = vmatpush.msra.mxu0 0.0
  %7232 = vmatpush.msra.mxu0 0.0
  %7233 = vmatpush.msra.mxu0 0.0
  %7234 = vmatpush.msra.mxu0 0.0
  %7235 = vmatpush.msra.mxu0 0.0
  %7236 = vmatpush.msra.mxu0 0.0
  %7237 = vmatpush.msra.mxu0 0.0
  %7238 = vmatpush.msra.mxu0 0.0
  %v7239 = vand.u32 %v7180, 4294901760
  %v7240 = vsub.f32 %v7180, %v7239
  %v7241 = vand.u32 %v7240, 4294901760
  %v7242 = vsub.f32 %v7240, %v7241
  %v7243 = vand.u32 %v7242, 4294901760
  %7244 = vmatpush.msra.mxu0 %v7243
  %v7245 = vand.u32 %v7166, 4294901760
  %v7246 = vsub.f32 %v7166, %v7245
  %v7247 = vand.u32 %v7246, 4294901760
  %v7248 = vsub.f32 %v7246, %v7247
  %v7249 = vand.u32 %v7248, 4294901760
  %7250 = vmatpush.msra.mxu0 %v7249
  %v7251 = vand.u32 %v7164, 4294901760
  %v7252 = vsub.f32 %v7164, %v7251
  %v7253 = vand.u32 %v7252, 4294901760
  %v7254 = vsub.f32 %v7252, %v7253
  %v7255 = vand.u32 %v7254, 4294901760
  %7256 = vmatpush.msra.mxu0 %v7255
  %v7257 = vand.u32 %v7172, 4294901760
  %7258 = vmatmul.f32.gmra.mxu0 %v7257
  %v7259 = vpop.f32.mrf.mxu0
  %v7260 = vadd.f32 %v7208, %v7259
  %v7261 = vand.u32 %v7175, 4294901760
  %7262 = vmatmul.f32.gmra.mxu0 %v7261
  %v7263 = vpop.f32.mrf.mxu0
  %v7264 = vadd.f32 %v7216, %v7263
  %v7265 = vand.u32 %v7178, 4294901760
  %7266 = vmatmul.f32.gmra.mxu0 %v7265
  %v7267 = vpop.f32.mrf.mxu0
  %v7268 = vadd.f32 %v7224, %v7267
  %7269 = vdwg.mxu0
  %7270 = vmatpush.msra.mxu0 0.0
  %7271 = vmatpush.msra.mxu0 0.0
  %7272 = vmatpush.msra.mxu0 0.0
  %7273 = vmatpush.msra.mxu0 0.0
  %7274 = vmatpush.msra.mxu0 0.0
  %7275 = vmatpush.msra.mxu0 0.0
  %7276 = vmatpush.msra.mxu0 0.0
  %7277 = vmatpush.msra.mxu0 0.0
  %7278 = vmatpush.msra.mxu0 0.0
  %7279 = vmatpush.msra.mxu0 0.0
  %7280 = vmatpush.msra.mxu0 0.0
  %7281 = vmatpush.msra.mxu0 0.0
  %7282 = vmatpush.msra.mxu0 0.0
  %v7283 = vand.u32 %v7180, 4294901760
  %v7284 = vsub.f32 %v7180, %v7283
  %7285 = vmatpush.msra.mxu0 %v7284
  %v7286 = vand.u32 %v7166, 4294901760
  %v7287 = vsub.f32 %v7166, %v7286
  %7288 = vmatpush.msra.mxu0 %v7287
  %v7289 = vand.u32 %v7164, 4294901760
  %v7290 = vsub.f32 %v7164, %v7289
  %7291 = vmatpush.msra.mxu0 %v7290
  %v7292 = vand.u32 %v7172, 4294901760
  %v7293 = vsub.f32 %v7172, %v7292
  %7294 = vmatmul.f32.gmra.mxu0 %v7293
  %v7295 = vpop.f32.mrf.mxu0
  %v7296 = vadd.f32 %v7260, %v7295
  %v7297 = vand.u32 %v7175, 4294901760
  %v7298 = vsub.f32 %v7175, %v7297
  %7299 = vmatmul.f32.gmra.mxu0 %v7298
  %v7300 = vpop.f32.mrf.mxu0
  %v7301 = vadd.f32 %v7264, %v7300
  %v7302 = vand.u32 %v7178, 4294901760
  %v7303 = vsub.f32 %v7178, %v7302
  %7304 = vmatmul.f32.gmra.mxu0 %v7303
  %v7305 = vpop.f32.mrf.mxu0
  %v7306 = vadd.f32 %v7268, %v7305
  %7307 = vdwg.mxu0
  %7308 = vmatpush.msra.mxu0 0.0
  %7309 = vmatpush.msra.mxu0 0.0
  %7310 = vmatpush.msra.mxu0 0.0
  %7311 = vmatpush.msra.mxu0 0.0
  %7312 = vmatpush.msra.mxu0 0.0
  %7313 = vmatpush.msra.mxu0 0.0
  %7314 = vmatpush.msra.mxu0 0.0
  %7315 = vmatpush.msra.mxu0 0.0
  %7316 = vmatpush.msra.mxu0 0.0
  %7317 = vmatpush.msra.mxu0 0.0
  %7318 = vmatpush.msra.mxu0 0.0
  %7319 = vmatpush.msra.mxu0 0.0
  %7320 = vmatpush.msra.mxu0 0.0
  %v7321 = vand.u32 %v7180, 4294901760
  %7322 = vmatpush.msra.mxu0 %v7321
  %v7323 = vand.u32 %v7166, 4294901760
  %7324 = vmatpush.msra.mxu0 %v7323
  %v7325 = vand.u32 %v7164, 4294901760
  %7326 = vmatpush.msra.mxu0 %v7325
  %v7327 = vand.u32 %v7172, 4294901760
  %v7328 = vsub.f32 %v7172, %v7327
  %v7329 = vand.u32 %v7328, 4294901760
  %7330 = vmatmul.f32.gmra.mxu0 %v7329
  %v7331 = vpop.f32.mrf.mxu0
  %v7332 = vadd.f32 %v7296, %v7331
  %v7333 = vand.u32 %v7175, 4294901760
  %v7334 = vsub.f32 %v7175, %v7333
  %v7335 = vand.u32 %v7334, 4294901760
  %7336 = vmatmul.f32.gmra.mxu0 %v7335
  %v7337 = vpop.f32.mrf.mxu0
  %v7338 = vadd.f32 %v7301, %v7337
  %v7339 = vand.u32 %v7178, 4294901760
  %v7340 = vsub.f32 %v7178, %v7339
  %v7341 = vand.u32 %v7340, 4294901760
  %7342 = vmatmul.f32.gmra.mxu0 %v7341
  %v7343 = vpop.f32.mrf.mxu0
  %v7344 = vadd.f32 %v7306, %v7343
  %7345 = vdwg.mxu0
  %7346 = vmatpush.msra.mxu0 0.0
  %7347 = vmatpush.msra.mxu0 0.0
  %7348 = vmatpush.msra.mxu0 0.0
  %7349 = vmatpush.msra.mxu0 0.0
  %7350 = vmatpush.msra.mxu0 0.0
  %7351 = vmatpush.msra.mxu0 0.0
  %7352 = vmatpush.msra.mxu0 0.0
  %7353 = vmatpush.msra.mxu0 0.0
  %7354 = vmatpush.msra.mxu0 0.0
  %7355 = vmatpush.msra.mxu0 0.0
  %7356 = vmatpush.msra.mxu0 0.0
  %7357 = vmatpush.msra.mxu0 0.0
  %7358 = vmatpush.msra.mxu0 0.0
  %v7359 = vand.u32 %v7180, 4294901760
  %v7360 = vsub.f32 %v7180, %v7359
  %v7361 = vand.u32 %v7360, 4294901760
  %7362 = vmatpush.msra.mxu0 %v7361
  %v7363 = vand.u32 %v7166, 4294901760
  %v7364 = vsub.f32 %v7166, %v7363
  %v7365 = vand.u32 %v7364, 4294901760
  %7366 = vmatpush.msra.mxu0 %v7365
  %v7367 = vand.u32 %v7164, 4294901760
  %v7368 = vsub.f32 %v7164, %v7367
  %v7369 = vand.u32 %v7368, 4294901760
  %7370 = vmatpush.msra.mxu0 %v7369
  %v7371 = vand.u32 %v7172, 4294901760
  %7372 = vmatmul.f32.gmra.mxu0 %v7371
  %v7373 = vpop.f32.mrf.mxu0
  %v7374 = vadd.f32 %v7332, %v7373
  %v7375 = vand.u32 %v7175, 4294901760
  %7376 = vmatmul.f32.gmra.mxu0 %v7375
  %v7377 = vpop.f32.mrf.mxu0
  %v7378 = vadd.f32 %v7338, %v7377
  %v7379 = vand.u32 %v7178, 4294901760
  %7380 = vmatmul.f32.gmra.mxu0 %v7379
  %v7381 = vpop.f32.mrf.mxu0
  %v7382 = vadd.f32 %v7344, %v7381
  %7383 = vdwg.mxu0
  %7384 = vmatpush.msra.mxu0 0.0
  %7385 = vmatpush.msra.mxu0 0.0
  %7386 = vmatpush.msra.mxu0 0.0
  %7387 = vmatpush.msra.mxu0 0.0
  %7388 = vmatpush.msra.mxu0 0.0
  %7389 = vmatpush.msra.mxu0 0.0
  %7390 = vmatpush.msra.mxu0 0.0
  %7391 = vmatpush.msra.mxu0 0.0
  %7392 = vmatpush.msra.mxu0 0.0
  %7393 = vmatpush.msra.mxu0 0.0
  %7394 = vmatpush.msra.mxu0 0.0
  %7395 = vmatpush.msra.mxu0 0.0
  %7396 = vmatpush.msra.mxu0 0.0
  %v7397 = vand.u32 %v7180, 4294901760
  %7398 = vmatpush.msra.mxu0 %v7397
  %v7399 = vand.u32 %v7166, 4294901760
  %7400 = vmatpush.msra.mxu0 %v7399
  %v7401 = vand.u32 %v7164, 4294901760
  %7402 = vmatpush.msra.mxu0 %v7401
  %v7403 = vand.u32 %v7172, 4294901760
  %7404 = vmatmul.f32.gmra.mxu0 %v7403
  %v7405 = vpop.f32.mrf.mxu0
  %v7406 = vadd.f32 %v7374, %v7405
  %v7407 = vand.u32 %v7175, 4294901760
  %7408 = vmatmul.f32.gmra.mxu0 %v7407
  %v7409 = vpop.f32.mrf.mxu0
  %v7410 = vadd.f32 %v7378, %v7409
  %v7411 = vand.u32 %v7178, 4294901760
  %7412 = vmatmul.f32.gmra.mxu0 %v7411
  %v7413 = vpop.f32.mrf.mxu0
  %v7414 = vadd.f32 %v7382, %v7413
  %7415 = vdwg.mxu0
  %v7417 = vsel %vm1208, %v7406, 0
  %v7420 = vsel %vm1208, %v7410, 0
  %v7423 = vsel %vm1208, %v7414, 0
  %7425 = vmatpush.msra.mxu0 0.0
  %7426 = vmatpush.msra.mxu0 0.0
  %7427 = vmatpush.msra.mxu0 0.0
  %7428 = vmatpush.msra.mxu0 0.0
  %7429 = vmatpush.msra.mxu0 0.0
  %7430 = vmatpush.msra.mxu0 0.0
  %7431 = vmatpush.msra.mxu0 0.0
  %7432 = vmatpush.msra.mxu0 0.0
  %7433 = vmatpush.msra.mxu0 0.0
  %7434 = vmatpush.msra.mxu0 0.0
  %7435 = vmatpush.msra.mxu0 0.0
  %7436 = vmatpush.msra.mxu0 0.0
  %7437 = vmatpush.msra.mxu0 0.0
  %7438 = vmatpush.msra.mxu0 0.0
  %7439 = vmatpush.msra.mxu0 0.0
  %v7440 = vand.u32 %v5333, 4294901760
  %7441 = vmatpush.msra.mxu0 %v7440
  %v7442 = vand.u32 %v7417, 4294901760
  %v7443 = vsub.f32 %v7417, %v7442
  %v7444 = vand.u32 %v7443, 4294901760
  %v7445 = vsub.f32 %v7443, %v7444
  %v7446 = vand.u32 %v7445, 4294901760
  %7447 = vmatmul.f32.gmra.mxu0 %v7446
  %v7448 = vpop.f32.mrf.mxu0
  %v7449 = vadd.f32 0.0, %v7448
  %v7450 = vand.u32 %v7420, 4294901760
  %v7451 = vsub.f32 %v7420, %v7450
  %v7452 = vand.u32 %v7451, 4294901760
  %v7453 = vsub.f32 %v7451, %v7452
  %v7454 = vand.u32 %v7453, 4294901760
  %7455 = vmatmul.f32.gmra.mxu0 %v7454
  %v7456 = vpop.f32.mrf.mxu0
  %v7457 = vadd.f32 0.0, %v7456
  %v7458 = vand.u32 %v7423, 4294901760
  %v7459 = vsub.f32 %v7423, %v7458
  %v7460 = vand.u32 %v7459, 4294901760
  %v7461 = vsub.f32 %v7459, %v7460
  %v7462 = vand.u32 %v7461, 4294901760
  %7463 = vmatmul.f32.gmra.mxu0 %v7462
  %v7464 = vpop.f32.mrf.mxu0
  %v7465 = vadd.f32 0.0, %v7464
  %7466 = vdwg.mxu0
  %7467 = vmatpush.msra.mxu0 0.0
  %7468 = vmatpush.msra.mxu0 0.0
  %7469 = vmatpush.msra.mxu0 0.0
  %7470 = vmatpush.msra.mxu0 0.0
  %7471 = vmatpush.msra.mxu0 0.0
  %7472 = vmatpush.msra.mxu0 0.0
  %7473 = vmatpush.msra.mxu0 0.0
  %7474 = vmatpush.msra.mxu0 0.0
  %7475 = vmatpush.msra.mxu0 0.0
  %7476 = vmatpush.msra.mxu0 0.0
  %7477 = vmatpush.msra.mxu0 0.0
  %7478 = vmatpush.msra.mxu0 0.0
  %7479 = vmatpush.msra.mxu0 0.0
  %7480 = vmatpush.msra.mxu0 0.0
  %7481 = vmatpush.msra.mxu0 0.0
  %v7482 = vand.u32 %v5333, 4294901760
  %v7483 = vsub.f32 %v5333, %v7482
  %v7484 = vand.u32 %v7483, 4294901760
  %v7485 = vsub.f32 %v7483, %v7484
  %v7486 = vand.u32 %v7485, 4294901760
  %7487 = vmatpush.msra.mxu0 %v7486
  %v7488 = vand.u32 %v7417, 4294901760
  %7489 = vmatmul.f32.gmra.mxu0 %v7488
  %v7490 = vpop.f32.mrf.mxu0
  %v7491 = vadd.f32 %v7449, %v7490
  %v7492 = vand.u32 %v7420, 4294901760
  %7493 = vmatmul.f32.gmra.mxu0 %v7492
  %v7494 = vpop.f32.mrf.mxu0
  %v7495 = vadd.f32 %v7457, %v7494
  %v7496 = vand.u32 %v7423, 4294901760
  %7497 = vmatmul.f32.gmra.mxu0 %v7496
  %v7498 = vpop.f32.mrf.mxu0
  %v7499 = vadd.f32 %v7465, %v7498
  %7500 = vdwg.mxu0
  %7501 = vmatpush.msra.mxu0 0.0
  %7502 = vmatpush.msra.mxu0 0.0
  %7503 = vmatpush.msra.mxu0 0.0
  %7504 = vmatpush.msra.mxu0 0.0
  %7505 = vmatpush.msra.mxu0 0.0
  %7506 = vmatpush.msra.mxu0 0.0
  %7507 = vmatpush.msra.mxu0 0.0
  %7508 = vmatpush.msra.mxu0 0.0
  %7509 = vmatpush.msra.mxu0 0.0
  %7510 = vmatpush.msra.mxu0 0.0
  %7511 = vmatpush.msra.mxu0 0.0
  %7512 = vmatpush.msra.mxu0 0.0
  %7513 = vmatpush.msra.mxu0 0.0
  %7514 = vmatpush.msra.mxu0 0.0
  %7515 = vmatpush.msra.mxu0 0.0
  %v7516 = vand.u32 %v5333, 4294901760
  %v7517 = vsub.f32 %v5333, %v7516
  %7518 = vmatpush.msra.mxu0 %v7517
  %v7519 = vand.u32 %v7417, 4294901760
  %v7520 = vsub.f32 %v7417, %v7519
  %7521 = vmatmul.f32.gmra.mxu0 %v7520
  %v7522 = vpop.f32.mrf.mxu0
  %v7523 = vadd.f32 %v7491, %v7522
  %v7524 = vand.u32 %v7420, 4294901760
  %v7525 = vsub.f32 %v7420, %v7524
  %7526 = vmatmul.f32.gmra.mxu0 %v7525
  %v7527 = vpop.f32.mrf.mxu0
  %v7528 = vadd.f32 %v7495, %v7527
  %v7529 = vand.u32 %v7423, 4294901760
  %v7530 = vsub.f32 %v7423, %v7529
  %7531 = vmatmul.f32.gmra.mxu0 %v7530
  %v7532 = vpop.f32.mrf.mxu0
  %v7533 = vadd.f32 %v7499, %v7532
  %7534 = vdwg.mxu0
  %7535 = vmatpush.msra.mxu0 0.0
  %7536 = vmatpush.msra.mxu0 0.0
  %7537 = vmatpush.msra.mxu0 0.0
  %7538 = vmatpush.msra.mxu0 0.0
  %7539 = vmatpush.msra.mxu0 0.0
  %7540 = vmatpush.msra.mxu0 0.0
  %7541 = vmatpush.msra.mxu0 0.0
  %7542 = vmatpush.msra.mxu0 0.0
  %7543 = vmatpush.msra.mxu0 0.0
  %7544 = vmatpush.msra.mxu0 0.0
  %7545 = vmatpush.msra.mxu0 0.0
  %7546 = vmatpush.msra.mxu0 0.0
  %7547 = vmatpush.msra.mxu0 0.0
  %7548 = vmatpush.msra.mxu0 0.0
  %7549 = vmatpush.msra.mxu0 0.0
  %v7550 = vand.u32 %v5333, 4294901760
  %7551 = vmatpush.msra.mxu0 %v7550
  %v7552 = vand.u32 %v7417, 4294901760
  %v7553 = vsub.f32 %v7417, %v7552
  %v7554 = vand.u32 %v7553, 4294901760
  %7555 = vmatmul.f32.gmra.mxu0 %v7554
  %v7556 = vpop.f32.mrf.mxu0
  %v7557 = vadd.f32 %v7523, %v7556
  %v7558 = vand.u32 %v7420, 4294901760
  %v7559 = vsub.f32 %v7420, %v7558
  %v7560 = vand.u32 %v7559, 4294901760
  %7561 = vmatmul.f32.gmra.mxu0 %v7560
  %v7562 = vpop.f32.mrf.mxu0
  %v7563 = vadd.f32 %v7528, %v7562
  %v7564 = vand.u32 %v7423, 4294901760
  %v7565 = vsub.f32 %v7423, %v7564
  %v7566 = vand.u32 %v7565, 4294901760
  %7567 = vmatmul.f32.gmra.mxu0 %v7566
  %v7568 = vpop.f32.mrf.mxu0
  %v7569 = vadd.f32 %v7533, %v7568
  %7570 = vdwg.mxu0
  %7571 = vmatpush.msra.mxu0 0.0
  %7572 = vmatpush.msra.mxu0 0.0
  %7573 = vmatpush.msra.mxu0 0.0
  %7574 = vmatpush.msra.mxu0 0.0
  %7575 = vmatpush.msra.mxu0 0.0
  %7576 = vmatpush.msra.mxu0 0.0
  %7577 = vmatpush.msra.mxu0 0.0
  %7578 = vmatpush.msra.mxu0 0.0
  %7579 = vmatpush.msra.mxu0 0.0
  %7580 = vmatpush.msra.mxu0 0.0
  %7581 = vmatpush.msra.mxu0 0.0
  %7582 = vmatpush.msra.mxu0 0.0
  %7583 = vmatpush.msra.mxu0 0.0
  %7584 = vmatpush.msra.mxu0 0.0
  %7585 = vmatpush.msra.mxu0 0.0
  %v7586 = vand.u32 %v5333, 4294901760
  %v7587 = vsub.f32 %v5333, %v7586
  %v7588 = vand.u32 %v7587, 4294901760
  %7589 = vmatpush.msra.mxu0 %v7588
  %v7590 = vand.u32 %v7417, 4294901760
  %7591 = vmatmul.f32.gmra.mxu0 %v7590
  %v7592 = vpop.f32.mrf.mxu0
  %v7593 = vadd.f32 %v7557, %v7592
  %v7594 = vand.u32 %v7420, 4294901760
  %7595 = vmatmul.f32.gmra.mxu0 %v7594
  %v7596 = vpop.f32.mrf.mxu0
  %v7597 = vadd.f32 %v7563, %v7596
  %v7598 = vand.u32 %v7423, 4294901760
  %7599 = vmatmul.f32.gmra.mxu0 %v7598
  %v7600 = vpop.f32.mrf.mxu0
  %v7601 = vadd.f32 %v7569, %v7600
  %7602 = vdwg.mxu0
  %7603 = vmatpush.msra.mxu0 0.0
  %7604 = vmatpush.msra.mxu0 0.0
  %7605 = vmatpush.msra.mxu0 0.0
  %7606 = vmatpush.msra.mxu0 0.0
  %7607 = vmatpush.msra.mxu0 0.0
  %7608 = vmatpush.msra.mxu0 0.0
  %7609 = vmatpush.msra.mxu0 0.0
  %7610 = vmatpush.msra.mxu0 0.0
  %7611 = vmatpush.msra.mxu0 0.0
  %7612 = vmatpush.msra.mxu0 0.0
  %7613 = vmatpush.msra.mxu0 0.0
  %7614 = vmatpush.msra.mxu0 0.0
  %7615 = vmatpush.msra.mxu0 0.0
  %7616 = vmatpush.msra.mxu0 0.0
  %7617 = vmatpush.msra.mxu0 0.0
  %v7618 = vand.u32 %v5333, 4294901760
  %7619 = vmatpush.msra.mxu0 %v7618
  %v7620 = vand.u32 %v7417, 4294901760
  %7621 = vmatmul.f32.gmra.mxu0 %v7620
  %v7622 = vpop.f32.mrf.mxu0
  %v7623 = vadd.f32 %v7593, %v7622
  %v7624 = vand.u32 %v7420, 4294901760
  %7625 = vmatmul.f32.gmra.mxu0 %v7624
  %v7626 = vpop.f32.mrf.mxu0
  %v7627 = vadd.f32 %v7597, %v7626
  %v7628 = vand.u32 %v7423, 4294901760
  %7629 = vmatmul.f32.gmra.mxu0 %v7628
  %v7630 = vpop.f32.mrf.mxu0
  %v7631 = vadd.f32 %v7601, %v7630
  %7632 = vdwg.mxu0
  %v7633 = vadd.f32 %v6856, %v7623
  %v7634 = vadd.f32 %v6860, %v7627
  %v7635 = vadd.f32 %v6864, %v7631
  %7636 = vrot.lane.b32.xlu0 %v5320, 104
  %v7637 = vpop.permute.xlu0 %7636
  %7638 = vrot.lane.b32.xlu0 %v5324, 104
  %v7639 = vpop.permute.xlu0 %7638
  %7640 = vrot.lane.b32.xlu0 %v5328, 104
  %v7641 = vpop.permute.xlu0 %7640
  %7642 = vrot.lane.b32.xlu0 %v5320, 72
  %v7643 = vpop.permute.xlu0 %7642
  %7644 = vrot.lane.b32.xlu0 %v5324, 72
  %v7645 = vpop.permute.xlu0 %7644
  %7646 = vrot.lane.b32.xlu0 %v5328, 72
  %v7647 = vpop.permute.xlu0 %7646
  %v7648 = vsel %vm1208, %v7637, 0
  %v7650 = vsel %vm1208, %v7639, 0
  %v7652 = vsel %vm1208, %v7641, 0
  %v7654 = vsel %vm1208, %v7643, 0
  %v7656 = vsel %vm1208, %v7645, 0
  %v7658 = vsel %vm1208, %v7647, 0
  %7660 = vmatpush.xpose.msra.mxu0 0.0
  %7661 = vmatpush.xpose.msra.mxu0 0.0
  %7662 = vmatpush.xpose.msra.mxu0 0.0
  %7663 = vmatpush.xpose.msra.mxu0 0.0
  %7664 = vmatpush.xpose.msra.mxu0 0.0
  %7665 = vmatpush.xpose.msra.mxu0 0.0
  %7666 = vmatpush.xpose.msra.mxu0 0.0
  %7667 = vmatpush.xpose.msra.mxu0 0.0
  %7668 = vmatpush.xpose.msra.mxu0 0.0
  %7669 = vmatpush.xpose.msra.mxu0 0.0
  %7670 = vmatpush.xpose.msra.mxu0 0.0
  %7671 = vmatpush.xpose.msra.mxu0 0.0
  %7672 = vmatpush.xpose.msra.mxu0 0.0
  %v7673 = vand.u32 %v7658, 4294901760
  %7674 = vmatpush.xpose.msra.mxu0 %v7673
  %v7675 = vand.u32 %v7656, 4294901760
  %7676 = vmatpush.xpose.msra.mxu0 %v7675
  %v7677 = vand.u32 %v7654, 4294901760
  %7678 = vmatpush.xpose.msra.mxu0 %v7677
  %v7679 = vand.u32 %v7648, 4294901760
  %v7680 = vsub.f32 %v7648, %v7679
  %v7681 = vand.u32 %v7680, 4294901760
  %v7682 = vsub.f32 %v7680, %v7681
  %v7683 = vand.u32 %v7682, 4294901760
  %7684 = vmatmul.f32.gmra.mxu0 %v7683
  %v7685 = vpop.f32.mrf.mxu0
  %v7686 = vadd.f32 0.0, %v7685
  %v7687 = vand.u32 %v7650, 4294901760
  %v7688 = vsub.f32 %v7650, %v7687
  %v7689 = vand.u32 %v7688, 4294901760
  %v7690 = vsub.f32 %v7688, %v7689
  %v7691 = vand.u32 %v7690, 4294901760
  %7692 = vmatmul.f32.gmra.mxu0 %v7691
  %v7693 = vpop.f32.mrf.mxu0
  %v7694 = vadd.f32 0.0, %v7693
  %v7695 = vand.u32 %v7652, 4294901760
  %v7696 = vsub.f32 %v7652, %v7695
  %v7697 = vand.u32 %v7696, 4294901760
  %v7698 = vsub.f32 %v7696, %v7697
  %v7699 = vand.u32 %v7698, 4294901760
  %7700 = vmatmul.f32.gmra.mxu0 %v7699
  %v7701 = vpop.f32.mrf.mxu0
  %v7702 = vadd.f32 0.0, %v7701
  %7703 = vdwg.mxu0
  %7704 = vmatpush.xpose.msra.mxu0 0.0
  %7705 = vmatpush.xpose.msra.mxu0 0.0
  %7706 = vmatpush.xpose.msra.mxu0 0.0
  %7707 = vmatpush.xpose.msra.mxu0 0.0
  %7708 = vmatpush.xpose.msra.mxu0 0.0
  %7709 = vmatpush.xpose.msra.mxu0 0.0
  %7710 = vmatpush.xpose.msra.mxu0 0.0
  %7711 = vmatpush.xpose.msra.mxu0 0.0
  %7712 = vmatpush.xpose.msra.mxu0 0.0
  %7713 = vmatpush.xpose.msra.mxu0 0.0
  %7714 = vmatpush.xpose.msra.mxu0 0.0
  %7715 = vmatpush.xpose.msra.mxu0 0.0
  %7716 = vmatpush.xpose.msra.mxu0 0.0
  %v7717 = vand.u32 %v7658, 4294901760
  %v7718 = vsub.f32 %v7658, %v7717
  %v7719 = vand.u32 %v7718, 4294901760
  %v7720 = vsub.f32 %v7718, %v7719
  %v7721 = vand.u32 %v7720, 4294901760
  %7722 = vmatpush.xpose.msra.mxu0 %v7721
  %v7723 = vand.u32 %v7656, 4294901760
  %v7724 = vsub.f32 %v7656, %v7723
  %v7725 = vand.u32 %v7724, 4294901760
  %v7726 = vsub.f32 %v7724, %v7725
  %v7727 = vand.u32 %v7726, 4294901760
  %7728 = vmatpush.xpose.msra.mxu0 %v7727
  %v7729 = vand.u32 %v7654, 4294901760
  %v7730 = vsub.f32 %v7654, %v7729
  %v7731 = vand.u32 %v7730, 4294901760
  %v7732 = vsub.f32 %v7730, %v7731
  %v7733 = vand.u32 %v7732, 4294901760
  %7734 = vmatpush.xpose.msra.mxu0 %v7733
  %v7735 = vand.u32 %v7648, 4294901760
  %7736 = vmatmul.f32.gmra.mxu0 %v7735
  %v7737 = vpop.f32.mrf.mxu0
  %v7738 = vadd.f32 %v7686, %v7737
  %v7739 = vand.u32 %v7650, 4294901760
  %7740 = vmatmul.f32.gmra.mxu0 %v7739
  %v7741 = vpop.f32.mrf.mxu0
  %v7742 = vadd.f32 %v7694, %v7741
  %v7743 = vand.u32 %v7652, 4294901760
  %7744 = vmatmul.f32.gmra.mxu0 %v7743
  %v7745 = vpop.f32.mrf.mxu0
  %v7746 = vadd.f32 %v7702, %v7745
  %7747 = vdwg.mxu0
  %7748 = vmatpush.xpose.msra.mxu0 0.0
  %7749 = vmatpush.xpose.msra.mxu0 0.0
  %7750 = vmatpush.xpose.msra.mxu0 0.0
  %7751 = vmatpush.xpose.msra.mxu0 0.0
  %7752 = vmatpush.xpose.msra.mxu0 0.0
  %7753 = vmatpush.xpose.msra.mxu0 0.0
  %7754 = vmatpush.xpose.msra.mxu0 0.0
  %7755 = vmatpush.xpose.msra.mxu0 0.0
  %7756 = vmatpush.xpose.msra.mxu0 0.0
  %7757 = vmatpush.xpose.msra.mxu0 0.0
  %7758 = vmatpush.xpose.msra.mxu0 0.0
  %7759 = vmatpush.xpose.msra.mxu0 0.0
  %7760 = vmatpush.xpose.msra.mxu0 0.0
  %v7761 = vand.u32 %v7658, 4294901760
  %v7762 = vsub.f32 %v7658, %v7761
  %7763 = vmatpush.xpose.msra.mxu0 %v7762
  %v7764 = vand.u32 %v7656, 4294901760
  %v7765 = vsub.f32 %v7656, %v7764
  %7766 = vmatpush.xpose.msra.mxu0 %v7765
  %v7767 = vand.u32 %v7654, 4294901760
  %v7768 = vsub.f32 %v7654, %v7767
  %7769 = vmatpush.xpose.msra.mxu0 %v7768
  %v7770 = vand.u32 %v7648, 4294901760
  %v7771 = vsub.f32 %v7648, %v7770
  %7772 = vmatmul.f32.gmra.mxu0 %v7771
  %v7773 = vpop.f32.mrf.mxu0
  %v7774 = vadd.f32 %v7738, %v7773
  %v7775 = vand.u32 %v7650, 4294901760
  %v7776 = vsub.f32 %v7650, %v7775
  %7777 = vmatmul.f32.gmra.mxu0 %v7776
  %v7778 = vpop.f32.mrf.mxu0
  %v7779 = vadd.f32 %v7742, %v7778
  %v7780 = vand.u32 %v7652, 4294901760
  %v7781 = vsub.f32 %v7652, %v7780
  %7782 = vmatmul.f32.gmra.mxu0 %v7781
  %v7783 = vpop.f32.mrf.mxu0
  %v7784 = vadd.f32 %v7746, %v7783
  %7785 = vdwg.mxu0
  %7786 = vmatpush.xpose.msra.mxu0 0.0
  %7787 = vmatpush.xpose.msra.mxu0 0.0
  %7788 = vmatpush.xpose.msra.mxu0 0.0
  %7789 = vmatpush.xpose.msra.mxu0 0.0
  %7790 = vmatpush.xpose.msra.mxu0 0.0
  %7791 = vmatpush.xpose.msra.mxu0 0.0
  %7792 = vmatpush.xpose.msra.mxu0 0.0
  %7793 = vmatpush.xpose.msra.mxu0 0.0
  %7794 = vmatpush.xpose.msra.mxu0 0.0
  %7795 = vmatpush.xpose.msra.mxu0 0.0
  %7796 = vmatpush.xpose.msra.mxu0 0.0
  %7797 = vmatpush.xpose.msra.mxu0 0.0
  %7798 = vmatpush.xpose.msra.mxu0 0.0
  %v7799 = vand.u32 %v7658, 4294901760
  %7800 = vmatpush.xpose.msra.mxu0 %v7799
  %v7801 = vand.u32 %v7656, 4294901760
  %7802 = vmatpush.xpose.msra.mxu0 %v7801
  %v7803 = vand.u32 %v7654, 4294901760
  %7804 = vmatpush.xpose.msra.mxu0 %v7803
  %v7805 = vand.u32 %v7648, 4294901760
  %v7806 = vsub.f32 %v7648, %v7805
  %v7807 = vand.u32 %v7806, 4294901760
  %7808 = vmatmul.f32.gmra.mxu0 %v7807
  %v7809 = vpop.f32.mrf.mxu0
  %v7810 = vadd.f32 %v7774, %v7809
  %v7811 = vand.u32 %v7650, 4294901760
  %v7812 = vsub.f32 %v7650, %v7811
  %v7813 = vand.u32 %v7812, 4294901760
  %7814 = vmatmul.f32.gmra.mxu0 %v7813
  %v7815 = vpop.f32.mrf.mxu0
  %v7816 = vadd.f32 %v7779, %v7815
  %v7817 = vand.u32 %v7652, 4294901760
  %v7818 = vsub.f32 %v7652, %v7817
  %v7819 = vand.u32 %v7818, 4294901760
  %7820 = vmatmul.f32.gmra.mxu0 %v7819
  %v7821 = vpop.f32.mrf.mxu0
  %v7822 = vadd.f32 %v7784, %v7821
  %7823 = vdwg.mxu0
  %7824 = vmatpush.xpose.msra.mxu0 0.0
  %7825 = vmatpush.xpose.msra.mxu0 0.0
  %7826 = vmatpush.xpose.msra.mxu0 0.0
  %7827 = vmatpush.xpose.msra.mxu0 0.0
  %7828 = vmatpush.xpose.msra.mxu0 0.0
  %7829 = vmatpush.xpose.msra.mxu0 0.0
  %7830 = vmatpush.xpose.msra.mxu0 0.0
  %7831 = vmatpush.xpose.msra.mxu0 0.0
  %7832 = vmatpush.xpose.msra.mxu0 0.0
  %7833 = vmatpush.xpose.msra.mxu0 0.0
  %7834 = vmatpush.xpose.msra.mxu0 0.0
  %7835 = vmatpush.xpose.msra.mxu0 0.0
  %7836 = vmatpush.xpose.msra.mxu0 0.0
  %v7837 = vand.u32 %v7658, 4294901760
  %v7838 = vsub.f32 %v7658, %v7837
  %v7839 = vand.u32 %v7838, 4294901760
  %7840 = vmatpush.xpose.msra.mxu0 %v7839
  %v7841 = vand.u32 %v7656, 4294901760
  %v7842 = vsub.f32 %v7656, %v7841
  %v7843 = vand.u32 %v7842, 4294901760
  %7844 = vmatpush.xpose.msra.mxu0 %v7843
  %v7845 = vand.u32 %v7654, 4294901760
  %v7846 = vsub.f32 %v7654, %v7845
  %v7847 = vand.u32 %v7846, 4294901760
  %7848 = vmatpush.xpose.msra.mxu0 %v7847
  %v7849 = vand.u32 %v7648, 4294901760
  %7850 = vmatmul.f32.gmra.mxu0 %v7849
  %v7851 = vpop.f32.mrf.mxu0
  %v7852 = vadd.f32 %v7810, %v7851
  %v7853 = vand.u32 %v7650, 4294901760
  %7854 = vmatmul.f32.gmra.mxu0 %v7853
  %v7855 = vpop.f32.mrf.mxu0
  %v7856 = vadd.f32 %v7816, %v7855
  %v7857 = vand.u32 %v7652, 4294901760
  %7858 = vmatmul.f32.gmra.mxu0 %v7857
  %v7859 = vpop.f32.mrf.mxu0
  %v7860 = vadd.f32 %v7822, %v7859
  %7861 = vdwg.mxu0
  %7862 = vmatpush.xpose.msra.mxu0 0.0
  %7863 = vmatpush.xpose.msra.mxu0 0.0
  %7864 = vmatpush.xpose.msra.mxu0 0.0
  %7865 = vmatpush.xpose.msra.mxu0 0.0
  %7866 = vmatpush.xpose.msra.mxu0 0.0
  %7867 = vmatpush.xpose.msra.mxu0 0.0
  %7868 = vmatpush.xpose.msra.mxu0 0.0
  %7869 = vmatpush.xpose.msra.mxu0 0.0
  %7870 = vmatpush.xpose.msra.mxu0 0.0
  %7871 = vmatpush.xpose.msra.mxu0 0.0
  %7872 = vmatpush.xpose.msra.mxu0 0.0
  %7873 = vmatpush.xpose.msra.mxu0 0.0
  %7874 = vmatpush.xpose.msra.mxu0 0.0
  %v7875 = vand.u32 %v7658, 4294901760
  %7876 = vmatpush.xpose.msra.mxu0 %v7875
  %v7877 = vand.u32 %v7656, 4294901760
  %7878 = vmatpush.xpose.msra.mxu0 %v7877
  %v7879 = vand.u32 %v7654, 4294901760
  %7880 = vmatpush.xpose.msra.mxu0 %v7879
  %v7881 = vand.u32 %v7648, 4294901760
  %7882 = vmatmul.f32.gmra.mxu0 %v7881
  %v7883 = vpop.f32.mrf.mxu0
  %v7884 = vadd.f32 %v7852, %v7883
  %v7885 = vand.u32 %v7650, 4294901760
  %7886 = vmatmul.f32.gmra.mxu0 %v7885
  %v7887 = vpop.f32.mrf.mxu0
  %v7888 = vadd.f32 %v7856, %v7887
  %v7889 = vand.u32 %v7652, 4294901760
  %7890 = vmatmul.f32.gmra.mxu0 %v7889
  %v7891 = vpop.f32.mrf.mxu0
  %v7892 = vadd.f32 %v7860, %v7891
  %7893 = vdwg.mxu0
  %v7894 = vmul.f32 %v7884, 0.35355338
  %v7895 = vmul.f32 %v7888, 0.35355338
  %v7896 = vmul.f32 %v7892, 0.35355338
  %v7897 = vadd.f32 %v7894, %v76
  %v7898 = vadd.f32 %v7895, %v77
  %v7899 = vadd.f32 %v7896, %v78
  %v7900 = vsel %vm1461, %v7897, -inf
  %7901 = vmax.xlane.f32.xlu0 %v7900
  %v7902 = vpop.xlane.xlu0 %7901
  %v7903 = vsel %vm1461, %v7898, -inf
  %7904 = vmax.xlane.f32.xlu0 %v7903
  %v7905 = vpop.xlane.xlu0 %7904
  %v7906 = vsel %vm1468, %v7899, -inf
  %7907 = vmax.xlane.f32.xlu0 %v7906
  %v7908 = vpop.xlane.xlu0 %7907
  %v7909 = vsub.f32 %v7897, %v7902
  %v7910 = vsub.f32 %v7898, %v7905
  %v7911 = vsub.f32 %v7899, %v7908
  %v7912 = vmul.f32 %v7909, 1.442695
  %v7913 = vpow.pop %v7912
  %v7914 = vmul.f32 %v7910, 1.442695
  %v7915 = vpow.pop %v7914
  %v7916 = vmul.f32 %v7911, 1.442695
  %v7917 = vpow.pop %v7916
  %v7918 = vsel %vm1461, %v7913, 0.0
  %7919 = vadd.xlane.f32.xlu0 %v7918
  %v7920 = vpop.xlane.xlu0 %7919
  %v7921 = vsel %vm1461, %v7915, 0.0
  %7922 = vadd.xlane.f32.xlu0 %v7921
  %v7923 = vpop.xlane.xlu0 %7922
  %v7924 = vsel %vm1468, %v7917, 0.0
  %7925 = vadd.xlane.f32.xlu0 %v7924
  %v7926 = vpop.xlane.xlu0 %7925
  %v7927 = vrcp.pop %v7920
  %v7928 = vrcp.pop %v7923
  %v7929 = vrcp.pop %v7926
  %v7930 = vmul.f32 %v7913, %v7927
  %v7931 = vmul.f32 %v7915, %v7928
  %v7932 = vmul.f32 %v7917, %v7929
  %7933 = vrot.lane.b32.xlu0 %v5320, 40
  %v7934 = vpop.permute.xlu0 %7933
  %7935 = vrot.lane.b32.xlu0 %v5324, 40
  %v7936 = vpop.permute.xlu0 %7935
  %7937 = vrot.lane.b32.xlu0 %v5328, 40
  %v7938 = vpop.permute.xlu0 %7937
  %v7942 = vsel %vm1461, %v7930, 0
  %v7945 = vsel %vm1461, %v7931, 0
  %v7948 = vsel %vm1461, %v7932, 0
  %v7950 = vsel %vm1513, %v7938, 0
  %7952 = vmatpush.msra.mxu0 0.0
  %7953 = vmatpush.msra.mxu0 0.0
  %7954 = vmatpush.msra.mxu0 0.0
  %7955 = vmatpush.msra.mxu0 0.0
  %7956 = vmatpush.msra.mxu0 0.0
  %7957 = vmatpush.msra.mxu0 0.0
  %7958 = vmatpush.msra.mxu0 0.0
  %7959 = vmatpush.msra.mxu0 0.0
  %7960 = vmatpush.msra.mxu0 0.0
  %7961 = vmatpush.msra.mxu0 0.0
  %7962 = vmatpush.msra.mxu0 0.0
  %7963 = vmatpush.msra.mxu0 0.0
  %7964 = vmatpush.msra.mxu0 0.0
  %v7965 = vand.u32 %v7950, 4294901760
  %7966 = vmatpush.msra.mxu0 %v7965
  %v7967 = vand.u32 %v7936, 4294901760
  %7968 = vmatpush.msra.mxu0 %v7967
  %v7969 = vand.u32 %v7934, 4294901760
  %7970 = vmatpush.msra.mxu0 %v7969
  %v7971 = vand.u32 %v7942, 4294901760
  %v7972 = vsub.f32 %v7942, %v7971
  %v7973 = vand.u32 %v7972, 4294901760
  %v7974 = vsub.f32 %v7972, %v7973
  %v7975 = vand.u32 %v7974, 4294901760
  %7976 = vmatmul.f32.gmra.mxu0 %v7975
  %v7977 = vpop.f32.mrf.mxu0
  %v7978 = vadd.f32 0.0, %v7977
  %v7979 = vand.u32 %v7945, 4294901760
  %v7980 = vsub.f32 %v7945, %v7979
  %v7981 = vand.u32 %v7980, 4294901760
  %v7982 = vsub.f32 %v7980, %v7981
  %v7983 = vand.u32 %v7982, 4294901760
  %7984 = vmatmul.f32.gmra.mxu0 %v7983
  %v7985 = vpop.f32.mrf.mxu0
  %v7986 = vadd.f32 0.0, %v7985
  %v7987 = vand.u32 %v7948, 4294901760
  %v7988 = vsub.f32 %v7948, %v7987
  %v7989 = vand.u32 %v7988, 4294901760
  %v7990 = vsub.f32 %v7988, %v7989
  %v7991 = vand.u32 %v7990, 4294901760
  %7992 = vmatmul.f32.gmra.mxu0 %v7991
  %v7993 = vpop.f32.mrf.mxu0
  %v7994 = vadd.f32 0.0, %v7993
  %7995 = vdwg.mxu0
  %7996 = vmatpush.msra.mxu0 0.0
  %7997 = vmatpush.msra.mxu0 0.0
  %7998 = vmatpush.msra.mxu0 0.0
  %7999 = vmatpush.msra.mxu0 0.0
  %8000 = vmatpush.msra.mxu0 0.0
  %8001 = vmatpush.msra.mxu0 0.0
  %8002 = vmatpush.msra.mxu0 0.0
  %8003 = vmatpush.msra.mxu0 0.0
  %8004 = vmatpush.msra.mxu0 0.0
  %8005 = vmatpush.msra.mxu0 0.0
  %8006 = vmatpush.msra.mxu0 0.0
  %8007 = vmatpush.msra.mxu0 0.0
  %8008 = vmatpush.msra.mxu0 0.0
  %v8009 = vand.u32 %v7950, 4294901760
  %v8010 = vsub.f32 %v7950, %v8009
  %v8011 = vand.u32 %v8010, 4294901760
  %v8012 = vsub.f32 %v8010, %v8011
  %v8013 = vand.u32 %v8012, 4294901760
  %8014 = vmatpush.msra.mxu0 %v8013
  %v8015 = vand.u32 %v7936, 4294901760
  %v8016 = vsub.f32 %v7936, %v8015
  %v8017 = vand.u32 %v8016, 4294901760
  %v8018 = vsub.f32 %v8016, %v8017
  %v8019 = vand.u32 %v8018, 4294901760
  %8020 = vmatpush.msra.mxu0 %v8019
  %v8021 = vand.u32 %v7934, 4294901760
  %v8022 = vsub.f32 %v7934, %v8021
  %v8023 = vand.u32 %v8022, 4294901760
  %v8024 = vsub.f32 %v8022, %v8023
  %v8025 = vand.u32 %v8024, 4294901760
  %8026 = vmatpush.msra.mxu0 %v8025
  %v8027 = vand.u32 %v7942, 4294901760
  %8028 = vmatmul.f32.gmra.mxu0 %v8027
  %v8029 = vpop.f32.mrf.mxu0
  %v8030 = vadd.f32 %v7978, %v8029
  %v8031 = vand.u32 %v7945, 4294901760
  %8032 = vmatmul.f32.gmra.mxu0 %v8031
  %v8033 = vpop.f32.mrf.mxu0
  %v8034 = vadd.f32 %v7986, %v8033
  %v8035 = vand.u32 %v7948, 4294901760
  %8036 = vmatmul.f32.gmra.mxu0 %v8035
  %v8037 = vpop.f32.mrf.mxu0
  %v8038 = vadd.f32 %v7994, %v8037
  %8039 = vdwg.mxu0
  %8040 = vmatpush.msra.mxu0 0.0
  %8041 = vmatpush.msra.mxu0 0.0
  %8042 = vmatpush.msra.mxu0 0.0
  %8043 = vmatpush.msra.mxu0 0.0
  %8044 = vmatpush.msra.mxu0 0.0
  %8045 = vmatpush.msra.mxu0 0.0
  %8046 = vmatpush.msra.mxu0 0.0
  %8047 = vmatpush.msra.mxu0 0.0
  %8048 = vmatpush.msra.mxu0 0.0
  %8049 = vmatpush.msra.mxu0 0.0
  %8050 = vmatpush.msra.mxu0 0.0
  %8051 = vmatpush.msra.mxu0 0.0
  %8052 = vmatpush.msra.mxu0 0.0
  %v8053 = vand.u32 %v7950, 4294901760
  %v8054 = vsub.f32 %v7950, %v8053
  %8055 = vmatpush.msra.mxu0 %v8054
  %v8056 = vand.u32 %v7936, 4294901760
  %v8057 = vsub.f32 %v7936, %v8056
  %8058 = vmatpush.msra.mxu0 %v8057
  %v8059 = vand.u32 %v7934, 4294901760
  %v8060 = vsub.f32 %v7934, %v8059
  %8061 = vmatpush.msra.mxu0 %v8060
  %v8062 = vand.u32 %v7942, 4294901760
  %v8063 = vsub.f32 %v7942, %v8062
  %8064 = vmatmul.f32.gmra.mxu0 %v8063
  %v8065 = vpop.f32.mrf.mxu0
  %v8066 = vadd.f32 %v8030, %v8065
  %v8067 = vand.u32 %v7945, 4294901760
  %v8068 = vsub.f32 %v7945, %v8067
  %8069 = vmatmul.f32.gmra.mxu0 %v8068
  %v8070 = vpop.f32.mrf.mxu0
  %v8071 = vadd.f32 %v8034, %v8070
  %v8072 = vand.u32 %v7948, 4294901760
  %v8073 = vsub.f32 %v7948, %v8072
  %8074 = vmatmul.f32.gmra.mxu0 %v8073
  %v8075 = vpop.f32.mrf.mxu0
  %v8076 = vadd.f32 %v8038, %v8075
  %8077 = vdwg.mxu0
  %8078 = vmatpush.msra.mxu0 0.0
  %8079 = vmatpush.msra.mxu0 0.0
  %8080 = vmatpush.msra.mxu0 0.0
  %8081 = vmatpush.msra.mxu0 0.0
  %8082 = vmatpush.msra.mxu0 0.0
  %8083 = vmatpush.msra.mxu0 0.0
  %8084 = vmatpush.msra.mxu0 0.0
  %8085 = vmatpush.msra.mxu0 0.0
  %8086 = vmatpush.msra.mxu0 0.0
  %8087 = vmatpush.msra.mxu0 0.0
  %8088 = vmatpush.msra.mxu0 0.0
  %8089 = vmatpush.msra.mxu0 0.0
  %8090 = vmatpush.msra.mxu0 0.0
  %v8091 = vand.u32 %v7950, 4294901760
  %8092 = vmatpush.msra.mxu0 %v8091
  %v8093 = vand.u32 %v7936, 4294901760
  %8094 = vmatpush.msra.mxu0 %v8093
  %v8095 = vand.u32 %v7934, 4294901760
  %8096 = vmatpush.msra.mxu0 %v8095
  %v8097 = vand.u32 %v7942, 4294901760
  %v8098 = vsub.f32 %v7942, %v8097
  %v8099 = vand.u32 %v8098, 4294901760
  %8100 = vmatmul.f32.gmra.mxu0 %v8099
  %v8101 = vpop.f32.mrf.mxu0
  %v8102 = vadd.f32 %v8066, %v8101
  %v8103 = vand.u32 %v7945, 4294901760
  %v8104 = vsub.f32 %v7945, %v8103
  %v8105 = vand.u32 %v8104, 4294901760
  %8106 = vmatmul.f32.gmra.mxu0 %v8105
  %v8107 = vpop.f32.mrf.mxu0
  %v8108 = vadd.f32 %v8071, %v8107
  %v8109 = vand.u32 %v7948, 4294901760
  %v8110 = vsub.f32 %v7948, %v8109
  %v8111 = vand.u32 %v8110, 4294901760
  %8112 = vmatmul.f32.gmra.mxu0 %v8111
  %v8113 = vpop.f32.mrf.mxu0
  %v8114 = vadd.f32 %v8076, %v8113
  %8115 = vdwg.mxu0
  %8116 = vmatpush.msra.mxu0 0.0
  %8117 = vmatpush.msra.mxu0 0.0
  %8118 = vmatpush.msra.mxu0 0.0
  %8119 = vmatpush.msra.mxu0 0.0
  %8120 = vmatpush.msra.mxu0 0.0
  %8121 = vmatpush.msra.mxu0 0.0
  %8122 = vmatpush.msra.mxu0 0.0
  %8123 = vmatpush.msra.mxu0 0.0
  %8124 = vmatpush.msra.mxu0 0.0
  %8125 = vmatpush.msra.mxu0 0.0
  %8126 = vmatpush.msra.mxu0 0.0
  %8127 = vmatpush.msra.mxu0 0.0
  %8128 = vmatpush.msra.mxu0 0.0
  %v8129 = vand.u32 %v7950, 4294901760
  %v8130 = vsub.f32 %v7950, %v8129
  %v8131 = vand.u32 %v8130, 4294901760
  %8132 = vmatpush.msra.mxu0 %v8131
  %v8133 = vand.u32 %v7936, 4294901760
  %v8134 = vsub.f32 %v7936, %v8133
  %v8135 = vand.u32 %v8134, 4294901760
  %8136 = vmatpush.msra.mxu0 %v8135
  %v8137 = vand.u32 %v7934, 4294901760
  %v8138 = vsub.f32 %v7934, %v8137
  %v8139 = vand.u32 %v8138, 4294901760
  %8140 = vmatpush.msra.mxu0 %v8139
  %v8141 = vand.u32 %v7942, 4294901760
  %8142 = vmatmul.f32.gmra.mxu0 %v8141
  %v8143 = vpop.f32.mrf.mxu0
  %v8144 = vadd.f32 %v8102, %v8143
  %v8145 = vand.u32 %v7945, 4294901760
  %8146 = vmatmul.f32.gmra.mxu0 %v8145
  %v8147 = vpop.f32.mrf.mxu0
  %v8148 = vadd.f32 %v8108, %v8147
  %v8149 = vand.u32 %v7948, 4294901760
  %8150 = vmatmul.f32.gmra.mxu0 %v8149
  %v8151 = vpop.f32.mrf.mxu0
  %v8152 = vadd.f32 %v8114, %v8151
  %8153 = vdwg.mxu0
  %8154 = vmatpush.msra.mxu0 0.0
  %8155 = vmatpush.msra.mxu0 0.0
  %8156 = vmatpush.msra.mxu0 0.0
  %8157 = vmatpush.msra.mxu0 0.0
  %8158 = vmatpush.msra.mxu0 0.0
  %8159 = vmatpush.msra.mxu0 0.0
  %8160 = vmatpush.msra.mxu0 0.0
  %8161 = vmatpush.msra.mxu0 0.0
  %8162 = vmatpush.msra.mxu0 0.0
  %8163 = vmatpush.msra.mxu0 0.0
  %8164 = vmatpush.msra.mxu0 0.0
  %8165 = vmatpush.msra.mxu0 0.0
  %8166 = vmatpush.msra.mxu0 0.0
  %v8167 = vand.u32 %v7950, 4294901760
  %8168 = vmatpush.msra.mxu0 %v8167
  %v8169 = vand.u32 %v7936, 4294901760
  %8170 = vmatpush.msra.mxu0 %v8169
  %v8171 = vand.u32 %v7934, 4294901760
  %8172 = vmatpush.msra.mxu0 %v8171
  %v8173 = vand.u32 %v7942, 4294901760
  %8174 = vmatmul.f32.gmra.mxu0 %v8173
  %v8175 = vpop.f32.mrf.mxu0
  %v8176 = vadd.f32 %v8144, %v8175
  %v8177 = vand.u32 %v7945, 4294901760
  %8178 = vmatmul.f32.gmra.mxu0 %v8177
  %v8179 = vpop.f32.mrf.mxu0
  %v8180 = vadd.f32 %v8148, %v8179
  %v8181 = vand.u32 %v7948, 4294901760
  %8182 = vmatmul.f32.gmra.mxu0 %v8181
  %v8183 = vpop.f32.mrf.mxu0
  %v8184 = vadd.f32 %v8152, %v8183
  %8185 = vdwg.mxu0
  %v8187 = vsel %vm1208, %v8176, 0
  %v8190 = vsel %vm1208, %v8180, 0
  %v8193 = vsel %vm1208, %v8184, 0
  %8195 = vmatpush.msra.mxu0 0.0
  %8196 = vmatpush.msra.mxu0 0.0
  %8197 = vmatpush.msra.mxu0 0.0
  %8198 = vmatpush.msra.mxu0 0.0
  %8199 = vmatpush.msra.mxu0 0.0
  %8200 = vmatpush.msra.mxu0 0.0
  %8201 = vmatpush.msra.mxu0 0.0
  %8202 = vmatpush.msra.mxu0 0.0
  %8203 = vmatpush.msra.mxu0 0.0
  %8204 = vmatpush.msra.mxu0 0.0
  %8205 = vmatpush.msra.mxu0 0.0
  %8206 = vmatpush.msra.mxu0 0.0
  %8207 = vmatpush.msra.mxu0 0.0
  %8208 = vmatpush.msra.mxu0 0.0
  %8209 = vmatpush.msra.mxu0 0.0
  %v8210 = vand.u32 %v5334, 4294901760
  %8211 = vmatpush.msra.mxu0 %v8210
  %v8212 = vand.u32 %v8187, 4294901760
  %v8213 = vsub.f32 %v8187, %v8212
  %v8214 = vand.u32 %v8213, 4294901760
  %v8215 = vsub.f32 %v8213, %v8214
  %v8216 = vand.u32 %v8215, 4294901760
  %8217 = vmatmul.f32.gmra.mxu0 %v8216
  %v8218 = vpop.f32.mrf.mxu0
  %v8219 = vadd.f32 0.0, %v8218
  %v8220 = vand.u32 %v8190, 4294901760
  %v8221 = vsub.f32 %v8190, %v8220
  %v8222 = vand.u32 %v8221, 4294901760
  %v8223 = vsub.f32 %v8221, %v8222
  %v8224 = vand.u32 %v8223, 4294901760
  %8225 = vmatmul.f32.gmra.mxu0 %v8224
  %v8226 = vpop.f32.mrf.mxu0
  %v8227 = vadd.f32 0.0, %v8226
  %v8228 = vand.u32 %v8193, 4294901760
  %v8229 = vsub.f32 %v8193, %v8228
  %v8230 = vand.u32 %v8229, 4294901760
  %v8231 = vsub.f32 %v8229, %v8230
  %v8232 = vand.u32 %v8231, 4294901760
  %8233 = vmatmul.f32.gmra.mxu0 %v8232
  %v8234 = vpop.f32.mrf.mxu0
  %v8235 = vadd.f32 0.0, %v8234
  %8236 = vdwg.mxu0
  %8237 = vmatpush.msra.mxu0 0.0
  %8238 = vmatpush.msra.mxu0 0.0
  %8239 = vmatpush.msra.mxu0 0.0
  %8240 = vmatpush.msra.mxu0 0.0
  %8241 = vmatpush.msra.mxu0 0.0
  %8242 = vmatpush.msra.mxu0 0.0
  %8243 = vmatpush.msra.mxu0 0.0
  %8244 = vmatpush.msra.mxu0 0.0
  %8245 = vmatpush.msra.mxu0 0.0
  %8246 = vmatpush.msra.mxu0 0.0
  %8247 = vmatpush.msra.mxu0 0.0
  %8248 = vmatpush.msra.mxu0 0.0
  %8249 = vmatpush.msra.mxu0 0.0
  %8250 = vmatpush.msra.mxu0 0.0
  %8251 = vmatpush.msra.mxu0 0.0
  %v8252 = vand.u32 %v5334, 4294901760
  %v8253 = vsub.f32 %v5334, %v8252
  %v8254 = vand.u32 %v8253, 4294901760
  %v8255 = vsub.f32 %v8253, %v8254
  %v8256 = vand.u32 %v8255, 4294901760
  %8257 = vmatpush.msra.mxu0 %v8256
  %v8258 = vand.u32 %v8187, 4294901760
  %8259 = vmatmul.f32.gmra.mxu0 %v8258
  %v8260 = vpop.f32.mrf.mxu0
  %v8261 = vadd.f32 %v8219, %v8260
  %v8262 = vand.u32 %v8190, 4294901760
  %8263 = vmatmul.f32.gmra.mxu0 %v8262
  %v8264 = vpop.f32.mrf.mxu0
  %v8265 = vadd.f32 %v8227, %v8264
  %v8266 = vand.u32 %v8193, 4294901760
  %8267 = vmatmul.f32.gmra.mxu0 %v8266
  %v8268 = vpop.f32.mrf.mxu0
  %v8269 = vadd.f32 %v8235, %v8268
  %8270 = vdwg.mxu0
  %8271 = vmatpush.msra.mxu0 0.0
  %8272 = vmatpush.msra.mxu0 0.0
  %8273 = vmatpush.msra.mxu0 0.0
  %8274 = vmatpush.msra.mxu0 0.0
  %8275 = vmatpush.msra.mxu0 0.0
  %8276 = vmatpush.msra.mxu0 0.0
  %8277 = vmatpush.msra.mxu0 0.0
  %8278 = vmatpush.msra.mxu0 0.0
  %8279 = vmatpush.msra.mxu0 0.0
  %8280 = vmatpush.msra.mxu0 0.0
  %8281 = vmatpush.msra.mxu0 0.0
  %8282 = vmatpush.msra.mxu0 0.0
  %8283 = vmatpush.msra.mxu0 0.0
  %8284 = vmatpush.msra.mxu0 0.0
  %8285 = vmatpush.msra.mxu0 0.0
  %v8286 = vand.u32 %v5334, 4294901760
  %v8287 = vsub.f32 %v5334, %v8286
  %8288 = vmatpush.msra.mxu0 %v8287
  %v8289 = vand.u32 %v8187, 4294901760
  %v8290 = vsub.f32 %v8187, %v8289
  %8291 = vmatmul.f32.gmra.mxu0 %v8290
  %v8292 = vpop.f32.mrf.mxu0
  %v8293 = vadd.f32 %v8261, %v8292
  %v8294 = vand.u32 %v8190, 4294901760
  %v8295 = vsub.f32 %v8190, %v8294
  %8296 = vmatmul.f32.gmra.mxu0 %v8295
  %v8297 = vpop.f32.mrf.mxu0
  %v8298 = vadd.f32 %v8265, %v8297
  %v8299 = vand.u32 %v8193, 4294901760
  %v8300 = vsub.f32 %v8193, %v8299
  %8301 = vmatmul.f32.gmra.mxu0 %v8300
  %v8302 = vpop.f32.mrf.mxu0
  %v8303 = vadd.f32 %v8269, %v8302
  %8304 = vdwg.mxu0
  %8305 = vmatpush.msra.mxu0 0.0
  %8306 = vmatpush.msra.mxu0 0.0
  %8307 = vmatpush.msra.mxu0 0.0
  %8308 = vmatpush.msra.mxu0 0.0
  %8309 = vmatpush.msra.mxu0 0.0
  %8310 = vmatpush.msra.mxu0 0.0
  %8311 = vmatpush.msra.mxu0 0.0
  %8312 = vmatpush.msra.mxu0 0.0
  %8313 = vmatpush.msra.mxu0 0.0
  %8314 = vmatpush.msra.mxu0 0.0
  %8315 = vmatpush.msra.mxu0 0.0
  %8316 = vmatpush.msra.mxu0 0.0
  %8317 = vmatpush.msra.mxu0 0.0
  %8318 = vmatpush.msra.mxu0 0.0
  %8319 = vmatpush.msra.mxu0 0.0
  %v8320 = vand.u32 %v5334, 4294901760
  %8321 = vmatpush.msra.mxu0 %v8320
  %v8322 = vand.u32 %v8187, 4294901760
  %v8323 = vsub.f32 %v8187, %v8322
  %v8324 = vand.u32 %v8323, 4294901760
  %8325 = vmatmul.f32.gmra.mxu0 %v8324
  %v8326 = vpop.f32.mrf.mxu0
  %v8327 = vadd.f32 %v8293, %v8326
  %v8328 = vand.u32 %v8190, 4294901760
  %v8329 = vsub.f32 %v8190, %v8328
  %v8330 = vand.u32 %v8329, 4294901760
  %8331 = vmatmul.f32.gmra.mxu0 %v8330
  %v8332 = vpop.f32.mrf.mxu0
  %v8333 = vadd.f32 %v8298, %v8332
  %v8334 = vand.u32 %v8193, 4294901760
  %v8335 = vsub.f32 %v8193, %v8334
  %v8336 = vand.u32 %v8335, 4294901760
  %8337 = vmatmul.f32.gmra.mxu0 %v8336
  %v8338 = vpop.f32.mrf.mxu0
  %v8339 = vadd.f32 %v8303, %v8338
  %8340 = vdwg.mxu0
  %8341 = vmatpush.msra.mxu0 0.0
  %8342 = vmatpush.msra.mxu0 0.0
  %8343 = vmatpush.msra.mxu0 0.0
  %8344 = vmatpush.msra.mxu0 0.0
  %8345 = vmatpush.msra.mxu0 0.0
  %8346 = vmatpush.msra.mxu0 0.0
  %8347 = vmatpush.msra.mxu0 0.0
  %8348 = vmatpush.msra.mxu0 0.0
  %8349 = vmatpush.msra.mxu0 0.0
  %8350 = vmatpush.msra.mxu0 0.0
  %8351 = vmatpush.msra.mxu0 0.0
  %8352 = vmatpush.msra.mxu0 0.0
  %8353 = vmatpush.msra.mxu0 0.0
  %8354 = vmatpush.msra.mxu0 0.0
  %8355 = vmatpush.msra.mxu0 0.0
  %v8356 = vand.u32 %v5334, 4294901760
  %v8357 = vsub.f32 %v5334, %v8356
  %v8358 = vand.u32 %v8357, 4294901760
  %8359 = vmatpush.msra.mxu0 %v8358
  %v8360 = vand.u32 %v8187, 4294901760
  %8361 = vmatmul.f32.gmra.mxu0 %v8360
  %v8362 = vpop.f32.mrf.mxu0
  %v8363 = vadd.f32 %v8327, %v8362
  %v8364 = vand.u32 %v8190, 4294901760
  %8365 = vmatmul.f32.gmra.mxu0 %v8364
  %v8366 = vpop.f32.mrf.mxu0
  %v8367 = vadd.f32 %v8333, %v8366
  %v8368 = vand.u32 %v8193, 4294901760
  %8369 = vmatmul.f32.gmra.mxu0 %v8368
  %v8370 = vpop.f32.mrf.mxu0
  %v8371 = vadd.f32 %v8339, %v8370
  %8372 = vdwg.mxu0
  %8373 = vmatpush.msra.mxu0 0.0
  %8374 = vmatpush.msra.mxu0 0.0
  %8375 = vmatpush.msra.mxu0 0.0
  %8376 = vmatpush.msra.mxu0 0.0
  %8377 = vmatpush.msra.mxu0 0.0
  %8378 = vmatpush.msra.mxu0 0.0
  %8379 = vmatpush.msra.mxu0 0.0
  %8380 = vmatpush.msra.mxu0 0.0
  %8381 = vmatpush.msra.mxu0 0.0
  %8382 = vmatpush.msra.mxu0 0.0
  %8383 = vmatpush.msra.mxu0 0.0
  %8384 = vmatpush.msra.mxu0 0.0
  %8385 = vmatpush.msra.mxu0 0.0
  %8386 = vmatpush.msra.mxu0 0.0
  %8387 = vmatpush.msra.mxu0 0.0
  %v8388 = vand.u32 %v5334, 4294901760
  %8389 = vmatpush.msra.mxu0 %v8388
  %v8390 = vand.u32 %v8187, 4294901760
  %8391 = vmatmul.f32.gmra.mxu0 %v8390
  %v8392 = vpop.f32.mrf.mxu0
  %v8393 = vadd.f32 %v8363, %v8392
  %v8394 = vand.u32 %v8190, 4294901760
  %8395 = vmatmul.f32.gmra.mxu0 %v8394
  %v8396 = vpop.f32.mrf.mxu0
  %v8397 = vadd.f32 %v8367, %v8396
  %v8398 = vand.u32 %v8193, 4294901760
  %8399 = vmatmul.f32.gmra.mxu0 %v8398
  %v8400 = vpop.f32.mrf.mxu0
  %v8401 = vadd.f32 %v8371, %v8400
  %8402 = vdwg.mxu0
  %v8403 = vadd.f32 %v7633, %v8393
  %v8404 = vadd.f32 %v7634, %v8397
  %v8405 = vadd.f32 %v7635, %v8401
  %v8406 = vadd.f32 %v4979, %v8403
  %v8407 = vadd.f32 %v4980, %v8404
  %v8408 = vadd.f32 %v4981, %v8405
  %s8409 = scalar_lea.vmem %s9, 1
  %v8410 = vld [vmem:[%s8409] sm:$0x1]
  %v8412 = vperm.slane %v8410, 0
  %v8414 = vadd.f32 %v8406, %v8412
  %v8415 = vadd.f32 %v8407, %v8412
  %v8416 = vadd.f32 %v8408, %v8412
  %s8417 = scalar_lea.vmem %s10, 1
  %v8418 = vld [vmem:[%s8417] sm:$0x1]
  %s8419 = scalar_lea.vmem %s11, 1
  %v8420 = vld [vmem:[%s8419] sm:$0x1]
  %v8421 = vsel %vm844, %v8414, 0.0
  %8422 = vadd.xlane.f32.xlu0 %v8421
  %v8423 = vpop.xlane.xlu0 %8422
  %v8424 = vsel %vm844, %v8415, 0.0
  %8425 = vadd.xlane.f32.xlu0 %v8424
  %v8426 = vpop.xlane.xlu0 %8425
  %v8427 = vsel %vm851, %v8416, 0.0
  %8428 = vadd.xlane.f32.xlu0 %v8427
  %v8429 = vpop.xlane.xlu0 %8428
  %v8430 = vmul.f32 %v8423, %v861
  %v8431 = vmul.f32 %v8426, %v861
  %v8432 = vmul.f32 %v8429, %v861
  %v8433 = vsub.f32 %v8414, %v8430
  %v8434 = vsub.f32 %v8415, %v8431
  %v8435 = vsub.f32 %v8416, %v8432
  %v8436 = vmul.f32 %v8433, %v8433
  %v8437 = vmul.f32 %v8434, %v8434
  %v8438 = vmul.f32 %v8435, %v8435
  %v8439 = vsel %vm844, %v8436, 0.0
  %8440 = vadd.xlane.f32.xlu0 %v8439
  %v8441 = vpop.xlane.xlu0 %8440
  %v8442 = vsel %vm844, %v8437, 0.0
  %8443 = vadd.xlane.f32.xlu0 %v8442
  %v8444 = vpop.xlane.xlu0 %8443
  %v8445 = vsel %vm851, %v8438, 0.0
  %8446 = vadd.xlane.f32.xlu0 %v8445
  %v8447 = vpop.xlane.xlu0 %8446
  %v8448 = vmul.f32 %v8441, %v861
  %v8449 = vmul.f32 %v8444, %v861
  %v8450 = vmul.f32 %v8447, %v861
  %v8451 = vadd.f32 %v8448, 1e-12
  %v8452 = vadd.f32 %v8449, 1e-12
  %v8453 = vadd.f32 %v8450, 1e-12
  %v8454 = vrsqrt.pop %v8451
  %v8455 = vmul.f32 %v8454, %v8451
  %v8456 = vmul.f32 %v8455, %v8454
  %v8457 = vmul.f32 0.5, %v8456
  %v8458 = vsub.f32 1.5, %v8457
  %v8459 = vmul.f32 %v8454, %v8458
  %vm8460 = vweird.f32 %v8451
  %vm8461 = vweird.f32 %v8454
  %vm8462 = vmor %vm8460, %vm8461
  %v8463 = vsel %vm8462, %v8454, %v8459
  %v8464 = vrsqrt.pop %v8452
  %v8465 = vmul.f32 %v8464, %v8452
  %v8466 = vmul.f32 %v8465, %v8464
  %v8467 = vmul.f32 0.5, %v8466
  %v8468 = vsub.f32 1.5, %v8467
  %v8469 = vmul.f32 %v8464, %v8468
  %vm8470 = vweird.f32 %v8452
  %vm8471 = vweird.f32 %v8464
  %vm8472 = vmor %vm8470, %vm8471
  %v8473 = vsel %vm8472, %v8464, %v8469
  %v8474 = vrsqrt.pop %v8453
  %v8475 = vmul.f32 %v8474, %v8453
  %v8476 = vmul.f32 %v8475, %v8474
  %v8477 = vmul.f32 0.5, %v8476
  %v8478 = vsub.f32 1.5, %v8477
  %v8479 = vmul.f32 %v8474, %v8478
  %vm8480 = vweird.f32 %v8453
  %vm8481 = vweird.f32 %v8474
  %vm8482 = vmor %vm8480, %vm8481
  %v8483 = vsel %vm8482, %v8474, %v8479
  %v8484 = vmul.f32 %v8433, %v8463
  %v8485 = vmul.f32 %v8434, %v8473
  %v8486 = vmul.f32 %v8435, %v8483
  %v8488 = vperm.slane %v8418, 0
  %v8490 = vmul.f32 %v8484, %v8488
  %v8491 = vmul.f32 %v8485, %v8488
  %v8492 = vmul.f32 %v8486, %v8488
  %v8494 = vperm.slane %v8420, 0
  %v8496 = vadd.f32 %v8490, %v8494
  %v8497 = vadd.f32 %v8491, %v8494
  %v8498 = vadd.f32 %v8492, %v8494
  %s8499 = scalar_lea.vmem %s12, 32
  %v8500 = vld [vmem:[%s8499] sm:$0xff]
  %v8501 = vld [vmem:[%s8499 + $0x8] sm:$0xff]
  %v8502 = vld [vmem:[%s8499 + $0x10] sm:$0xff]
  %v8503 = vld [vmem:[%s8499 + $0x18] sm:$0xff]
  %s8504 = scalar_lea.vmem %s13, 1
  %v8505 = vld [vmem:[%s8504] sm:$0x1]
  %v8507 = vperm.slane %v8505, 0
  %v8510 = vsel %vm844, %v8496, 0
  %v8513 = vsel %vm844, %v8497, 0
  %v8516 = vsel %vm844, %v8498, 0
  %8518 = vmatpush.msra.mxu0 0.0
  %8519 = vmatpush.msra.mxu0 0.0
  %8520 = vmatpush.msra.mxu0 0.0
  %8521 = vmatpush.msra.mxu0 0.0
  %8522 = vmatpush.msra.mxu0 0.0
  %8523 = vmatpush.msra.mxu0 0.0
  %8524 = vmatpush.msra.mxu0 0.0
  %8525 = vmatpush.msra.mxu0 0.0
  %8526 = vmatpush.msra.mxu0 0.0
  %8527 = vmatpush.msra.mxu0 0.0
  %8528 = vmatpush.msra.mxu0 0.0
  %8529 = vmatpush.msra.mxu0 0.0
  %v8530 = vand.u32 %v8503, 4294901760
  %8531 = vmatpush.msra.mxu0 %v8530
  %v8532 = vand.u32 %v8502, 4294901760
  %8533 = vmatpush.msra.mxu0 %v8532
  %v8534 = vand.u32 %v8501, 4294901760
  %8535 = vmatpush.msra.mxu0 %v8534
  %v8536 = vand.u32 %v8500, 4294901760
  %8537 = vmatpush.msra.mxu0 %v8536
  %v8538 = vand.u32 %v8510, 4294901760
  %v8539 = vsub.f32 %v8510, %v8538
  %v8540 = vand.u32 %v8539, 4294901760
  %v8541 = vsub.f32 %v8539, %v8540
  %v8542 = vand.u32 %v8541, 4294901760
  %8543 = vmatmul.f32.gmra.mxu0 %v8542
  %v8544 = vpop.f32.mrf.mxu0
  %v8545 = vadd.f32 %v8507, %v8544
  %v8546 = vand.u32 %v8513, 4294901760
  %v8547 = vsub.f32 %v8513, %v8546
  %v8548 = vand.u32 %v8547, 4294901760
  %v8549 = vsub.f32 %v8547, %v8548
  %v8550 = vand.u32 %v8549, 4294901760
  %8551 = vmatmul.f32.gmra.mxu0 %v8550
  %v8552 = vpop.f32.mrf.mxu0
  %v8553 = vadd.f32 %v8507, %v8552
  %v8554 = vand.u32 %v8516, 4294901760
  %v8555 = vsub.f32 %v8516, %v8554
  %v8556 = vand.u32 %v8555, 4294901760
  %v8557 = vsub.f32 %v8555, %v8556
  %v8558 = vand.u32 %v8557, 4294901760
  %8559 = vmatmul.f32.gmra.mxu0 %v8558
  %v8560 = vpop.f32.mrf.mxu0
  %v8561 = vadd.f32 %v8507, %v8560
  %8562 = vdwg.mxu0
  %8563 = vmatpush.msra.mxu0 0.0
  %8564 = vmatpush.msra.mxu0 0.0
  %8565 = vmatpush.msra.mxu0 0.0
  %8566 = vmatpush.msra.mxu0 0.0
  %8567 = vmatpush.msra.mxu0 0.0
  %8568 = vmatpush.msra.mxu0 0.0
  %8569 = vmatpush.msra.mxu0 0.0
  %8570 = vmatpush.msra.mxu0 0.0
  %8571 = vmatpush.msra.mxu0 0.0
  %8572 = vmatpush.msra.mxu0 0.0
  %8573 = vmatpush.msra.mxu0 0.0
  %8574 = vmatpush.msra.mxu0 0.0
  %v8575 = vand.u32 %v8503, 4294901760
  %v8576 = vsub.f32 %v8503, %v8575
  %v8577 = vand.u32 %v8576, 4294901760
  %v8578 = vsub.f32 %v8576, %v8577
  %v8579 = vand.u32 %v8578, 4294901760
  %8580 = vmatpush.msra.mxu0 %v8579
  %v8581 = vand.u32 %v8502, 4294901760
  %v8582 = vsub.f32 %v8502, %v8581
  %v8583 = vand.u32 %v8582, 4294901760
  %v8584 = vsub.f32 %v8582, %v8583
  %v8585 = vand.u32 %v8584, 4294901760
  %8586 = vmatpush.msra.mxu0 %v8585
  %v8587 = vand.u32 %v8501, 4294901760
  %v8588 = vsub.f32 %v8501, %v8587
  %v8589 = vand.u32 %v8588, 4294901760
  %v8590 = vsub.f32 %v8588, %v8589
  %v8591 = vand.u32 %v8590, 4294901760
  %8592 = vmatpush.msra.mxu0 %v8591
  %v8593 = vand.u32 %v8500, 4294901760
  %v8594 = vsub.f32 %v8500, %v8593
  %v8595 = vand.u32 %v8594, 4294901760
  %v8596 = vsub.f32 %v8594, %v8595
  %v8597 = vand.u32 %v8596, 4294901760
  %8598 = vmatpush.msra.mxu0 %v8597
  %v8599 = vand.u32 %v8510, 4294901760
  %8600 = vmatmul.f32.gmra.mxu0 %v8599
  %v8601 = vpop.f32.mrf.mxu0
  %v8602 = vadd.f32 %v8545, %v8601
  %v8603 = vand.u32 %v8513, 4294901760
  %8604 = vmatmul.f32.gmra.mxu0 %v8603
  %v8605 = vpop.f32.mrf.mxu0
  %v8606 = vadd.f32 %v8553, %v8605
  %v8607 = vand.u32 %v8516, 4294901760
  %8608 = vmatmul.f32.gmra.mxu0 %v8607
  %v8609 = vpop.f32.mrf.mxu0
  %v8610 = vadd.f32 %v8561, %v8609
  %8611 = vdwg.mxu0
  %8612 = vmatpush.msra.mxu0 0.0
  %8613 = vmatpush.msra.mxu0 0.0
  %8614 = vmatpush.msra.mxu0 0.0
  %8615 = vmatpush.msra.mxu0 0.0
  %8616 = vmatpush.msra.mxu0 0.0
  %8617 = vmatpush.msra.mxu0 0.0
  %8618 = vmatpush.msra.mxu0 0.0
  %8619 = vmatpush.msra.mxu0 0.0
  %8620 = vmatpush.msra.mxu0 0.0
  %8621 = vmatpush.msra.mxu0 0.0
  %8622 = vmatpush.msra.mxu0 0.0
  %8623 = vmatpush.msra.mxu0 0.0
  %v8624 = vand.u32 %v8503, 4294901760
  %v8625 = vsub.f32 %v8503, %v8624
  %8626 = vmatpush.msra.mxu0 %v8625
  %v8627 = vand.u32 %v8502, 4294901760
  %v8628 = vsub.f32 %v8502, %v8627
  %8629 = vmatpush.msra.mxu0 %v8628
  %v8630 = vand.u32 %v8501, 4294901760
  %v8631 = vsub.f32 %v8501, %v8630
  %8632 = vmatpush.msra.mxu0 %v8631
  %v8633 = vand.u32 %v8500, 4294901760
  %v8634 = vsub.f32 %v8500, %v8633
  %8635 = vmatpush.msra.mxu0 %v8634
  %v8636 = vand.u32 %v8510, 4294901760
  %v8637 = vsub.f32 %v8510, %v8636
  %8638 = vmatmul.f32.gmra.mxu0 %v8637
  %v8639 = vpop.f32.mrf.mxu0
  %v8640 = vadd.f32 %v8602, %v8639
  %v8641 = vand.u32 %v8513, 4294901760
  %v8642 = vsub.f32 %v8513, %v8641
  %8643 = vmatmul.f32.gmra.mxu0 %v8642
  %v8644 = vpop.f32.mrf.mxu0
  %v8645 = vadd.f32 %v8606, %v8644
  %v8646 = vand.u32 %v8516, 4294901760
  %v8647 = vsub.f32 %v8516, %v8646
  %8648 = vmatmul.f32.gmra.mxu0 %v8647
  %v8649 = vpop.f32.mrf.mxu0
  %v8650 = vadd.f32 %v8610, %v8649
  %8651 = vdwg.mxu0
  %8652 = vmatpush.msra.mxu0 0.0
  %8653 = vmatpush.msra.mxu0 0.0
  %8654 = vmatpush.msra.mxu0 0.0
  %8655 = vmatpush.msra.mxu0 0.0
  %8656 = vmatpush.msra.mxu0 0.0
  %8657 = vmatpush.msra.mxu0 0.0
  %8658 = vmatpush.msra.mxu0 0.0
  %8659 = vmatpush.msra.mxu0 0.0
  %8660 = vmatpush.msra.mxu0 0.0
  %8661 = vmatpush.msra.mxu0 0.0
  %8662 = vmatpush.msra.mxu0 0.0
  %8663 = vmatpush.msra.mxu0 0.0
  %v8664 = vand.u32 %v8503, 4294901760
  %8665 = vmatpush.msra.mxu0 %v8664
  %v8666 = vand.u32 %v8502, 4294901760
  %8667 = vmatpush.msra.mxu0 %v8666
  %v8668 = vand.u32 %v8501, 4294901760
  %8669 = vmatpush.msra.mxu0 %v8668
  %v8670 = vand.u32 %v8500, 4294901760
  %8671 = vmatpush.msra.mxu0 %v8670
  %v8672 = vand.u32 %v8510, 4294901760
  %v8673 = vsub.f32 %v8510, %v8672
  %v8674 = vand.u32 %v8673, 4294901760
  %8675 = vmatmul.f32.gmra.mxu0 %v8674
  %v8676 = vpop.f32.mrf.mxu0
  %v8677 = vadd.f32 %v8640, %v8676
  %v8678 = vand.u32 %v8513, 4294901760
  %v8679 = vsub.f32 %v8513, %v8678
  %v8680 = vand.u32 %v8679, 4294901760
  %8681 = vmatmul.f32.gmra.mxu0 %v8680
  %v8682 = vpop.f32.mrf.mxu0
  %v8683 = vadd.f32 %v8645, %v8682
  %v8684 = vand.u32 %v8516, 4294901760
  %v8685 = vsub.f32 %v8516, %v8684
  %v8686 = vand.u32 %v8685, 4294901760
  %8687 = vmatmul.f32.gmra.mxu0 %v8686
  %v8688 = vpop.f32.mrf.mxu0
  %v8689 = vadd.f32 %v8650, %v8688
  %8690 = vdwg.mxu0
  %8691 = vmatpush.msra.mxu0 0.0
  %8692 = vmatpush.msra.mxu0 0.0
  %8693 = vmatpush.msra.mxu0 0.0
  %8694 = vmatpush.msra.mxu0 0.0
  %8695 = vmatpush.msra.mxu0 0.0
  %8696 = vmatpush.msra.mxu0 0.0
  %8697 = vmatpush.msra.mxu0 0.0
  %8698 = vmatpush.msra.mxu0 0.0
  %8699 = vmatpush.msra.mxu0 0.0
  %8700 = vmatpush.msra.mxu0 0.0
  %8701 = vmatpush.msra.mxu0 0.0
  %8702 = vmatpush.msra.mxu0 0.0
  %v8703 = vand.u32 %v8503, 4294901760
  %v8704 = vsub.f32 %v8503, %v8703
  %v8705 = vand.u32 %v8704, 4294901760
  %8706 = vmatpush.msra.mxu0 %v8705
  %v8707 = vand.u32 %v8502, 4294901760
  %v8708 = vsub.f32 %v8502, %v8707
  %v8709 = vand.u32 %v8708, 4294901760
  %8710 = vmatpush.msra.mxu0 %v8709
  %v8711 = vand.u32 %v8501, 4294901760
  %v8712 = vsub.f32 %v8501, %v8711
  %v8713 = vand.u32 %v8712, 4294901760
  %8714 = vmatpush.msra.mxu0 %v8713
  %v8715 = vand.u32 %v8500, 4294901760
  %v8716 = vsub.f32 %v8500, %v8715
  %v8717 = vand.u32 %v8716, 4294901760
  %8718 = vmatpush.msra.mxu0 %v8717
  %v8719 = vand.u32 %v8510, 4294901760
  %8720 = vmatmul.f32.gmra.mxu0 %v8719
  %v8721 = vpop.f32.mrf.mxu0
  %v8722 = vadd.f32 %v8677, %v8721
  %v8723 = vand.u32 %v8513, 4294901760
  %8724 = vmatmul.f32.gmra.mxu0 %v8723
  %v8725 = vpop.f32.mrf.mxu0
  %v8726 = vadd.f32 %v8683, %v8725
  %v8727 = vand.u32 %v8516, 4294901760
  %8728 = vmatmul.f32.gmra.mxu0 %v8727
  %v8729 = vpop.f32.mrf.mxu0
  %v8730 = vadd.f32 %v8689, %v8729
  %8731 = vdwg.mxu0
  %8732 = vmatpush.msra.mxu0 0.0
  %8733 = vmatpush.msra.mxu0 0.0
  %8734 = vmatpush.msra.mxu0 0.0
  %8735 = vmatpush.msra.mxu0 0.0
  %8736 = vmatpush.msra.mxu0 0.0
  %8737 = vmatpush.msra.mxu0 0.0
  %8738 = vmatpush.msra.mxu0 0.0
  %8739 = vmatpush.msra.mxu0 0.0
  %8740 = vmatpush.msra.mxu0 0.0
  %8741 = vmatpush.msra.mxu0 0.0
  %8742 = vmatpush.msra.mxu0 0.0
  %8743 = vmatpush.msra.mxu0 0.0
  %v8744 = vand.u32 %v8503, 4294901760
  %8745 = vmatpush.msra.mxu0 %v8744
  %v8746 = vand.u32 %v8502, 4294901760
  %8747 = vmatpush.msra.mxu0 %v8746
  %v8748 = vand.u32 %v8501, 4294901760
  %8749 = vmatpush.msra.mxu0 %v8748
  %v8750 = vand.u32 %v8500, 4294901760
  %8751 = vmatpush.msra.mxu0 %v8750
  %v8752 = vand.u32 %v8510, 4294901760
  %8753 = vmatmul.f32.gmra.mxu0 %v8752
  %v8754 = vpop.f32.mrf.mxu0
  %v8755 = vadd.f32 %v8722, %v8754
  %v8756 = vand.u32 %v8513, 4294901760
  %8757 = vmatmul.f32.gmra.mxu0 %v8756
  %v8758 = vpop.f32.mrf.mxu0
  %v8759 = vadd.f32 %v8726, %v8758
  %v8760 = vand.u32 %v8516, 4294901760
  %8761 = vmatmul.f32.gmra.mxu0 %v8760
  %v8762 = vpop.f32.mrf.mxu0
  %v8763 = vadd.f32 %v8730, %v8762
  %8764 = vdwg.mxu0
  %v8765 = vmul.f32 %v8755, 0.5
  %v8766 = vmul.f32 %v8759, 0.5
  %v8767 = vmul.f32 %v8763, 0.5
  %v8768 = vmul.f32 %v8755, 0.044715
  %v8769 = vmul.f32 %v8759, 0.044715
  %v8770 = vmul.f32 %v8763, 0.044715
  %v8771 = vmul.f32 %v8768, %v8755
  %v8772 = vmul.f32 %v8769, %v8759
  %v8773 = vmul.f32 %v8770, %v8763
  %v8774 = vmul.f32 %v8771, %v8755
  %v8775 = vmul.f32 %v8772, %v8759
  %v8776 = vmul.f32 %v8773, %v8763
  %v8777 = vadd.f32 %v8755, %v8774
  %v8778 = vadd.f32 %v8759, %v8775
  %v8779 = vadd.f32 %v8763, %v8776
  %v8780 = vmul.f32 %v8777, 0.7978846
  %v8781 = vmul.f32 %v8778, 0.7978846
  %v8782 = vmul.f32 %v8779, 0.7978846
  %v8783 = vtanh.pop %v8780
  %v8784 = vtanh.pop %v8781
  %v8785 = vtanh.pop %v8782
  %v8786 = vadd.f32 %v8783, 1.0
  %v8787 = vadd.f32 %v8784, 1.0
  %v8788 = vadd.f32 %v8785, 1.0
  %v8789 = vmul.f32 %v8765, %v8786
  %v8790 = vmul.f32 %v8766, %v8787
  %v8791 = vmul.f32 %v8767, %v8788
  %s8792 = scalar_lea.vmem %s14, 64
  %v8793 = vld [vmem:[%s8792] sm:$0xff]
  %v8794 = vld [vmem:[%s8792 + $0x8] sm:$0xff]
  %v8795 = vld [vmem:[%s8792 + $0x10] sm:$0xff]
  %v8796 = vld [vmem:[%s8792 + $0x18] sm:$0xff]
  %v8797 = vld [vmem:[%s8792 + $0x20] sm:$0xff]
  %v8798 = vld [vmem:[%s8792 + $0x28] sm:$0xff]
  %v8799 = vld [vmem:[%s8792 + $0x30] sm:$0xff]
  %v8800 = vld [vmem:[%s8792 + $0x38] sm:$0xff]
  %v8802 = vsel %vm4663, %v8789, 0
  %v8805 = vsel %vm4663, %v8790, 0
  %v8808 = vsel %vm4663, %v8791, 0
  %8810 = vmatpush.msra.mxu0 0.0
  %8811 = vmatpush.msra.mxu0 0.0
  %8812 = vmatpush.msra.mxu0 0.0
  %8813 = vmatpush.msra.mxu0 0.0
  %8814 = vmatpush.msra.mxu0 0.0
  %8815 = vmatpush.msra.mxu0 0.0
  %8816 = vmatpush.msra.mxu0 0.0
  %8817 = vmatpush.msra.mxu0 0.0
  %v8818 = vand.u32 %v8800, 4294901760
  %8819 = vmatpush.msra.mxu0 %v8818
  %v8820 = vand.u32 %v8799, 4294901760
  %8821 = vmatpush.msra.mxu0 %v8820
  %v8822 = vand.u32 %v8798, 4294901760
  %8823 = vmatpush.msra.mxu0 %v8822
  %v8824 = vand.u32 %v8797, 4294901760
  %8825 = vmatpush.msra.mxu0 %v8824
  %v8826 = vand.u32 %v8796, 4294901760
  %8827 = vmatpush.msra.mxu0 %v8826
  %v8828 = vand.u32 %v8795, 4294901760
  %8829 = vmatpush.msra.mxu0 %v8828
  %v8830 = vand.u32 %v8794, 4294901760
  %8831 = vmatpush.msra.mxu0 %v8830
  %v8832 = vand.u32 %v8793, 4294901760
  %8833 = vmatpush.msra.mxu0 %v8832
  %v8834 = vand.u32 %v8802, 4294901760
  %v8835 = vsub.f32 %v8802, %v8834
  %v8836 = vand.u32 %v8835, 4294901760
  %v8837 = vsub.f32 %v8835, %v8836
  %v8838 = vand.u32 %v8837, 4294901760
  %8839 = vmatmul.f32.gmra.mxu0 %v8838
  %v8840 = vpop.f32.mrf.mxu0
  %v8841 = vadd.f32 0.0, %v8840
  %v8842 = vand.u32 %v8805, 4294901760
  %v8843 = vsub.f32 %v8805, %v8842
  %v8844 = vand.u32 %v8843, 4294901760
  %v8845 = vsub.f32 %v8843, %v8844
  %v8846 = vand.u32 %v8845, 4294901760
  %8847 = vmatmul.f32.gmra.mxu0 %v8846
  %v8848 = vpop.f32.mrf.mxu0
  %v8849 = vadd.f32 0.0, %v8848
  %v8850 = vand.u32 %v8808, 4294901760
  %v8851 = vsub.f32 %v8808, %v8850
  %v8852 = vand.u32 %v8851, 4294901760
  %v8853 = vsub.f32 %v8851, %v8852
  %v8854 = vand.u32 %v8853, 4294901760
  %8855 = vmatmul.f32.gmra.mxu0 %v8854
  %v8856 = vpop.f32.mrf.mxu0
  %v8857 = vadd.f32 0.0, %v8856
  %8858 = vdwg.mxu0
  %8859 = vmatpush.msra.mxu0 0.0
  %8860 = vmatpush.msra.mxu0 0.0
  %8861 = vmatpush.msra.mxu0 0.0
  %8862 = vmatpush.msra.mxu0 0.0
  %8863 = vmatpush.msra.mxu0 0.0
  %8864 = vmatpush.msra.mxu0 0.0
  %8865 = vmatpush.msra.mxu0 0.0
  %8866 = vmatpush.msra.mxu0 0.0
  %v8867 = vand.u32 %v8800, 4294901760
  %v8868 = vsub.f32 %v8800, %v8867
  %v8869 = vand.u32 %v8868, 4294901760
  %v8870 = vsub.f32 %v8868, %v8869
  %v8871 = vand.u32 %v8870, 4294901760
  %8872 = vmatpush.msra.mxu0 %v8871
  %v8873 = vand.u32 %v8799, 4294901760
  %v8874 = vsub.f32 %v8799, %v8873
  %v8875 = vand.u32 %v8874, 4294901760
  %v8876 = vsub.f32 %v8874, %v8875
  %v8877 = vand.u32 %v8876, 4294901760
  %8878 = vmatpush.msra.mxu0 %v8877
  %v8879 = vand.u32 %v8798, 4294901760
  %v8880 = vsub.f32 %v8798, %v8879
  %v8881 = vand.u32 %v8880, 4294901760
  %v8882 = vsub.f32 %v8880, %v8881
  %v8883 = vand.u32 %v8882, 4294901760
  %8884 = vmatpush.msra.mxu0 %v8883
  %v8885 = vand.u32 %v8797, 4294901760
  %v8886 = vsub.f32 %v8797, %v8885
  %v8887 = vand.u32 %v8886, 4294901760
  %v8888 = vsub.f32 %v8886, %v8887
  %v8889 = vand.u32 %v8888, 4294901760
  %8890 = vmatpush.msra.mxu0 %v8889
  %v8891 = vand.u32 %v8796, 4294901760
  %v8892 = vsub.f32 %v8796, %v8891
  %v8893 = vand.u32 %v8892, 4294901760
  %v8894 = vsub.f32 %v8892, %v8893
  %v8895 = vand.u32 %v8894, 4294901760
  %8896 = vmatpush.msra.mxu0 %v8895
  %v8897 = vand.u32 %v8795, 4294901760
  %v8898 = vsub.f32 %v8795, %v8897
  %v8899 = vand.u32 %v8898, 4294901760
  %v8900 = vsub.f32 %v8898, %v8899
  %v8901 = vand.u32 %v8900, 4294901760
  %8902 = vmatpush.msra.mxu0 %v8901
  %v8903 = vand.u32 %v8794, 4294901760
  %v8904 = vsub.f32 %v8794, %v8903
  %v8905 = vand.u32 %v8904, 4294901760
  %v8906 = vsub.f32 %v8904, %v8905
  %v8907 = vand.u32 %v8906, 4294901760
  %8908 = vmatpush.msra.mxu0 %v8907
  %v8909 = vand.u32 %v8793, 4294901760
  %v8910 = vsub.f32 %v8793, %v8909
  %v8911 = vand.u32 %v8910, 4294901760
  %v8912 = vsub.f32 %v8910, %v8911
  %v8913 = vand.u32 %v8912, 4294901760
  %8914 = vmatpush.msra.mxu0 %v8913
  %v8915 = vand.u32 %v8802, 4294901760
  %8916 = vmatmul.f32.gmra.mxu0 %v8915
  %v8917 = vpop.f32.mrf.mxu0
  %v8918 = vadd.f32 %v8841, %v8917
  %v8919 = vand.u32 %v8805, 4294901760
  %8920 = vmatmul.f32.gmra.mxu0 %v8919
  %v8921 = vpop.f32.mrf.mxu0
  %v8922 = vadd.f32 %v8849, %v8921
  %v8923 = vand.u32 %v8808, 4294901760
  %8924 = vmatmul.f32.gmra.mxu0 %v8923
  %v8925 = vpop.f32.mrf.mxu0
  %v8926 = vadd.f32 %v8857, %v8925
  %8927 = vdwg.mxu0
  %8928 = vmatpush.msra.mxu0 0.0
  %8929 = vmatpush.msra.mxu0 0.0
  %8930 = vmatpush.msra.mxu0 0.0
  %8931 = vmatpush.msra.mxu0 0.0
  %8932 = vmatpush.msra.mxu0 0.0
  %8933 = vmatpush.msra.mxu0 0.0
  %8934 = vmatpush.msra.mxu0 0.0
  %8935 = vmatpush.msra.mxu0 0.0
  %v8936 = vand.u32 %v8800, 4294901760
  %v8937 = vsub.f32 %v8800, %v8936
  %8938 = vmatpush.msra.mxu0 %v8937
  %v8939 = vand.u32 %v8799, 4294901760
  %v8940 = vsub.f32 %v8799, %v8939
  %8941 = vmatpush.msra.mxu0 %v8940
  %v8942 = vand.u32 %v8798, 4294901760
  %v8943 = vsub.f32 %v8798, %v8942
  %8944 = vmatpush.msra.mxu0 %v8943
  %v8945 = vand.u32 %v8797, 4294901760
  %v8946 = vsub.f32 %v8797, %v8945
  %8947 = vmatpush.msra.mxu0 %v8946
  %v8948 = vand.u32 %v8796, 4294901760
  %v8949 = vsub.f32 %v8796, %v8948
  %8950 = vmatpush.msra.mxu0 %v8949
  %v8951 = vand.u32 %v8795, 4294901760
  %v8952 = vsub.f32 %v8795, %v8951
  %8953 = vmatpush.msra.mxu0 %v8952
  %v8954 = vand.u32 %v8794, 4294901760
  %v8955 = vsub.f32 %v8794, %v8954
  %8956 = vmatpush.msra.mxu0 %v8955
  %v8957 = vand.u32 %v8793, 4294901760
  %v8958 = vsub.f32 %v8793, %v8957
  %8959 = vmatpush.msra.mxu0 %v8958
  %v8960 = vand.u32 %v8802, 4294901760
  %v8961 = vsub.f32 %v8802, %v8960
  %8962 = vmatmul.f32.gmra.mxu0 %v8961
  %v8963 = vpop.f32.mrf.mxu0
  %v8964 = vadd.f32 %v8918, %v8963
  %v8965 = vand.u32 %v8805, 4294901760
  %v8966 = vsub.f32 %v8805, %v8965
  %8967 = vmatmul.f32.gmra.mxu0 %v8966
  %v8968 = vpop.f32.mrf.mxu0
  %v8969 = vadd.f32 %v8922, %v8968
  %v8970 = vand.u32 %v8808, 4294901760
  %v8971 = vsub.f32 %v8808, %v8970
  %8972 = vmatmul.f32.gmra.mxu0 %v8971
  %v8973 = vpop.f32.mrf.mxu0
  %v8974 = vadd.f32 %v8926, %v8973
  %8975 = vdwg.mxu0
  %8976 = vmatpush.msra.mxu0 0.0
  %8977 = vmatpush.msra.mxu0 0.0
  %8978 = vmatpush.msra.mxu0 0.0
  %8979 = vmatpush.msra.mxu0 0.0
  %8980 = vmatpush.msra.mxu0 0.0
  %8981 = vmatpush.msra.mxu0 0.0
  %8982 = vmatpush.msra.mxu0 0.0
  %8983 = vmatpush.msra.mxu0 0.0
  %v8984 = vand.u32 %v8800, 4294901760
  %8985 = vmatpush.msra.mxu0 %v8984
  %v8986 = vand.u32 %v8799, 4294901760
  %8987 = vmatpush.msra.mxu0 %v8986
  %v8988 = vand.u32 %v8798, 4294901760
  %8989 = vmatpush.msra.mxu0 %v8988
  %v8990 = vand.u32 %v8797, 4294901760
  %8991 = vmatpush.msra.mxu0 %v8990
  %v8992 = vand.u32 %v8796, 4294901760
  %8993 = vmatpush.msra.mxu0 %v8992
  %v8994 = vand.u32 %v8795, 4294901760
  %8995 = vmatpush.msra.mxu0 %v8994
  %v8996 = vand.u32 %v8794, 4294901760
  %8997 = vmatpush.msra.mxu0 %v8996
  %v8998 = vand.u32 %v8793, 4294901760
  %8999 = vmatpush.msra.mxu0 %v8998
  %v9000 = vand.u32 %v8802, 4294901760
  %v9001 = vsub.f32 %v8802, %v9000
  %v9002 = vand.u32 %v9001, 4294901760
  %9003 = vmatmul.f32.gmra.mxu0 %v9002
  %v9004 = vpop.f32.mrf.mxu0
  %v9005 = vadd.f32 %v8964, %v9004
  %v9006 = vand.u32 %v8805, 4294901760
  %v9007 = vsub.f32 %v8805, %v9006
  %v9008 = vand.u32 %v9007, 4294901760
  %9009 = vmatmul.f32.gmra.mxu0 %v9008
  %v9010 = vpop.f32.mrf.mxu0
  %v9011 = vadd.f32 %v8969, %v9010
  %v9012 = vand.u32 %v8808, 4294901760
  %v9013 = vsub.f32 %v8808, %v9012
  %v9014 = vand.u32 %v9013, 4294901760
  %9015 = vmatmul.f32.gmra.mxu0 %v9014
  %v9016 = vpop.f32.mrf.mxu0
  %v9017 = vadd.f32 %v8974, %v9016
  %9018 = vdwg.mxu0
  %9019 = vmatpush.msra.mxu0 0.0
  %9020 = vmatpush.msra.mxu0 0.0
  %9021 = vmatpush.msra.mxu0 0.0
  %9022 = vmatpush.msra.mxu0 0.0
  %9023 = vmatpush.msra.mxu0 0.0
  %9024 = vmatpush.msra.mxu0 0.0
  %9025 = vmatpush.msra.mxu0 0.0
  %9026 = vmatpush.msra.mxu0 0.0
  %v9027 = vand.u32 %v8800, 4294901760
  %v9028 = vsub.f32 %v8800, %v9027
  %v9029 = vand.u32 %v9028, 4294901760
  %9030 = vmatpush.msra.mxu0 %v9029
  %v9031 = vand.u32 %v8799, 4294901760
  %v9032 = vsub.f32 %v8799, %v9031
  %v9033 = vand.u32 %v9032, 4294901760
  %9034 = vmatpush.msra.mxu0 %v9033
  %v9035 = vand.u32 %v8798, 4294901760
  %v9036 = vsub.f32 %v8798, %v9035
  %v9037 = vand.u32 %v9036, 4294901760
  %9038 = vmatpush.msra.mxu0 %v9037
  %v9039 = vand.u32 %v8797, 4294901760
  %v9040 = vsub.f32 %v8797, %v9039
  %v9041 = vand.u32 %v9040, 4294901760
  %9042 = vmatpush.msra.mxu0 %v9041
  %v9043 = vand.u32 %v8796, 4294901760
  %v9044 = vsub.f32 %v8796, %v9043
  %v9045 = vand.u32 %v9044, 4294901760
  %9046 = vmatpush.msra.mxu0 %v9045
  %v9047 = vand.u32 %v8795, 4294901760
  %v9048 = vsub.f32 %v8795, %v9047
  %v9049 = vand.u32 %v9048, 4294901760
  %9050 = vmatpush.msra.mxu0 %v9049
  %v9051 = vand.u32 %v8794, 4294901760
  %v9052 = vsub.f32 %v8794, %v9051
  %v9053 = vand.u32 %v9052, 4294901760
  %9054 = vmatpush.msra.mxu0 %v9053
  %v9055 = vand.u32 %v8793, 4294901760
  %v9056 = vsub.f32 %v8793, %v9055
  %v9057 = vand.u32 %v9056, 4294901760
  %9058 = vmatpush.msra.mxu0 %v9057
  %v9059 = vand.u32 %v8802, 4294901760
  %9060 = vmatmul.f32.gmra.mxu0 %v9059
  %v9061 = vpop.f32.mrf.mxu0
  %v9062 = vadd.f32 %v9005, %v9061
  %v9063 = vand.u32 %v8805, 4294901760
  %9064 = vmatmul.f32.gmra.mxu0 %v9063
  %v9065 = vpop.f32.mrf.mxu0
  %v9066 = vadd.f32 %v9011, %v9065
  %v9067 = vand.u32 %v8808, 4294901760
  %9068 = vmatmul.f32.gmra.mxu0 %v9067
  %v9069 = vpop.f32.mrf.mxu0
  %v9070 = vadd.f32 %v9017, %v9069
  %9071 = vdwg.mxu0
  %9072 = vmatpush.msra.mxu0 0.0
  %9073 = vmatpush.msra.mxu0 0.0
  %9074 = vmatpush.msra.mxu0 0.0
  %9075 = vmatpush.msra.mxu0 0.0
  %9076 = vmatpush.msra.mxu0 0.0
  %9077 = vmatpush.msra.mxu0 0.0
  %9078 = vmatpush.msra.mxu0 0.0
  %9079 = vmatpush.msra.mxu0 0.0
  %v9080 = vand.u32 %v8800, 4294901760
  %9081 = vmatpush.msra.mxu0 %v9080
  %v9082 = vand.u32 %v8799, 4294901760
  %9083 = vmatpush.msra.mxu0 %v9082
  %v9084 = vand.u32 %v8798, 4294901760
  %9085 = vmatpush.msra.mxu0 %v9084
  %v9086 = vand.u32 %v8797, 4294901760
  %9087 = vmatpush.msra.mxu0 %v9086
  %v9088 = vand.u32 %v8796, 4294901760
  %9089 = vmatpush.msra.mxu0 %v9088
  %v9090 = vand.u32 %v8795, 4294901760
  %9091 = vmatpush.msra.mxu0 %v9090
  %v9092 = vand.u32 %v8794, 4294901760
  %9093 = vmatpush.msra.mxu0 %v9092
  %v9094 = vand.u32 %v8793, 4294901760
  %9095 = vmatpush.msra.mxu0 %v9094
  %v9096 = vand.u32 %v8802, 4294901760
  %9097 = vmatmul.f32.gmra.mxu0 %v9096
  %v9098 = vpop.f32.mrf.mxu0
  %v9099 = vadd.f32 %v9062, %v9098
  %v9100 = vand.u32 %v8805, 4294901760
  %9101 = vmatmul.f32.gmra.mxu0 %v9100
  %v9102 = vpop.f32.mrf.mxu0
  %v9103 = vadd.f32 %v9066, %v9102
  %v9104 = vand.u32 %v8808, 4294901760
  %9105 = vmatmul.f32.gmra.mxu0 %v9104
  %v9106 = vpop.f32.mrf.mxu0
  %v9107 = vadd.f32 %v9070, %v9106
  %9108 = vdwg.mxu0
  %v9109 = vadd.f32 %v8414, %v9099
  %v9110 = vadd.f32 %v8415, %v9103
  %v9111 = vadd.f32 %v8416, %v9107
  %s9112 = scalar_lea.vmem %s15, 1
  %v9113 = vld [vmem:[%s9112] sm:$0x1]
  %v9115 = vperm.slane %v9113, 0
  %v9117 = vadd.f32 %v9109, %v9115
  %v9118 = vadd.f32 %v9110, %v9115
  %v9119 = vadd.f32 %v9111, %v9115
  %v9120 = vld [vmem:[%s16] sm:$0xf]
  %v9122 = vsel %vm1461, %v9120, 0
  %v9125 = vsel %vm1513, %v9119, 0
  %9127 = vmatpush.msra.mxu0 0.0
  %9128 = vmatpush.msra.mxu0 0.0
  %9129 = vmatpush.msra.mxu0 0.0
  %9130 = vmatpush.msra.mxu0 0.0
  %9131 = vmatpush.msra.mxu0 0.0
  %9132 = vmatpush.msra.mxu0 0.0
  %9133 = vmatpush.msra.mxu0 0.0
  %9134 = vmatpush.msra.mxu0 0.0
  %9135 = vmatpush.msra.mxu0 0.0
  %9136 = vmatpush.msra.mxu0 0.0
  %9137 = vmatpush.msra.mxu0 0.0
  %9138 = vmatpush.msra.mxu0 0.0
  %9139 = vmatpush.msra.mxu0 0.0
  %v9140 = vand.u32 %v9125, 4294901760
  %9141 = vmatpush.msra.mxu0 %v9140
  %v9142 = vand.u32 %v9118, 4294901760
  %9143 = vmatpush.msra.mxu0 %v9142
  %v9144 = vand.u32 %v9117, 4294901760
  %9145 = vmatpush.msra.mxu0 %v9144
  %v9146 = vand.u32 %v9122, 4294901760
  %v9147 = vsub.f32 %v9122, %v9146
  %v9148 = vand.u32 %v9147, 4294901760
  %v9149 = vsub.f32 %v9147, %v9148
  %v9150 = vand.u32 %v9149, 4294901760
  %9151 = vmatmul.f32.gmra.mxu0 %v9150
  %v9152 = vpop.f32.mrf.mxu0
  %v9153 = vadd.f32 0.0, %v9152
  %9154 = vdwg.mxu0
  %9155 = vmatpush.msra.mxu0 0.0
  %9156 = vmatpush.msra.mxu0 0.0
  %9157 = vmatpush.msra.mxu0 0.0
  %9158 = vmatpush.msra.mxu0 0.0
  %9159 = vmatpush.msra.mxu0 0.0
  %9160 = vmatpush.msra.mxu0 0.0
  %9161 = vmatpush.msra.mxu0 0.0
  %9162 = vmatpush.msra.mxu0 0.0
  %9163 = vmatpush.msra.mxu0 0.0
  %9164 = vmatpush.msra.mxu0 0.0
  %9165 = vmatpush.msra.mxu0 0.0
  %9166 = vmatpush.msra.mxu0 0.0
  %9167 = vmatpush.msra.mxu0 0.0
  %v9168 = vand.u32 %v9125, 4294901760
  %v9169 = vsub.f32 %v9125, %v9168
  %v9170 = vand.u32 %v9169, 4294901760
  %v9171 = vsub.f32 %v9169, %v9170
  %v9172 = vand.u32 %v9171, 4294901760
  %9173 = vmatpush.msra.mxu0 %v9172
  %v9174 = vand.u32 %v9118, 4294901760
  %v9175 = vsub.f32 %v9118, %v9174
  %v9176 = vand.u32 %v9175, 4294901760
  %v9177 = vsub.f32 %v9175, %v9176
  %v9178 = vand.u32 %v9177, 4294901760
  %9179 = vmatpush.msra.mxu0 %v9178
  %v9180 = vand.u32 %v9117, 4294901760
  %v9181 = vsub.f32 %v9117, %v9180
  %v9182 = vand.u32 %v9181, 4294901760
  %v9183 = vsub.f32 %v9181, %v9182
  %v9184 = vand.u32 %v9183, 4294901760
  %9185 = vmatpush.msra.mxu0 %v9184
  %v9186 = vand.u32 %v9122, 4294901760
  %9187 = vmatmul.f32.gmra.mxu0 %v9186
  %v9188 = vpop.f32.mrf.mxu0
  %v9189 = vadd.f32 %v9153, %v9188
  %9190 = vdwg.mxu0
  %9191 = vmatpush.msra.mxu0 0.0
  %9192 = vmatpush.msra.mxu0 0.0
  %9193 = vmatpush.msra.mxu0 0.0
  %9194 = vmatpush.msra.mxu0 0.0
  %9195 = vmatpush.msra.mxu0 0.0
  %9196 = vmatpush.msra.mxu0 0.0
  %9197 = vmatpush.msra.mxu0 0.0
  %9198 = vmatpush.msra.mxu0 0.0
  %9199 = vmatpush.msra.mxu0 0.0
  %9200 = vmatpush.msra.mxu0 0.0
  %9201 = vmatpush.msra.mxu0 0.0
  %9202 = vmatpush.msra.mxu0 0.0
  %9203 = vmatpush.msra.mxu0 0.0
  %v9204 = vand.u32 %v9125, 4294901760
  %v9205 = vsub.f32 %v9125, %v9204
  %9206 = vmatpush.msra.mxu0 %v9205
  %v9207 = vand.u32 %v9118, 4294901760
  %v9208 = vsub.f32 %v9118, %v9207
  %9209 = vmatpush.msra.mxu0 %v9208
  %v9210 = vand.u32 %v9117, 4294901760
  %v9211 = vsub.f32 %v9117, %v9210
  %9212 = vmatpush.msra.mxu0 %v9211
  %v9213 = vand.u32 %v9122, 4294901760
  %v9214 = vsub.f32 %v9122, %v9213
  %9215 = vmatmul.f32.gmra.mxu0 %v9214
  %v9216 = vpop.f32.mrf.mxu0
  %v9217 = vadd.f32 %v9189, %v9216
  %9218 = vdwg.mxu0
  %9219 = vmatpush.msra.mxu0 0.0
  %9220 = vmatpush.msra.mxu0 0.0
  %9221 = vmatpush.msra.mxu0 0.0
  %9222 = vmatpush.msra.mxu0 0.0
  %9223 = vmatpush.msra.mxu0 0.0
  %9224 = vmatpush.msra.mxu0 0.0
  %9225 = vmatpush.msra.mxu0 0.0
  %9226 = vmatpush.msra.mxu0 0.0
  %9227 = vmatpush.msra.mxu0 0.0
  %9228 = vmatpush.msra.mxu0 0.0
  %9229 = vmatpush.msra.mxu0 0.0
  %9230 = vmatpush.msra.mxu0 0.0
  %9231 = vmatpush.msra.mxu0 0.0
  %v9232 = vand.u32 %v9125, 4294901760
  %9233 = vmatpush.msra.mxu0 %v9232
  %v9234 = vand.u32 %v9118, 4294901760
  %9235 = vmatpush.msra.mxu0 %v9234
  %v9236 = vand.u32 %v9117, 4294901760
  %9237 = vmatpush.msra.mxu0 %v9236
  %v9238 = vand.u32 %v9122, 4294901760
  %v9239 = vsub.f32 %v9122, %v9238
  %v9240 = vand.u32 %v9239, 4294901760
  %9241 = vmatmul.f32.gmra.mxu0 %v9240
  %v9242 = vpop.f32.mrf.mxu0
  %v9243 = vadd.f32 %v9217, %v9242
  %9244 = vdwg.mxu0
  %9245 = vmatpush.msra.mxu0 0.0
  %9246 = vmatpush.msra.mxu0 0.0
  %9247 = vmatpush.msra.mxu0 0.0
  %9248 = vmatpush.msra.mxu0 0.0
  %9249 = vmatpush.msra.mxu0 0.0
  %9250 = vmatpush.msra.mxu0 0.0
  %9251 = vmatpush.msra.mxu0 0.0
  %9252 = vmatpush.msra.mxu0 0.0
  %9253 = vmatpush.msra.mxu0 0.0
  %9254 = vmatpush.msra.mxu0 0.0
  %9255 = vmatpush.msra.mxu0 0.0
  %9256 = vmatpush.msra.mxu0 0.0
  %9257 = vmatpush.msra.mxu0 0.0
  %v9258 = vand.u32 %v9125, 4294901760
  %v9259 = vsub.f32 %v9125, %v9258
  %v9260 = vand.u32 %v9259, 4294901760
  %9261 = vmatpush.msra.mxu0 %v9260
  %v9262 = vand.u32 %v9118, 4294901760
  %v9263 = vsub.f32 %v9118, %v9262
  %v9264 = vand.u32 %v9263, 4294901760
  %9265 = vmatpush.msra.mxu0 %v9264
  %v9266 = vand.u32 %v9117, 4294901760
  %v9267 = vsub.f32 %v9117, %v9266
  %v9268 = vand.u32 %v9267, 4294901760
  %9269 = vmatpush.msra.mxu0 %v9268
  %v9270 = vand.u32 %v9122, 4294901760
  %9271 = vmatmul.f32.gmra.mxu0 %v9270
  %v9272 = vpop.f32.mrf.mxu0
  %v9273 = vadd.f32 %v9243, %v9272
  %9274 = vdwg.mxu0
  %9275 = vmatpush.msra.mxu0 0.0
  %9276 = vmatpush.msra.mxu0 0.0
  %9277 = vmatpush.msra.mxu0 0.0
  %9278 = vmatpush.msra.mxu0 0.0
  %9279 = vmatpush.msra.mxu0 0.0
  %9280 = vmatpush.msra.mxu0 0.0
  %9281 = vmatpush.msra.mxu0 0.0
  %9282 = vmatpush.msra.mxu0 0.0
  %9283 = vmatpush.msra.mxu0 0.0
  %9284 = vmatpush.msra.mxu0 0.0
  %9285 = vmatpush.msra.mxu0 0.0
  %9286 = vmatpush.msra.mxu0 0.0
  %9287 = vmatpush.msra.mxu0 0.0
  %v9288 = vand.u32 %v9125, 4294901760
  %9289 = vmatpush.msra.mxu0 %v9288
  %v9290 = vand.u32 %v9118, 4294901760
  %9291 = vmatpush.msra.mxu0 %v9290
  %v9292 = vand.u32 %v9117, 4294901760
  %9293 = vmatpush.msra.mxu0 %v9292
  %v9294 = vand.u32 %v9122, 4294901760
  %9295 = vmatmul.f32.gmra.mxu0 %v9294
  %v9296 = vpop.f32.mrf.mxu0
  %v9297 = vadd.f32 %v9273, %v9296
  %9298 = vdwg.mxu0
  %v9299 = vld [vmem:[%s17] sm:$0x1]
  %v9300 = vld [vmem:[%s18] sm:$0x1]
  %v9301 = vsel %vm851, %v9297, 0.0
  %9302 = vadd.xlane.f32.xlu0 %v9301
  %v9303 = vpop.xlane.xlu0 %9302
  %v9304 = vmul.f32 %v9303, %v861
  %v9305 = vsub.f32 %v9297, %v9304
  %v9306 = vmul.f32 %v9305, %v9305
  %v9307 = vsel %vm851, %v9306, 0.0
  %9308 = vadd.xlane.f32.xlu0 %v9307
  %v9309 = vpop.xlane.xlu0 %9308
  %v9310 = vmul.f32 %v9309, %v861
  %v9311 = vadd.f32 %v9310, 1e-12
  %v9312 = vrsqrt.pop %v9311
  %v9313 = vmul.f32 %v9312, %v9311
  %v9314 = vmul.f32 %v9313, %v9312
  %v9315 = vmul.f32 0.5, %v9314
  %v9316 = vsub.f32 1.5, %v9315
  %v9317 = vmul.f32 %v9312, %v9316
  %vm9318 = vweird.f32 %v9311
  %vm9319 = vweird.f32 %v9312
  %vm9320 = vmor %vm9318, %vm9319
  %v9321 = vsel %vm9320, %v9312, %v9317
  %v9322 = vmul.f32 %v9305, %v9321
  %v9324 = vperm.slane %v9299, 0
  %v9326 = vmul.f32 %v9322, %v9324
  %v9328 = vperm.slane %v9300, 0
  %v9330 = vadd.f32 %v9326, %v9328
  %v9331 = vld [vmem:[%s19] sm:$0xff]
  %v9332 = vld [vmem:[%s19 + $0x8] sm:$0xff]
  %v9333 = vld [vmem:[%s19 + $0x10] sm:$0xff]
  %v9334 = vld [vmem:[%s19 + $0x18] sm:$0xff]
  %v9335 = vld [vmem:[%s20] sm:$0x1]
  %v9337 = vperm.slane %v9335, 0
  %v9340 = vsel %vm844, %v9330, 0
  %9342 = vmatpush.msra.mxu0 0.0
  %9343 = vmatpush.msra.mxu0 0.0
  %9344 = vmatpush.msra.mxu0 0.0
  %9345 = vmatpush.msra.mxu0 0.0
  %9346 = vmatpush.msra.mxu0 0.0
  %9347 = vmatpush.msra.mxu0 0.0
  %9348 = vmatpush.msra.mxu0 0.0
  %9349 = vmatpush.msra.mxu0 0.0
  %9350 = vmatpush.msra.mxu0 0.0
  %9351 = vmatpush.msra.mxu0 0.0
  %9352 = vmatpush.msra.mxu0 0.0
  %9353 = vmatpush.msra.mxu0 0.0
  %v9354 = vand.u32 %v9334, 4294901760
  %9355 = vmatpush.msra.mxu0 %v9354
  %v9356 = vand.u32 %v9333, 4294901760
  %9357 = vmatpush.msra.mxu0 %v9356
  %v9358 = vand.u32 %v9332, 4294901760
  %9359 = vmatpush.msra.mxu0 %v9358
  %v9360 = vand.u32 %v9331, 4294901760
  %9361 = vmatpush.msra.mxu0 %v9360
  %v9362 = vand.u32 %v9340, 4294901760
  %v9363 = vsub.f32 %v9340, %v9362
  %v9364 = vand.u32 %v9363, 4294901760
  %v9365 = vsub.f32 %v9363, %v9364
  %v9366 = vand.u32 %v9365, 4294901760
  %9367 = vmatmul.f32.gmra.mxu0 %v9366
  %v9368 = vpop.f32.mrf.mxu0
  %v9369 = vadd.f32 %v9337, %v9368
  %9370 = vdwg.mxu0
  %9371 = vmatpush.msra.mxu0 0.0
  %9372 = vmatpush.msra.mxu0 0.0
  %9373 = vmatpush.msra.mxu0 0.0
  %9374 = vmatpush.msra.mxu0 0.0
  %9375 = vmatpush.msra.mxu0 0.0
  %9376 = vmatpush.msra.mxu0 0.0
  %9377 = vmatpush.msra.mxu0 0.0
  %9378 = vmatpush.msra.mxu0 0.0
  %9379 = vmatpush.msra.mxu0 0.0
  %9380 = vmatpush.msra.mxu0 0.0
  %9381 = vmatpush.msra.mxu0 0.0
  %9382 = vmatpush.msra.mxu0 0.0
  %v9383 = vand.u32 %v9334, 4294901760
  %v9384 = vsub.f32 %v9334, %v9383
  %v9385 = vand.u32 %v9384, 4294901760
  %v9386 = vsub.f32 %v9384, %v9385
  %v9387 = vand.u32 %v9386, 4294901760
  %9388 = vmatpush.msra.mxu0 %v9387
  %v9389 = vand.u32 %v9333, 4294901760
  %v9390 = vsub.f32 %v9333, %v9389
  %v9391 = vand.u32 %v9390, 4294901760
  %v9392 = vsub.f32 %v9390, %v9391
  %v9393 = vand.u32 %v9392, 4294901760
  %9394 = vmatpush.msra.mxu0 %v9393
  %v9395 = vand.u32 %v9332, 4294901760
  %v9396 = vsub.f32 %v9332, %v9395
  %v9397 = vand.u32 %v9396, 4294901760
  %v9398 = vsub.f32 %v9396, %v9397
  %v9399 = vand.u32 %v9398, 4294901760
  %9400 = vmatpush.msra.mxu0 %v9399
  %v9401 = vand.u32 %v9331, 4294901760
  %v9402 = vsub.f32 %v9331, %v9401
  %v9403 = vand.u32 %v9402, 4294901760
  %v9404 = vsub.f32 %v9402, %v9403
  %v9405 = vand.u32 %v9404, 4294901760
  %9406 = vmatpush.msra.mxu0 %v9405
  %v9407 = vand.u32 %v9340, 4294901760
  %9408 = vmatmul.f32.gmra.mxu0 %v9407
  %v9409 = vpop.f32.mrf.mxu0
  %v9410 = vadd.f32 %v9369, %v9409
  %9411 = vdwg.mxu0
  %9412 = vmatpush.msra.mxu0 0.0
  %9413 = vmatpush.msra.mxu0 0.0
  %9414 = vmatpush.msra.mxu0 0.0
  %9415 = vmatpush.msra.mxu0 0.0
  %9416 = vmatpush.msra.mxu0 0.0
  %9417 = vmatpush.msra.mxu0 0.0
  %9418 = vmatpush.msra.mxu0 0.0
  %9419 = vmatpush.msra.mxu0 0.0
  %9420 = vmatpush.msra.mxu0 0.0
  %9421 = vmatpush.msra.mxu0 0.0
  %9422 = vmatpush.msra.mxu0 0.0
  %9423 = vmatpush.msra.mxu0 0.0
  %v9424 = vand.u32 %v9334, 4294901760
  %v9425 = vsub.f32 %v9334, %v9424
  %9426 = vmatpush.msra.mxu0 %v9425
  %v9427 = vand.u32 %v9333, 4294901760
  %v9428 = vsub.f32 %v9333, %v9427
  %9429 = vmatpush.msra.mxu0 %v9428
  %v9430 = vand.u32 %v9332, 4294901760
  %v9431 = vsub.f32 %v9332, %v9430
  %9432 = vmatpush.msra.mxu0 %v9431
  %v9433 = vand.u32 %v9331, 4294901760
  %v9434 = vsub.f32 %v9331, %v9433
  %9435 = vmatpush.msra.mxu0 %v9434
  %v9436 = vand.u32 %v9340, 4294901760
  %v9437 = vsub.f32 %v9340, %v9436
  %9438 = vmatmul.f32.gmra.mxu0 %v9437
  %v9439 = vpop.f32.mrf.mxu0
  %v9440 = vadd.f32 %v9410, %v9439
  %9441 = vdwg.mxu0
  %9442 = vmatpush.msra.mxu0 0.0
  %9443 = vmatpush.msra.mxu0 0.0
  %9444 = vmatpush.msra.mxu0 0.0
  %9445 = vmatpush.msra.mxu0 0.0
  %9446 = vmatpush.msra.mxu0 0.0
  %9447 = vmatpush.msra.mxu0 0.0
  %9448 = vmatpush.msra.mxu0 0.0
  %9449 = vmatpush.msra.mxu0 0.0
  %9450 = vmatpush.msra.mxu0 0.0
  %9451 = vmatpush.msra.mxu0 0.0
  %9452 = vmatpush.msra.mxu0 0.0
  %9453 = vmatpush.msra.mxu0 0.0
  %v9454 = vand.u32 %v9334, 4294901760
  %9455 = vmatpush.msra.mxu0 %v9454
  %v9456 = vand.u32 %v9333, 4294901760
  %9457 = vmatpush.msra.mxu0 %v9456
  %v9458 = vand.u32 %v9332, 4294901760
  %9459 = vmatpush.msra.mxu0 %v9458
  %v9460 = vand.u32 %v9331, 4294901760
  %9461 = vmatpush.msra.mxu0 %v9460
  %v9462 = vand.u32 %v9340, 4294901760
  %v9463 = vsub.f32 %v9340, %v9462
  %v9464 = vand.u32 %v9463, 4294901760
  %9465 = vmatmul.f32.gmra.mxu0 %v9464
  %v9466 = vpop.f32.mrf.mxu0
  %v9467 = vadd.f32 %v9440, %v9466
  %9468 = vdwg.mxu0
  %9469 = vmatpush.msra.mxu0 0.0
  %9470 = vmatpush.msra.mxu0 0.0
  %9471 = vmatpush.msra.mxu0 0.0
  %9472 = vmatpush.msra.mxu0 0.0
  %9473 = vmatpush.msra.mxu0 0.0
  %9474 = vmatpush.msra.mxu0 0.0
  %9475 = vmatpush.msra.mxu0 0.0
  %9476 = vmatpush.msra.mxu0 0.0
  %9477 = vmatpush.msra.mxu0 0.0
  %9478 = vmatpush.msra.mxu0 0.0
  %9479 = vmatpush.msra.mxu0 0.0
  %9480 = vmatpush.msra.mxu0 0.0
  %v9481 = vand.u32 %v9334, 4294901760
  %v9482 = vsub.f32 %v9334, %v9481
  %v9483 = vand.u32 %v9482, 4294901760
  %9484 = vmatpush.msra.mxu0 %v9483
  %v9485 = vand.u32 %v9333, 4294901760
  %v9486 = vsub.f32 %v9333, %v9485
  %v9487 = vand.u32 %v9486, 4294901760
  %9488 = vmatpush.msra.mxu0 %v9487
  %v9489 = vand.u32 %v9332, 4294901760
  %v9490 = vsub.f32 %v9332, %v9489
  %v9491 = vand.u32 %v9490, 4294901760
  %9492 = vmatpush.msra.mxu0 %v9491
  %v9493 = vand.u32 %v9331, 4294901760
  %v9494 = vsub.f32 %v9331, %v9493
  %v9495 = vand.u32 %v9494, 4294901760
  %9496 = vmatpush.msra.mxu0 %v9495
  %v9497 = vand.u32 %v9340, 4294901760
  %9498 = vmatmul.f32.gmra.mxu0 %v9497
  %v9499 = vpop.f32.mrf.mxu0
  %v9500 = vadd.f32 %v9467, %v9499
  %9501 = vdwg.mxu0
  %9502 = vmatpush.msra.mxu0 0.0
  %9503 = vmatpush.msra.mxu0 0.0
  %9504 = vmatpush.msra.mxu0 0.0
  %9505 = vmatpush.msra.mxu0 0.0
  %9506 = vmatpush.msra.mxu0 0.0
  %9507 = vmatpush.msra.mxu0 0.0
  %9508 = vmatpush.msra.mxu0 0.0
  %9509 = vmatpush.msra.mxu0 0.0
  %9510 = vmatpush.msra.mxu0 0.0
  %9511 = vmatpush.msra.mxu0 0.0
  %9512 = vmatpush.msra.mxu0 0.0
  %9513 = vmatpush.msra.mxu0 0.0
  %v9514 = vand.u32 %v9334, 4294901760
  %9515 = vmatpush.msra.mxu0 %v9514
  %v9516 = vand.u32 %v9333, 4294901760
  %9517 = vmatpush.msra.mxu0 %v9516
  %v9518 = vand.u32 %v9332, 4294901760
  %9519 = vmatpush.msra.mxu0 %v9518
  %v9520 = vand.u32 %v9331, 4294901760
  %9521 = vmatpush.msra.mxu0 %v9520
  %v9522 = vand.u32 %v9340, 4294901760
  %9523 = vmatmul.f32.gmra.mxu0 %v9522
  %v9524 = vpop.f32.mrf.mxu0
  %v9525 = vadd.f32 %v9500, %v9524
  %9526 = vdwg.mxu0
  %v9527 = vtanh.pop %v9525
  %v9528 = vld [vmem:[%s21] sm:$0x3]
  %v9529 = vperm.slane %v9528, 0
  %v9530 = vmul.f32 %v9527, %v9529
  %vm9531 = vcmask 254976
  %v9532 = vsel %vm9531, %v9530, 0.0
  %9533 = vadd.xlane.f32.xlu0 %v9532
  %v9534 = vpop.xlane.xlu0 %9533
  %v9535 = vperm.slane %v9528, 1
  %v9536 = vmul.f32 %v9527, %v9535
  %vm9537 = vcmask 257026
  %v9538 = vsel %vm9537, %v9536, 0.0
  %9539 = vadd.xlane.f32.xlu0 %v9538
  %v9540 = vpop.xlane.xlu0 %9539
  %v9542 = vrot.slane %v9540, 2
  %v9544 = vadd.f32 %v9534, %v9542
  %v9545 = vld [vmem:[#allocation2] sm:$0x1]
  %v9547 = vperm.slane %v9545, 0
  %v9549 = vadd.f32 %v9544, %v9547
  %v9550 = vsub.f32 0.0, %v9549
  %v9551 = vmul.f32 %v9550, 1.442695
  %v9552 = vpow.pop %v9551
  %v9553 = vadd.f32 %v9552, 1.0
  %v9554 = vrcp.pop %v9553
  %v9555 = vmul.f32 %v9553, %v9554
  %v9556 = vsub.f32 1.0, %v9555
  %v9557 = vmul.f32 %v9554, %v9556
  %v9558 = vadd.f32 %v9554, %v9557
  %vm9559 = vweird.f32 %v9553
  %vm9560 = vweird.f32 %v9554
  %vm9561 = vmor %vm9559, %vm9560
  %v9562 = vsel %vm9561, %v9554, %v9558
  %v9563 = vand.u32 2147483647, %v9553
  %vm9564 = vcmp.eq.f32.partialorder %v9563, 8.507059e+37
  %v9565 = vand.u32 %v9553, 2147483648
  %v9566 = vor.u32 1.1754944e-38, %v9565
  %v9567 = vsel %vm9564, %v9566, %v9562
  %v9568 = vmul.f32 1.0, %v9567
  %9570 = vset.pattern.permute.xlu0 0
  %9571 = vperm.xlu0 %9570, %v9568
  %v9572 = vpop.permute.xlu0 %9571
  %9574 = vst [vmem:[%s23] sm:$0x3] %v9572
  // Predicated region
  $region94: #{progress_vit_forward.1} parent=0 // pred_check
    _
  $region95: #{progress_vit_forward.1} parent=0 // pred_check_branch
    %9576 = sbr.rel (0) target = $region97
  $region96: #{progress_vit_forward.1} parent=0 // pred_region
    _
  $region97: #{progress_vit_forward.1} parent=0 // pred_fallthru
    _
  // Predicated region
  $region98: #{progress_vit_forward.1} parent=0 // pred_check
    _
  $region99: #{progress_vit_forward.1} parent=0 // pred_check_branch
    %9578 = sbr.rel (0) target = $region101
  $region100: #{progress_vit_forward.1} parent=0 // pred_region
    _
  $region101: #{progress_vit_forward.1} parent=0 // pred_fallthru
    _

</llo_original>
